<compile_context>
chip_gen: v5e
topology: v5e:2x2
jax: 0.10.0
libtpu: 0.0.40
codegen_flags: <defaults>
</compile_context>

<pallas_src>
import functools

import jax
import jax.numpy as jnp
from jax.experimental import pallas as pl
from jax.experimental.pallas import tpu as pltpu


def _layernorm(x, gamma, beta, eps=1e-6):
    # x: (R, C) f32, gamma/beta: (1, C); biased variance (PyTorch LayerNorm).
    mean = jnp.mean(x, axis=-1, keepdims=True)
    xc = x - mean
    var = jnp.mean(xc * xc, axis=-1, keepdims=True)
    inv = jax.lax.rsqrt(var + eps)
    return xc * inv * gamma + beta


def _encoder_kernel(x_ref, wqkv_ref, wo_ref, bo_ref, g1_ref, b1_ref,
                    w1_ref, w2_ref, g2_ref, b2_ref, o_ref, ctx_ref,
                    *, bt, n_tok, heads, dim_head):
    C = heads * dim_head

    x = x_ref[...]                                   # (R, C) f32 residual path
    xb = x.astype(jnp.bfloat16)                      # bf16 MXU operand

    # Fused QKV projection over all Bt*N rows; attention scale is pre-folded
    # into the q columns of wqkv, f32 accumulation.
    qkv = jnp.dot(xb, wqkv_ref[...],
                  preferred_element_type=jnp.float32)            # (R, 3C) f32

    # --- self-attention -------------------------------------------------
    # Per (batch, head): scores -> softmax -> P@V.  Heads are concatenated
    # lane-wise into a (N, C) block written straight to VMEM scratch (bounds
    # live ranges); the to_out projection runs once for the whole row block.
    for b in range(bt):                              # static unroll, bt small
        r0 = b * n_tok
        qb = qkv[r0:r0 + n_tok, 0:C].astype(jnp.bfloat16)        # (N, C)
        kb = qkv[r0:r0 + n_tok, C:2 * C].astype(jnp.bfloat16)    # (N, C)
        vb = qkv[r0:r0 + n_tok, 2 * C:3 * C].astype(jnp.bfloat16)  # (N, C)
        ctx_heads = []
        for h in range(heads):                       # static unroll over heads
            lo = h * dim_head
            qh = qb[:, lo:lo + dim_head]
            kh = kb[:, lo:lo + dim_head]
            vh = vb[:, lo:lo + dim_head]

            # q @ k^T without materializing a transpose (contract last dims).
            dots = jax.lax.dot_general(
                qh, kh, (((1,), (1,)), ((), ())),
                preferred_element_type=jnp.float32)              # (N, N) f32

            dots = dots - jnp.max(dots, axis=-1, keepdims=True)
            p = jnp.exp(dots)
            p = p * pl.reciprocal(jnp.sum(p, axis=-1, keepdims=True),
                                  approx=True)

            ctx = jnp.dot(p.astype(jnp.bfloat16), vh,
                          preferred_element_type=jnp.float32)    # (N, d) f32
            ctx_heads.append(ctx.astype(jnp.bfloat16))

        ctx_b = ctx_heads[0] if heads == 1 else jnp.concatenate(ctx_heads, -1)
        ctx_ref[r0:r0 + n_tok, :] = ctx_b            # lane-dense (N, C) write

    # Single fused output projection for the whole (Bt*N, C) row block.
    attn = jnp.dot(ctx_ref[...], wo_ref[...],
                   preferred_element_type=jnp.float32) + bo_ref[...]  # (R, C)

    # --- residual + LayerNorm (f32 statistics) ---------------------------
    y1 = _layernorm(x + attn, g1_ref[...], b1_ref[...])               # (R, C)

    # --- FFN: Linear(C->4C, no bias) -> ReLU6 -> Linear(4C->C) -> ReLU6 --
    h1 = jnp.dot(y1.astype(jnp.bfloat16), w1_ref[...],
                 preferred_element_type=jnp.float32)                  # (R, 4C)
    h1 = jnp.clip(h1, 0.0, 6.0)
    h2 = jnp.dot(h1.astype(jnp.bfloat16), w2_ref[...],
                 preferred_element_type=jnp.float32)                  # (R, C)
    h2 = jnp.clip(h2, 0.0, 6.0)

    out = _layernorm(y1 + h2, g2_ref[...], b2_ref[...])               # (R, C)
    o_ref[...] = out.astype(o_ref.dtype)


def transformer_encoder_2d(x_nchw, params, *, heads, dim_head,
                           block_batch=None, weight_buffers=1):
    """x_nchw: (B, C, H, W) with C == heads * dim_head."""
    B, C, H, W = x_nchw.shape
    assert C == heads * dim_head
    N = H * W
    R = B * N

    # NCHW -> (B*N, C) token rows.
    # TODO(synk): consuming/producing NHWC upstream (or doing the (C,N)->(N,C)
    # transpose in-kernel from a (Bt, C, N) block) would remove these extra
    # HBM read+write passes around the kernel.
    x = jnp.transpose(x_nchw, (0, 2, 3, 1)).reshape(R, C)

    wqkv, wo, bo, g1, b1, w1, w2, g2, b2 = params
    # Fold the attention scale into the q columns (one-time constant fold).
    scale = dim_head ** (-0.5)
    wqkv = wqkv.at[:, :C].multiply(scale)
    # bf16 MXU operands for the big weights (halves HBM traffic / VMEM).
    wqkv_b = wqkv.astype(jnp.bfloat16)
    wo_b = wo.astype(jnp.bfloat16)
    w1_b = w1.astype(jnp.bfloat16)
    w2_b = w2.astype(jnp.bfloat16)

    # Choose Bt so the grid has >=4 steps (>=2 per TensorCore on v7x megacore,
    # keeping per-core double-buffered pipelining) while pushing M = Bt*N
    # toward ~256 MXU rows.
    if block_batch is None:
        max_bt = max(1, B // 4)
        bt = min(max_bt, max(1, pl.cdiv(256, max(N, 1))))
        while B % bt:
            bt -= 1
        block_batch = bt
    # (8, 128) rule: second-last block dim must divide by 8 unless the block
    # covers the full array.
    if (block_batch * N) % 8 != 0 and block_batch != B:
        block_batch = B
    Bt = block_batch
    assert B % Bt == 0
    grid = (B // Bt,)

    def full(arr):
        nd = arr.ndim
        if weight_buffers == 1:
            # Grid-invariant: fetched once; single buffer halves its VMEM use.
            return pl.BlockSpec(arr.shape, lambda i: (0,) * nd,
                                pipeline_mode=pl.Buffered(1))
        return pl.BlockSpec(arr.shape, lambda i: (0,) * nd)

    out = pl.pallas_call(
        functools.partial(_encoder_kernel, bt=Bt, n_tok=N,
                          heads=heads, dim_head=dim_head),
        out_shape=jax.ShapeDtypeStruct((R, C), x.dtype),
        grid_spec=pltpu.PrefetchScalarGridSpec(
            num_scalar_prefetch=0,
            grid=grid,
            in_specs=[
                pl.BlockSpec((Bt * N, C), lambda i: (i, 0)),  # x rows
                full(wqkv_b),   # W_qkv^T  (C, 3C)  bf16 (q cols pre-scaled)
                full(wo_b),     # W_out^T  (C, C)   bf16
                full(bo),       # b_out    (1, C)   f32
                full(g1),       # ln1 gamma (1, C)
                full(b1),       # ln1 beta  (1, C)
                full(w1_b),     # W1^T     (C, 4C)  bf16
                full(w2_b),     # W2^T     (4C, C)  bf16
                full(g2),       # ln2 gamma (1, C)
                full(b2),       # ln2 beta  (1, C)
            ],
            out_specs=pl.BlockSpec((Bt * N, C), lambda i: (i, 0)),
            scratch_shapes=[pltpu.VMEM((Bt * N, C), jnp.bfloat16)],
        ),
        compiler_params=pltpu.CompilerParams(
            dimension_semantics=("parallel",),
            # v7x only has 64 MiB physical VMEM per core -> leave headroom.
            vmem_limit_bytes=48 * 1024 * 1024),
    )(x, wqkv_b, wo_b, bo, g1, b1, w1_b, w2_b, g2, b2)

    # (B*N, C) -> NCHW
    return jnp.transpose(out.reshape(B, H, W, C), (0, 3, 1, 2))


def init_params(key, heads, dim_head):
    C = heads * dim_head
    ks = jax.random.split(key, 9)
    scale = 0.02
    # Weights stored pre-transposed so the kernel computes x @ W directly
    # (PyTorch Linear is y = x @ W.T).
    wqkv = jax.random.normal(ks[0], (C, 3 * C), jnp.float32) * scale
    wo = jax.random.normal(ks[1], (C, C), jnp.float32) * scale
    bo = jax.random.normal(ks[2], (1, C), jnp.float32) * scale
    g1 = 1.0 + jax.random.normal(ks[3], (1, C), jnp.float32) * scale
    b1 = jax.random.normal(ks[4], (1, C), jnp.float32) * scale
    w1 = jax.random.normal(ks[5], (C, 4 * C), jnp.float32) * scale
    w2 = jax.random.normal(ks[6], (4 * C, C), jnp.float32) * scale
    g2 = 1.0 + jax.random.normal(ks[7], (1, C), jnp.float32) * scale
    b2 = jax.random.normal(ks[8], (1, C), jnp.float32) * scale
    return (wqkv, wo, bo, g1, b1, w1, w2, g2, b2)


def reference(x_nchw, params, *, heads, dim_head):
    """Pure-JAX f32 reference of the PyTorch forward (sanity check)."""
    wqkv, wo, bo, g1, b1, w1, w2, g2, b2 = params
    B, C, H, W = x_nchw.shape
    N = H * W
    x = jnp.transpose(x_nchw, (0, 2, 3, 1)).reshape(B, N, C)

    def ln(t, g, b):
        m = jnp.mean(t, -1, keepdims=True)
        v = jnp.mean((t - m) ** 2, -1, keepdims=True)
        return (t - m) / jnp.sqrt(v + 1e-6) * g + b

    qkv = x @ wqkv
    q, k, v = jnp.split(qkv, 3, axis=-1)
    rs = lambda t: t.reshape(B, N, heads, dim_head).transpose(0, 2, 1, 3)
    q, k, v = rs(q), rs(k), rs(v)
    dots = jnp.einsum("bhnd,bhmd->bhnm", q, k) * (dim_head ** -0.5)
    attn = jax.nn.softmax(dots, axis=-1)
    o = jnp.einsum("bhnm,bhmd->bhnd", attn, v).transpose(0, 2, 1, 3).reshape(B, N, C)
    o = o @ wo + bo
    a = ln(x + o, g1, b1)
    h = jnp.clip(a @ w1, 0, 6)
    h = jnp.clip(h @ w2, 0, 6)
    out = ln(a + h, g2, b2)
    return jnp.transpose(out.reshape(B, H, W, C), (0, 3, 1, 2))


if __name__ == "__main__":
    heads, dim_head = 2, 64          # inner_dim = C = 128 (lane-dense channels)
    B, H, W = 8, 8, 8                # N = 64 tokens; Bt=2 -> grid=(4,)
    C = heads * dim_head

    key = jax.random.PRNGKey(0)
    kx, kp = jax.random.split(key)
    x = jax.random.normal(kx, (B, C, H, W), jnp.float32)
    params = init_params(kp, heads, dim_head)

    try:
        out = transformer_encoder_2d(x, params, heads=heads, dim_head=dim_head)
        out = jax.block_until_ready(out)
    except Exception:
        # Portability guard: fall back to default double-buffered weight specs
        # if this jax build rejects pl.Buffered(1) on pallas_call BlockSpecs.
        out = transformer_encoder_2d(x, params, heads=heads, dim_head=dim_head,
                                     weight_buffers=2)
        out = jax.block_until_ready(out)

    ref = reference(x, params, heads=heads, dim_head=dim_head)
    assert out.shape == (B, C, H, W)
    # bf16 MXU operands with f32 accumulation -> compare at bf16 tolerance.
    max_err = float(jnp.max(jnp.abs(out - ref)))
    assert max_err < 2e-2, f"mismatch vs reference: max |diff| = {max_err}"

    print("KERNEL_OK")
</pallas_src>

<mosaic_0001>
module attributes {stable_mosaic.version = 11 : i64} {
  func.func @_encoder_kernel(%arg0: i32, %arg1: memref<128x128xf32, #tpu.memory_space<vmem>>, %arg2: memref<128x384xbf16, #tpu.memory_space<vmem>>, %arg3: memref<128x128xbf16, #tpu.memory_space<vmem>>, %arg4: memref<1x128xf32, #tpu.memory_space<vmem>>, %arg5: memref<1x128xf32, #tpu.memory_space<vmem>>, %arg6: memref<1x128xf32, #tpu.memory_space<vmem>>, %arg7: memref<128x512xbf16, #tpu.memory_space<vmem>>, %arg8: memref<512x128xbf16, #tpu.memory_space<vmem>>, %arg9: memref<1x128xf32, #tpu.memory_space<vmem>>, %arg10: memref<1x128xf32, #tpu.memory_space<vmem>>, %arg11: memref<128x128xf32, #tpu.memory_space<vmem>>, %arg12: memref<128x128xbf16, #tpu.memory_space<vmem>>) attributes {dimension_semantics = [#tpu.dimension_semantics<parallel>], iteration_bounds = array<i64: 4>, scalar_prefetch = 0 : i64, scratch_operands = 1 : i64, tpu.core_type = #tpu.core_type<tc>, window_params = [{transform_indices = @transform_0, window_bounds = array<i64: 128, 128>}, {pipeline_mode = #tpu.pipeline_mode<synchronous>, transform_indices = @transform_1, window_bounds = array<i64: 128, 384>}, {pipeline_mode = #tpu.pipeline_mode<synchronous>, transform_indices = @transform_2, window_bounds = array<i64: 128, 128>}, {pipeline_mode = #tpu.pipeline_mode<synchronous>, transform_indices = @transform_3, window_bounds = array<i64: 1, 128>}, {pipeline_mode = #tpu.pipeline_mode<synchronous>, transform_indices = @transform_4, window_bounds = array<i64: 1, 128>}, {pipeline_mode = #tpu.pipeline_mode<synchronous>, transform_indices = @transform_5, window_bounds = array<i64: 1, 128>}, {pipeline_mode = #tpu.pipeline_mode<synchronous>, transform_indices = @transform_6, window_bounds = array<i64: 128, 512>}, {pipeline_mode = #tpu.pipeline_mode<synchronous>, transform_indices = @transform_7, window_bounds = array<i64: 512, 128>}, {pipeline_mode = #tpu.pipeline_mode<synchronous>, transform_indices = @transform_8, window_bounds = array<i64: 1, 128>}, {pipeline_mode = #tpu.pipeline_mode<synchronous>, transform_indices = @transform_9, window_bounds = array<i64: 1, 128>}, {transform_indices = @transform_10, window_bounds = array<i64: 128, 128>}]} {
    %c0 = arith.constant 0 : index
    %c0_0 = arith.constant 0 : index
    %0 = vector.load %arg1[%c0, %c0_0] : memref<128x128xf32, #tpu.memory_space<vmem>>, vector<128x128xf32>
    %1 = arith.truncf %0 : vector<128x128xf32> to vector<128x128xbf16>
    %c0_1 = arith.constant 0 : index
    %c0_2 = arith.constant 0 : index
    %2 = vector.load %arg2[%c0_1, %c0_2] : memref<128x384xbf16, #tpu.memory_space<vmem>>, vector<128x384xbf16>
    %cst = arith.constant dense<0.000000e+00> : vector<128x384xf32>
    %3 = tpu.matmul %1, %2, %cst {dimension_numbers = #tpu.dot_dimension_numbers<[1], [0], [0], [1], [0, 0, 1, 1], [], []>} : vector<128x128xbf16>, vector<128x384xbf16>, vector<128x384xf32> -> vector<128x384xf32>
    %4 = vector.extract_strided_slice %3 {offsets = [0, 0], sizes = [64, 128], strides = [1, 1]} : vector<128x384xf32> to vector<64x128xf32>
    %5 = arith.truncf %4 : vector<64x128xf32> to vector<64x128xbf16>
    %6 = vector.extract_strided_slice %3 {offsets = [0, 128], sizes = [64, 128], strides = [1, 1]} : vector<128x384xf32> to vector<64x128xf32>
    %7 = arith.truncf %6 : vector<64x128xf32> to vector<64x128xbf16>
    %8 = vector.extract_strided_slice %3 {offsets = [0, 256], sizes = [64, 128], strides = [1, 1]} : vector<128x384xf32> to vector<64x128xf32>
    %9 = arith.truncf %8 : vector<64x128xf32> to vector<64x128xbf16>
    %10 = vector.extract_strided_slice %5 {offsets = [0, 0], sizes = [64, 64], strides = [1, 1]} : vector<64x128xbf16> to vector<64x64xbf16>
    %11 = vector.extract_strided_slice %7 {offsets = [0, 0], sizes = [64, 64], strides = [1, 1]} : vector<64x128xbf16> to vector<64x64xbf16>
    %12 = vector.extract_strided_slice %9 {offsets = [0, 0], sizes = [64, 64], strides = [1, 1]} : vector<64x128xbf16> to vector<64x64xbf16>
    %cst_3 = arith.constant dense<0.000000e+00> : vector<64x64xf32>
    %13 = tpu.matmul %10, %11, %cst_3 {dimension_numbers = #tpu.dot_dimension_numbers<[1], [1], [0], [0], [0, 0, 1, 0], [], []>} : vector<64x64xbf16>, vector<64x64xbf16>, vector<64x64xf32> -> vector<64x64xf32>
    %cst_4 = arith.constant dense<0xFF800000> : vector<64xf32>
    %14 = vector.multi_reduction <maximumf>, %13, %cst_4 [1] : vector<64x64xf32> to vector<64xf32>
    %15 = vector.shape_cast %14 : vector<64xf32> to vector<64x1xf32>
    %16 = vector.broadcast %15 : vector<64x1xf32> to vector<64x64xf32>
    %17 = arith.subf %13, %16 : vector<64x64xf32>
    %18 = math.exp %17 : vector<64x64xf32>
    %cst_5 = arith.constant dense<0.000000e+00> : vector<64xf32>
    %19 = vector.multi_reduction <add>, %18, %cst_5 [1] : vector<64x64xf32> to vector<64xf32>
    %20 = vector.shape_cast %19 : vector<64xf32> to vector<64x1xf32>
    %21 = tpu.reciprocal %20 {approx = true} : vector<64x1xf32> -> vector<64x1xf32>
    %22 = vector.broadcast %21 : vector<64x1xf32> to vector<64x64xf32>
    %23 = arith.mulf %18, %22 : vector<64x64xf32>
    %24 = arith.truncf %23 : vector<64x64xf32> to vector<64x64xbf16>
    %cst_6 = arith.constant dense<0.000000e+00> : vector<64x64xf32>
    %25 = tpu.matmul %24, %12, %cst_6 {dimension_numbers = #tpu.dot_dimension_numbers<[1], [0], [0], [1], [0, 0, 1, 1], [], []>} : vector<64x64xbf16>, vector<64x64xbf16>, vector<64x64xf32> -> vector<64x64xf32>
    %26 = arith.truncf %25 : vector<64x64xf32> to vector<64x64xbf16>
    %27 = vector.extract_strided_slice %5 {offsets = [0, 64], sizes = [64, 64], strides = [1, 1]} : vector<64x128xbf16> to vector<64x64xbf16>
    %28 = vector.extract_strided_slice %7 {offsets = [0, 64], sizes = [64, 64], strides = [1, 1]} : vector<64x128xbf16> to vector<64x64xbf16>
    %29 = vector.extract_strided_slice %9 {offsets = [0, 64], sizes = [64, 64], strides = [1, 1]} : vector<64x128xbf16> to vector<64x64xbf16>
    %cst_7 = arith.constant dense<0.000000e+00> : vector<64x64xf32>
    %30 = tpu.matmul %27, %28, %cst_7 {dimension_numbers = #tpu.dot_dimension_numbers<[1], [1], [0], [0], [0, 0, 1, 0], [], []>} : vector<64x64xbf16>, vector<64x64xbf16>, vector<64x64xf32> -> vector<64x64xf32>
    %cst_8 = arith.constant dense<0xFF800000> : vector<64xf32>
    %31 = vector.multi_reduction <maximumf>, %30, %cst_8 [1] : vector<64x64xf32> to vector<64xf32>
    %32 = vector.shape_cast %31 : vector<64xf32> to vector<64x1xf32>
    %33 = vector.broadcast %32 : vector<64x1xf32> to vector<64x64xf32>
    %34 = arith.subf %30, %33 : vector<64x64xf32>
    %35 = math.exp %34 : vector<64x64xf32>
    %cst_9 = arith.constant dense<0.000000e+00> : vector<64xf32>
    %36 = vector.multi_reduction <add>, %35, %cst_9 [1] : vector<64x64xf32> to vector<64xf32>
    %37 = vector.shape_cast %36 : vector<64xf32> to vector<64x1xf32>
    %38 = tpu.reciprocal %37 {approx = true} : vector<64x1xf32> -> vector<64x1xf32>
    %39 = vector.broadcast %38 : vector<64x1xf32> to vector<64x64xf32>
    %40 = arith.mulf %35, %39 : vector<64x64xf32>
    %41 = arith.truncf %40 : vector<64x64xf32> to vector<64x64xbf16>
    %cst_10 = arith.constant dense<0.000000e+00> : vector<64x64xf32>
    %42 = tpu.matmul %41, %29, %cst_10 {dimension_numbers = #tpu.dot_dimension_numbers<[1], [0], [0], [1], [0, 0, 1, 1], [], []>} : vector<64x64xbf16>, vector<64x64xbf16>, vector<64x64xf32> -> vector<64x64xf32>
    %43 = arith.truncf %42 : vector<64x64xf32> to vector<64x64xbf16>
    %44 = tpu.concatenate %26, %43 in 1 : vector<64x64xbf16>, vector<64x64xbf16> -> vector<64x128xbf16>
    %c0_11 = arith.constant 0 : index
    %c0_12 = arith.constant 0 : index
    %45 = vector.load %arg12[%c0_11, %c0_12] : memref<128x128xbf16, #tpu.memory_space<vmem>>, vector<64x128xbf16>
    tpu.vector_store %arg12[%c0_11, %c0_12], %44 {strides = array<i32>} : memref<128x128xbf16, #tpu.memory_space<vmem>>, vector<64x128xbf16>,
    %46 = vector.extract_strided_slice %3 {offsets = [64, 0], sizes = [64, 128], strides = [1, 1]} : vector<128x384xf32> to vector<64x128xf32>
    %47 = arith.truncf %46 : vector<64x128xf32> to vector<64x128xbf16>
    %48 = vector.extract_strided_slice %3 {offsets = [64, 128], sizes = [64, 128], strides = [1, 1]} : vector<128x384xf32> to vector<64x128xf32>
    %49 = arith.truncf %48 : vector<64x128xf32> to vector<64x128xbf16>
    %50 = vector.extract_strided_slice %3 {offsets = [64, 256], sizes = [64, 128], strides = [1, 1]} : vector<128x384xf32> to vector<64x128xf32>
    %51 = arith.truncf %50 : vector<64x128xf32> to vector<64x128xbf16>
    %52 = vector.extract_strided_slice %47 {offsets = [0, 0], sizes = [64, 64], strides = [1, 1]} : vector<64x128xbf16> to vector<64x64xbf16>
    %53 = vector.extract_strided_slice %49 {offsets = [0, 0], sizes = [64, 64], strides = [1, 1]} : vector<64x128xbf16> to vector<64x64xbf16>
    %54 = vector.extract_strided_slice %51 {offsets = [0, 0], sizes = [64, 64], strides = [1, 1]} : vector<64x128xbf16> to vector<64x64xbf16>
    %cst_13 = arith.constant dense<0.000000e+00> : vector<64x64xf32>
    %55 = tpu.matmul %52, %53, %cst_13 {dimension_numbers = #tpu.dot_dimension_numbers<[1], [1], [0], [0], [0, 0, 1, 0], [], []>} : vector<64x64xbf16>, vector<64x64xbf16>, vector<64x64xf32> -> vector<64x64xf32>
    %cst_14 = arith.constant dense<0xFF800000> : vector<64xf32>
    %56 = vector.multi_reduction <maximumf>, %55, %cst_14 [1] : vector<64x64xf32> to vector<64xf32>
    %57 = vector.shape_cast %56 : vector<64xf32> to vector<64x1xf32>
    %58 = vector.broadcast %57 : vector<64x1xf32> to vector<64x64xf32>
    %59 = arith.subf %55, %58 : vector<64x64xf32>
    %60 = math.exp %59 : vector<64x64xf32>
    %cst_15 = arith.constant dense<0.000000e+00> : vector<64xf32>
    %61 = vector.multi_reduction <add>, %60, %cst_15 [1] : vector<64x64xf32> to vector<64xf32>
    %62 = vector.shape_cast %61 : vector<64xf32> to vector<64x1xf32>
    %63 = tpu.reciprocal %62 {approx = true} : vector<64x1xf32> -> vector<64x1xf32>
    %64 = vector.broadcast %63 : vector<64x1xf32> to vector<64x64xf32>
    %65 = arith.mulf %60, %64 : vector<64x64xf32>
    %66 = arith.truncf %65 : vector<64x64xf32> to vector<64x64xbf16>
    %cst_16 = arith.constant dense<0.000000e+00> : vector<64x64xf32>
    %67 = tpu.matmul %66, %54, %cst_16 {dimension_numbers = #tpu.dot_dimension_numbers<[1], [0], [0], [1], [0, 0, 1, 1], [], []>} : vector<64x64xbf16>, vector<64x64xbf16>, vector<64x64xf32> -> vector<64x64xf32>
    %68 = arith.truncf %67 : vector<64x64xf32> to vector<64x64xbf16>
    %69 = vector.extract_strided_slice %47 {offsets = [0, 64], sizes = [64, 64], strides = [1, 1]} : vector<64x128xbf16> to vector<64x64xbf16>
    %70 = vector.extract_strided_slice %49 {offsets = [0, 64], sizes = [64, 64], strides = [1, 1]} : vector<64x128xbf16> to vector<64x64xbf16>
    %71 = vector.extract_strided_slice %51 {offsets = [0, 64], sizes = [64, 64], strides = [1, 1]} : vector<64x128xbf16> to vector<64x64xbf16>
    %cst_17 = arith.constant dense<0.000000e+00> : vector<64x64xf32>
    %72 = tpu.matmul %69, %70, %cst_17 {dimension_numbers = #tpu.dot_dimension_numbers<[1], [1], [0], [0], [0, 0, 1, 0], [], []>} : vector<64x64xbf16>, vector<64x64xbf16>, vector<64x64xf32> -> vector<64x64xf32>
    %cst_18 = arith.constant dense<0xFF800000> : vector<64xf32>
    %73 = vector.multi_reduction <maximumf>, %72, %cst_18 [1] : vector<64x64xf32> to vector<64xf32>
    %74 = vector.shape_cast %73 : vector<64xf32> to vector<64x1xf32>
    %75 = vector.broadcast %74 : vector<64x1xf32> to vector<64x64xf32>
    %76 = arith.subf %72, %75 : vector<64x64xf32>
    %77 = math.exp %76 : vector<64x64xf32>
    %cst_19 = arith.constant dense<0.000000e+00> : vector<64xf32>
    %78 = vector.multi_reduction <add>, %77, %cst_19 [1] : vector<64x64xf32> to vector<64xf32>
    %79 = vector.shape_cast %78 : vector<64xf32> to vector<64x1xf32>
    %80 = tpu.reciprocal %79 {approx = true} : vector<64x1xf32> -> vector<64x1xf32>
    %81 = vector.broadcast %80 : vector<64x1xf32> to vector<64x64xf32>
    %82 = arith.mulf %77, %81 : vector<64x64xf32>
    %83 = arith.truncf %82 : vector<64x64xf32> to vector<64x64xbf16>
    %cst_20 = arith.constant dense<0.000000e+00> : vector<64x64xf32>
    %84 = tpu.matmul %83, %71, %cst_20 {dimension_numbers = #tpu.dot_dimension_numbers<[1], [0], [0], [1], [0, 0, 1, 1], [], []>} : vector<64x64xbf16>, vector<64x64xbf16>, vector<64x64xf32> -> vector<64x64xf32>
    %85 = arith.truncf %84 : vector<64x64xf32> to vector<64x64xbf16>
    %86 = tpu.concatenate %68, %85 in 1 : vector<64x64xbf16>, vector<64x64xbf16> -> vector<64x128xbf16>
    %c64 = arith.constant 64 : index
    %c0_21 = arith.constant 0 : index
    %87 = vector.load %arg12[%c64, %c0_21] : memref<128x128xbf16, #tpu.memory_space<vmem>>, vector<64x128xbf16>
    tpu.vector_store %arg12[%c64, %c0_21], %86 {strides = array<i32>} : memref<128x128xbf16, #tpu.memory_space<vmem>>, vector<64x128xbf16>,
    %c0_22 = arith.constant 0 : index
    %c0_23 = arith.constant 0 : index
    %88 = vector.load %arg12[%c0_22, %c0_23] : memref<128x128xbf16, #tpu.memory_space<vmem>>, vector<128x128xbf16>
    %c0_24 = arith.constant 0 : index
    %c0_25 = arith.constant 0 : index
    %89 = vector.load %arg3[%c0_24, %c0_25] : memref<128x128xbf16, #tpu.memory_space<vmem>>, vector<128x128xbf16>
    %cst_26 = arith.constant dense<0.000000e+00> : vector<128x128xf32>
    %90 = tpu.matmul %88, %89, %cst_26 {dimension_numbers = #tpu.dot_dimension_numbers<[1], [0], [0], [1], [0, 0, 1, 1], [], []>} : vector<128x128xbf16>, vector<128x128xbf16>, vector<128x128xf32> -> vector<128x128xf32>
    %c0_27 = arith.constant 0 : index
    %c0_28 = arith.constant 0 : index
    %91 = vector.load %arg4[%c0_27, %c0_28] : memref<1x128xf32, #tpu.memory_space<vmem>>, vector<1x128xf32>
    %92 = vector.broadcast %91 : vector<1x128xf32> to vector<128x128xf32>
    %93 = arith.addf %90, %92 : vector<128x128xf32>
    %94 = arith.addf %0, %93 : vector<128x128xf32>
    %c0_29 = arith.constant 0 : index
    %c0_30 = arith.constant 0 : index
    %95 = vector.load %arg5[%c0_29, %c0_30] : memref<1x128xf32, #tpu.memory_space<vmem>>, vector<1x128xf32>
    %c0_31 = arith.constant 0 : index
    %c0_32 = arith.constant 0 : index
    %96 = vector.load %arg6[%c0_31, %c0_32] : memref<1x128xf32, #tpu.memory_space<vmem>>, vector<1x128xf32>
    %cst_33 = arith.constant dense<0.000000e+00> : vector<128xf32>
    %97 = vector.multi_reduction <add>, %94, %cst_33 [1] : vector<128x128xf32> to vector<128xf32>
    %98 = vector.shape_cast %97 : vector<128xf32> to vector<128x1xf32>
    %cst_34 = arith.constant 1.280000e+02 : f32
    %99 = vector.broadcast %cst_34 : f32 to vector<128x1xf32>
    %100 = arith.divf %98, %99 : vector<128x1xf32>
    %101 = vector.broadcast %100 : vector<128x1xf32> to vector<128x128xf32>
    %102 = arith.subf %94, %101 : vector<128x128xf32>
    %103 = arith.mulf %102, %102 : vector<128x128xf32>
    %cst_35 = arith.constant dense<0.000000e+00> : vector<128xf32>
    %104 = vector.multi_reduction <add>, %103, %cst_35 [1] : vector<128x128xf32> to vector<128xf32>
    %105 = vector.shape_cast %104 : vector<128xf32> to vector<128x1xf32>
    %cst_36 = arith.constant 1.280000e+02 : f32
    %106 = vector.broadcast %cst_36 : f32 to vector<128x1xf32>
    %107 = arith.divf %105, %106 : vector<128x1xf32>
    %cst_37 = arith.constant 9.99999997E-7 : f32
    %108 = vector.broadcast %cst_37 : f32 to vector<128x1xf32>
    %109 = arith.addf %107, %108 : vector<128x1xf32>
    %110 = math.rsqrt %109 : vector<128x1xf32>
    %111 = vector.broadcast %110 : vector<128x1xf32> to vector<128x128xf32>
    %112 = arith.mulf %102, %111 : vector<128x128xf32>
    %113 = vector.broadcast %95 : vector<1x128xf32> to vector<128x128xf32>
    %114 = arith.mulf %112, %113 : vector<128x128xf32>
    %115 = vector.broadcast %96 : vector<1x128xf32> to vector<128x128xf32>
    %116 = arith.addf %114, %115 : vector<128x128xf32>
    %117 = arith.truncf %116 : vector<128x128xf32> to vector<128x128xbf16>
    %c0_38 = arith.constant 0 : index
    %c0_39 = arith.constant 0 : index
    %118 = vector.load %arg7[%c0_38, %c0_39] : memref<128x512xbf16, #tpu.memory_space<vmem>>, vector<128x512xbf16>
    %cst_40 = arith.constant dense<0.000000e+00> : vector<128x512xf32>
    %119 = tpu.matmul %117, %118, %cst_40 {dimension_numbers = #tpu.dot_dimension_numbers<[1], [0], [0], [1], [0, 0, 1, 1], [], []>} : vector<128x128xbf16>, vector<128x512xbf16>, vector<128x512xf32> -> vector<128x512xf32>
    %cst_41 = arith.constant 0.000000e+00 : f32
    %cst_42 = arith.constant 6.000000e+00 : f32
    %120 = vector.broadcast %cst_41 : f32 to vector<128x512xf32>
    %121 = arith.maximumf %120, %119 : vector<128x512xf32>
    %122 = vector.broadcast %cst_42 : f32 to vector<128x512xf32>
    %123 = arith.minimumf %122, %121 : vector<128x512xf32>
    %124 = arith.truncf %123 : vector<128x512xf32> to vector<128x512xbf16>
    %c0_43 = arith.constant 0 : index
    %c0_44 = arith.constant 0 : index
    %125 = vector.load %arg8[%c0_43, %c0_44] : memref<512x128xbf16, #tpu.memory_space<vmem>>, vector<512x128xbf16>
    %cst_45 = arith.constant dense<0.000000e+00> : vector<128x128xf32>
    %126 = tpu.matmul %124, %125, %cst_45 {dimension_numbers = #tpu.dot_dimension_numbers<[1], [0], [0], [1], [0, 0, 1, 1], [], []>} : vector<128x512xbf16>, vector<512x128xbf16>, vector<128x128xf32> -> vector<128x128xf32>
    %cst_46 = arith.constant 0.000000e+00 : f32
    %cst_47 = arith.constant 6.000000e+00 : f32
    %127 = vector.broadcast %cst_46 : f32 to vector<128x128xf32>
    %128 = arith.maximumf %127, %126 : vector<128x128xf32>
    %129 = vector.broadcast %cst_47 : f32 to vector<128x128xf32>
    %130 = arith.minimumf %129, %128 : vector<128x128xf32>
    %131 = arith.addf %116, %130 : vector<128x128xf32>
    %c0_48 = arith.constant 0 : index
    %c0_49 = arith.constant 0 : index
    %132 = vector.load %arg9[%c0_48, %c0_49] : memref<1x128xf32, #tpu.memory_space<vmem>>, vector<1x128xf32>
    %c0_50 = arith.constant 0 : index
    %c0_51 = arith.constant 0 : index
    %133 = vector.load %arg10[%c0_50, %c0_51] : memref<1x128xf32, #tpu.memory_space<vmem>>, vector<1x128xf32>
    %cst_52 = arith.constant dense<0.000000e+00> : vector<128xf32>
    %134 = vector.multi_reduction <add>, %131, %cst_52 [1] : vector<128x128xf32> to vector<128xf32>
    %135 = vector.shape_cast %134 : vector<128xf32> to vector<128x1xf32>
    %cst_53 = arith.constant 1.280000e+02 : f32
    %136 = vector.broadcast %cst_53 : f32 to vector<128x1xf32>
    %137 = arith.divf %135, %136 : vector<128x1xf32>
    %138 = vector.broadcast %137 : vector<128x1xf32> to vector<128x128xf32>
    %139 = arith.subf %131, %138 : vector<128x128xf32>
    %140 = arith.mulf %139, %139 : vector<128x128xf32>
    %cst_54 = arith.constant dense<0.000000e+00> : vector<128xf32>
    %141 = vector.multi_reduction <add>, %140, %cst_54 [1] : vector<128x128xf32> to vector<128xf32>
    %142 = vector.shape_cast %141 : vector<128xf32> to vector<128x1xf32>
    %cst_55 = arith.constant 1.280000e+02 : f32
    %143 = vector.broadcast %cst_55 : f32 to vector<128x1xf32>
    %144 = arith.divf %142, %143 : vector<128x1xf32>
    %cst_56 = arith.constant 9.99999997E-7 : f32
    %145 = vector.broadcast %cst_56 : f32 to vector<128x1xf32>
    %146 = arith.addf %144, %145 : vector<128x1xf32>
    %147 = math.rsqrt %146 : vector<128x1xf32>
    %148 = vector.broadcast %147 : vector<128x1xf32> to vector<128x128xf32>
    %149 = arith.mulf %139, %148 : vector<128x128xf32>
    %150 = vector.broadcast %132 : vector<1x128xf32> to vector<128x128xf32>
    %151 = arith.mulf %149, %150 : vector<128x128xf32>
    %152 = vector.broadcast %133 : vector<1x128xf32> to vector<128x128xf32>
    %153 = arith.addf %151, %152 : vector<128x128xf32>
    %c0_57 = arith.constant 0 : index
    %c0_58 = arith.constant 0 : index
    %154 = vector.load %arg11[%c0_57, %c0_58] : memref<128x128xf32, #tpu.memory_space<vmem>>, vector<128x128xf32>
    tpu.vector_store %arg11[%c0_57, %c0_58], %153 {strides = array<i32>} : memref<128x128xf32, #tpu.memory_space<vmem>>, vector<128x128xf32>,
    return
  }
  func.func @transform_0(%arg0: i32) -> (i32, i32) {
    %c0_i32 = arith.constant 0 : i32
    %c0_i32_0 = arith.constant 0 : i32
    return %arg0, %c0_i32 : i32, i32
  }
  func.func @transform_1(%arg0: i32) -> (i32, i32) {
    %c0_i32 = arith.constant 0 : i32
    %c0_i32_0 = arith.constant 0 : i32
    %c0_i32_1 = arith.constant 0 : i32
    return %c0_i32, %c0_i32_0 : i32, i32
  }
  func.func @transform_2(%arg0: i32) -> (i32, i32) {
    %c0_i32 = arith.constant 0 : i32
    %c0_i32_0 = arith.constant 0 : i32
    %c0_i32_1 = arith.constant 0 : i32
    return %c0_i32, %c0_i32_0 : i32, i32
  }
  func.func @transform_3(%arg0: i32) -> (i32, i32) {
    %c0_i32 = arith.constant 0 : i32
    %c0_i32_0 = arith.constant 0 : i32
    %c0_i32_1 = arith.constant 0 : i32
    return %c0_i32, %c0_i32_0 : i32, i32
  }
  func.func @transform_4(%arg0: i32) -> (i32, i32) {
    %c0_i32 = arith.constant 0 : i32
    %c0_i32_0 = arith.constant 0 : i32
    %c0_i32_1 = arith.constant 0 : i32
    return %c0_i32, %c0_i32_0 : i32, i32
  }
  func.func @transform_5(%arg0: i32) -> (i32, i32) {
    %c0_i32 = arith.constant 0 : i32
    %c0_i32_0 = arith.constant 0 : i32
    %c0_i32_1 = arith.constant 0 : i32
    return %c0_i32, %c0_i32_0 : i32, i32
  }
  func.func @transform_6(%arg0: i32) -> (i32, i32) {
    %c0_i32 = arith.constant 0 : i32
    %c0_i32_0 = arith.constant 0 : i32
    %c0_i32_1 = arith.constant 0 : i32
    return %c0_i32, %c0_i32_0 : i32, i32
  }
  func.func @transform_7(%arg0: i32) -> (i32, i32) {
    %c0_i32 = arith.constant 0 : i32
    %c0_i32_0 = arith.constant 0 : i32
    %c0_i32_1 = arith.constant 0 : i32
    return %c0_i32, %c0_i32_0 : i32, i32
  }
  func.func @transform_8(%arg0: i32) -> (i32, i32) {
    %c0_i32 = arith.constant 0 : i32
    %c0_i32_0 = arith.constant 0 : i32
    %c0_i32_1 = arith.constant 0 : i32
    return %c0_i32, %c0_i32_0 : i32, i32
  }
  func.func @transform_9(%arg0: i32) -> (i32, i32) {
    %c0_i32 = arith.constant 0 : i32
    %c0_i32_0 = arith.constant 0 : i32
    %c0_i32_1 = arith.constant 0 : i32
    return %c0_i32, %c0_i32_0 : i32, i32
  }
  func.func @transform_10(%arg0: i32) -> (i32, i32) {
    %c0_i32 = arith.constant 0 : i32
    %c0_i32_0 = arith.constant 0 : i32
    return %arg0, %c0_i32 : i32, i32
  }
}

module attributes {stable_mosaic.version = 11 : i64} {
  func.func @_encoder_kernel(%arg0: i32, %arg1: memref<128x128xf32, #tpu.memory_space<vmem>>, %arg2: memref<128x384xbf16, #tpu.memory_space<vmem>>, %arg3: memref<128x128xbf16, #tpu.memory_space<vmem>>, %arg4: memref<1x128xf32, #tpu.memory_space<vmem>>, %arg5: memref<1x128xf32, #tpu.memory_space<vmem>>, %arg6: memref<1x128xf32, #tpu.memory_space<vmem>>, %arg7: memref<128x512xbf16, #tpu.memory_space<vmem>>, %arg8: memref<512x128xbf16, #tpu.memory_space<vmem>>, %arg9: memref<1x128xf32, #tpu.memory_space<vmem>>, %arg10: memref<1x128xf32, #tpu.memory_space<vmem>>, %arg11: memref<128x128xf32, #tpu.memory_space<vmem>>, %arg12: memref<128x128xbf16, #tpu.memory_space<vmem>>) attributes {dimension_semantics = [#tpu.dimension_semantics<parallel>], iteration_bounds = array<i64: 4>, scalar_prefetch = 0 : i64, scratch_operands = 1 : i64, tpu.core_type = #tpu.core_type<tc>, window_params = [{transform_indices = @transform_0, window_bounds = array<i64: 128, 128>}, {pipeline_mode = #tpu.pipeline_mode<synchronous>, transform_indices = @transform_1, window_bounds = array<i64: 128, 384>}, {pipeline_mode = #tpu.pipeline_mode<synchronous>, transform_indices = @transform_2, window_bounds = array<i64: 128, 128>}, {pipeline_mode = #tpu.pipeline_mode<synchronous>, transform_indices = @transform_3, window_bounds = array<i64: 1, 128>}, {pipeline_mode = #tpu.pipeline_mode<synchronous>, transform_indices = @transform_4, window_bounds = array<i64: 1, 128>}, {pipeline_mode = #tpu.pipeline_mode<synchronous>, transform_indices = @transform_5, window_bounds = array<i64: 1, 128>}, {pipeline_mode = #tpu.pipeline_mode<synchronous>, transform_indices = @transform_6, window_bounds = array<i64: 128, 512>}, {pipeline_mode = #tpu.pipeline_mode<synchronous>, transform_indices = @transform_7, window_bounds = array<i64: 512, 128>}, {pipeline_mode = #tpu.pipeline_mode<synchronous>, transform_indices = @transform_8, window_bounds = array<i64: 1, 128>}, {pipeline_mode = #tpu.pipeline_mode<synchronous>, transform_indices = @transform_9, window_bounds = array<i64: 1, 128>}, {transform_indices = @transform_10, window_bounds = array<i64: 128, 128>}]} {
    %c0 = arith.constant 0 : index
    %c0_0 = arith.constant 0 : index
    %0 = vector.load %arg1[%c0, %c0_0] : memref<128x128xf32, #tpu.memory_space<vmem>>, vector<128x128xf32>
    %1 = arith.truncf %0 : vector<128x128xf32> to vector<128x128xbf16>
    %c0_1 = arith.constant 0 : index
    %c0_2 = arith.constant 0 : index
    %2 = vector.load %arg2[%c0_1, %c0_2] : memref<128x384xbf16, #tpu.memory_space<vmem>>, vector<128x384xbf16>
    %cst = arith.constant dense<0.000000e+00> : vector<128x384xf32>
    %3 = tpu.matmul %1, %2, %cst {dimension_numbers = #tpu.dot_dimension_numbers<[1], [0], [0], [1], [0, 0, 1, 1], [], []>} : vector<128x128xbf16>, vector<128x384xbf16>, vector<128x384xf32> -> vector<128x384xf32>
    %4 = vector.extract_strided_slice %3 {offsets = [0, 0], sizes = [64, 128], strides = [1, 1]} : vector<128x384xf32> to vector<64x128xf32>
    %5 = arith.truncf %4 : vector<64x128xf32> to vector<64x128xbf16>
    %6 = vector.extract_strided_slice %3 {offsets = [0, 128], sizes = [64, 128], strides = [1, 1]} : vector<128x384xf32> to vector<64x128xf32>
    %7 = arith.truncf %6 : vector<64x128xf32> to vector<64x128xbf16>
    %8 = vector.extract_strided_slice %3 {offsets = [0, 256], sizes = [64, 128], strides = [1, 1]} : vector<128x384xf32> to vector<64x128xf32>
    %9 = arith.truncf %8 : vector<64x128xf32> to vector<64x128xbf16>
    %10 = vector.extract_strided_slice %5 {offsets = [0, 0], sizes = [64, 64], strides = [1, 1]} : vector<64x128xbf16> to vector<64x64xbf16>
    %11 = vector.extract_strided_slice %7 {offsets = [0, 0], sizes = [64, 64], strides = [1, 1]} : vector<64x128xbf16> to vector<64x64xbf16>
    %12 = vector.extract_strided_slice %9 {offsets = [0, 0], sizes = [64, 64], strides = [1, 1]} : vector<64x128xbf16> to vector<64x64xbf16>
    %cst_3 = arith.constant dense<0.000000e+00> : vector<64x64xf32>
    %13 = tpu.matmul %10, %11, %cst_3 {dimension_numbers = #tpu.dot_dimension_numbers<[1], [1], [0], [0], [0, 0, 1, 0], [], []>} : vector<64x64xbf16>, vector<64x64xbf16>, vector<64x64xf32> -> vector<64x64xf32>
    %cst_4 = arith.constant dense<0xFF800000> : vector<64xf32>
    %14 = vector.multi_reduction <maximumf>, %13, %cst_4 [1] : vector<64x64xf32> to vector<64xf32>
    %15 = vector.shape_cast %14 : vector<64xf32> to vector<64x1xf32>
    %16 = vector.broadcast %15 : vector<64x1xf32> to vector<64x64xf32>
    %17 = arith.subf %13, %16 : vector<64x64xf32>
    %18 = math.exp %17 : vector<64x64xf32>
    %cst_5 = arith.constant dense<0.000000e+00> : vector<64xf32>
    %19 = vector.multi_reduction <add>, %18, %cst_5 [1] : vector<64x64xf32> to vector<64xf32>
    %20 = vector.shape_cast %19 : vector<64xf32> to vector<64x1xf32>
    %21 = tpu.reciprocal %20 {approx = true} : vector<64x1xf32> -> vector<64x1xf32>
    %22 = vector.broadcast %21 : vector<64x1xf32> to vector<64x64xf32>
    %23 = arith.mulf %18, %22 : vector<64x64xf32>
    %24 = arith.truncf %23 : vector<64x64xf32> to vector<64x64xbf16>
    %cst_6 = arith.constant dense<0.000000e+00> : vector<64x64xf32>
    %25 = tpu.matmul %24, %12, %cst_6 {dimension_numbers = #tpu.dot_dimension_numbers<[1], [0], [0], [1], [0, 0, 1, 1], [], []>} : vector<64x64xbf16>, vector<64x64xbf16>, vector<64x64xf32> -> vector<64x64xf32>
    %26 = arith.truncf %25 : vector<64x64xf32> to vector<64x64xbf16>
    %27 = vector.extract_strided_slice %5 {offsets = [0, 64], sizes = [64, 64], strides = [1, 1]} : vector<64x128xbf16> to vector<64x64xbf16>
    %28 = vector.extract_strided_slice %7 {offsets = [0, 64], sizes = [64, 64], strides = [1, 1]} : vector<64x128xbf16> to vector<64x64xbf16>
    %29 = vector.extract_strided_slice %9 {offsets = [0, 64], sizes = [64, 64], strides = [1, 1]} : vector<64x128xbf16> to vector<64x64xbf16>
    %cst_7 = arith.constant dense<0.000000e+00> : vector<64x64xf32>
    %30 = tpu.matmul %27, %28, %cst_7 {dimension_numbers = #tpu.dot_dimension_numbers<[1], [1], [0], [0], [0, 0, 1, 0], [], []>} : vector<64x64xbf16>, vector<64x64xbf16>, vector<64x64xf32> -> vector<64x64xf32>
    %cst_8 = arith.constant dense<0xFF800000> : vector<64xf32>
    %31 = vector.multi_reduction <maximumf>, %30, %cst_8 [1] : vector<64x64xf32> to vector<64xf32>
    %32 = vector.shape_cast %31 : vector<64xf32> to vector<64x1xf32>
    %33 = vector.broadcast %32 : vector<64x1xf32> to vector<64x64xf32>
    %34 = arith.subf %30, %33 : vector<64x64xf32>
    %35 = math.exp %34 : vector<64x64xf32>
    %cst_9 = arith.constant dense<0.000000e+00> : vector<64xf32>
    %36 = vector.multi_reduction <add>, %35, %cst_9 [1] : vector<64x64xf32> to vector<64xf32>
    %37 = vector.shape_cast %36 : vector<64xf32> to vector<64x1xf32>
    %38 = tpu.reciprocal %37 {approx = true} : vector<64x1xf32> -> vector<64x1xf32>
    %39 = vector.broadcast %38 : vector<64x1xf32> to vector<64x64xf32>
    %40 = arith.mulf %35, %39 : vector<64x64xf32>
    %41 = arith.truncf %40 : vector<64x64xf32> to vector<64x64xbf16>
    %cst_10 = arith.constant dense<0.000000e+00> : vector<64x64xf32>
    %42 = tpu.matmul %41, %29, %cst_10 {dimension_numbers = #tpu.dot_dimension_numbers<[1], [0], [0], [1], [0, 0, 1, 1], [], []>} : vector<64x64xbf16>, vector<64x64xbf16>, vector<64x64xf32> -> vector<64x64xf32>
    %43 = arith.truncf %42 : vector<64x64xf32> to vector<64x64xbf16>
    %44 = tpu.concatenate %26, %43 in 1 : vector<64x64xbf16>, vector<64x64xbf16> -> vector<64x128xbf16>
    %c0_11 = arith.constant 0 : index
    %c0_12 = arith.constant 0 : index
    %45 = vector.load %arg12[%c0_11, %c0_12] : memref<128x128xbf16, #tpu.memory_space<vmem>>, vector<64x128xbf16>
    tpu.vector_store %arg12[%c0_11, %c0_12], %44 {strides = array<i32>} : memref<128x128xbf16, #tpu.memory_space<vmem>>, vector<64x128xbf16>,
    %46 = vector.extract_strided_slice %3 {offsets = [64, 0], sizes = [64, 128], strides = [1, 1]} : vector<128x384xf32> to vector<64x128xf32>
    %47 = arith.truncf %46 : vector<64x128xf32> to vector<64x128xbf16>
    %48 = vector.extract_strided_slice %3 {offsets = [64, 128], sizes = [64, 128], strides = [1, 1]} : vector<128x384xf32> to vector<64x128xf32>
    %49 = arith.truncf %48 : vector<64x128xf32> to vector<64x128xbf16>
    %50 = vector.extract_strided_slice %3 {offsets = [64, 256], sizes = [64, 128], strides = [1, 1]} : vector<128x384xf32> to vector<64x128xf32>
    %51 = arith.truncf %50 : vector<64x128xf32> to vector<64x128xbf16>
    %52 = vector.extract_strided_slice %47 {offsets = [0, 0], sizes = [64, 64], strides = [1, 1]} : vector<64x128xbf16> to vector<64x64xbf16>
    %53 = vector.extract_strided_slice %49 {offsets = [0, 0], sizes = [64, 64], strides = [1, 1]} : vector<64x128xbf16> to vector<64x64xbf16>
    %54 = vector.extract_strided_slice %51 {offsets = [0, 0], sizes = [64, 64], strides = [1, 1]} : vector<64x128xbf16> to vector<64x64xbf16>
    %cst_13 = arith.constant dense<0.000000e+00> : vector<64x64xf32>
    %55 = tpu.matmul %52, %53, %cst_13 {dimension_numbers = #tpu.dot_dimension_numbers<[1], [1], [0], [0], [0, 0, 1, 0], [], []>} : vector<64x64xbf16>, vector<64x64xbf16>, vector<64x64xf32> -> vector<64x64xf32>
    %cst_14 = arith.constant dense<0xFF800000> : vector<64xf32>
    %56 = vector.multi_reduction <maximumf>, %55, %cst_14 [1] : vector<64x64xf32> to vector<64xf32>
    %57 = vector.shape_cast %56 : vector<64xf32> to vector<64x1xf32>
    %58 = vector.broadcast %57 : vector<64x1xf32> to vector<64x64xf32>
    %59 = arith.subf %55, %58 : vector<64x64xf32>
    %60 = math.exp %59 : vector<64x64xf32>
    %cst_15 = arith.constant dense<0.000000e+00> : vector<64xf32>
    %61 = vector.multi_reduction <add>, %60, %cst_15 [1] : vector<64x64xf32> to vector<64xf32>
    %62 = vector.shape_cast %61 : vector<64xf32> to vector<64x1xf32>
    %63 = tpu.reciprocal %62 {approx = true} : vector<64x1xf32> -> vector<64x1xf32>
    %64 = vector.broadcast %63 : vector<64x1xf32> to vector<64x64xf32>
    %65 = arith.mulf %60, %64 : vector<64x64xf32>
    %66 = arith.truncf %65 : vector<64x64xf32> to vector<64x64xbf16>
    %cst_16 = arith.constant dense<0.000000e+00> : vector<64x64xf32>
    %67 = tpu.matmul %66, %54, %cst_16 {dimension_numbers = #tpu.dot_dimension_numbers<[1], [0], [0], [1], [0, 0, 1, 1], [], []>} : vector<64x64xbf16>, vector<64x64xbf16>, vector<64x64xf32> -> vector<64x64xf32>
    %68 = arith.truncf %67 : vector<64x64xf32> to vector<64x64xbf16>
    %69 = vector.extract_strided_slice %47 {offsets = [0, 64], sizes = [64, 64], strides = [1, 1]} : vector<64x128xbf16> to vector<64x64xbf16>
    %70 = vector.extract_strided_slice %49 {offsets = [0, 64], sizes = [64, 64], strides = [1, 1]} : vector<64x128xbf16> to vector<64x64xbf16>
    %71 = vector.extract_strided_slice %51 {offsets = [0, 64], sizes = [64, 64], strides = [1, 1]} : vector<64x128xbf16> to vector<64x64xbf16>
    %cst_17 = arith.constant dense<0.000000e+00> : vector<64x64xf32>
    %72 = tpu.matmul %69, %70, %cst_17 {dimension_numbers = #tpu.dot_dimension_numbers<[1], [1], [0], [0], [0, 0, 1, 0], [], []>} : vector<64x64xbf16>, vector<64x64xbf16>, vector<64x64xf32> -> vector<64x64xf32>
    %cst_18 = arith.constant dense<0xFF800000> : vector<64xf32>
    %73 = vector.multi_reduction <maximumf>, %72, %cst_18 [1] : vector<64x64xf32> to vector<64xf32>
    %74 = vector.shape_cast %73 : vector<64xf32> to vector<64x1xf32>
    %75 = vector.broadcast %74 : vector<64x1xf32> to vector<64x64xf32>
    %76 = arith.subf %72, %75 : vector<64x64xf32>
    %77 = math.exp %76 : vector<64x64xf32>
    %cst_19 = arith.constant dense<0.000000e+00> : vector<64xf32>
    %78 = vector.multi_reduction <add>, %77, %cst_19 [1] : vector<64x64xf32> to vector<64xf32>
    %79 = vector.shape_cast %78 : vector<64xf32> to vector<64x1xf32>
    %80 = tpu.reciprocal %79 {approx = true} : vector<64x1xf32> -> vector<64x1xf32>
    %81 = vector.broadcast %80 : vector<64x1xf32> to vector<64x64xf32>
    %82 = arith.mulf %77, %81 : vector<64x64xf32>
    %83 = arith.truncf %82 : vector<64x64xf32> to vector<64x64xbf16>
    %cst_20 = arith.constant dense<0.000000e+00> : vector<64x64xf32>
    %84 = tpu.matmul %83, %71, %cst_20 {dimension_numbers = #tpu.dot_dimension_numbers<[1], [0], [0], [1], [0, 0, 1, 1], [], []>} : vector<64x64xbf16>, vector<64x64xbf16>, vector<64x64xf32> -> vector<64x64xf32>
    %85 = arith.truncf %84 : vector<64x64xf32> to vector<64x64xbf16>
    %86 = tpu.concatenate %68, %85 in 1 : vector<64x64xbf16>, vector<64x64xbf16> -> vector<64x128xbf16>
    %c64 = arith.constant 64 : index
    %c0_21 = arith.constant 0 : index
    %87 = vector.load %arg12[%c64, %c0_21] : memref<128x128xbf16, #tpu.memory_space<vmem>>, vector<64x128xbf16>
    tpu.vector_store %arg12[%c64, %c0_21], %86 {strides = array<i32>} : memref<128x128xbf16, #tpu.memory_space<vmem>>, vector<64x128xbf16>,
    %c0_22 = arith.constant 0 : index
    %c0_23 = arith.constant 0 : index
    %88 = vector.load %arg12[%c0_22, %c0_23] : memref<128x128xbf16, #tpu.memory_space<vmem>>, vector<128x128xbf16>
    %c0_24 = arith.constant 0 : index
    %c0_25 = arith.constant 0 : index
    %89 = vector.load %arg3[%c0_24, %c0_25] : memref<128x128xbf16, #tpu.memory_space<vmem>>, vector<128x128xbf16>
    %cst_26 = arith.constant dense<0.000000e+00> : vector<128x128xf32>
    %90 = tpu.matmul %88, %89, %cst_26 {dimension_numbers = #tpu.dot_dimension_numbers<[1], [0], [0], [1], [0, 0, 1, 1], [], []>} : vector<128x128xbf16>, vector<128x128xbf16>, vector<128x128xf32> -> vector<128x128xf32>
    %c0_27 = arith.constant 0 : index
    %c0_28 = arith.constant 0 : index
    %91 = vector.load %arg4[%c0_27, %c0_28] : memref<1x128xf32, #tpu.memory_space<vmem>>, vector<1x128xf32>
    %92 = vector.broadcast %91 : vector<1x128xf32> to vector<128x128xf32>
    %93 = arith.addf %90, %92 : vector<128x128xf32>
    %94 = arith.addf %0, %93 : vector<128x128xf32>
    %c0_29 = arith.constant 0 : index
    %c0_30 = arith.constant 0 : index
    %95 = vector.load %arg5[%c0_29, %c0_30] : memref<1x128xf32, #tpu.memory_space<vmem>>, vector<1x128xf32>
    %c0_31 = arith.constant 0 : index
    %c0_32 = arith.constant 0 : index
    %96 = vector.load %arg6[%c0_31, %c0_32] : memref<1x128xf32, #tpu.memory_space<vmem>>, vector<1x128xf32>
    %cst_33 = arith.constant dense<0.000000e+00> : vector<128xf32>
    %97 = vector.multi_reduction <add>, %94, %cst_33 [1] : vector<128x128xf32> to vector<128xf32>
    %98 = vector.shape_cast %97 : vector<128xf32> to vector<128x1xf32>
    %cst_34 = arith.constant 1.280000e+02 : f32
    %99 = vector.broadcast %cst_34 : f32 to vector<128x1xf32>
    %100 = arith.divf %98, %99 : vector<128x1xf32>
    %101 = vector.broadcast %100 : vector<128x1xf32> to vector<128x128xf32>
    %102 = arith.subf %94, %101 : vector<128x128xf32>
    %103 = arith.mulf %102, %102 : vector<128x128xf32>
    %cst_35 = arith.constant dense<0.000000e+00> : vector<128xf32>
    %104 = vector.multi_reduction <add>, %103, %cst_35 [1] : vector<128x128xf32> to vector<128xf32>
    %105 = vector.shape_cast %104 : vector<128xf32> to vector<128x1xf32>
    %cst_36 = arith.constant 1.280000e+02 : f32
    %106 = vector.broadcast %cst_36 : f32 to vector<128x1xf32>
    %107 = arith.divf %105, %106 : vector<128x1xf32>
    %cst_37 = arith.constant 9.99999997E-7 : f32
    %108 = vector.broadcast %cst_37 : f32 to vector<128x1xf32>
    %109 = arith.addf %107, %108 : vector<128x1xf32>
    %110 = math.rsqrt %109 : vector<128x1xf32>
    %111 = vector.broadcast %110 : vector<128x1xf32> to vector<128x128xf32>
    %112 = arith.mulf %102, %111 : vector<128x128xf32>
    %113 = vector.broadcast %95 : vector<1x128xf32> to vector<128x128xf32>
    %114 = arith.mulf %112, %113 : vector<128x128xf32>
    %115 = vector.broadcast %96 : vector<1x128xf32> to vector<128x128xf32>
    %116 = arith.addf %114, %115 : vector<128x128xf32>
    %117 = arith.truncf %116 : vector<128x128xf32> to vector<128x128xbf16>
    %c0_38 = arith.constant 0 : index
    %c0_39 = arith.constant 0 : index
    %118 = vector.load %arg7[%c0_38, %c0_39] : memref<128x512xbf16, #tpu.memory_space<vmem>>, vector<128x512xbf16>
    %cst_40 = arith.constant dense<0.000000e+00> : vector<128x512xf32>
    %119 = tpu.matmul %117, %118, %cst_40 {dimension_numbers = #tpu.dot_dimension_numbers<[1], [0], [0], [1], [0, 0, 1, 1], [], []>} : vector<128x128xbf16>, vector<128x512xbf16>, vector<128x512xf32> -> vector<128x512xf32>
    %cst_41 = arith.constant 0.000000e+00 : f32
    %cst_42 = arith.constant 6.000000e+00 : f32
    %120 = vector.broadcast %cst_41 : f32 to vector<128x512xf32>
    %121 = arith.maximumf %120, %119 : vector<128x512xf32>
    %122 = vector.broadcast %cst_42 : f32 to vector<128x512xf32>
    %123 = arith.minimumf %122, %121 : vector<128x512xf32>
    %124 = arith.truncf %123 : vector<128x512xf32> to vector<128x512xbf16>
    %c0_43 = arith.constant 0 : index
    %c0_44 = arith.constant 0 : index
    %125 = vector.load %arg8[%c0_43, %c0_44] : memref<512x128xbf16, #tpu.memory_space<vmem>>, vector<512x128xbf16>
    %cst_45 = arith.constant dense<0.000000e+00> : vector<128x128xf32>
    %126 = tpu.matmul %124, %125, %cst_45 {dimension_numbers = #tpu.dot_dimension_numbers<[1], [0], [0], [1], [0, 0, 1, 1], [], []>} : vector<128x512xbf16>, vector<512x128xbf16>, vector<128x128xf32> -> vector<128x128xf32>
    %cst_46 = arith.constant 0.000000e+00 : f32
    %cst_47 = arith.constant 6.000000e+00 : f32
    %127 = vector.broadcast %cst_46 : f32 to vector<128x128xf32>
    %128 = arith.maximumf %127, %126 : vector<128x128xf32>
    %129 = vector.broadcast %cst_47 : f32 to vector<128x128xf32>
    %130 = arith.minimumf %129, %128 : vector<128x128xf32>
    %131 = arith.addf %116, %130 : vector<128x128xf32>
    %c0_48 = arith.constant 0 : index
    %c0_49 = arith.constant 0 : index
    %132 = vector.load %arg9[%c0_48, %c0_49] : memref<1x128xf32, #tpu.memory_space<vmem>>, vector<1x128xf32>
    %c0_50 = arith.constant 0 : index
    %c0_51 = arith.constant 0 : index
    %133 = vector.load %arg10[%c0_50, %c0_51] : memref<1x128xf32, #tpu.memory_space<vmem>>, vector<1x128xf32>
    %cst_52 = arith.constant dense<0.000000e+00> : vector<128xf32>
    %134 = vector.multi_reduction <add>, %131, %cst_52 [1] : vector<128x128xf32> to vector<128xf32>
    %135 = vector.shape_cast %134 : vector<128xf32> to vector<128x1xf32>
    %cst_53 = arith.constant 1.280000e+02 : f32
    %136 = vector.broadcast %cst_53 : f32 to vector<128x1xf32>
    %137 = arith.divf %135, %136 : vector<128x1xf32>
    %138 = vector.broadcast %137 : vector<128x1xf32> to vector<128x128xf32>
    %139 = arith.subf %131, %138 : vector<128x128xf32>
    %140 = arith.mulf %139, %139 : vector<128x128xf32>
    %cst_54 = arith.constant dense<0.000000e+00> : vector<128xf32>
    %141 = vector.multi_reduction <add>, %140, %cst_54 [1] : vector<128x128xf32> to vector<128xf32>
    %142 = vector.shape_cast %141 : vector<128xf32> to vector<128x1xf32>
    %cst_55 = arith.constant 1.280000e+02 : f32
    %143 = vector.broadcast %cst_55 : f32 to vector<128x1xf32>
    %144 = arith.divf %142, %143 : vector<128x1xf32>
    %cst_56 = arith.constant 9.99999997E-7 : f32
    %145 = vector.broadcast %cst_56 : f32 to vector<128x1xf32>
    %146 = arith.addf %144, %145 : vector<128x1xf32>
    %147 = math.rsqrt %146 : vector<128x1xf32>
    %148 = vector.broadcast %147 : vector<128x1xf32> to vector<128x128xf32>
    %149 = arith.mulf %139, %148 : vector<128x128xf32>
    %150 = vector.broadcast %132 : vector<1x128xf32> to vector<128x128xf32>
    %151 = arith.mulf %149, %150 : vector<128x128xf32>
    %152 = vector.broadcast %133 : vector<1x128xf32> to vector<128x128xf32>
    %153 = arith.addf %151, %152 : vector<128x128xf32>
    %c0_57 = arith.constant 0 : index
    %c0_58 = arith.constant 0 : index
    %154 = vector.load %arg11[%c0_57, %c0_58] : memref<128x128xf32, #tpu.memory_space<vmem>>, vector<128x128xf32>
    tpu.vector_store %arg11[%c0_57, %c0_58], %153 {strides = array<i32>} : memref<128x128xf32, #tpu.memory_space<vmem>>, vector<128x128xf32>,
    return
  }
  func.func @transform_0(%arg0: i32) -> (i32, i32) {
    %c0_i32 = arith.constant 0 : i32
    %c0_i32_0 = arith.constant 0 : i32
    return %arg0, %c0_i32 : i32, i32
  }
  func.func @transform_1(%arg0: i32) -> (i32, i32) {
    %c0_i32 = arith.constant 0 : i32
    %c0_i32_0 = arith.constant 0 : i32
    %c0_i32_1 = arith.constant 0 : i32
    return %c0_i32, %c0_i32_0 : i32, i32
  }
  func.func @transform_2(%arg0: i32) -> (i32, i32) {
    %c0_i32 = arith.constant 0 : i32
    %c0_i32_0 = arith.constant 0 : i32
    %c0_i32_1 = arith.constant 0 : i32
    return %c0_i32, %c0_i32_0 : i32, i32
  }
  func.func @transform_3(%arg0: i32) -> (i32, i32) {
    %c0_i32 = arith.constant 0 : i32
    %c0_i32_0 = arith.constant 0 : i32
    %c0_i32_1 = arith.constant 0 : i32
    return %c0_i32, %c0_i32_0 : i32, i32
  }
  func.func @transform_4(%arg0: i32) -> (i32, i32) {
    %c0_i32 = arith.constant 0 : i32
    %c0_i32_0 = arith.constant 0 : i32
    %c0_i32_1 = arith.constant 0 : i32
    return %c0_i32, %c0_i32_0 : i32, i32
  }
  func.func @transform_5(%arg0: i32) -> (i32, i32) {
    %c0_i32 = arith.constant 0 : i32
    %c0_i32_0 = arith.constant 0 : i32
    %c0_i32_1 = arith.constant 0 : i32
    return %c0_i32, %c0_i32_0 : i32, i32
  }
  func.func @transform_6(%arg0: i32) -> (i32, i32) {
    %c0_i32 = arith.constant 0 : i32
    %c0_i32_0 = arith.constant 0 : i32
    %c0_i32_1 = arith.constant 0 : i32
    return %c0_i32, %c0_i32_0 : i32, i32
  }
  func.func @transform_7(%arg0: i32) -> (i32, i32) {
    %c0_i32 = arith.constant 0 : i32
    %c0_i32_0 = arith.constant 0 : i32
    %c0_i32_1 = arith.constant 0 : i32
    return %c0_i32, %c0_i32_0 : i32, i32
  }
  func.func @transform_8(%arg0: i32) -> (i32, i32) {
    %c0_i32 = arith.constant 0 : i32
    %c0_i32_0 = arith.constant 0 : i32
    %c0_i32_1 = arith.constant 0 : i32
    return %c0_i32, %c0_i32_0 : i32, i32
  }
  func.func @transform_9(%arg0: i32) -> (i32, i32) {
    %c0_i32 = arith.constant 0 : i32
    %c0_i32_0 = arith.constant 0 : i32
    %c0_i32_1 = arith.constant 0 : i32
    return %c0_i32, %c0_i32_0 : i32, i32
  }
  func.func @transform_10(%arg0: i32) -> (i32, i32) {
    %c0_i32 = arith.constant 0 : i32
    %c0_i32_0 = arith.constant 0 : i32
    return %arg0, %c0_i32 : i32, i32
  }
}

</mosaic_0001>

<llo_original>
// kernel: tpu_custom_call.1
$region0: #{tpu_custom_call.1}
  #allocation0 [shape = 'u32[]', space=smem, size = 0x4, offset = 0x4, fixed_abs, tag = 'smem constant byte address 0x4 - core index']
  #allocation1 [shape = 'u32[72,128]{1,0:T(1,128)}', space=vmem, size = 0x9000, scoped, tag = 'internal scratch']
  #allocation2 [shape = 'bf16[128,128]{1,0:T(8,128)(2,1)}', space=vmem, size = 0x8000, scoped, tag = 'scratch operand']
  %s0 = inlined_call_operand.hbm [shape: f32[512,128], index: 0, kind: input, shape index: {}]
  %s1 = inlined_call_operand.hbm [shape: bf16[128,384], index: 1, kind: input, shape index: {}]
  %s2 = inlined_call_operand.hbm [shape: bf16[128,128], index: 2, kind: input, shape index: {}]
  %s3 = inlined_call_operand.vmem [shape: f32[1,128], index: 3, kind: input, shape index: {}]
  %s4 = inlined_call_operand.vmem [shape: f32[1,128], index: 4, kind: input, shape index: {}]
  %s5 = inlined_call_operand.vmem [shape: f32[1,128], index: 5, kind: input, shape index: {}]
  %s6 = inlined_call_operand.hbm [shape: bf16[128,512], index: 6, kind: input, shape index: {}]
  %s7 = inlined_call_operand.hbm [shape: bf16[512,128], index: 7, kind: input, shape index: {}]
  %s8 = inlined_call_operand.vmem [shape: f32[1,128], index: 8, kind: input, shape index: {}]
  %s9 = inlined_call_operand.vmem [shape: f32[1,128], index: 9, kind: input, shape index: {}]
  %s10 = inlined_call_operand.hbm [shape: f32[512,128], index: 10, kind: output, shape index: {}]
  %s11 = sld [smem:[#allocation0]]
  $region93: #{tpu_custom_call.1} parent=0
    _
  %s13 = ssub.s32 1, %s11
  %s14 = scalar_select 0, %s13, %s11
  $region1: #{tpu_custom_call.1} parent=0
    #allocation3 [shape = 'u8[131072]{0}', space=vmem, size = 0x20000, scoped, tag = 'input window, operand 0']
    #allocation4 [shape = 's32[2]{0}', space=sflag, size = 0x8, scoped, tag = 'scoped memory for tpu_custom_call.1']
    #allocation5 [shape = 's32[2]{0}', space=sflag, size = 0x8, scoped, tag = 'scoped memory for tpu_custom_call.1']
    #allocation6 [shape = 'u8[98304]{0}', space=vmem, size = 0x18000, scoped, tag = 'input window, operand 1, single buffered']
    #allocation7 [shape = 's32[1]{0}', space=sflag, size = 0x4, scoped, tag = 'scoped memory for tpu_custom_call.1']
    #allocation8 [shape = 'u8[32768]{0}', space=vmem, size = 0x8000, scoped, tag = 'input window, operand 2, single buffered']
    #allocation9 [shape = 'u8[131072]{0}', space=vmem, size = 0x20000, scoped, tag = 'input window, operand 6, single buffered']
    #allocation10 [shape = 's32[1]{0}', space=sflag, size = 0x4, scoped, tag = 'scoped memory for tpu_custom_call.1']
    #allocation11 [shape = 'u8[131072]{0}', space=vmem, size = 0x20000, scoped, tag = 'input window, operand 7, single buffered']
    #allocation12 [shape = 'u8[131072]{0}', space=vmem, size = 0x20000, scoped, tag = 'output window, operand 0']
    %15 = vsyncpa [#allocation4], 0
    %s16 = scalar_lea.sflag [#allocation4], 1
    %17 = vsyncpa %s16, 0
    %18 = vsyncpa [#allocation7], 0
    %19 = vsyncpa [#allocation10], 0
    %20 = vsyncpa [#allocation5], 0
    %s21 = scalar_lea.sflag [#allocation5], 1
    %22 = vsyncpa %s21, 0
    loop: start=0, step=1, limit=6
    $region2: #{tpu_custom_call.1} parent=1 // loop_pre_header
      _
    $region3: #{tpu_custom_call.1} parent=1 // loop_header
      %s24 = sphi 0, %s28
      %p25 = scmp.ge.s32.totalorder %s24, 6
      %s34 = sphi 0, %s36
      %s37 = sphi 0, %s34
      %s38 = sphi 0, %s37
      %s54 = sphi 0, %s38
      %s58 = sphi 0, %s58
      %s60 = sphi 0, %s58
      %s61 = sphi 0, %s60
      %s75 = sphi 0, %s61
      %s79 = sphi 0, %s79
      %s81 = sphi 0, %s79
      %s82 = sphi 0, %s81
      %s96 = sphi 0, %s82
      %s100 = sphi 0, %s100
      %s102 = sphi 0, %s100
      %s103 = sphi 0, %s102
      %s117 = sphi 0, %s103
      %s121 = sphi 0, %s121
      %s123 = sphi 0, %s121
      %s124 = sphi 0, %s123
      %s138 = sphi 0, %s124
      %s142 = sphi 0, %s142
      %s144 = sphi 0, %s142
      %s145 = sphi 0, %s144
      %s159 = sphi 0, %s145
      %s163 = sphi 0, %s163
      %s165 = sphi 0, %s163
      %s166 = sphi 0, %s165
      %s180 = sphi 0, %s166
      %s184 = sphi 0, %s184
      %s186 = sphi 0, %s184
      %s187 = sphi 0, %s186
      %s201 = sphi 0, %s187
      %s205 = sphi 0, %s205
      %s207 = sphi 0, %s205
      %s208 = sphi 0, %s207
      %s222 = sphi 0, %s208
      %s226 = sphi 0, %s226
      %s228 = sphi 0, %s226
      %s229 = sphi 0, %s228
      %s243 = sphi 0, %s229
      %s249 = sphi 0, %s251
      %s252 = sphi 0, %s249
      %s253 = sphi 0, %s252
      %s269 = sphi 0, %s253
    $region4: #{tpu_custom_call.1} parent=1 // loop_header_branch
      %27 = sbr.rel (%p25) target = $region8
    $region5: #{tpu_custom_call.1} parent=1 // loop_body
      %s29 = ssub.s32 %s24, 1
      %s30 = ssub.s32 %s24, 2
      %s31 = sadd.s32 %s24, 1
      %s32 = ssub.s32 %s24, %s31
      %p33 = scmp.eq.s32.totalorder %s32, 0
      %s35 = sadd.s32 %s34, 1
      %s36 = scalar_select %p33, %s34, %s35
      %p39 = pneg %p33
      %p40 = scmp.eq.s32.totalorder %s24, 3
      %p41 = por %p39, %p40
      %p42 = scmp.ne.s32.totalorder %s34, %s37
      %p43 = scmp.eq.s32.totalorder %s24, 0
      %p44 = por %p42, %p43
      %p45 = scmp.ne.s32.totalorder %s34, %s37
      %p46 = scmp.eq.s32.totalorder %s29, 3
      %p47 = por %p45, %p46
      %p48 = scmp.ne.s32.totalorder %s37, %s38
      %p49 = scmp.eq.s32.totalorder %s29, 0
      %p50 = por %p48, %p49
      %p51 = scmp.ne.s32.totalorder %s37, %s38
      %p52 = scmp.eq.s32.totalorder %s30, 3
      %p53 = por %p51, %p52
      %p55 = scmp.ne.s32.totalorder %s38, %s54
      %p56 = scmp.eq.s32.totalorder %s30, 0
      %p57 = por %p55, %p56
      %s59 = sadd.s32 %s58, 1
      %p62 = scmp.eq.s32.totalorder %s24, 3
      %p63 = scmp.ne.s32.totalorder %s58, %s60
      %p64 = scmp.eq.s32.totalorder %s24, 0
      %p65 = por %p63, %p64
      %p66 = scmp.ne.s32.totalorder %s58, %s60
      %p67 = scmp.eq.s32.totalorder %s29, 3
      %p68 = por %p66, %p67
      %p69 = scmp.ne.s32.totalorder %s60, %s61
      %p70 = scmp.eq.s32.totalorder %s29, 0
      %p71 = por %p69, %p70
      %p72 = scmp.ne.s32.totalorder %s60, %s61
      %p73 = scmp.eq.s32.totalorder %s30, 3
      %p74 = por %p72, %p73
      %p76 = scmp.ne.s32.totalorder %s61, %s75
      %p77 = scmp.eq.s32.totalorder %s30, 0
      %p78 = por %p76, %p77
      %s80 = sadd.s32 %s79, 1
      %p83 = scmp.eq.s32.totalorder %s24, 3
      %p84 = scmp.ne.s32.totalorder %s79, %s81
      %p85 = scmp.eq.s32.totalorder %s24, 0
      %p86 = por %p84, %p85
      %p87 = scmp.ne.s32.totalorder %s79, %s81
      %p88 = scmp.eq.s32.totalorder %s29, 3
      %p89 = por %p87, %p88
      %p90 = scmp.ne.s32.totalorder %s81, %s82
      %p91 = scmp.eq.s32.totalorder %s29, 0
      %p92 = por %p90, %p91
      %p93 = scmp.ne.s32.totalorder %s81, %s82
      %p94 = scmp.eq.s32.totalorder %s30, 3
      %p95 = por %p93, %p94
      %p97 = scmp.ne.s32.totalorder %s82, %s96
      %p98 = scmp.eq.s32.totalorder %s30, 0
      %p99 = por %p97, %p98
      %s101 = sadd.s32 %s100, 1
      %p104 = scmp.eq.s32.totalorder %s24, 3
      %p105 = scmp.ne.s32.totalorder %s100, %s102
      %p106 = scmp.eq.s32.totalorder %s24, 0
      %p107 = por %p105, %p106
      %p108 = scmp.ne.s32.totalorder %s100, %s102
      %p109 = scmp.eq.s32.totalorder %s29, 3
      %p110 = por %p108, %p109
      %p111 = scmp.ne.s32.totalorder %s102, %s103
      %p112 = scmp.eq.s32.totalorder %s29, 0
      %p113 = por %p111, %p112
      %p114 = scmp.ne.s32.totalorder %s102, %s103
      %p115 = scmp.eq.s32.totalorder %s30, 3
      %p116 = por %p114, %p115
      %p118 = scmp.ne.s32.totalorder %s103, %s117
      %p119 = scmp.eq.s32.totalorder %s30, 0
      %p120 = por %p118, %p119
      %s122 = sadd.s32 %s121, 1
      %p125 = scmp.eq.s32.totalorder %s24, 3
      %p126 = scmp.ne.s32.totalorder %s121, %s123
      %p127 = scmp.eq.s32.totalorder %s24, 0
      %p128 = por %p126, %p127
      %p129 = scmp.ne.s32.totalorder %s121, %s123
      %p130 = scmp.eq.s32.totalorder %s29, 3
      %p131 = por %p129, %p130
      %p132 = scmp.ne.s32.totalorder %s123, %s124
      %p133 = scmp.eq.s32.totalorder %s29, 0
      %p134 = por %p132, %p133
      %p135 = scmp.ne.s32.totalorder %s123, %s124
      %p136 = scmp.eq.s32.totalorder %s30, 3
      %p137 = por %p135, %p136
      %p139 = scmp.ne.s32.totalorder %s124, %s138
      %p140 = scmp.eq.s32.totalorder %s30, 0
      %p141 = por %p139, %p140
      %s143 = sadd.s32 %s142, 1
      %p146 = scmp.eq.s32.totalorder %s24, 3
      %p147 = scmp.ne.s32.totalorder %s142, %s144
      %p148 = scmp.eq.s32.totalorder %s24, 0
      %p149 = por %p147, %p148
      %p150 = scmp.ne.s32.totalorder %s142, %s144
      %p151 = scmp.eq.s32.totalorder %s29, 3
      %p152 = por %p150, %p151
      %p153 = scmp.ne.s32.totalorder %s144, %s145
      %p154 = scmp.eq.s32.totalorder %s29, 0
      %p155 = por %p153, %p154
      %p156 = scmp.ne.s32.totalorder %s144, %s145
      %p157 = scmp.eq.s32.totalorder %s30, 3
      %p158 = por %p156, %p157
      %p160 = scmp.ne.s32.totalorder %s145, %s159
      %p161 = scmp.eq.s32.totalorder %s30, 0
      %p162 = por %p160, %p161
      %s164 = sadd.s32 %s163, 1
      %p167 = scmp.eq.s32.totalorder %s24, 3
      %p168 = scmp.ne.s32.totalorder %s163, %s165
      %p169 = scmp.eq.s32.totalorder %s24, 0
      %p170 = por %p168, %p169
      %p171 = scmp.ne.s32.totalorder %s163, %s165
      %p172 = scmp.eq.s32.totalorder %s29, 3
      %p173 = por %p171, %p172
      %p174 = scmp.ne.s32.totalorder %s165, %s166
      %p175 = scmp.eq.s32.totalorder %s29, 0
      %p176 = por %p174, %p175
      %p177 = scmp.ne.s32.totalorder %s165, %s166
      %p178 = scmp.eq.s32.totalorder %s30, 3
      %p179 = por %p177, %p178
      %p181 = scmp.ne.s32.totalorder %s166, %s180
      %p182 = scmp.eq.s32.totalorder %s30, 0
      %p183 = por %p181, %p182
      %s185 = sadd.s32 %s184, 1
      %p188 = scmp.eq.s32.totalorder %s24, 3
      %p189 = scmp.ne.s32.totalorder %s184, %s186
      %p190 = scmp.eq.s32.totalorder %s24, 0
      %p191 = por %p189, %p190
      %p192 = scmp.ne.s32.totalorder %s184, %s186
      %p193 = scmp.eq.s32.totalorder %s29, 3
      %p194 = por %p192, %p193
      %p195 = scmp.ne.s32.totalorder %s186, %s187
      %p196 = scmp.eq.s32.totalorder %s29, 0
      %p197 = por %p195, %p196
      %p198 = scmp.ne.s32.totalorder %s186, %s187
      %p199 = scmp.eq.s32.totalorder %s30, 3
      %p200 = por %p198, %p199
      %p202 = scmp.ne.s32.totalorder %s187, %s201
      %p203 = scmp.eq.s32.totalorder %s30, 0
      %p204 = por %p202, %p203
      %s206 = sadd.s32 %s205, 1
      %p209 = scmp.eq.s32.totalorder %s24, 3
      %p210 = scmp.ne.s32.totalorder %s205, %s207
      %p211 = scmp.eq.s32.totalorder %s24, 0
      %p212 = por %p210, %p211
      %p213 = scmp.ne.s32.totalorder %s205, %s207
      %p214 = scmp.eq.s32.totalorder %s29, 3
      %p215 = por %p213, %p214
      %p216 = scmp.ne.s32.totalorder %s207, %s208
      %p217 = scmp.eq.s32.totalorder %s29, 0
      %p218 = por %p216, %p217
      %p219 = scmp.ne.s32.totalorder %s207, %s208
      %p220 = scmp.eq.s32.totalorder %s30, 3
      %p221 = por %p219, %p220
      %p223 = scmp.ne.s32.totalorder %s208, %s222
      %p224 = scmp.eq.s32.totalorder %s30, 0
      %p225 = por %p223, %p224
      %s227 = sadd.s32 %s226, 1
      %p230 = scmp.eq.s32.totalorder %s24, 3
      %p231 = scmp.ne.s32.totalorder %s226, %s228
      %p232 = scmp.eq.s32.totalorder %s24, 0
      %p233 = por %p231, %p232
      %p234 = scmp.ne.s32.totalorder %s226, %s228
      %p235 = scmp.eq.s32.totalorder %s29, 3
      %p236 = por %p234, %p235
      %p237 = scmp.ne.s32.totalorder %s228, %s229
      %p238 = scmp.eq.s32.totalorder %s29, 0
      %p239 = por %p237, %p238
      %p240 = scmp.ne.s32.totalorder %s228, %s229
      %p241 = scmp.eq.s32.totalorder %s30, 3
      %p242 = por %p240, %p241
      %p244 = scmp.ne.s32.totalorder %s229, %s243
      %p245 = scmp.eq.s32.totalorder %s30, 0
      %p246 = por %p244, %p245
      %s247 = ssub.s32 %s24, %s31
      %p248 = scmp.eq.s32.totalorder %s247, 0
      %s250 = sadd.s32 %s249, 1
      %s251 = scalar_select %p248, %s249, %s250
      %p254 = pneg %p248
      %p255 = scmp.eq.s32.totalorder %s24, 3
      %p256 = por %p254, %p255
      %p257 = scmp.ne.s32.totalorder %s249, %s252
      %p258 = scmp.eq.s32.totalorder %s24, 0
      %p259 = por %p257, %p258
      %p260 = scmp.ne.s32.totalorder %s249, %s252
      %p261 = scmp.eq.s32.totalorder %s29, 3
      %p262 = por %p260, %p261
      %p263 = scmp.ne.s32.totalorder %s252, %s253
      %p264 = scmp.eq.s32.totalorder %s29, 0
      %p265 = por %p263, %p264
      %p266 = scmp.ne.s32.totalorder %s252, %s253
      %p267 = scmp.eq.s32.totalorder %s30, 3
      %p268 = por %p266, %p267
      %p270 = scmp.ne.s32.totalorder %s253, %s269
      %p271 = scmp.eq.s32.totalorder %s30, 0
      %p272 = por %p270, %p271
      %p273 = scmp.le.s32.totalorder 1, %s24
      %p274 = scmp.lt.s32.totalorder %s24, 5
      %p275 = pnand %p273, %p274
      %p276 = pneg %p275
      // Predicated region
      $region9: #{tpu_custom_call.1} parent=5 // pred_check
        _
      $region10: #{tpu_custom_call.1} parent=5 // pred_check_branch
        %278 = sbr.rel (%p275) target = $region12
      $region11: #{tpu_custom_call.1} parent=5 // pred_region
        %s279 = ssub.s32 %s24, 1
        // Predicated region
        $region13: #{tpu_custom_call.1} parent=11 // pred_check
          %p280 = pneg %p71
        $region14: #{tpu_custom_call.1} parent=11 // pred_check_branch
          %282 = sbr.rel (%p280) target = $region16
        $region15: #{tpu_custom_call.1} parent=11 // pred_region
          %284 = vsyncadd [#allocation7], 0
          %s285 = sshll.u32 %s1, 4
          %s286 = int_to_ptr.hbm [resolvable:$true] %s285
          %s287 = sshll.u32 [#allocation6], 4
          %s288 = int_to_ptr.vmem [resolvable:$true] %s287
          %293 = dma.hbm_to_vmem [thread:$0]  %s286, 3072, %s288, [#allocation7], 192, 192, 12
        $region16: #{tpu_custom_call.1} parent=11 // pred_fallthru
          _
        // Predicated region
        $region17: #{tpu_custom_call.1} parent=11 // pred_check
          %p294 = pneg %p92
        $region18: #{tpu_custom_call.1} parent=11 // pred_check_branch
          %296 = sbr.rel (%p294) target = $region20
        $region19: #{tpu_custom_call.1} parent=11 // pred_region
          %298 = vsyncadd [#allocation7], 0
          %s299 = sshll.u32 %s2, 4
          %s300 = int_to_ptr.hbm [resolvable:$true] %s299
          %s301 = sshll.u32 [#allocation8], 4
          %s302 = int_to_ptr.vmem [resolvable:$true] %s301
          %307 = dma.hbm_to_vmem [thread:$0]  %s300, 1024, %s302, [#allocation7], 64, 64, 4
        $region20: #{tpu_custom_call.1} parent=11 // pred_fallthru
          _
        // Predicated region
        $region21: #{tpu_custom_call.1} parent=11 // pred_check
          %p308 = pneg %p113
        $region22: #{tpu_custom_call.1} parent=11 // pred_check_branch
          %310 = sbr.rel (%p308) target = $region24
        $region23: #{tpu_custom_call.1} parent=11 // pred_region
          _
        $region24: #{tpu_custom_call.1} parent=11 // pred_fallthru
          _
        // Predicated region
        $region25: #{tpu_custom_call.1} parent=11 // pred_check
          %p311 = pneg %p134
        $region26: #{tpu_custom_call.1} parent=11 // pred_check_branch
          %313 = sbr.rel (%p311) target = $region28
        $region27: #{tpu_custom_call.1} parent=11 // pred_region
          _
        $region28: #{tpu_custom_call.1} parent=11 // pred_fallthru
          _
        // Predicated region
        $region29: #{tpu_custom_call.1} parent=11 // pred_check
          %p314 = pneg %p155
        $region30: #{tpu_custom_call.1} parent=11 // pred_check_branch
          %316 = sbr.rel (%p314) target = $region32
        $region31: #{tpu_custom_call.1} parent=11 // pred_region
          _
        $region32: #{tpu_custom_call.1} parent=11 // pred_fallthru
          _
        // Predicated region
        $region33: #{tpu_custom_call.1} parent=11 // pred_check
          %p317 = pneg %p176
        $region34: #{tpu_custom_call.1} parent=11 // pred_check_branch
          %319 = sbr.rel (%p317) target = $region36
        $region35: #{tpu_custom_call.1} parent=11 // pred_region
          %321 = vsyncadd [#allocation10], 0
          %s322 = sshll.u32 %s6, 4
          %s323 = int_to_ptr.hbm [resolvable:$true] %s322
          %s324 = sshll.u32 [#allocation9], 4
          %s325 = int_to_ptr.vmem [resolvable:$true] %s324
          %330 = dma.hbm_to_vmem [thread:$0]  %s323, 4096, %s325, [#allocation10], 256, 256, 16
        $region36: #{tpu_custom_call.1} parent=11 // pred_fallthru
          _
        // Predicated region
        $region37: #{tpu_custom_call.1} parent=11 // pred_check
          %p331 = pneg %p197
        $region38: #{tpu_custom_call.1} parent=11 // pred_check_branch
          %333 = sbr.rel (%p331) target = $region40
        $region39: #{tpu_custom_call.1} parent=11 // pred_region
          %335 = vsyncadd [#allocation10], 0
          %s336 = sshll.u32 %s7, 4
          %s337 = int_to_ptr.hbm [resolvable:$true] %s336
          %s338 = sshll.u32 [#allocation11], 4
          %s339 = int_to_ptr.vmem [resolvable:$true] %s338
          %344 = dma.hbm_to_vmem [thread:$0]  %s337, 4096, %s339, [#allocation10], 64, 64, 4
        $region40: #{tpu_custom_call.1} parent=11 // pred_fallthru
          _
        // Predicated region
        $region41: #{tpu_custom_call.1} parent=11 // pred_check
          %p345 = pneg %p218
        $region42: #{tpu_custom_call.1} parent=11 // pred_check_branch
          %347 = sbr.rel (%p345) target = $region44
        $region43: #{tpu_custom_call.1} parent=11 // pred_region
          _
        $region44: #{tpu_custom_call.1} parent=11 // pred_fallthru
          _
        // Predicated region
        $region45: #{tpu_custom_call.1} parent=11 // pred_check
          %p348 = pneg %p239
        $region46: #{tpu_custom_call.1} parent=11 // pred_check_branch
          %350 = sbr.rel (%p348) target = $region48
        $region47: #{tpu_custom_call.1} parent=11 // pred_region
          _
        $region48: #{tpu_custom_call.1} parent=11 // pred_fallthru
          _
      $region12: #{tpu_custom_call.1} parent=5 // pred_fallthru
        _
      %p351 = scmp.lt.s32.totalorder %s24, 4
      // Predicated region
      $region49: #{tpu_custom_call.1} parent=5 // pred_check
        %p352 = pneg %p351
      $region50: #{tpu_custom_call.1} parent=5 // pred_check_branch
        %354 = sbr.rel (%p352) target = $region52
      $region51: #{tpu_custom_call.1} parent=5 // pred_region
        // Predicated region
        $region53: #{tpu_custom_call.1} parent=51 // pred_check
          %p355 = pneg %p44
        $region54: #{tpu_custom_call.1} parent=51 // pred_check_branch
          %357 = sbr.rel (%p355) target = $region56
        $region55: #{tpu_custom_call.1} parent=51 // pred_region
          %s358 = sand.u32 %s34, 1
          %s359 = scalar_lea.sflag [#allocation4], %s358
          %s360 = sand.u32 %s34, 1
          %s361 = smul.addr %s360, 128
          %s362 = scalar_lea.vmem [#allocation3], %s361
          %s363 = smul.u32 16, %s24
          %365 = vsyncadd %s359, 0
          %s366 = smul.addr %s363, 8
          %s367 = scalar_lea.hbm %s0, %s366
          %s368 = sshll.u32 %s367, 4
          %s369 = int_to_ptr.hbm [resolvable:$true] %s368
          %s370 = sshll.u32 %s362, 4
          %s371 = int_to_ptr.vmem [resolvable:$true] %s370
          %376 = dma.hbm_to_vmem [thread:$0]  %s369, 2048, %s371, %s359, 128, 128, 8
        $region56: #{tpu_custom_call.1} parent=51 // pred_fallthru
          _
      $region52: #{tpu_custom_call.1} parent=5 // pred_fallthru
        _
      %p377 = scmp.le.s32.totalorder 1, %s24
      %p378 = scmp.lt.s32.totalorder %s24, 5
      %p379 = pnand %p377, %p378
      %p380 = pneg %p379
      // Predicated region
      $region57: #{tpu_custom_call.1} parent=5 // pred_check
        _
      $region58: #{tpu_custom_call.1} parent=5 // pred_check_branch
        %382 = sbr.rel (%p379) target = $region60
      $region59: #{tpu_custom_call.1} parent=5 // pred_region
        %s383 = ssub.s32 %s24, 1
        %s384 = sand.u32 %s37, 1
        %s385 = scalar_lea.sflag [#allocation4], %s384
        %s386 = sand.u32 %s37, 1
        %s387 = smul.addr %s386, 128
        %s388 = scalar_lea.vmem [#allocation3], %s387
        // Predicated region
        $region61: #{tpu_custom_call.1} parent=59 // pred_check
          %p389 = pneg %p50
        $region62: #{tpu_custom_call.1} parent=59 // pred_check_branch
          %391 = sbr.rel (%p389) target = $region64
        $region63: #{tpu_custom_call.1} parent=59 // pred_region
          %393 = dma.done %s385, 2048
        $region64: #{tpu_custom_call.1} parent=59 // pred_fallthru
          _
        // Predicated region
        $region65: #{tpu_custom_call.1} parent=59 // pred_check
          %p394 = pneg %p71
        $region66: #{tpu_custom_call.1} parent=59 // pred_check_branch
          %396 = sbr.rel (%p394) target = $region68
        $region67: #{tpu_custom_call.1} parent=59 // pred_region
          %398 = dma.done [#allocation7], 3072
        $region68: #{tpu_custom_call.1} parent=59 // pred_fallthru
          _
        // Predicated region
        $region69: #{tpu_custom_call.1} parent=59 // pred_check
          %p399 = pneg %p92
        $region70: #{tpu_custom_call.1} parent=59 // pred_check_branch
          %401 = sbr.rel (%p399) target = $region72
        $region71: #{tpu_custom_call.1} parent=59 // pred_region
          %403 = dma.done [#allocation7], 1024
        $region72: #{tpu_custom_call.1} parent=59 // pred_fallthru
          _
        // Predicated region
        $region73: #{tpu_custom_call.1} parent=59 // pred_check
          %p404 = pneg %p176
        $region74: #{tpu_custom_call.1} parent=59 // pred_check_branch
          %406 = sbr.rel (%p404) target = $region76
        $region75: #{tpu_custom_call.1} parent=59 // pred_region
          %408 = dma.done [#allocation10], 4096
        $region76: #{tpu_custom_call.1} parent=59 // pred_fallthru
          _
        // Predicated region
        $region77: #{tpu_custom_call.1} parent=59 // pred_check
          %p409 = pneg %p197
        $region78: #{tpu_custom_call.1} parent=59 // pred_check_branch
          %411 = sbr.rel (%p409) target = $region80
        $region79: #{tpu_custom_call.1} parent=59 // pred_region
          %413 = dma.done [#allocation10], 4096
        $region80: #{tpu_custom_call.1} parent=59 // pred_fallthru
          _
        %s414 = sand.u32 %s37, 1
        %s415 = scalar_lea.sflag [#allocation4], %s414
        %s416 = sand.u32 %s37, 1
        %s417 = smul.addr %s416, 128
        %s418 = scalar_lea.vmem [#allocation3], %s417
        %p419 = pneg %p50
        %p420 = pneg %p47
        %p421 = pneg %p71
        %p422 = pneg %p68
        %p423 = pneg %p92
        %p424 = pneg %p89
        %p425 = pneg %p113
        %p426 = pneg %p110
        %p427 = pneg %p134
        %p428 = pneg %p131
        %p429 = pneg %p155
        %p430 = pneg %p152
        %p431 = pneg %p176
        %p432 = pneg %p173
        %p433 = pneg %p197
        %p434 = pneg %p194
        %p435 = pneg %p218
        %p436 = pneg %p215
        %p437 = pneg %p239
        %p438 = pneg %p236
        %p439 = pneg %p265
        %p440 = pneg %p262
        %s441 = sand.u32 %s252, 1
        %s442 = scalar_lea.sflag [#allocation5], %s441
        %s443 = sand.u32 %s252, 1
        %s444 = smul.addr %s443, 128
        %s445 = scalar_lea.vmem [#allocation12], %s444
        %s446 = smul.u32 16, %s29
        %s447 = smul.u32 16, %s29
        %v449 = vld [vmem:[%s388] sm:$0xff]
        %v450 = vld [vmem:[%s388 + $0x8] sm:$0xff]
        %v451 = vld [vmem:[%s388 + $0x10] sm:$0xff]
        %v452 = vld [vmem:[%s388 + $0x18] sm:$0xff]
        %v453 = vld [vmem:[%s388 + $0x20] sm:$0xff]
        %v454 = vld [vmem:[%s388 + $0x28] sm:$0xff]
        %v455 = vld [vmem:[%s388 + $0x30] sm:$0xff]
        %v456 = vld [vmem:[%s388 + $0x38] sm:$0xff]
        %v457 = vld [vmem:[%s388 + $0x40] sm:$0xff]
        %v458 = vld [vmem:[%s388 + $0x48] sm:$0xff]
        %v459 = vld [vmem:[%s388 + $0x50] sm:$0xff]
        %v460 = vld [vmem:[%s388 + $0x58] sm:$0xff]
        %v461 = vld [vmem:[%s388 + $0x60] sm:$0xff]
        %v462 = vld [vmem:[%s388 + $0x68] sm:$0xff]
        %v463 = vld [vmem:[%s388 + $0x70] sm:$0xff]
        %v464 = vld [vmem:[%s388 + $0x78] sm:$0xff]
        %v465 = vpack.c.bf16 %v450, %v449
        %v466 = vpack.c.bf16 %v452, %v451
        %v467 = vpack.c.bf16 %v454, %v453
        %v468 = vpack.c.bf16 %v456, %v455
        %v469 = vpack.c.bf16 %v458, %v457
        %v470 = vpack.c.bf16 %v460, %v459
        %v471 = vpack.c.bf16 %v462, %v461
        %v472 = vpack.c.bf16 %v464, %v463
        %v473 = vld [vmem:[#allocation6] sm:$0xff]
        %v474 = vld [vmem:[#allocation6 + $0x8] sm:$0xf]
        %v475 = vld [vmem:[#allocation6 + $0xc] sm:$0xff]
        %v476 = vld [vmem:[#allocation6 + $0x14] sm:$0xf]
        %v477 = vld [vmem:[#allocation6 + $0x18] sm:$0xff]
        %v478 = vld [vmem:[#allocation6 + $0x20] sm:$0xf]
        %v479 = vld [vmem:[#allocation6 + $0x24] sm:$0xff]
        %v480 = vld [vmem:[#allocation6 + $0x2c] sm:$0xf]
        %v481 = vld [vmem:[#allocation6 + $0x30] sm:$0xff]
        %v482 = vld [vmem:[#allocation6 + $0x38] sm:$0xf]
        %v483 = vld [vmem:[#allocation6 + $0x3c] sm:$0xff]
        %v484 = vld [vmem:[#allocation6 + $0x44] sm:$0xf]
        %v485 = vld [vmem:[#allocation6 + $0x48] sm:$0xff]
        %v486 = vld [vmem:[#allocation6 + $0x50] sm:$0xf]
        %v487 = vld [vmem:[#allocation6 + $0x54] sm:$0xff]
        %v488 = vld [vmem:[#allocation6 + $0x5c] sm:$0xf]
        %v489 = vld [vmem:[#allocation6 + $0x60] sm:$0xff]
        %v490 = vld [vmem:[#allocation6 + $0x68] sm:$0xf]
        %v491 = vld [vmem:[#allocation6 + $0x6c] sm:$0xff]
        %v492 = vld [vmem:[#allocation6 + $0x74] sm:$0xf]
        %v493 = vld [vmem:[#allocation6 + $0x78] sm:$0xff]
        %v494 = vld [vmem:[#allocation6 + $0x80] sm:$0xf]
        %v495 = vld [vmem:[#allocation6 + $0x84] sm:$0xff]
        %v496 = vld [vmem:[#allocation6 + $0x8c] sm:$0xf]
        %v497 = vld [vmem:[#allocation6 + $0x90] sm:$0xff]
        %v498 = vld [vmem:[#allocation6 + $0x98] sm:$0xf]
        %v499 = vld [vmem:[#allocation6 + $0x9c] sm:$0xff]
        %v500 = vld [vmem:[#allocation6 + $0xa4] sm:$0xf]
        %v501 = vld [vmem:[#allocation6 + $0xa8] sm:$0xff]
        %v502 = vld [vmem:[#allocation6 + $0xb0] sm:$0xf]
        %v503 = vld [vmem:[#allocation6 + $0xb4] sm:$0xff]
        %v504 = vld [vmem:[#allocation6 + $0xbc] sm:$0xf]
        %v537 = vunpack.c.l.b16 %v473
        %v538 = vunpack.c.h.b16 %v473
        %v539 = vunpack.c.l.b16 %v474
        %v540 = vunpack.c.l.b16 %v475
        %v541 = vunpack.c.h.b16 %v475
        %v542 = vunpack.c.l.b16 %v476
        %v543 = vunpack.c.l.b16 %v477
        %v544 = vunpack.c.h.b16 %v477
        %v545 = vunpack.c.l.b16 %v478
        %v546 = vunpack.c.l.b16 %v479
        %v547 = vunpack.c.h.b16 %v479
        %v548 = vunpack.c.l.b16 %v480
        %v549 = vunpack.c.l.b16 %v481
        %v550 = vunpack.c.h.b16 %v481
        %v551 = vunpack.c.l.b16 %v482
        %v552 = vunpack.c.l.b16 %v483
        %v553 = vunpack.c.h.b16 %v483
        %v554 = vunpack.c.l.b16 %v484
        %v555 = vunpack.c.l.b16 %v485
        %v556 = vunpack.c.h.b16 %v485
        %v557 = vunpack.c.l.b16 %v486
        %v558 = vunpack.c.l.b16 %v487
        %v559 = vunpack.c.h.b16 %v487
        %v560 = vunpack.c.l.b16 %v488
        %v561 = vunpack.c.l.b16 %v489
        %v562 = vunpack.c.h.b16 %v489
        %v563 = vunpack.c.l.b16 %v490
        %v564 = vunpack.c.l.b16 %v491
        %v565 = vunpack.c.h.b16 %v491
        %v566 = vunpack.c.l.b16 %v492
        %v567 = vunpack.c.l.b16 %v493
        %v568 = vunpack.c.h.b16 %v493
        %v569 = vunpack.c.l.b16 %v494
        %v570 = vunpack.c.l.b16 %v495
        %v571 = vunpack.c.h.b16 %v495
        %v572 = vunpack.c.l.b16 %v496
        %v573 = vunpack.c.l.b16 %v497
        %v574 = vunpack.c.h.b16 %v497
        %v575 = vunpack.c.l.b16 %v498
        %v576 = vunpack.c.l.b16 %v499
        %v577 = vunpack.c.h.b16 %v499
        %v578 = vunpack.c.l.b16 %v500
        %v579 = vunpack.c.l.b16 %v501
        %v580 = vunpack.c.h.b16 %v501
        %v581 = vunpack.c.l.b16 %v502
        %v582 = vunpack.c.l.b16 %v503
        %v583 = vunpack.c.h.b16 %v503
        %v584 = vunpack.c.l.b16 %v504
        %v585 = vpack.c.b16 %v540, %v537
        %v586 = vpack.c.b16 %v541, %v538
        %v587 = vpack.c.b16 %v542, %v539
        %v588 = vpack.c.b16 %v546, %v543
        %v589 = vpack.c.b16 %v547, %v544
        %v590 = vpack.c.b16 %v548, %v545
        %v591 = vpack.c.b16 %v552, %v549
        %v592 = vpack.c.b16 %v553, %v550
        %v593 = vpack.c.b16 %v554, %v551
        %v594 = vpack.c.b16 %v558, %v555
        %v595 = vpack.c.b16 %v559, %v556
        %v596 = vpack.c.b16 %v560, %v557
        %v597 = vpack.c.b16 %v564, %v561
        %v598 = vpack.c.b16 %v565, %v562
        %v599 = vpack.c.b16 %v566, %v563
        %v600 = vpack.c.b16 %v570, %v567
        %v601 = vpack.c.b16 %v571, %v568
        %v602 = vpack.c.b16 %v572, %v569
        %v603 = vpack.c.b16 %v576, %v573
        %v604 = vpack.c.b16 %v577, %v574
        %v605 = vpack.c.b16 %v578, %v575
        %v606 = vpack.c.b16 %v582, %v579
        %v607 = vpack.c.b16 %v583, %v580
        %v608 = vpack.c.b16 %v584, %v581
        %633 = vmatpush.bf16.msra.mxu0 %v606
        %634 = vmatpush.bf16.msra.mxu0 %v603
        %635 = vmatpush.bf16.msra.mxu0 %v600
        %636 = vmatpush.bf16.msra.mxu0 %v597
        %637 = vmatpush.bf16.msra.mxu0 %v594
        %638 = vmatpush.bf16.msra.mxu0 %v591
        %639 = vmatpush.bf16.msra.mxu0 %v588
        %640 = vmatpush.bf16.msra.mxu0 %v585
        %641 = vmatmul.bf16.gmra.mxu0 %v465
        %v642 = vpop.f32.mrf.mxu0
        %v643 = vadd.f32 0.0, %v642
        %v644 = vpop.f32.mrf.mxu0
        %v645 = vadd.f32 0.0, %v644
        %646 = vmatmul.bf16.gmra.mxu0 %v466
        %v647 = vpop.f32.mrf.mxu0
        %v648 = vadd.f32 0.0, %v647
        %v649 = vpop.f32.mrf.mxu0
        %v650 = vadd.f32 0.0, %v649
        %651 = vmatmul.bf16.gmra.mxu0 %v467
        %v652 = vpop.f32.mrf.mxu0
        %v653 = vadd.f32 0.0, %v652
        %v654 = vpop.f32.mrf.mxu0
        %v655 = vadd.f32 0.0, %v654
        %656 = vmatmul.bf16.gmra.mxu0 %v468
        %v657 = vpop.f32.mrf.mxu0
        %v658 = vadd.f32 0.0, %v657
        %v659 = vpop.f32.mrf.mxu0
        %v660 = vadd.f32 0.0, %v659
        %661 = vmatmul.bf16.gmra.mxu0 %v469
        %v662 = vpop.f32.mrf.mxu0
        %v663 = vadd.f32 0.0, %v662
        %v664 = vpop.f32.mrf.mxu0
        %v665 = vadd.f32 0.0, %v664
        %666 = vmatmul.bf16.gmra.mxu0 %v470
        %v667 = vpop.f32.mrf.mxu0
        %v668 = vadd.f32 0.0, %v667
        %v669 = vpop.f32.mrf.mxu0
        %v670 = vadd.f32 0.0, %v669
        %671 = vmatmul.bf16.gmra.mxu0 %v471
        %v672 = vpop.f32.mrf.mxu0
        %v673 = vadd.f32 0.0, %v672
        %v674 = vpop.f32.mrf.mxu0
        %v675 = vadd.f32 0.0, %v674
        %676 = vmatmul.bf16.gmra.mxu0 %v472
        %v677 = vpop.f32.mrf.mxu0
        %v678 = vadd.f32 0.0, %v677
        %v679 = vpop.f32.mrf.mxu0
        %v680 = vadd.f32 0.0, %v679
        %681 = vdwg.mxu0
        %682 = vmatpush.bf16.msra.mxu0 %v607
        %683 = vmatpush.bf16.msra.mxu0 %v604
        %684 = vmatpush.bf16.msra.mxu0 %v601
        %685 = vmatpush.bf16.msra.mxu0 %v598
        %686 = vmatpush.bf16.msra.mxu0 %v595
        %687 = vmatpush.bf16.msra.mxu0 %v592
        %688 = vmatpush.bf16.msra.mxu0 %v589
        %689 = vmatpush.bf16.msra.mxu0 %v586
        %690 = vmatmul.bf16.gmra.mxu0 %v465
        %v691 = vpop.f32.mrf.mxu0
        %v692 = vadd.f32 0.0, %v691
        %v693 = vpop.f32.mrf.mxu0
        %v694 = vadd.f32 0.0, %v693
        %695 = vmatmul.bf16.gmra.mxu0 %v466
        %v696 = vpop.f32.mrf.mxu0
        %v697 = vadd.f32 0.0, %v696
        %v698 = vpop.f32.mrf.mxu0
        %v699 = vadd.f32 0.0, %v698
        %700 = vmatmul.bf16.gmra.mxu0 %v467
        %v701 = vpop.f32.mrf.mxu0
        %v702 = vadd.f32 0.0, %v701
        %v703 = vpop.f32.mrf.mxu0
        %v704 = vadd.f32 0.0, %v703
        %705 = vmatmul.bf16.gmra.mxu0 %v468
        %v706 = vpop.f32.mrf.mxu0
        %v707 = vadd.f32 0.0, %v706
        %v708 = vpop.f32.mrf.mxu0
        %v709 = vadd.f32 0.0, %v708
        %710 = vmatmul.bf16.gmra.mxu0 %v469
        %v711 = vpop.f32.mrf.mxu0
        %v712 = vadd.f32 0.0, %v711
        %v713 = vpop.f32.mrf.mxu0
        %v714 = vadd.f32 0.0, %v713
        %715 = vmatmul.bf16.gmra.mxu0 %v470
        %v716 = vpop.f32.mrf.mxu0
        %v717 = vadd.f32 0.0, %v716
        %v718 = vpop.f32.mrf.mxu0
        %v719 = vadd.f32 0.0, %v718
        %720 = vmatmul.bf16.gmra.mxu0 %v471
        %v721 = vpop.f32.mrf.mxu0
        %v722 = vadd.f32 0.0, %v721
        %v723 = vpop.f32.mrf.mxu0
        %v724 = vadd.f32 0.0, %v723
        %725 = vmatmul.bf16.gmra.mxu0 %v472
        %v726 = vpop.f32.mrf.mxu0
        %v727 = vadd.f32 0.0, %v726
        %v728 = vpop.f32.mrf.mxu0
        %v729 = vadd.f32 0.0, %v728
        %730 = vdwg.mxu0
        %731 = vmatpush.bf16.msra.mxu0 %v608
        %732 = vmatpush.bf16.msra.mxu0 %v605
        %733 = vmatpush.bf16.msra.mxu0 %v602
        %734 = vmatpush.bf16.msra.mxu0 %v599
        %735 = vmatpush.bf16.msra.mxu0 %v596
        %736 = vmatpush.bf16.msra.mxu0 %v593
        %737 = vmatpush.bf16.msra.mxu0 %v590
        %738 = vmatpush.bf16.msra.mxu0 %v587
        %739 = vmatmul.bf16.gmra.mxu0 %v465
        %v740 = vpop.f32.mrf.mxu0
        %v741 = vadd.f32 0.0, %v740
        %v742 = vpop.f32.mrf.mxu0
        %v743 = vadd.f32 0.0, %v742
        %744 = vmatmul.bf16.gmra.mxu0 %v466
        %v745 = vpop.f32.mrf.mxu0
        %v746 = vadd.f32 0.0, %v745
        %v747 = vpop.f32.mrf.mxu0
        %v748 = vadd.f32 0.0, %v747
        %749 = vmatmul.bf16.gmra.mxu0 %v467
        %v750 = vpop.f32.mrf.mxu0
        %v751 = vadd.f32 0.0, %v750
        %v752 = vpop.f32.mrf.mxu0
        %v753 = vadd.f32 0.0, %v752
        %754 = vmatmul.bf16.gmra.mxu0 %v468
        %v755 = vpop.f32.mrf.mxu0
        %v756 = vadd.f32 0.0, %v755
        %v757 = vpop.f32.mrf.mxu0
        %v758 = vadd.f32 0.0, %v757
        %759 = vmatmul.bf16.gmra.mxu0 %v469
        %v760 = vpop.f32.mrf.mxu0
        %v761 = vadd.f32 0.0, %v760
        %v762 = vpop.f32.mrf.mxu0
        %v763 = vadd.f32 0.0, %v762
        %764 = vmatmul.bf16.gmra.mxu0 %v470
        %v765 = vpop.f32.mrf.mxu0
        %v766 = vadd.f32 0.0, %v765
        %v767 = vpop.f32.mrf.mxu0
        %v768 = vadd.f32 0.0, %v767
        %769 = vmatmul.bf16.gmra.mxu0 %v471
        %v770 = vpop.f32.mrf.mxu0
        %v771 = vadd.f32 0.0, %v770
        %v772 = vpop.f32.mrf.mxu0
        %v773 = vadd.f32 0.0, %v772
        %774 = vmatmul.bf16.gmra.mxu0 %v472
        %v775 = vpop.f32.mrf.mxu0
        %v776 = vadd.f32 0.0, %v775
        %v777 = vpop.f32.mrf.mxu0
        %v778 = vadd.f32 0.0, %v777
        %779 = vdwg.mxu0
        %v780 = vpack.c.bf16 %v643, %v643
        %v781 = vpack.c.bf16 %v645, %v645
        %v782 = vpack.c.bf16 %v648, %v648
        %v783 = vpack.c.bf16 %v650, %v650
        %v784 = vpack.c.bf16 %v653, %v653
        %v785 = vpack.c.bf16 %v655, %v655
        %v786 = vpack.c.bf16 %v658, %v658
        %v787 = vpack.c.bf16 %v660, %v660
        %v788 = vpack.c.bf16 %v692, %v692
        %v789 = vpack.c.bf16 %v694, %v694
        %v790 = vpack.c.bf16 %v697, %v697
        %v791 = vpack.c.bf16 %v699, %v699
        %v792 = vpack.c.bf16 %v702, %v702
        %v793 = vpack.c.bf16 %v704, %v704
        %v794 = vpack.c.bf16 %v707, %v707
        %v795 = vpack.c.bf16 %v709, %v709
        %v796 = vpack.c.bf16 %v741, %v741
        %v797 = vpack.c.bf16 %v743, %v743
        %v798 = vpack.c.bf16 %v746, %v746
        %v799 = vpack.c.bf16 %v748, %v748
        %v800 = vpack.c.bf16 %v751, %v751
        %v801 = vpack.c.bf16 %v753, %v753
        %v802 = vpack.c.bf16 %v756, %v756
        %v803 = vpack.c.bf16 %v758, %v758
        %v812 = vunpack.c.l.b16 %v780
        %v813 = vunpack.c.l.b16 %v781
        %v814 = vunpack.c.l.b16 %v782
        %v815 = vunpack.c.l.b16 %v783
        %v816 = vunpack.c.l.b16 %v784
        %v817 = vunpack.c.l.b16 %v785
        %v818 = vunpack.c.l.b16 %v786
        %v819 = vunpack.c.l.b16 %v787
        %v820 = vpack.c.b16 %v813, %v812
        %v821 = vpack.c.b16 %v815, %v814
        %v822 = vpack.c.b16 %v817, %v816
        %v823 = vpack.c.b16 %v819, %v818
        %v832 = vunpack.c.l.b16 %v788
        %v833 = vunpack.c.l.b16 %v789
        %v834 = vunpack.c.l.b16 %v790
        %v835 = vunpack.c.l.b16 %v791
        %v836 = vunpack.c.l.b16 %v792
        %v837 = vunpack.c.l.b16 %v793
        %v838 = vunpack.c.l.b16 %v794
        %v839 = vunpack.c.l.b16 %v795
        %v840 = vpack.c.b16 %v833, %v832
        %v841 = vpack.c.b16 %v835, %v834
        %v842 = vpack.c.b16 %v837, %v836
        %v843 = vpack.c.b16 %v839, %v838
        %vm844 = vcmask 523264
        %v846 = vsel %vm844, %v820, 0
        %v849 = vsel %vm844, %v821, 0
        %v852 = vsel %vm844, %v822, 0
        %v855 = vsel %vm844, %v823, 0
        %v858 = vsel %vm844, %v840, 0
        %v861 = vsel %vm844, %v841, 0
        %v864 = vsel %vm844, %v842, 0
        %v867 = vsel %vm844, %v843, 0
        %869 = vmatpush.bf16.xpose.msra.mxu0 0
        %870 = vmatpush.bf16.xpose.msra.mxu0 0
        %871 = vmatpush.bf16.xpose.msra.mxu0 0
        %872 = vmatpush.bf16.xpose.msra.mxu0 0
        %873 = vmatpush.bf16.xpose.msra.mxu0 %v867
        %874 = vmatpush.bf16.xpose.msra.mxu0 %v864
        %875 = vmatpush.bf16.xpose.msra.mxu0 %v861
        %876 = vmatpush.bf16.xpose.msra.mxu0 %v858
        %877 = vmatmul.bf16.gmra.mxu0 %v846
        %v878 = vpop.f32.mrf.mxu0
        %v879 = vadd.f32 0.0, %v878
        %v880 = vpop.f32.mrf.mxu0
        %v881 = vadd.f32 0.0, %v880
        %882 = vmatmul.bf16.gmra.mxu0 %v849
        %v883 = vpop.f32.mrf.mxu0
        %v884 = vadd.f32 0.0, %v883
        %v885 = vpop.f32.mrf.mxu0
        %v886 = vadd.f32 0.0, %v885
        %887 = vmatmul.bf16.gmra.mxu0 %v852
        %v888 = vpop.f32.mrf.mxu0
        %v889 = vadd.f32 0.0, %v888
        %v890 = vpop.f32.mrf.mxu0
        %v891 = vadd.f32 0.0, %v890
        %892 = vmatmul.bf16.gmra.mxu0 %v855
        %v893 = vpop.f32.mrf.mxu0
        %v894 = vadd.f32 0.0, %v893
        %v895 = vpop.f32.mrf.mxu0
        %v896 = vadd.f32 0.0, %v895
        %897 = vdwg.mxu0
        %v898 = vsel %vm844, %v879, -inf
        %899 = vmax.xlane.f32.xlu0 %v898
        %v900 = vpop.xlane.xlu0 %899
        %v901 = vsel %vm844, %v881, -inf
        %902 = vmax.xlane.f32.xlu0 %v901
        %v903 = vpop.xlane.xlu0 %902
        %v904 = vsel %vm844, %v884, -inf
        %905 = vmax.xlane.f32.xlu0 %v904
        %v906 = vpop.xlane.xlu0 %905
        %v907 = vsel %vm844, %v886, -inf
        %908 = vmax.xlane.f32.xlu0 %v907
        %v909 = vpop.xlane.xlu0 %908
        %v910 = vsel %vm844, %v889, -inf
        %911 = vmax.xlane.f32.xlu0 %v910
        %v912 = vpop.xlane.xlu0 %911
        %v913 = vsel %vm844, %v891, -inf
        %914 = vmax.xlane.f32.xlu0 %v913
        %v915 = vpop.xlane.xlu0 %914
        %v916 = vsel %vm844, %v894, -inf
        %917 = vmax.xlane.f32.xlu0 %v916
        %v918 = vpop.xlane.xlu0 %917
        %v919 = vsel %vm844, %v896, -inf
        %920 = vmax.xlane.f32.xlu0 %v919
        %v921 = vpop.xlane.xlu0 %920
        %v922 = vsub.f32 %v879, %v900
        %v923 = vsub.f32 %v881, %v903
        %v924 = vsub.f32 %v884, %v906
        %v925 = vsub.f32 %v886, %v909
        %v926 = vsub.f32 %v889, %v912
        %v927 = vsub.f32 %v891, %v915
        %v928 = vsub.f32 %v894, %v918
        %v929 = vsub.f32 %v896, %v921
        %v930 = vmul.f32 %v922, 1.442695
        %v931 = vpow.pop %v930
        %v932 = vmul.f32 %v923, 1.442695
        %v933 = vpow.pop %v932
        %v934 = vmul.f32 %v924, 1.442695
        %v935 = vpow.pop %v934
        %v936 = vmul.f32 %v925, 1.442695
        %v937 = vpow.pop %v936
        %v938 = vmul.f32 %v926, 1.442695
        %v939 = vpow.pop %v938
        %v940 = vmul.f32 %v927, 1.442695
        %v941 = vpow.pop %v940
        %v942 = vmul.f32 %v928, 1.442695
        %v943 = vpow.pop %v942
        %v944 = vmul.f32 %v929, 1.442695
        %v945 = vpow.pop %v944
        %v946 = vsel %vm844, %v931, 0.0
        %947 = vadd.xlane.f32.xlu0 %v946
        %v948 = vpop.xlane.xlu0 %947
        %v949 = vsel %vm844, %v933, 0.0
        %950 = vadd.xlane.f32.xlu0 %v949
        %v951 = vpop.xlane.xlu0 %950
        %v952 = vsel %vm844, %v935, 0.0
        %953 = vadd.xlane.f32.xlu0 %v952
        %v954 = vpop.xlane.xlu0 %953
        %v955 = vsel %vm844, %v937, 0.0
        %956 = vadd.xlane.f32.xlu0 %v955
        %v957 = vpop.xlane.xlu0 %956
        %v958 = vsel %vm844, %v939, 0.0
        %959 = vadd.xlane.f32.xlu0 %v958
        %v960 = vpop.xlane.xlu0 %959
        %v961 = vsel %vm844, %v941, 0.0
        %962 = vadd.xlane.f32.xlu0 %v961
        %v963 = vpop.xlane.xlu0 %962
        %v964 = vsel %vm844, %v943, 0.0
        %965 = vadd.xlane.f32.xlu0 %v964
        %v966 = vpop.xlane.xlu0 %965
        %v967 = vsel %vm844, %v945, 0.0
        %968 = vadd.xlane.f32.xlu0 %v967
        %v969 = vpop.xlane.xlu0 %968
        %v970 = vrcp.pop %v948
        %v971 = vrcp.pop %v951
        %v972 = vrcp.pop %v954
        %v973 = vrcp.pop %v957
        %v974 = vrcp.pop %v960
        %v975 = vrcp.pop %v963
        %v976 = vrcp.pop %v966
        %v977 = vrcp.pop %v969
        %v978 = vmul.f32 %v931, %v970
        %v979 = vmul.f32 %v933, %v971
        %v980 = vmul.f32 %v935, %v972
        %v981 = vmul.f32 %v937, %v973
        %v982 = vmul.f32 %v939, %v974
        %v983 = vmul.f32 %v941, %v975
        %v984 = vmul.f32 %v943, %v976
        %v985 = vmul.f32 %v945, %v977
        %v986 = vpack.c.bf16 %v979, %v978
        %v987 = vpack.c.bf16 %v981, %v980
        %v988 = vpack.c.bf16 %v983, %v982
        %v989 = vpack.c.bf16 %v985, %v984
        %v998 = vunpack.c.l.b16 %v796
        %v999 = vunpack.c.l.b16 %v797
        %v1000 = vunpack.c.l.b16 %v798
        %v1001 = vunpack.c.l.b16 %v799
        %v1002 = vunpack.c.l.b16 %v800
        %v1003 = vunpack.c.l.b16 %v801
        %v1004 = vunpack.c.l.b16 %v802
        %v1005 = vunpack.c.l.b16 %v803
        %v1006 = vpack.c.b16 %v999, %v998
        %v1007 = vpack.c.b16 %v1001, %v1000
        %v1008 = vpack.c.b16 %v1003, %v1002
        %v1009 = vpack.c.b16 %v1005, %v1004
        %v1015 = vsel %vm844, %v986, 0
        %v1018 = vsel %vm844, %v987, 0
        %v1021 = vsel %vm844, %v988, 0
        %v1024 = vsel %vm844, %v989, 0
        %1026 = vmatpush.bf16.msra.mxu0 0
        %1027 = vmatpush.bf16.msra.mxu0 0
        %1028 = vmatpush.bf16.msra.mxu0 0
        %1029 = vmatpush.bf16.msra.mxu0 0
        %1030 = vmatpush.bf16.msra.mxu0 %v1009
        %1031 = vmatpush.bf16.msra.mxu0 %v1008
        %1032 = vmatpush.bf16.msra.mxu0 %v1007
        %1033 = vmatpush.bf16.msra.mxu0 %v1006
        %1034 = vmatmul.bf16.gmra.mxu0 %v1015
        %v1035 = vpop.f32.mrf.mxu0
        %v1036 = vadd.f32 0.0, %v1035
        %v1037 = vpop.f32.mrf.mxu0
        %v1038 = vadd.f32 0.0, %v1037
        %1039 = vmatmul.bf16.gmra.mxu0 %v1018
        %v1040 = vpop.f32.mrf.mxu0
        %v1041 = vadd.f32 0.0, %v1040
        %v1042 = vpop.f32.mrf.mxu0
        %v1043 = vadd.f32 0.0, %v1042
        %1044 = vmatmul.bf16.gmra.mxu0 %v1021
        %v1045 = vpop.f32.mrf.mxu0
        %v1046 = vadd.f32 0.0, %v1045
        %v1047 = vpop.f32.mrf.mxu0
        %v1048 = vadd.f32 0.0, %v1047
        %1049 = vmatmul.bf16.gmra.mxu0 %v1024
        %v1050 = vpop.f32.mrf.mxu0
        %v1051 = vadd.f32 0.0, %v1050
        %v1052 = vpop.f32.mrf.mxu0
        %v1053 = vadd.f32 0.0, %v1052
        %1054 = vdwg.mxu0
        %v1055 = vpack.c.bf16 %v1036, %v1036
        %v1056 = vpack.c.bf16 %v1038, %v1038
        %v1057 = vpack.c.bf16 %v1041, %v1041
        %v1058 = vpack.c.bf16 %v1043, %v1043
        %v1059 = vpack.c.bf16 %v1046, %v1046
        %v1060 = vpack.c.bf16 %v1048, %v1048
        %v1061 = vpack.c.bf16 %v1051, %v1051
        %v1062 = vpack.c.bf16 %v1053, %v1053
        %1063 = vrot.lane.b32.xlu0 %v820, 64
        %v1064 = vpop.permute.xlu0 %1063
        %1065 = vrot.lane.b32.xlu0 %v821, 64
        %v1066 = vpop.permute.xlu0 %1065
        %1067 = vrot.lane.b32.xlu0 %v822, 64
        %v1068 = vpop.permute.xlu0 %1067
        %1069 = vrot.lane.b32.xlu0 %v823, 64
        %v1070 = vpop.permute.xlu0 %1069
        %1071 = vrot.lane.b32.xlu0 %v840, 64
        %v1072 = vpop.permute.xlu0 %1071
        %1073 = vrot.lane.b32.xlu0 %v841, 64
        %v1074 = vpop.permute.xlu0 %1073
        %1075 = vrot.lane.b32.xlu0 %v842, 64
        %v1076 = vpop.permute.xlu0 %1075
        %1077 = vrot.lane.b32.xlu0 %v843, 64
        %v1078 = vpop.permute.xlu0 %1077
        %v1080 = vsel %vm844, %v1064, 0
        %v1083 = vsel %vm844, %v1066, 0
        %v1086 = vsel %vm844, %v1068, 0
        %v1089 = vsel %vm844, %v1070, 0
        %v1092 = vsel %vm844, %v1072, 0
        %v1095 = vsel %vm844, %v1074, 0
        %v1098 = vsel %vm844, %v1076, 0
        %v1101 = vsel %vm844, %v1078, 0
        %1103 = vmatpush.bf16.xpose.msra.mxu0 0
        %1104 = vmatpush.bf16.xpose.msra.mxu0 0
        %1105 = vmatpush.bf16.xpose.msra.mxu0 0
        %1106 = vmatpush.bf16.xpose.msra.mxu0 0
        %1107 = vmatpush.bf16.xpose.msra.mxu0 %v1101
        %1108 = vmatpush.bf16.xpose.msra.mxu0 %v1098
        %1109 = vmatpush.bf16.xpose.msra.mxu0 %v1095
        %1110 = vmatpush.bf16.xpose.msra.mxu0 %v1092
        %1111 = vmatmul.bf16.gmra.mxu0 %v1080
        %v1112 = vpop.f32.mrf.mxu0
        %v1113 = vadd.f32 0.0, %v1112
        %v1114 = vpop.f32.mrf.mxu0
        %v1115 = vadd.f32 0.0, %v1114
        %1116 = vmatmul.bf16.gmra.mxu0 %v1083
        %v1117 = vpop.f32.mrf.mxu0
        %v1118 = vadd.f32 0.0, %v1117
        %v1119 = vpop.f32.mrf.mxu0
        %v1120 = vadd.f32 0.0, %v1119
        %1121 = vmatmul.bf16.gmra.mxu0 %v1086
        %v1122 = vpop.f32.mrf.mxu0
        %v1123 = vadd.f32 0.0, %v1122
        %v1124 = vpop.f32.mrf.mxu0
        %v1125 = vadd.f32 0.0, %v1124
        %1126 = vmatmul.bf16.gmra.mxu0 %v1089
        %v1127 = vpop.f32.mrf.mxu0
        %v1128 = vadd.f32 0.0, %v1127
        %v1129 = vpop.f32.mrf.mxu0
        %v1130 = vadd.f32 0.0, %v1129
        %1131 = vdwg.mxu0
        %v1132 = vsel %vm844, %v1113, -inf
        %1133 = vmax.xlane.f32.xlu0 %v1132
        %v1134 = vpop.xlane.xlu0 %1133
        %v1135 = vsel %vm844, %v1115, -inf
        %1136 = vmax.xlane.f32.xlu0 %v1135
        %v1137 = vpop.xlane.xlu0 %1136
        %v1138 = vsel %vm844, %v1118, -inf
        %1139 = vmax.xlane.f32.xlu0 %v1138
        %v1140 = vpop.xlane.xlu0 %1139
        %v1141 = vsel %vm844, %v1120, -inf
        %1142 = vmax.xlane.f32.xlu0 %v1141
        %v1143 = vpop.xlane.xlu0 %1142
        %v1144 = vsel %vm844, %v1123, -inf
        %1145 = vmax.xlane.f32.xlu0 %v1144
        %v1146 = vpop.xlane.xlu0 %1145
        %v1147 = vsel %vm844, %v1125, -inf
        %1148 = vmax.xlane.f32.xlu0 %v1147
        %v1149 = vpop.xlane.xlu0 %1148
        %v1150 = vsel %vm844, %v1128, -inf
        %1151 = vmax.xlane.f32.xlu0 %v1150
        %v1152 = vpop.xlane.xlu0 %1151
        %v1153 = vsel %vm844, %v1130, -inf
        %1154 = vmax.xlane.f32.xlu0 %v1153
        %v1155 = vpop.xlane.xlu0 %1154
        %v1156 = vsub.f32 %v1113, %v1134
        %v1157 = vsub.f32 %v1115, %v1137
        %v1158 = vsub.f32 %v1118, %v1140
        %v1159 = vsub.f32 %v1120, %v1143
        %v1160 = vsub.f32 %v1123, %v1146
        %v1161 = vsub.f32 %v1125, %v1149
        %v1162 = vsub.f32 %v1128, %v1152
        %v1163 = vsub.f32 %v1130, %v1155
        %v1164 = vmul.f32 %v1156, 1.442695
        %v1165 = vpow.pop %v1164
        %v1166 = vmul.f32 %v1157, 1.442695
        %v1167 = vpow.pop %v1166
        %v1168 = vmul.f32 %v1158, 1.442695
        %v1169 = vpow.pop %v1168
        %v1170 = vmul.f32 %v1159, 1.442695
        %v1171 = vpow.pop %v1170
        %v1172 = vmul.f32 %v1160, 1.442695
        %v1173 = vpow.pop %v1172
        %v1174 = vmul.f32 %v1161, 1.442695
        %v1175 = vpow.pop %v1174
        %v1176 = vmul.f32 %v1162, 1.442695
        %v1177 = vpow.pop %v1176
        %v1178 = vmul.f32 %v1163, 1.442695
        %v1179 = vpow.pop %v1178
        %v1180 = vsel %vm844, %v1165, 0.0
        %1181 = vadd.xlane.f32.xlu0 %v1180
        %v1182 = vpop.xlane.xlu0 %1181
        %v1183 = vsel %vm844, %v1167, 0.0
        %1184 = vadd.xlane.f32.xlu0 %v1183
        %v1185 = vpop.xlane.xlu0 %1184
        %v1186 = vsel %vm844, %v1169, 0.0
        %1187 = vadd.xlane.f32.xlu0 %v1186
        %v1188 = vpop.xlane.xlu0 %1187
        %v1189 = vsel %vm844, %v1171, 0.0
        %1190 = vadd.xlane.f32.xlu0 %v1189
        %v1191 = vpop.xlane.xlu0 %1190
        %v1192 = vsel %vm844, %v1173, 0.0
        %1193 = vadd.xlane.f32.xlu0 %v1192
        %v1194 = vpop.xlane.xlu0 %1193
        %v1195 = vsel %vm844, %v1175, 0.0
        %1196 = vadd.xlane.f32.xlu0 %v1195
        %v1197 = vpop.xlane.xlu0 %1196
        %v1198 = vsel %vm844, %v1177, 0.0
        %1199 = vadd.xlane.f32.xlu0 %v1198
        %v1200 = vpop.xlane.xlu0 %1199
        %v1201 = vsel %vm844, %v1179, 0.0
        %1202 = vadd.xlane.f32.xlu0 %v1201
        %v1203 = vpop.xlane.xlu0 %1202
        %v1204 = vrcp.pop %v1182
        %v1205 = vrcp.pop %v1185
        %v1206 = vrcp.pop %v1188
        %v1207 = vrcp.pop %v1191
        %v1208 = vrcp.pop %v1194
        %v1209 = vrcp.pop %v1197
        %v1210 = vrcp.pop %v1200
        %v1211 = vrcp.pop %v1203
        %v1212 = vmul.f32 %v1165, %v1204
        %v1213 = vmul.f32 %v1167, %v1205
        %v1214 = vmul.f32 %v1169, %v1206
        %v1215 = vmul.f32 %v1171, %v1207
        %v1216 = vmul.f32 %v1173, %v1208
        %v1217 = vmul.f32 %v1175, %v1209
        %v1218 = vmul.f32 %v1177, %v1210
        %v1219 = vmul.f32 %v1179, %v1211
        %v1220 = vpack.c.bf16 %v1213, %v1212
        %v1221 = vpack.c.bf16 %v1215, %v1214
        %v1222 = vpack.c.bf16 %v1217, %v1216
        %v1223 = vpack.c.bf16 %v1219, %v1218
        %1224 = vrot.lane.b32.xlu0 %v1006, 64
        %v1225 = vpop.permute.xlu0 %1224
        %1226 = vrot.lane.b32.xlu0 %v1007, 64
        %v1227 = vpop.permute.xlu0 %1226
        %1228 = vrot.lane.b32.xlu0 %v1008, 64
        %v1229 = vpop.permute.xlu0 %1228
        %1230 = vrot.lane.b32.xlu0 %v1009, 64
        %v1231 = vpop.permute.xlu0 %1230
        %v1237 = vsel %vm844, %v1220, 0
        %v1240 = vsel %vm844, %v1221, 0
        %v1243 = vsel %vm844, %v1222, 0
        %v1246 = vsel %vm844, %v1223, 0
        %1248 = vmatpush.bf16.msra.mxu0 0
        %1249 = vmatpush.bf16.msra.mxu0 0
        %1250 = vmatpush.bf16.msra.mxu0 0
        %1251 = vmatpush.bf16.msra.mxu0 0
        %1252 = vmatpush.bf16.msra.mxu0 %v1231
        %1253 = vmatpush.bf16.msra.mxu0 %v1229
        %1254 = vmatpush.bf16.msra.mxu0 %v1227
        %1255 = vmatpush.bf16.msra.mxu0 %v1225
        %1256 = vmatmul.bf16.gmra.mxu0 %v1237
        %v1257 = vpop.f32.mrf.mxu0
        %v1258 = vadd.f32 0.0, %v1257
        %v1259 = vpop.f32.mrf.mxu0
        %v1260 = vadd.f32 0.0, %v1259
        %1261 = vmatmul.bf16.gmra.mxu0 %v1240
        %v1262 = vpop.f32.mrf.mxu0
        %v1263 = vadd.f32 0.0, %v1262
        %v1264 = vpop.f32.mrf.mxu0
        %v1265 = vadd.f32 0.0, %v1264
        %1266 = vmatmul.bf16.gmra.mxu0 %v1243
        %v1267 = vpop.f32.mrf.mxu0
        %v1268 = vadd.f32 0.0, %v1267
        %v1269 = vpop.f32.mrf.mxu0
        %v1270 = vadd.f32 0.0, %v1269
        %1271 = vmatmul.bf16.gmra.mxu0 %v1246
        %v1272 = vpop.f32.mrf.mxu0
        %v1273 = vadd.f32 0.0, %v1272
        %v1274 = vpop.f32.mrf.mxu0
        %v1275 = vadd.f32 0.0, %v1274
        %1276 = vdwg.mxu0
        %v1277 = vpack.c.bf16 %v1258, %v1258
        %v1278 = vpack.c.bf16 %v1260, %v1260
        %v1279 = vpack.c.bf16 %v1263, %v1263
        %v1280 = vpack.c.bf16 %v1265, %v1265
        %v1281 = vpack.c.bf16 %v1268, %v1268
        %v1282 = vpack.c.bf16 %v1270, %v1270
        %v1283 = vpack.c.bf16 %v1273, %v1273
        %v1284 = vpack.c.bf16 %v1275, %v1275
        %v1293 = vunpack.c.l.b16 %v1055
        %v1294 = vunpack.c.l.b16 %v1056
        %v1295 = vunpack.c.l.b16 %v1057
        %v1296 = vunpack.c.l.b16 %v1058
        %v1297 = vunpack.c.l.b16 %v1059
        %v1298 = vunpack.c.l.b16 %v1060
        %v1299 = vunpack.c.l.b16 %v1061
        %v1300 = vunpack.c.l.b16 %v1062
        %v1301 = vpack.c.b16 %v1294, %v1293
        %v1302 = vpack.c.b16 %v1296, %v1295
        %v1303 = vpack.c.b16 %v1298, %v1297
        %v1304 = vpack.c.b16 %v1300, %v1299
        %v1313 = vunpack.c.l.b16 %v1277
        %v1314 = vunpack.c.l.b16 %v1278
        %v1315 = vunpack.c.l.b16 %v1279
        %v1316 = vunpack.c.l.b16 %v1280
        %v1317 = vunpack.c.l.b16 %v1281
        %v1318 = vunpack.c.l.b16 %v1282
        %v1319 = vunpack.c.l.b16 %v1283
        %v1320 = vunpack.c.l.b16 %v1284
        %v1321 = vpack.c.b16 %v1314, %v1313
        %v1322 = vpack.c.b16 %v1316, %v1315
        %v1323 = vpack.c.b16 %v1318, %v1317
        %v1324 = vpack.c.b16 %v1320, %v1319
        %1325 = vrot.lane.b32.xlu0 %v1321, 64
        %v1326 = vpop.permute.xlu0 %1325
        %1327 = vrot.lane.b32.xlu0 %v1322, 64
        %v1328 = vpop.permute.xlu0 %1327
        %1329 = vrot.lane.b32.xlu0 %v1323, 64
        %v1330 = vpop.permute.xlu0 %1329
        %1331 = vrot.lane.b32.xlu0 %v1324, 64
        %v1332 = vpop.permute.xlu0 %1331
        %v1335 = vsel %vm844, %v1301, %v1326
        %v1338 = vsel %vm844, %v1302, %v1328
        %v1341 = vsel %vm844, %v1303, %v1330
        %v1344 = vsel %vm844, %v1304, %v1332
        %v1349 = vunpack.c.l.b16 %v1335
        %v1350 = vunpack.c.h.b16 %v1335
        %v1351 = vunpack.c.l.b16 %v1338
        %v1352 = vunpack.c.h.b16 %v1338
        %v1353 = vunpack.c.l.b16 %v1341
        %v1354 = vunpack.c.h.b16 %v1341
        %v1355 = vunpack.c.l.b16 %v1344
        %v1356 = vunpack.c.h.b16 %v1344
        %v1357 = vpack.c.b16 %v1349, %v1349
        %v1358 = vpack.c.b16 %v1350, %v1350
        %v1359 = vpack.c.b16 %v1351, %v1351
        %v1360 = vpack.c.b16 %v1352, %v1352
        %v1361 = vpack.c.b16 %v1353, %v1353
        %v1362 = vpack.c.b16 %v1354, %v1354
        %v1363 = vpack.c.b16 %v1355, %v1355
        %v1364 = vpack.c.b16 %v1356, %v1356
        %1373 = vst [vmem:[#allocation2] sm:$0xf] %v1357
        %1374 = vst [vmem:[#allocation2 + $0x4] sm:$0xf] %v1358
        %1375 = vst [vmem:[#allocation2 + $0x8] sm:$0xf] %v1359
        %1376 = vst [vmem:[#allocation2 + $0xc] sm:$0xf] %v1360
        %1377 = vst [vmem:[#allocation2 + $0x10] sm:$0xf] %v1361
        %1378 = vst [vmem:[#allocation2 + $0x14] sm:$0xf] %v1362
        %1379 = vst [vmem:[#allocation2 + $0x18] sm:$0xf] %v1363
        %1380 = vst [vmem:[#allocation2 + $0x1c] sm:$0xf] %v1364
        %v1381 = vpack.c.bf16 %v663, %v663
        %v1382 = vpack.c.bf16 %v665, %v665
        %v1383 = vpack.c.bf16 %v668, %v668
        %v1384 = vpack.c.bf16 %v670, %v670
        %v1385 = vpack.c.bf16 %v673, %v673
        %v1386 = vpack.c.bf16 %v675, %v675
        %v1387 = vpack.c.bf16 %v678, %v678
        %v1388 = vpack.c.bf16 %v680, %v680
        %v1389 = vpack.c.bf16 %v712, %v712
        %v1390 = vpack.c.bf16 %v714, %v714
        %v1391 = vpack.c.bf16 %v717, %v717
        %v1392 = vpack.c.bf16 %v719, %v719
        %v1393 = vpack.c.bf16 %v722, %v722
        %v1394 = vpack.c.bf16 %v724, %v724
        %v1395 = vpack.c.bf16 %v727, %v727
        %v1396 = vpack.c.bf16 %v729, %v729
        %v1397 = vpack.c.bf16 %v761, %v761
        %v1398 = vpack.c.bf16 %v763, %v763
        %v1399 = vpack.c.bf16 %v766, %v766
        %v1400 = vpack.c.bf16 %v768, %v768
        %v1401 = vpack.c.bf16 %v771, %v771
        %v1402 = vpack.c.bf16 %v773, %v773
        %v1403 = vpack.c.bf16 %v776, %v776
        %v1404 = vpack.c.bf16 %v778, %v778
        %v1413 = vunpack.c.l.b16 %v1381
        %v1414 = vunpack.c.l.b16 %v1382
        %v1415 = vunpack.c.l.b16 %v1383
        %v1416 = vunpack.c.l.b16 %v1384
        %v1417 = vunpack.c.l.b16 %v1385
        %v1418 = vunpack.c.l.b16 %v1386
        %v1419 = vunpack.c.l.b16 %v1387
        %v1420 = vunpack.c.l.b16 %v1388
        %v1421 = vpack.c.b16 %v1414, %v1413
        %v1422 = vpack.c.b16 %v1416, %v1415
        %v1423 = vpack.c.b16 %v1418, %v1417
        %v1424 = vpack.c.b16 %v1420, %v1419
        %v1433 = vunpack.c.l.b16 %v1389
        %v1434 = vunpack.c.l.b16 %v1390
        %v1435 = vunpack.c.l.b16 %v1391
        %v1436 = vunpack.c.l.b16 %v1392
        %v1437 = vunpack.c.l.b16 %v1393
        %v1438 = vunpack.c.l.b16 %v1394
        %v1439 = vunpack.c.l.b16 %v1395
        %v1440 = vunpack.c.l.b16 %v1396
        %v1441 = vpack.c.b16 %v1434, %v1433
        %v1442 = vpack.c.b16 %v1436, %v1435
        %v1443 = vpack.c.b16 %v1438, %v1437
        %v1444 = vpack.c.b16 %v1440, %v1439
        %v1446 = vsel %vm844, %v1421, 0
        %v1449 = vsel %vm844, %v1422, 0
        %v1452 = vsel %vm844, %v1423, 0
        %v1455 = vsel %vm844, %v1424, 0
        %v1458 = vsel %vm844, %v1441, 0
        %v1461 = vsel %vm844, %v1442, 0
        %v1464 = vsel %vm844, %v1443, 0
        %v1467 = vsel %vm844, %v1444, 0
        %1469 = vmatpush.bf16.xpose.msra.mxu0 0
        %1470 = vmatpush.bf16.xpose.msra.mxu0 0
        %1471 = vmatpush.bf16.xpose.msra.mxu0 0
        %1472 = vmatpush.bf16.xpose.msra.mxu0 0
        %1473 = vmatpush.bf16.xpose.msra.mxu0 %v1467
        %1474 = vmatpush.bf16.xpose.msra.mxu0 %v1464
        %1475 = vmatpush.bf16.xpose.msra.mxu0 %v1461
        %1476 = vmatpush.bf16.xpose.msra.mxu0 %v1458
        %1477 = vmatmul.bf16.gmra.mxu0 %v1446
        %v1478 = vpop.f32.mrf.mxu0
        %v1479 = vadd.f32 0.0, %v1478
        %v1480 = vpop.f32.mrf.mxu0
        %v1481 = vadd.f32 0.0, %v1480
        %1482 = vmatmul.bf16.gmra.mxu0 %v1449
        %v1483 = vpop.f32.mrf.mxu0
        %v1484 = vadd.f32 0.0, %v1483
        %v1485 = vpop.f32.mrf.mxu0
        %v1486 = vadd.f32 0.0, %v1485
        %1487 = vmatmul.bf16.gmra.mxu0 %v1452
        %v1488 = vpop.f32.mrf.mxu0
        %v1489 = vadd.f32 0.0, %v1488
        %v1490 = vpop.f32.mrf.mxu0
        %v1491 = vadd.f32 0.0, %v1490
        %1492 = vmatmul.bf16.gmra.mxu0 %v1455
        %v1493 = vpop.f32.mrf.mxu0
        %v1494 = vadd.f32 0.0, %v1493
        %v1495 = vpop.f32.mrf.mxu0
        %v1496 = vadd.f32 0.0, %v1495
        %1497 = vdwg.mxu0
        %v1498 = vsel %vm844, %v1479, -inf
        %1499 = vmax.xlane.f32.xlu0 %v1498
        %v1500 = vpop.xlane.xlu0 %1499
        %v1501 = vsel %vm844, %v1481, -inf
        %1502 = vmax.xlane.f32.xlu0 %v1501
        %v1503 = vpop.xlane.xlu0 %1502
        %v1504 = vsel %vm844, %v1484, -inf
        %1505 = vmax.xlane.f32.xlu0 %v1504
        %v1506 = vpop.xlane.xlu0 %1505
        %v1507 = vsel %vm844, %v1486, -inf
        %1508 = vmax.xlane.f32.xlu0 %v1507
        %v1509 = vpop.xlane.xlu0 %1508
        %v1510 = vsel %vm844, %v1489, -inf
        %1511 = vmax.xlane.f32.xlu0 %v1510
        %v1512 = vpop.xlane.xlu0 %1511
        %v1513 = vsel %vm844, %v1491, -inf
        %1514 = vmax.xlane.f32.xlu0 %v1513
        %v1515 = vpop.xlane.xlu0 %1514
        %v1516 = vsel %vm844, %v1494, -inf
        %1517 = vmax.xlane.f32.xlu0 %v1516
        %v1518 = vpop.xlane.xlu0 %1517
        %v1519 = vsel %vm844, %v1496, -inf
        %1520 = vmax.xlane.f32.xlu0 %v1519
        %v1521 = vpop.xlane.xlu0 %1520
        %v1522 = vsub.f32 %v1479, %v1500
        %v1523 = vsub.f32 %v1481, %v1503
        %v1524 = vsub.f32 %v1484, %v1506
        %v1525 = vsub.f32 %v1486, %v1509
        %v1526 = vsub.f32 %v1489, %v1512
        %v1527 = vsub.f32 %v1491, %v1515
        %v1528 = vsub.f32 %v1494, %v1518
        %v1529 = vsub.f32 %v1496, %v1521
        %v1530 = vmul.f32 %v1522, 1.442695
        %v1531 = vpow.pop %v1530
        %v1532 = vmul.f32 %v1523, 1.442695
        %v1533 = vpow.pop %v1532
        %v1534 = vmul.f32 %v1524, 1.442695
        %v1535 = vpow.pop %v1534
        %v1536 = vmul.f32 %v1525, 1.442695
        %v1537 = vpow.pop %v1536
        %v1538 = vmul.f32 %v1526, 1.442695
        %v1539 = vpow.pop %v1538
        %v1540 = vmul.f32 %v1527, 1.442695
        %v1541 = vpow.pop %v1540
        %v1542 = vmul.f32 %v1528, 1.442695
        %v1543 = vpow.pop %v1542
        %v1544 = vmul.f32 %v1529, 1.442695
        %v1545 = vpow.pop %v1544
        %v1546 = vsel %vm844, %v1531, 0.0
        %1547 = vadd.xlane.f32.xlu0 %v1546
        %v1548 = vpop.xlane.xlu0 %1547
        %v1549 = vsel %vm844, %v1533, 0.0
        %1550 = vadd.xlane.f32.xlu0 %v1549
        %v1551 = vpop.xlane.xlu0 %1550
        %v1552 = vsel %vm844, %v1535, 0.0
        %1553 = vadd.xlane.f32.xlu0 %v1552
        %v1554 = vpop.xlane.xlu0 %1553
        %v1555 = vsel %vm844, %v1537, 0.0
        %1556 = vadd.xlane.f32.xlu0 %v1555
        %v1557 = vpop.xlane.xlu0 %1556
        %v1558 = vsel %vm844, %v1539, 0.0
        %1559 = vadd.xlane.f32.xlu0 %v1558
        %v1560 = vpop.xlane.xlu0 %1559
        %v1561 = vsel %vm844, %v1541, 0.0
        %1562 = vadd.xlane.f32.xlu0 %v1561
        %v1563 = vpop.xlane.xlu0 %1562
        %v1564 = vsel %vm844, %v1543, 0.0
        %1565 = vadd.xlane.f32.xlu0 %v1564
        %v1566 = vpop.xlane.xlu0 %1565
        %v1567 = vsel %vm844, %v1545, 0.0
        %1568 = vadd.xlane.f32.xlu0 %v1567
        %v1569 = vpop.xlane.xlu0 %1568
        %v1570 = vrcp.pop %v1548
        %v1571 = vrcp.pop %v1551
        %v1572 = vrcp.pop %v1554
        %v1573 = vrcp.pop %v1557
        %v1574 = vrcp.pop %v1560
        %v1575 = vrcp.pop %v1563
        %v1576 = vrcp.pop %v1566
        %v1577 = vrcp.pop %v1569
        %v1578 = vmul.f32 %v1531, %v1570
        %v1579 = vmul.f32 %v1533, %v1571
        %v1580 = vmul.f32 %v1535, %v1572
        %v1581 = vmul.f32 %v1537, %v1573
        %v1582 = vmul.f32 %v1539, %v1574
        %v1583 = vmul.f32 %v1541, %v1575
        %v1584 = vmul.f32 %v1543, %v1576
        %v1585 = vmul.f32 %v1545, %v1577
        %v1586 = vpack.c.bf16 %v1579, %v1578
        %v1587 = vpack.c.bf16 %v1581, %v1580
        %v1588 = vpack.c.bf16 %v1583, %v1582
        %v1589 = vpack.c.bf16 %v1585, %v1584
        %v1598 = vunpack.c.l.b16 %v1397
        %v1599 = vunpack.c.l.b16 %v1398
        %v1600 = vunpack.c.l.b16 %v1399
        %v1601 = vunpack.c.l.b16 %v1400
        %v1602 = vunpack.c.l.b16 %v1401
        %v1603 = vunpack.c.l.b16 %v1402
        %v1604 = vunpack.c.l.b16 %v1403
        %v1605 = vunpack.c.l.b16 %v1404
        %v1606 = vpack.c.b16 %v1599, %v1598
        %v1607 = vpack.c.b16 %v1601, %v1600
        %v1608 = vpack.c.b16 %v1603, %v1602
        %v1609 = vpack.c.b16 %v1605, %v1604
        %v1615 = vsel %vm844, %v1586, 0
        %v1618 = vsel %vm844, %v1587, 0
        %v1621 = vsel %vm844, %v1588, 0
        %v1624 = vsel %vm844, %v1589, 0
        %1626 = vmatpush.bf16.msra.mxu0 0
        %1627 = vmatpush.bf16.msra.mxu0 0
        %1628 = vmatpush.bf16.msra.mxu0 0
        %1629 = vmatpush.bf16.msra.mxu0 0
        %1630 = vmatpush.bf16.msra.mxu0 %v1609
        %1631 = vmatpush.bf16.msra.mxu0 %v1608
        %1632 = vmatpush.bf16.msra.mxu0 %v1607
        %1633 = vmatpush.bf16.msra.mxu0 %v1606
        %1634 = vmatmul.bf16.gmra.mxu0 %v1615
        %v1635 = vpop.f32.mrf.mxu0
        %v1636 = vadd.f32 0.0, %v1635
        %v1637 = vpop.f32.mrf.mxu0
        %v1638 = vadd.f32 0.0, %v1637
        %1639 = vmatmul.bf16.gmra.mxu0 %v1618
        %v1640 = vpop.f32.mrf.mxu0
        %v1641 = vadd.f32 0.0, %v1640
        %v1642 = vpop.f32.mrf.mxu0
        %v1643 = vadd.f32 0.0, %v1642
        %1644 = vmatmul.bf16.gmra.mxu0 %v1621
        %v1645 = vpop.f32.mrf.mxu0
        %v1646 = vadd.f32 0.0, %v1645
        %v1647 = vpop.f32.mrf.mxu0
        %v1648 = vadd.f32 0.0, %v1647
        %1649 = vmatmul.bf16.gmra.mxu0 %v1624
        %v1650 = vpop.f32.mrf.mxu0
        %v1651 = vadd.f32 0.0, %v1650
        %v1652 = vpop.f32.mrf.mxu0
        %v1653 = vadd.f32 0.0, %v1652
        %1654 = vdwg.mxu0
        %v1655 = vpack.c.bf16 %v1636, %v1636
        %v1656 = vpack.c.bf16 %v1638, %v1638
        %v1657 = vpack.c.bf16 %v1641, %v1641
        %v1658 = vpack.c.bf16 %v1643, %v1643
        %v1659 = vpack.c.bf16 %v1646, %v1646
        %v1660 = vpack.c.bf16 %v1648, %v1648
        %v1661 = vpack.c.bf16 %v1651, %v1651
        %v1662 = vpack.c.bf16 %v1653, %v1653
        %1663 = vrot.lane.b32.xlu0 %v1421, 64
        %v1664 = vpop.permute.xlu0 %1663
        %1665 = vrot.lane.b32.xlu0 %v1422, 64
        %v1666 = vpop.permute.xlu0 %1665
        %1667 = vrot.lane.b32.xlu0 %v1423, 64
        %v1668 = vpop.permute.xlu0 %1667
        %1669 = vrot.lane.b32.xlu0 %v1424, 64
        %v1670 = vpop.permute.xlu0 %1669
        %1671 = vrot.lane.b32.xlu0 %v1441, 64
        %v1672 = vpop.permute.xlu0 %1671
        %1673 = vrot.lane.b32.xlu0 %v1442, 64
        %v1674 = vpop.permute.xlu0 %1673
        %1675 = vrot.lane.b32.xlu0 %v1443, 64
        %v1676 = vpop.permute.xlu0 %1675
        %1677 = vrot.lane.b32.xlu0 %v1444, 64
        %v1678 = vpop.permute.xlu0 %1677
        %v1680 = vsel %vm844, %v1664, 0
        %v1683 = vsel %vm844, %v1666, 0
        %v1686 = vsel %vm844, %v1668, 0
        %v1689 = vsel %vm844, %v1670, 0
        %v1692 = vsel %vm844, %v1672, 0
        %v1695 = vsel %vm844, %v1674, 0
        %v1698 = vsel %vm844, %v1676, 0
        %v1701 = vsel %vm844, %v1678, 0
        %1703 = vmatpush.bf16.xpose.msra.mxu0 0
        %1704 = vmatpush.bf16.xpose.msra.mxu0 0
        %1705 = vmatpush.bf16.xpose.msra.mxu0 0
        %1706 = vmatpush.bf16.xpose.msra.mxu0 0
        %1707 = vmatpush.bf16.xpose.msra.mxu0 %v1701
        %1708 = vmatpush.bf16.xpose.msra.mxu0 %v1698
        %1709 = vmatpush.bf16.xpose.msra.mxu0 %v1695
        %1710 = vmatpush.bf16.xpose.msra.mxu0 %v1692
        %1711 = vmatmul.bf16.gmra.mxu0 %v1680
        %v1712 = vpop.f32.mrf.mxu0
        %v1713 = vadd.f32 0.0, %v1712
        %v1714 = vpop.f32.mrf.mxu0
        %v1715 = vadd.f32 0.0, %v1714
        %1716 = vmatmul.bf16.gmra.mxu0 %v1683
        %v1717 = vpop.f32.mrf.mxu0
        %v1718 = vadd.f32 0.0, %v1717
        %v1719 = vpop.f32.mrf.mxu0
        %v1720 = vadd.f32 0.0, %v1719
        %1721 = vmatmul.bf16.gmra.mxu0 %v1686
        %v1722 = vpop.f32.mrf.mxu0
        %v1723 = vadd.f32 0.0, %v1722
        %v1724 = vpop.f32.mrf.mxu0
        %v1725 = vadd.f32 0.0, %v1724
        %1726 = vmatmul.bf16.gmra.mxu0 %v1689
        %v1727 = vpop.f32.mrf.mxu0
        %v1728 = vadd.f32 0.0, %v1727
        %v1729 = vpop.f32.mrf.mxu0
        %v1730 = vadd.f32 0.0, %v1729
        %1731 = vdwg.mxu0
        %v1732 = vsel %vm844, %v1713, -inf
        %1733 = vmax.xlane.f32.xlu0 %v1732
        %v1734 = vpop.xlane.xlu0 %1733
        %v1735 = vsel %vm844, %v1715, -inf
        %1736 = vmax.xlane.f32.xlu0 %v1735
        %v1737 = vpop.xlane.xlu0 %1736
        %v1738 = vsel %vm844, %v1718, -inf
        %1739 = vmax.xlane.f32.xlu0 %v1738
        %v1740 = vpop.xlane.xlu0 %1739
        %v1741 = vsel %vm844, %v1720, -inf
        %1742 = vmax.xlane.f32.xlu0 %v1741
        %v1743 = vpop.xlane.xlu0 %1742
        %v1744 = vsel %vm844, %v1723, -inf
        %1745 = vmax.xlane.f32.xlu0 %v1744
        %v1746 = vpop.xlane.xlu0 %1745
        %v1747 = vsel %vm844, %v1725, -inf
        %1748 = vmax.xlane.f32.xlu0 %v1747
        %v1749 = vpop.xlane.xlu0 %1748
        %v1750 = vsel %vm844, %v1728, -inf
        %1751 = vmax.xlane.f32.xlu0 %v1750
        %v1752 = vpop.xlane.xlu0 %1751
        %v1753 = vsel %vm844, %v1730, -inf
        %1754 = vmax.xlane.f32.xlu0 %v1753
        %v1755 = vpop.xlane.xlu0 %1754
        %v1756 = vsub.f32 %v1713, %v1734
        %v1757 = vsub.f32 %v1715, %v1737
        %v1758 = vsub.f32 %v1718, %v1740
        %v1759 = vsub.f32 %v1720, %v1743
        %v1760 = vsub.f32 %v1723, %v1746
        %v1761 = vsub.f32 %v1725, %v1749
        %v1762 = vsub.f32 %v1728, %v1752
        %v1763 = vsub.f32 %v1730, %v1755
        %v1764 = vmul.f32 %v1756, 1.442695
        %v1765 = vpow.pop %v1764
        %v1766 = vmul.f32 %v1757, 1.442695
        %v1767 = vpow.pop %v1766
        %v1768 = vmul.f32 %v1758, 1.442695
        %v1769 = vpow.pop %v1768
        %v1770 = vmul.f32 %v1759, 1.442695
        %v1771 = vpow.pop %v1770
        %v1772 = vmul.f32 %v1760, 1.442695
        %v1773 = vpow.pop %v1772
        %v1774 = vmul.f32 %v1761, 1.442695
        %v1775 = vpow.pop %v1774
        %v1776 = vmul.f32 %v1762, 1.442695
        %v1777 = vpow.pop %v1776
        %v1778 = vmul.f32 %v1763, 1.442695
        %v1779 = vpow.pop %v1778
        %v1780 = vsel %vm844, %v1765, 0.0
        %1781 = vadd.xlane.f32.xlu0 %v1780
        %v1782 = vpop.xlane.xlu0 %1781
        %v1783 = vsel %vm844, %v1767, 0.0
        %1784 = vadd.xlane.f32.xlu0 %v1783
        %v1785 = vpop.xlane.xlu0 %1784
        %v1786 = vsel %vm844, %v1769, 0.0
        %1787 = vadd.xlane.f32.xlu0 %v1786
        %v1788 = vpop.xlane.xlu0 %1787
        %v1789 = vsel %vm844, %v1771, 0.0
        %1790 = vadd.xlane.f32.xlu0 %v1789
        %v1791 = vpop.xlane.xlu0 %1790
        %v1792 = vsel %vm844, %v1773, 0.0
        %1793 = vadd.xlane.f32.xlu0 %v1792
        %v1794 = vpop.xlane.xlu0 %1793
        %v1795 = vsel %vm844, %v1775, 0.0
        %1796 = vadd.xlane.f32.xlu0 %v1795
        %v1797 = vpop.xlane.xlu0 %1796
        %v1798 = vsel %vm844, %v1777, 0.0
        %1799 = vadd.xlane.f32.xlu0 %v1798
        %v1800 = vpop.xlane.xlu0 %1799
        %v1801 = vsel %vm844, %v1779, 0.0
        %1802 = vadd.xlane.f32.xlu0 %v1801
        %v1803 = vpop.xlane.xlu0 %1802
        %v1804 = vrcp.pop %v1782
        %v1805 = vrcp.pop %v1785
        %v1806 = vrcp.pop %v1788
        %v1807 = vrcp.pop %v1791
        %v1808 = vrcp.pop %v1794
        %v1809 = vrcp.pop %v1797
        %v1810 = vrcp.pop %v1800
        %v1811 = vrcp.pop %v1803
        %v1812 = vmul.f32 %v1765, %v1804
        %v1813 = vmul.f32 %v1767, %v1805
        %v1814 = vmul.f32 %v1769, %v1806
        %v1815 = vmul.f32 %v1771, %v1807
        %v1816 = vmul.f32 %v1773, %v1808
        %v1817 = vmul.f32 %v1775, %v1809
        %v1818 = vmul.f32 %v1777, %v1810
        %v1819 = vmul.f32 %v1779, %v1811
        %v1820 = vpack.c.bf16 %v1813, %v1812
        %v1821 = vpack.c.bf16 %v1815, %v1814
        %v1822 = vpack.c.bf16 %v1817, %v1816
        %v1823 = vpack.c.bf16 %v1819, %v1818
        %1824 = vrot.lane.b32.xlu0 %v1606, 64
        %v1825 = vpop.permute.xlu0 %1824
        %1826 = vrot.lane.b32.xlu0 %v1607, 64
        %v1827 = vpop.permute.xlu0 %1826
        %1828 = vrot.lane.b32.xlu0 %v1608, 64
        %v1829 = vpop.permute.xlu0 %1828
        %1830 = vrot.lane.b32.xlu0 %v1609, 64
        %v1831 = vpop.permute.xlu0 %1830
        %v1837 = vsel %vm844, %v1820, 0
        %v1840 = vsel %vm844, %v1821, 0
        %v1843 = vsel %vm844, %v1822, 0
        %v1846 = vsel %vm844, %v1823, 0
        %1848 = vmatpush.bf16.msra.mxu0 0
        %1849 = vmatpush.bf16.msra.mxu0 0
        %1850 = vmatpush.bf16.msra.mxu0 0
        %1851 = vmatpush.bf16.msra.mxu0 0
        %1852 = vmatpush.bf16.msra.mxu0 %v1831
        %1853 = vmatpush.bf16.msra.mxu0 %v1829
        %1854 = vmatpush.bf16.msra.mxu0 %v1827
        %1855 = vmatpush.bf16.msra.mxu0 %v1825
        %1856 = vmatmul.bf16.gmra.mxu0 %v1837
        %v1857 = vpop.f32.mrf.mxu0
        %v1858 = vadd.f32 0.0, %v1857
        %v1859 = vpop.f32.mrf.mxu0
        %v1860 = vadd.f32 0.0, %v1859
        %1861 = vmatmul.bf16.gmra.mxu0 %v1840
        %v1862 = vpop.f32.mrf.mxu0
        %v1863 = vadd.f32 0.0, %v1862
        %v1864 = vpop.f32.mrf.mxu0
        %v1865 = vadd.f32 0.0, %v1864
        %1866 = vmatmul.bf16.gmra.mxu0 %v1843
        %v1867 = vpop.f32.mrf.mxu0
        %v1868 = vadd.f32 0.0, %v1867
        %v1869 = vpop.f32.mrf.mxu0
        %v1870 = vadd.f32 0.0, %v1869
        %1871 = vmatmul.bf16.gmra.mxu0 %v1846
        %v1872 = vpop.f32.mrf.mxu0
        %v1873 = vadd.f32 0.0, %v1872
        %v1874 = vpop.f32.mrf.mxu0
        %v1875 = vadd.f32 0.0, %v1874
        %1876 = vdwg.mxu0
        %v1877 = vpack.c.bf16 %v1858, %v1858
        %v1878 = vpack.c.bf16 %v1860, %v1860
        %v1879 = vpack.c.bf16 %v1863, %v1863
        %v1880 = vpack.c.bf16 %v1865, %v1865
        %v1881 = vpack.c.bf16 %v1868, %v1868
        %v1882 = vpack.c.bf16 %v1870, %v1870
        %v1883 = vpack.c.bf16 %v1873, %v1873
        %v1884 = vpack.c.bf16 %v1875, %v1875
        %v1893 = vunpack.c.l.b16 %v1655
        %v1894 = vunpack.c.l.b16 %v1656
        %v1895 = vunpack.c.l.b16 %v1657
        %v1896 = vunpack.c.l.b16 %v1658
        %v1897 = vunpack.c.l.b16 %v1659
        %v1898 = vunpack.c.l.b16 %v1660
        %v1899 = vunpack.c.l.b16 %v1661
        %v1900 = vunpack.c.l.b16 %v1662
        %v1901 = vpack.c.b16 %v1894, %v1893
        %v1902 = vpack.c.b16 %v1896, %v1895
        %v1903 = vpack.c.b16 %v1898, %v1897
        %v1904 = vpack.c.b16 %v1900, %v1899
        %v1913 = vunpack.c.l.b16 %v1877
        %v1914 = vunpack.c.l.b16 %v1878
        %v1915 = vunpack.c.l.b16 %v1879
        %v1916 = vunpack.c.l.b16 %v1880
        %v1917 = vunpack.c.l.b16 %v1881
        %v1918 = vunpack.c.l.b16 %v1882
        %v1919 = vunpack.c.l.b16 %v1883
        %v1920 = vunpack.c.l.b16 %v1884
        %v1921 = vpack.c.b16 %v1914, %v1913
        %v1922 = vpack.c.b16 %v1916, %v1915
        %v1923 = vpack.c.b16 %v1918, %v1917
        %v1924 = vpack.c.b16 %v1920, %v1919
        %1925 = vrot.lane.b32.xlu0 %v1921, 64
        %v1926 = vpop.permute.xlu0 %1925
        %1927 = vrot.lane.b32.xlu0 %v1922, 64
        %v1928 = vpop.permute.xlu0 %1927
        %1929 = vrot.lane.b32.xlu0 %v1923, 64
        %v1930 = vpop.permute.xlu0 %1929
        %1931 = vrot.lane.b32.xlu0 %v1924, 64
        %v1932 = vpop.permute.xlu0 %1931
        %v1935 = vsel %vm844, %v1901, %v1926
        %v1938 = vsel %vm844, %v1902, %v1928
        %v1941 = vsel %vm844, %v1903, %v1930
        %v1944 = vsel %vm844, %v1904, %v1932
        %v1949 = vunpack.c.l.b16 %v1935
        %v1950 = vunpack.c.h.b16 %v1935
        %v1951 = vunpack.c.l.b16 %v1938
        %v1952 = vunpack.c.h.b16 %v1938
        %v1953 = vunpack.c.l.b16 %v1941
        %v1954 = vunpack.c.h.b16 %v1941
        %v1955 = vunpack.c.l.b16 %v1944
        %v1956 = vunpack.c.h.b16 %v1944
        %v1957 = vpack.c.b16 %v1949, %v1949
        %v1958 = vpack.c.b16 %v1950, %v1950
        %v1959 = vpack.c.b16 %v1951, %v1951
        %v1960 = vpack.c.b16 %v1952, %v1952
        %v1961 = vpack.c.b16 %v1953, %v1953
        %v1962 = vpack.c.b16 %v1954, %v1954
        %v1963 = vpack.c.b16 %v1955, %v1955
        %v1964 = vpack.c.b16 %v1956, %v1956
        %1973 = vst [vmem:[#allocation2 + $0x20] sm:$0xf] %v1957
        %1974 = vst [vmem:[#allocation2 + $0x24] sm:$0xf] %v1958
        %1975 = vst [vmem:[#allocation2 + $0x28] sm:$0xf] %v1959
        %1976 = vst [vmem:[#allocation2 + $0x2c] sm:$0xf] %v1960
        %1977 = vst [vmem:[#allocation2 + $0x30] sm:$0xf] %v1961
        %1978 = vst [vmem:[#allocation2 + $0x34] sm:$0xf] %v1962
        %1979 = vst [vmem:[#allocation2 + $0x38] sm:$0xf] %v1963
        %1980 = vst [vmem:[#allocation2 + $0x3c] sm:$0xf] %v1964
        %v1981 = vld [vmem:[#allocation2] sm:$0xf]
        %v1982 = vld [vmem:[#allocation2 + $0x4] sm:$0xf]
        %v1983 = vld [vmem:[#allocation2 + $0x8] sm:$0xf]
        %v1984 = vld [vmem:[#allocation2 + $0xc] sm:$0xf]
        %v1985 = vld [vmem:[#allocation2 + $0x10] sm:$0xf]
        %v1986 = vld [vmem:[#allocation2 + $0x14] sm:$0xf]
        %v1987 = vld [vmem:[#allocation2 + $0x18] sm:$0xf]
        %v1988 = vld [vmem:[#allocation2 + $0x1c] sm:$0xf]
        %v1989 = vld [vmem:[#allocation2 + $0x20] sm:$0xf]
        %v1990 = vld [vmem:[#allocation2 + $0x24] sm:$0xf]
        %v1991 = vld [vmem:[#allocation2 + $0x28] sm:$0xf]
        %v1992 = vld [vmem:[#allocation2 + $0x2c] sm:$0xf]
        %v1993 = vld [vmem:[#allocation2 + $0x30] sm:$0xf]
        %v1994 = vld [vmem:[#allocation2 + $0x34] sm:$0xf]
        %v1995 = vld [vmem:[#allocation2 + $0x38] sm:$0xf]
        %v1996 = vld [vmem:[#allocation2 + $0x3c] sm:$0xf]
        %v1997 = vld [vmem:[#allocation8] sm:$0xf]
        %v1998 = vld [vmem:[#allocation8 + $0x4] sm:$0xf]
        %v1999 = vld [vmem:[#allocation8 + $0x8] sm:$0xf]
        %v2000 = vld [vmem:[#allocation8 + $0xc] sm:$0xf]
        %v2001 = vld [vmem:[#allocation8 + $0x10] sm:$0xf]
        %v2002 = vld [vmem:[#allocation8 + $0x14] sm:$0xf]
        %v2003 = vld [vmem:[#allocation8 + $0x18] sm:$0xf]
        %v2004 = vld [vmem:[#allocation8 + $0x1c] sm:$0xf]
        %v2005 = vld [vmem:[#allocation8 + $0x20] sm:$0xf]
        %v2006 = vld [vmem:[#allocation8 + $0x24] sm:$0xf]
        %v2007 = vld [vmem:[#allocation8 + $0x28] sm:$0xf]
        %v2008 = vld [vmem:[#allocation8 + $0x2c] sm:$0xf]
        %v2009 = vld [vmem:[#allocation8 + $0x30] sm:$0xf]
        %v2010 = vld [vmem:[#allocation8 + $0x34] sm:$0xf]
        %v2011 = vld [vmem:[#allocation8 + $0x38] sm:$0xf]
        %v2012 = vld [vmem:[#allocation8 + $0x3c] sm:$0xf]
        %v2013 = vld [vmem:[%s3] sm:$0x1]
        %v2015 = vperm.slane %v2013, 0
        %v2033 = vunpack.c.l.b16 %v1981
        %v2034 = vunpack.c.l.b16 %v1982
        %v2035 = vunpack.c.l.b16 %v1983
        %v2036 = vunpack.c.l.b16 %v1984
        %v2037 = vunpack.c.l.b16 %v1985
        %v2038 = vunpack.c.l.b16 %v1986
        %v2039 = vunpack.c.l.b16 %v1987
        %v2040 = vunpack.c.l.b16 %v1988
        %v2041 = vunpack.c.l.b16 %v1989
        %v2042 = vunpack.c.l.b16 %v1990
        %v2043 = vunpack.c.l.b16 %v1991
        %v2044 = vunpack.c.l.b16 %v1992
        %v2045 = vunpack.c.l.b16 %v1993
        %v2046 = vunpack.c.l.b16 %v1994
        %v2047 = vunpack.c.l.b16 %v1995
        %v2048 = vunpack.c.l.b16 %v1996
        %v2049 = vpack.c.b16 %v2034, %v2033
        %v2050 = vpack.c.b16 %v2036, %v2035
        %v2051 = vpack.c.b16 %v2038, %v2037
        %v2052 = vpack.c.b16 %v2040, %v2039
        %v2053 = vpack.c.b16 %v2042, %v2041
        %v2054 = vpack.c.b16 %v2044, %v2043
        %v2055 = vpack.c.b16 %v2046, %v2045
        %v2056 = vpack.c.b16 %v2048, %v2047
        %v2081 = vunpack.c.l.b16 %v1997
        %v2082 = vunpack.c.l.b16 %v1998
        %v2083 = vunpack.c.l.b16 %v1999
        %v2084 = vunpack.c.l.b16 %v2000
        %v2085 = vunpack.c.l.b16 %v2001
        %v2086 = vunpack.c.l.b16 %v2002
        %v2087 = vunpack.c.l.b16 %v2003
        %v2088 = vunpack.c.l.b16 %v2004
        %v2089 = vunpack.c.l.b16 %v2005
        %v2090 = vunpack.c.l.b16 %v2006
        %v2091 = vunpack.c.l.b16 %v2007
        %v2092 = vunpack.c.l.b16 %v2008
        %v2093 = vunpack.c.l.b16 %v2009
        %v2094 = vunpack.c.l.b16 %v2010
        %v2095 = vunpack.c.l.b16 %v2011
        %v2096 = vunpack.c.l.b16 %v2012
        %v2097 = vpack.c.b16 %v2082, %v2081
        %v2098 = vpack.c.b16 %v2084, %v2083
        %v2099 = vpack.c.b16 %v2086, %v2085
        %v2100 = vpack.c.b16 %v2088, %v2087
        %v2101 = vpack.c.b16 %v2090, %v2089
        %v2102 = vpack.c.b16 %v2092, %v2091
        %v2103 = vpack.c.b16 %v2094, %v2093
        %v2104 = vpack.c.b16 %v2096, %v2095
        %2113 = vmatpush.bf16.msra.mxu0 %v2104
        %2114 = vmatpush.bf16.msra.mxu0 %v2103
        %2115 = vmatpush.bf16.msra.mxu0 %v2102
        %2116 = vmatpush.bf16.msra.mxu0 %v2101
        %2117 = vmatpush.bf16.msra.mxu0 %v2100
        %2118 = vmatpush.bf16.msra.mxu0 %v2099
        %2119 = vmatpush.bf16.msra.mxu0 %v2098
        %2120 = vmatpush.bf16.msra.mxu0 %v2097
        %2121 = vmatmul.bf16.gmra.mxu0 %v2049
        %v2122 = vpop.f32.mrf.mxu0
        %v2123 = vadd.f32 %v2015, %v2122
        %v2124 = vpop.f32.mrf.mxu0
        %v2125 = vadd.f32 %v2015, %v2124
        %2126 = vmatmul.bf16.gmra.mxu0 %v2050
        %v2127 = vpop.f32.mrf.mxu0
        %v2128 = vadd.f32 %v2015, %v2127
        %v2129 = vpop.f32.mrf.mxu0
        %v2130 = vadd.f32 %v2015, %v2129
        %2131 = vmatmul.bf16.gmra.mxu0 %v2051
        %v2132 = vpop.f32.mrf.mxu0
        %v2133 = vadd.f32 %v2015, %v2132
        %v2134 = vpop.f32.mrf.mxu0
        %v2135 = vadd.f32 %v2015, %v2134
        %2136 = vmatmul.bf16.gmra.mxu0 %v2052
        %v2137 = vpop.f32.mrf.mxu0
        %v2138 = vadd.f32 %v2015, %v2137
        %v2139 = vpop.f32.mrf.mxu0
        %v2140 = vadd.f32 %v2015, %v2139
        %2141 = vmatmul.bf16.gmra.mxu0 %v2053
        %v2142 = vpop.f32.mrf.mxu0
        %v2143 = vadd.f32 %v2015, %v2142
        %v2144 = vpop.f32.mrf.mxu0
        %v2145 = vadd.f32 %v2015, %v2144
        %2146 = vmatmul.bf16.gmra.mxu0 %v2054
        %v2147 = vpop.f32.mrf.mxu0
        %v2148 = vadd.f32 %v2015, %v2147
        %v2149 = vpop.f32.mrf.mxu0
        %v2150 = vadd.f32 %v2015, %v2149
        %2151 = vmatmul.bf16.gmra.mxu0 %v2055
        %v2152 = vpop.f32.mrf.mxu0
        %v2153 = vadd.f32 %v2015, %v2152
        %v2154 = vpop.f32.mrf.mxu0
        %v2155 = vadd.f32 %v2015, %v2154
        %2156 = vmatmul.bf16.gmra.mxu0 %v2056
        %v2157 = vpop.f32.mrf.mxu0
        %v2158 = vadd.f32 %v2015, %v2157
        %v2159 = vpop.f32.mrf.mxu0
        %v2160 = vadd.f32 %v2015, %v2159
        %2161 = vdwg.mxu0
        %v2162 = vadd.f32 %v449, %v2123
        %v2163 = vadd.f32 %v450, %v2125
        %v2164 = vadd.f32 %v451, %v2128
        %v2165 = vadd.f32 %v452, %v2130
        %v2166 = vadd.f32 %v453, %v2133
        %v2167 = vadd.f32 %v454, %v2135
        %v2168 = vadd.f32 %v455, %v2138
        %v2169 = vadd.f32 %v456, %v2140
        %v2170 = vadd.f32 %v457, %v2143
        %v2171 = vadd.f32 %v458, %v2145
        %v2172 = vadd.f32 %v459, %v2148
        %v2173 = vadd.f32 %v460, %v2150
        %v2174 = vadd.f32 %v461, %v2153
        %v2175 = vadd.f32 %v462, %v2155
        %v2176 = vadd.f32 %v463, %v2158
        %v2177 = vadd.f32 %v464, %v2160
        %v2178 = vld [vmem:[%s4] sm:$0x1]
        %v2179 = vld [vmem:[%s5] sm:$0x1]
        %2180 = vadd.xlane.f32.xlu0 %v2162
        %v2181 = vpop.xlane.xlu0 %2180
        %2182 = vadd.xlane.f32.xlu0 %v2163
        %v2183 = vpop.xlane.xlu0 %2182
        %2184 = vadd.xlane.f32.xlu0 %v2164
        %v2185 = vpop.xlane.xlu0 %2184
        %2186 = vadd.xlane.f32.xlu0 %v2165
        %v2187 = vpop.xlane.xlu0 %2186
        %2188 = vadd.xlane.f32.xlu0 %v2166
        %v2189 = vpop.xlane.xlu0 %2188
        %2190 = vadd.xlane.f32.xlu0 %v2167
        %v2191 = vpop.xlane.xlu0 %2190
        %2192 = vadd.xlane.f32.xlu0 %v2168
        %v2193 = vpop.xlane.xlu0 %2192
        %2194 = vadd.xlane.f32.xlu0 %v2169
        %v2195 = vpop.xlane.xlu0 %2194
        %2196 = vadd.xlane.f32.xlu0 %v2170
        %v2197 = vpop.xlane.xlu0 %2196
        %2198 = vadd.xlane.f32.xlu0 %v2171
        %v2199 = vpop.xlane.xlu0 %2198
        %2200 = vadd.xlane.f32.xlu0 %v2172
        %v2201 = vpop.xlane.xlu0 %2200
        %2202 = vadd.xlane.f32.xlu0 %v2173
        %v2203 = vpop.xlane.xlu0 %2202
        %2204 = vadd.xlane.f32.xlu0 %v2174
        %v2205 = vpop.xlane.xlu0 %2204
        %2206 = vadd.xlane.f32.xlu0 %v2175
        %v2207 = vpop.xlane.xlu0 %2206
        %2208 = vadd.xlane.f32.xlu0 %v2176
        %v2209 = vpop.xlane.xlu0 %2208
        %2210 = vadd.xlane.f32.xlu0 %v2177
        %v2211 = vpop.xlane.xlu0 %2210
        %v2212 = vrcp.pop 128.0
        %v2213 = vmul.f32 128.0, %v2212
        %v2214 = vsub.f32 1.0, %v2213
        %v2215 = vmul.f32 %v2212, %v2214
        %v2216 = vadd.f32 %v2212, %v2215
        %vm2217 = vweird.f32 %v2212
        %v2218 = vsel %vm2217, %v2212, %v2216
        %v2219 = vmul.f32 %v2181, %v2218
        %v2220 = vmul.f32 %v2183, %v2218
        %v2221 = vmul.f32 %v2185, %v2218
        %v2222 = vmul.f32 %v2187, %v2218
        %v2223 = vmul.f32 %v2189, %v2218
        %v2224 = vmul.f32 %v2191, %v2218
        %v2225 = vmul.f32 %v2193, %v2218
        %v2226 = vmul.f32 %v2195, %v2218
        %v2227 = vmul.f32 %v2197, %v2218
        %v2228 = vmul.f32 %v2199, %v2218
        %v2229 = vmul.f32 %v2201, %v2218
        %v2230 = vmul.f32 %v2203, %v2218
        %v2231 = vmul.f32 %v2205, %v2218
        %v2232 = vmul.f32 %v2207, %v2218
        %v2233 = vmul.f32 %v2209, %v2218
        %v2234 = vmul.f32 %v2211, %v2218
        %v2235 = vsub.f32 %v2162, %v2219
        %v2236 = vsub.f32 %v2163, %v2220
        %v2237 = vsub.f32 %v2164, %v2221
        %v2238 = vsub.f32 %v2165, %v2222
        %v2239 = vsub.f32 %v2166, %v2223
        %v2240 = vsub.f32 %v2167, %v2224
        %v2241 = vsub.f32 %v2168, %v2225
        %v2242 = vsub.f32 %v2169, %v2226
        %v2243 = vsub.f32 %v2170, %v2227
        %v2244 = vsub.f32 %v2171, %v2228
        %v2245 = vsub.f32 %v2172, %v2229
        %v2246 = vsub.f32 %v2173, %v2230
        %v2247 = vsub.f32 %v2174, %v2231
        %v2248 = vsub.f32 %v2175, %v2232
        %v2249 = vsub.f32 %v2176, %v2233
        %v2250 = vsub.f32 %v2177, %v2234
        %v2251 = vmul.f32 %v2235, %v2235
        %v2252 = vmul.f32 %v2236, %v2236
        %v2253 = vmul.f32 %v2237, %v2237
        %v2254 = vmul.f32 %v2238, %v2238
        %v2255 = vmul.f32 %v2239, %v2239
        %v2256 = vmul.f32 %v2240, %v2240
        %v2257 = vmul.f32 %v2241, %v2241
        %v2258 = vmul.f32 %v2242, %v2242
        %v2259 = vmul.f32 %v2243, %v2243
        %v2260 = vmul.f32 %v2244, %v2244
        %v2261 = vmul.f32 %v2245, %v2245
        %v2262 = vmul.f32 %v2246, %v2246
        %v2263 = vmul.f32 %v2247, %v2247
        %v2264 = vmul.f32 %v2248, %v2248
        %v2265 = vmul.f32 %v2249, %v2249
        %v2266 = vmul.f32 %v2250, %v2250
        %2267 = vadd.xlane.f32.xlu0 %v2251
        %v2268 = vpop.xlane.xlu0 %2267
        %2269 = vadd.xlane.f32.xlu0 %v2252
        %v2270 = vpop.xlane.xlu0 %2269
        %2271 = vadd.xlane.f32.xlu0 %v2253
        %v2272 = vpop.xlane.xlu0 %2271
        %2273 = vadd.xlane.f32.xlu0 %v2254
        %v2274 = vpop.xlane.xlu0 %2273
        %2275 = vadd.xlane.f32.xlu0 %v2255
        %v2276 = vpop.xlane.xlu0 %2275
        %2277 = vadd.xlane.f32.xlu0 %v2256
        %v2278 = vpop.xlane.xlu0 %2277
        %2279 = vadd.xlane.f32.xlu0 %v2257
        %v2280 = vpop.xlane.xlu0 %2279
        %2281 = vadd.xlane.f32.xlu0 %v2258
        %v2282 = vpop.xlane.xlu0 %2281
        %2283 = vadd.xlane.f32.xlu0 %v2259
        %v2284 = vpop.xlane.xlu0 %2283
        %2285 = vadd.xlane.f32.xlu0 %v2260
        %v2286 = vpop.xlane.xlu0 %2285
        %2287 = vadd.xlane.f32.xlu0 %v2261
        %v2288 = vpop.xlane.xlu0 %2287
        %2289 = vadd.xlane.f32.xlu0 %v2262
        %v2290 = vpop.xlane.xlu0 %2289
        %2291 = vadd.xlane.f32.xlu0 %v2263
        %v2292 = vpop.xlane.xlu0 %2291
        %2293 = vadd.xlane.f32.xlu0 %v2264
        %v2294 = vpop.xlane.xlu0 %2293
        %2295 = vadd.xlane.f32.xlu0 %v2265
        %v2296 = vpop.xlane.xlu0 %2295
        %2297 = vadd.xlane.f32.xlu0 %v2266
        %v2298 = vpop.xlane.xlu0 %2297
        %v2299 = vmul.f32 %v2268, %v2218
        %v2300 = vmul.f32 %v2270, %v2218
        %v2301 = vmul.f32 %v2272, %v2218
        %v2302 = vmul.f32 %v2274, %v2218
        %v2303 = vmul.f32 %v2276, %v2218
        %v2304 = vmul.f32 %v2278, %v2218
        %v2305 = vmul.f32 %v2280, %v2218
        %v2306 = vmul.f32 %v2282, %v2218
        %v2307 = vmul.f32 %v2284, %v2218
        %v2308 = vmul.f32 %v2286, %v2218
        %v2309 = vmul.f32 %v2288, %v2218
        %v2310 = vmul.f32 %v2290, %v2218
        %v2311 = vmul.f32 %v2292, %v2218
        %v2312 = vmul.f32 %v2294, %v2218
        %v2313 = vmul.f32 %v2296, %v2218
        %v2314 = vmul.f32 %v2298, %v2218
        %v2315 = vadd.f32 %v2299, 1e-06
        %v2316 = vadd.f32 %v2300, 1e-06
        %v2317 = vadd.f32 %v2301, 1e-06
        %v2318 = vadd.f32 %v2302, 1e-06
        %v2319 = vadd.f32 %v2303, 1e-06
        %v2320 = vadd.f32 %v2304, 1e-06
        %v2321 = vadd.f32 %v2305, 1e-06
        %v2322 = vadd.f32 %v2306, 1e-06
        %v2323 = vadd.f32 %v2307, 1e-06
        %v2324 = vadd.f32 %v2308, 1e-06
        %v2325 = vadd.f32 %v2309, 1e-06
        %v2326 = vadd.f32 %v2310, 1e-06
        %v2327 = vadd.f32 %v2311, 1e-06
        %v2328 = vadd.f32 %v2312, 1e-06
        %v2329 = vadd.f32 %v2313, 1e-06
        %v2330 = vadd.f32 %v2314, 1e-06
        %v2331 = vrsqrt.pop %v2315
        %v2332 = vmul.f32 %v2331, %v2315
        %v2333 = vmul.f32 %v2332, %v2331
        %v2334 = vmul.f32 0.5, %v2333
        %v2335 = vsub.f32 1.5, %v2334
        %v2336 = vmul.f32 %v2331, %v2335
        %vm2337 = vweird.f32 %v2315
        %vm2338 = vweird.f32 %v2331
        %vm2339 = vmor %vm2337, %vm2338
        %v2340 = vsel %vm2339, %v2331, %v2336
        %v2341 = vrsqrt.pop %v2316
        %v2342 = vmul.f32 %v2341, %v2316
        %v2343 = vmul.f32 %v2342, %v2341
        %v2344 = vmul.f32 0.5, %v2343
        %v2345 = vsub.f32 1.5, %v2344
        %v2346 = vmul.f32 %v2341, %v2345
        %vm2347 = vweird.f32 %v2316
        %vm2348 = vweird.f32 %v2341
        %vm2349 = vmor %vm2347, %vm2348
        %v2350 = vsel %vm2349, %v2341, %v2346
        %v2351 = vrsqrt.pop %v2317
        %v2352 = vmul.f32 %v2351, %v2317
        %v2353 = vmul.f32 %v2352, %v2351
        %v2354 = vmul.f32 0.5, %v2353
        %v2355 = vsub.f32 1.5, %v2354
        %v2356 = vmul.f32 %v2351, %v2355
        %vm2357 = vweird.f32 %v2317
        %vm2358 = vweird.f32 %v2351
        %vm2359 = vmor %vm2357, %vm2358
        %v2360 = vsel %vm2359, %v2351, %v2356
        %v2361 = vrsqrt.pop %v2318
        %v2362 = vmul.f32 %v2361, %v2318
        %v2363 = vmul.f32 %v2362, %v2361
        %v2364 = vmul.f32 0.5, %v2363
        %v2365 = vsub.f32 1.5, %v2364
        %v2366 = vmul.f32 %v2361, %v2365
        %vm2367 = vweird.f32 %v2318
        %vm2368 = vweird.f32 %v2361
        %vm2369 = vmor %vm2367, %vm2368
        %v2370 = vsel %vm2369, %v2361, %v2366
        %v2371 = vrsqrt.pop %v2319
        %v2372 = vmul.f32 %v2371, %v2319
        %v2373 = vmul.f32 %v2372, %v2371
        %v2374 = vmul.f32 0.5, %v2373
        %v2375 = vsub.f32 1.5, %v2374
        %v2376 = vmul.f32 %v2371, %v2375
        %vm2377 = vweird.f32 %v2319
        %vm2378 = vweird.f32 %v2371
        %vm2379 = vmor %vm2377, %vm2378
        %v2380 = vsel %vm2379, %v2371, %v2376
        %v2381 = vrsqrt.pop %v2320
        %v2382 = vmul.f32 %v2381, %v2320
        %v2383 = vmul.f32 %v2382, %v2381
        %v2384 = vmul.f32 0.5, %v2383
        %v2385 = vsub.f32 1.5, %v2384
        %v2386 = vmul.f32 %v2381, %v2385
        %vm2387 = vweird.f32 %v2320
        %vm2388 = vweird.f32 %v2381
        %vm2389 = vmor %vm2387, %vm2388
        %v2390 = vsel %vm2389, %v2381, %v2386
        %v2391 = vrsqrt.pop %v2321
        %v2392 = vmul.f32 %v2391, %v2321
        %v2393 = vmul.f32 %v2392, %v2391
        %v2394 = vmul.f32 0.5, %v2393
        %v2395 = vsub.f32 1.5, %v2394
        %v2396 = vmul.f32 %v2391, %v2395
        %vm2397 = vweird.f32 %v2321
        %vm2398 = vweird.f32 %v2391
        %vm2399 = vmor %vm2397, %vm2398
        %v2400 = vsel %vm2399, %v2391, %v2396
        %v2401 = vrsqrt.pop %v2322
        %v2402 = vmul.f32 %v2401, %v2322
        %v2403 = vmul.f32 %v2402, %v2401
        %v2404 = vmul.f32 0.5, %v2403
        %v2405 = vsub.f32 1.5, %v2404
        %v2406 = vmul.f32 %v2401, %v2405
        %vm2407 = vweird.f32 %v2322
        %vm2408 = vweird.f32 %v2401
        %vm2409 = vmor %vm2407, %vm2408
        %v2410 = vsel %vm2409, %v2401, %v2406
        %v2411 = vrsqrt.pop %v2323
        %v2412 = vmul.f32 %v2411, %v2323
        %v2413 = vmul.f32 %v2412, %v2411
        %v2414 = vmul.f32 0.5, %v2413
        %v2415 = vsub.f32 1.5, %v2414
        %v2416 = vmul.f32 %v2411, %v2415
        %vm2417 = vweird.f32 %v2323
        %vm2418 = vweird.f32 %v2411
        %vm2419 = vmor %vm2417, %vm2418
        %v2420 = vsel %vm2419, %v2411, %v2416
        %v2421 = vrsqrt.pop %v2324
        %v2422 = vmul.f32 %v2421, %v2324
        %v2423 = vmul.f32 %v2422, %v2421
        %v2424 = vmul.f32 0.5, %v2423
        %v2425 = vsub.f32 1.5, %v2424
        %v2426 = vmul.f32 %v2421, %v2425
        %vm2427 = vweird.f32 %v2324
        %vm2428 = vweird.f32 %v2421
        %vm2429 = vmor %vm2427, %vm2428
        %v2430 = vsel %vm2429, %v2421, %v2426
        %v2431 = vrsqrt.pop %v2325
        %v2432 = vmul.f32 %v2431, %v2325
        %v2433 = vmul.f32 %v2432, %v2431
        %v2434 = vmul.f32 0.5, %v2433
        %v2435 = vsub.f32 1.5, %v2434
        %v2436 = vmul.f32 %v2431, %v2435
        %vm2437 = vweird.f32 %v2325
        %vm2438 = vweird.f32 %v2431
        %vm2439 = vmor %vm2437, %vm2438
        %v2440 = vsel %vm2439, %v2431, %v2436
        %v2441 = vrsqrt.pop %v2326
        %v2442 = vmul.f32 %v2441, %v2326
        %v2443 = vmul.f32 %v2442, %v2441
        %v2444 = vmul.f32 0.5, %v2443
        %v2445 = vsub.f32 1.5, %v2444
        %v2446 = vmul.f32 %v2441, %v2445
        %vm2447 = vweird.f32 %v2326
        %vm2448 = vweird.f32 %v2441
        %vm2449 = vmor %vm2447, %vm2448
        %v2450 = vsel %vm2449, %v2441, %v2446
        %v2451 = vrsqrt.pop %v2327
        %v2452 = vmul.f32 %v2451, %v2327
        %v2453 = vmul.f32 %v2452, %v2451
        %v2454 = vmul.f32 0.5, %v2453
        %v2455 = vsub.f32 1.5, %v2454
        %v2456 = vmul.f32 %v2451, %v2455
        %vm2457 = vweird.f32 %v2327
        %vm2458 = vweird.f32 %v2451
        %vm2459 = vmor %vm2457, %vm2458
        %v2460 = vsel %vm2459, %v2451, %v2456
        %v2461 = vrsqrt.pop %v2328
        %v2462 = vmul.f32 %v2461, %v2328
        %v2463 = vmul.f32 %v2462, %v2461
        %v2464 = vmul.f32 0.5, %v2463
        %v2465 = vsub.f32 1.5, %v2464
        %v2466 = vmul.f32 %v2461, %v2465
        %vm2467 = vweird.f32 %v2328
        %vm2468 = vweird.f32 %v2461
        %vm2469 = vmor %vm2467, %vm2468
        %v2470 = vsel %vm2469, %v2461, %v2466
        %v2471 = vrsqrt.pop %v2329
        %v2472 = vmul.f32 %v2471, %v2329
        %v2473 = vmul.f32 %v2472, %v2471
        %v2474 = vmul.f32 0.5, %v2473
        %v2475 = vsub.f32 1.5, %v2474
        %v2476 = vmul.f32 %v2471, %v2475
        %vm2477 = vweird.f32 %v2329
        %vm2478 = vweird.f32 %v2471
        %vm2479 = vmor %vm2477, %vm2478
        %v2480 = vsel %vm2479, %v2471, %v2476
        %v2481 = vrsqrt.pop %v2330
        %v2482 = vmul.f32 %v2481, %v2330
        %v2483 = vmul.f32 %v2482, %v2481
        %v2484 = vmul.f32 0.5, %v2483
        %v2485 = vsub.f32 1.5, %v2484
        %v2486 = vmul.f32 %v2481, %v2485
        %vm2487 = vweird.f32 %v2330
        %vm2488 = vweird.f32 %v2481
        %vm2489 = vmor %vm2487, %vm2488
        %v2490 = vsel %vm2489, %v2481, %v2486
        %v2491 = vmul.f32 %v2235, %v2340
        %v2492 = vmul.f32 %v2236, %v2350
        %v2493 = vmul.f32 %v2237, %v2360
        %v2494 = vmul.f32 %v2238, %v2370
        %v2495 = vmul.f32 %v2239, %v2380
        %v2496 = vmul.f32 %v2240, %v2390
        %v2497 = vmul.f32 %v2241, %v2400
        %v2498 = vmul.f32 %v2242, %v2410
        %v2499 = vmul.f32 %v2243, %v2420
        %v2500 = vmul.f32 %v2244, %v2430
        %v2501 = vmul.f32 %v2245, %v2440
        %v2502 = vmul.f32 %v2246, %v2450
        %v2503 = vmul.f32 %v2247, %v2460
        %v2504 = vmul.f32 %v2248, %v2470
        %v2505 = vmul.f32 %v2249, %v2480
        %v2506 = vmul.f32 %v2250, %v2490
        %v2508 = vperm.slane %v2178, 0
        %v2510 = vmul.f32 %v2491, %v2508
        %v2511 = vmul.f32 %v2492, %v2508
        %v2512 = vmul.f32 %v2493, %v2508
        %v2513 = vmul.f32 %v2494, %v2508
        %v2514 = vmul.f32 %v2495, %v2508
        %v2515 = vmul.f32 %v2496, %v2508
        %v2516 = vmul.f32 %v2497, %v2508
        %v2517 = vmul.f32 %v2498, %v2508
        %v2518 = vmul.f32 %v2499, %v2508
        %v2519 = vmul.f32 %v2500, %v2508
        %v2520 = vmul.f32 %v2501, %v2508
        %v2521 = vmul.f32 %v2502, %v2508
        %v2522 = vmul.f32 %v2503, %v2508
        %v2523 = vmul.f32 %v2504, %v2508
        %v2524 = vmul.f32 %v2505, %v2508
        %v2525 = vmul.f32 %v2506, %v2508
        %v2527 = vperm.slane %v2179, 0
        %v2529 = vadd.f32 %v2510, %v2527
        %v2530 = vadd.f32 %v2511, %v2527
        %v2531 = vadd.f32 %v2512, %v2527
        %v2532 = vadd.f32 %v2513, %v2527
        %v2533 = vadd.f32 %v2514, %v2527
        %v2534 = vadd.f32 %v2515, %v2527
        %v2535 = vadd.f32 %v2516, %v2527
        %v2536 = vadd.f32 %v2517, %v2527
        %v2537 = vadd.f32 %v2518, %v2527
        %v2538 = vadd.f32 %v2519, %v2527
        %v2539 = vadd.f32 %v2520, %v2527
        %v2540 = vadd.f32 %v2521, %v2527
        %v2541 = vadd.f32 %v2522, %v2527
        %v2542 = vadd.f32 %v2523, %v2527
        %v2543 = vadd.f32 %v2524, %v2527
        %v2544 = vadd.f32 %v2525, %v2527
        %v2545 = vpack.c.bf16 %v2530, %v2529
        %v2546 = vpack.c.bf16 %v2532, %v2531
        %v2547 = vpack.c.bf16 %v2534, %v2533
        %v2548 = vpack.c.bf16 %v2536, %v2535
        %v2549 = vpack.c.bf16 %v2538, %v2537
        %v2550 = vpack.c.bf16 %v2540, %v2539
        %v2551 = vpack.c.bf16 %v2542, %v2541
        %v2552 = vpack.c.bf16 %v2544, %v2543
        %v2553 = vld [vmem:[#allocation9] sm:$0xff]
        %v2554 = vld [vmem:[#allocation9 + $0x8] sm:$0xff]
        %v2555 = vld [vmem:[#allocation9 + $0x10] sm:$0xff]
        %v2556 = vld [vmem:[#allocation9 + $0x18] sm:$0xff]
        %v2557 = vld [vmem:[#allocation9 + $0x20] sm:$0xff]
        %v2558 = vld [vmem:[#allocation9 + $0x28] sm:$0xff]
        %v2559 = vld [vmem:[#allocation9 + $0x30] sm:$0xff]
        %v2560 = vld [vmem:[#allocation9 + $0x38] sm:$0xff]
        %v2561 = vld [vmem:[#allocation9 + $0x40] sm:$0xff]
        %v2562 = vld [vmem:[#allocation9 + $0x48] sm:$0xff]
        %v2563 = vld [vmem:[#allocation9 + $0x50] sm:$0xff]
        %v2564 = vld [vmem:[#allocation9 + $0x58] sm:$0xff]
        %v2565 = vld [vmem:[#allocation9 + $0x60] sm:$0xff]
        %v2566 = vld [vmem:[#allocation9 + $0x68] sm:$0xff]
        %v2567 = vld [vmem:[#allocation9 + $0x70] sm:$0xff]
        %v2568 = vld [vmem:[#allocation9 + $0x78] sm:$0xff]
        %v2569 = vld [vmem:[#allocation9 + $0x80] sm:$0xff]
        %v2570 = vld [vmem:[#allocation9 + $0x88] sm:$0xff]
        %v2571 = vld [vmem:[#allocation9 + $0x90] sm:$0xff]
        %v2572 = vld [vmem:[#allocation9 + $0x98] sm:$0xff]
        %v2573 = vld [vmem:[#allocation9 + $0xa0] sm:$0xff]
        %v2574 = vld [vmem:[#allocation9 + $0xa8] sm:$0xff]
        %v2575 = vld [vmem:[#allocation9 + $0xb0] sm:$0xff]
        %v2576 = vld [vmem:[#allocation9 + $0xb8] sm:$0xff]
        %v2577 = vld [vmem:[#allocation9 + $0xc0] sm:$0xff]
        %v2578 = vld [vmem:[#allocation9 + $0xc8] sm:$0xff]
        %v2579 = vld [vmem:[#allocation9 + $0xd0] sm:$0xff]
        %v2580 = vld [vmem:[#allocation9 + $0xd8] sm:$0xff]
        %v2581 = vld [vmem:[#allocation9 + $0xe0] sm:$0xff]
        %v2582 = vld [vmem:[#allocation9 + $0xe8] sm:$0xff]
        %v2583 = vld [vmem:[#allocation9 + $0xf0] sm:$0xff]
        %v2584 = vld [vmem:[#allocation9 + $0xf8] sm:$0xff]
        %v2617 = vunpack.c.l.b16 %v2553
        %v2618 = vunpack.c.h.b16 %v2553
        %v2619 = vunpack.c.l.b16 %v2554
        %v2620 = vunpack.c.h.b16 %v2554
        %v2621 = vunpack.c.l.b16 %v2555
        %v2622 = vunpack.c.h.b16 %v2555
        %v2623 = vunpack.c.l.b16 %v2556
        %v2624 = vunpack.c.h.b16 %v2556
        %v2625 = vunpack.c.l.b16 %v2557
        %v2626 = vunpack.c.h.b16 %v2557
        %v2627 = vunpack.c.l.b16 %v2558
        %v2628 = vunpack.c.h.b16 %v2558
        %v2629 = vunpack.c.l.b16 %v2559
        %v2630 = vunpack.c.h.b16 %v2559
        %v2631 = vunpack.c.l.b16 %v2560
        %v2632 = vunpack.c.h.b16 %v2560
        %v2633 = vunpack.c.l.b16 %v2561
        %v2634 = vunpack.c.h.b16 %v2561
        %v2635 = vunpack.c.l.b16 %v2562
        %v2636 = vunpack.c.h.b16 %v2562
        %v2637 = vunpack.c.l.b16 %v2563
        %v2638 = vunpack.c.h.b16 %v2563
        %v2639 = vunpack.c.l.b16 %v2564
        %v2640 = vunpack.c.h.b16 %v2564
        %v2641 = vunpack.c.l.b16 %v2565
        %v2642 = vunpack.c.h.b16 %v2565
        %v2643 = vunpack.c.l.b16 %v2566
        %v2644 = vunpack.c.h.b16 %v2566
        %v2645 = vunpack.c.l.b16 %v2567
        %v2646 = vunpack.c.h.b16 %v2567
        %v2647 = vunpack.c.l.b16 %v2568
        %v2648 = vunpack.c.h.b16 %v2568
        %v2649 = vunpack.c.l.b16 %v2569
        %v2650 = vunpack.c.h.b16 %v2569
        %v2651 = vunpack.c.l.b16 %v2570
        %v2652 = vunpack.c.h.b16 %v2570
        %v2653 = vunpack.c.l.b16 %v2571
        %v2654 = vunpack.c.h.b16 %v2571
        %v2655 = vunpack.c.l.b16 %v2572
        %v2656 = vunpack.c.h.b16 %v2572
        %v2657 = vunpack.c.l.b16 %v2573
        %v2658 = vunpack.c.h.b16 %v2573
        %v2659 = vunpack.c.l.b16 %v2574
        %v2660 = vunpack.c.h.b16 %v2574
        %v2661 = vunpack.c.l.b16 %v2575
        %v2662 = vunpack.c.h.b16 %v2575
        %v2663 = vunpack.c.l.b16 %v2576
        %v2664 = vunpack.c.h.b16 %v2576
        %v2665 = vunpack.c.l.b16 %v2577
        %v2666 = vunpack.c.h.b16 %v2577
        %v2667 = vunpack.c.l.b16 %v2578
        %v2668 = vunpack.c.h.b16 %v2578
        %v2669 = vunpack.c.l.b16 %v2579
        %v2670 = vunpack.c.h.b16 %v2579
        %v2671 = vunpack.c.l.b16 %v2580
        %v2672 = vunpack.c.h.b16 %v2580
        %v2673 = vunpack.c.l.b16 %v2581
        %v2674 = vunpack.c.h.b16 %v2581
        %v2675 = vunpack.c.l.b16 %v2582
        %v2676 = vunpack.c.h.b16 %v2582
        %v2677 = vunpack.c.l.b16 %v2583
        %v2678 = vunpack.c.h.b16 %v2583
        %v2679 = vunpack.c.l.b16 %v2584
        %v2680 = vunpack.c.h.b16 %v2584
        %v2681 = vpack.c.b16 %v2621, %v2617
        %v2682 = vpack.c.b16 %v2622, %v2618
        %v2683 = vpack.c.b16 %v2623, %v2619
        %v2684 = vpack.c.b16 %v2624, %v2620
        %v2685 = vpack.c.b16 %v2629, %v2625
        %v2686 = vpack.c.b16 %v2630, %v2626
        %v2687 = vpack.c.b16 %v2631, %v2627
        %v2688 = vpack.c.b16 %v2632, %v2628
        %v2689 = vpack.c.b16 %v2637, %v2633
        %v2690 = vpack.c.b16 %v2638, %v2634
        %v2691 = vpack.c.b16 %v2639, %v2635
        %v2692 = vpack.c.b16 %v2640, %v2636
        %v2693 = vpack.c.b16 %v2645, %v2641
        %v2694 = vpack.c.b16 %v2646, %v2642
        %v2695 = vpack.c.b16 %v2647, %v2643
        %v2696 = vpack.c.b16 %v2648, %v2644
        %v2697 = vpack.c.b16 %v2653, %v2649
        %v2698 = vpack.c.b16 %v2654, %v2650
        %v2699 = vpack.c.b16 %v2655, %v2651
        %v2700 = vpack.c.b16 %v2656, %v2652
        %v2701 = vpack.c.b16 %v2661, %v2657
        %v2702 = vpack.c.b16 %v2662, %v2658
        %v2703 = vpack.c.b16 %v2663, %v2659
        %v2704 = vpack.c.b16 %v2664, %v2660
        %v2705 = vpack.c.b16 %v2669, %v2665
        %v2706 = vpack.c.b16 %v2670, %v2666
        %v2707 = vpack.c.b16 %v2671, %v2667
        %v2708 = vpack.c.b16 %v2672, %v2668
        %v2709 = vpack.c.b16 %v2677, %v2673
        %v2710 = vpack.c.b16 %v2678, %v2674
        %v2711 = vpack.c.b16 %v2679, %v2675
        %v2712 = vpack.c.b16 %v2680, %v2676
        %2745 = vmatpush.bf16.msra.mxu0 %v2709
        %2746 = vmatpush.bf16.msra.mxu0 %v2705
        %2747 = vmatpush.bf16.msra.mxu0 %v2701
        %2748 = vmatpush.bf16.msra.mxu0 %v2697
        %2749 = vmatpush.bf16.msra.mxu0 %v2693
        %2750 = vmatpush.bf16.msra.mxu0 %v2689
        %2751 = vmatpush.bf16.msra.mxu0 %v2685
        %2752 = vmatpush.bf16.msra.mxu0 %v2681
        %2753 = vmatmul.bf16.gmra.mxu0 %v2545
        %v2754 = vpop.f32.mrf.mxu0
        %v2755 = vadd.f32 0.0, %v2754
        %v2756 = vpop.f32.mrf.mxu0
        %v2757 = vadd.f32 0.0, %v2756
        %2758 = vmatmul.bf16.gmra.mxu0 %v2546
        %v2759 = vpop.f32.mrf.mxu0
        %v2760 = vadd.f32 0.0, %v2759
        %v2761 = vpop.f32.mrf.mxu0
        %v2762 = vadd.f32 0.0, %v2761
        %2763 = vmatmul.bf16.gmra.mxu0 %v2547
        %v2764 = vpop.f32.mrf.mxu0
        %v2765 = vadd.f32 0.0, %v2764
        %v2766 = vpop.f32.mrf.mxu0
        %v2767 = vadd.f32 0.0, %v2766
        %2768 = vmatmul.bf16.gmra.mxu0 %v2548
        %v2769 = vpop.f32.mrf.mxu0
        %v2770 = vadd.f32 0.0, %v2769
        %v2771 = vpop.f32.mrf.mxu0
        %v2772 = vadd.f32 0.0, %v2771
        %2773 = vmatmul.bf16.gmra.mxu0 %v2549
        %v2774 = vpop.f32.mrf.mxu0
        %v2775 = vadd.f32 0.0, %v2774
        %v2776 = vpop.f32.mrf.mxu0
        %v2777 = vadd.f32 0.0, %v2776
        %2778 = vmatmul.bf16.gmra.mxu0 %v2550
        %v2779 = vpop.f32.mrf.mxu0
        %v2780 = vadd.f32 0.0, %v2779
        %v2781 = vpop.f32.mrf.mxu0
        %v2782 = vadd.f32 0.0, %v2781
        %2783 = vmatmul.bf16.gmra.mxu0 %v2551
        %v2784 = vpop.f32.mrf.mxu0
        %v2785 = vadd.f32 0.0, %v2784
        %v2786 = vpop.f32.mrf.mxu0
        %v2787 = vadd.f32 0.0, %v2786
        %2788 = vmatmul.bf16.gmra.mxu0 %v2552
        %v2789 = vpop.f32.mrf.mxu0
        %v2790 = vadd.f32 0.0, %v2789
        %v2791 = vpop.f32.mrf.mxu0
        %v2792 = vadd.f32 0.0, %v2791
        %2793 = vdwg.mxu0
        %2794 = vmatpush.bf16.msra.mxu0 %v2710
        %2795 = vmatpush.bf16.msra.mxu0 %v2706
        %2796 = vmatpush.bf16.msra.mxu0 %v2702
        %2797 = vmatpush.bf16.msra.mxu0 %v2698
        %2798 = vmatpush.bf16.msra.mxu0 %v2694
        %2799 = vmatpush.bf16.msra.mxu0 %v2690
        %2800 = vmatpush.bf16.msra.mxu0 %v2686
        %2801 = vmatpush.bf16.msra.mxu0 %v2682
        %2802 = vmatmul.bf16.gmra.mxu0 %v2545
        %v2803 = vpop.f32.mrf.mxu0
        %v2804 = vadd.f32 0.0, %v2803
        %v2805 = vpop.f32.mrf.mxu0
        %v2806 = vadd.f32 0.0, %v2805
        %2807 = vmatmul.bf16.gmra.mxu0 %v2546
        %v2808 = vpop.f32.mrf.mxu0
        %v2809 = vadd.f32 0.0, %v2808
        %v2810 = vpop.f32.mrf.mxu0
        %v2811 = vadd.f32 0.0, %v2810
        %2812 = vmatmul.bf16.gmra.mxu0 %v2547
        %v2813 = vpop.f32.mrf.mxu0
        %v2814 = vadd.f32 0.0, %v2813
        %v2815 = vpop.f32.mrf.mxu0
        %v2816 = vadd.f32 0.0, %v2815
        %2817 = vmatmul.bf16.gmra.mxu0 %v2548
        %v2818 = vpop.f32.mrf.mxu0
        %v2819 = vadd.f32 0.0, %v2818
        %v2820 = vpop.f32.mrf.mxu0
        %v2821 = vadd.f32 0.0, %v2820
        %2822 = vmatmul.bf16.gmra.mxu0 %v2549
        %v2823 = vpop.f32.mrf.mxu0
        %v2824 = vadd.f32 0.0, %v2823
        %v2825 = vpop.f32.mrf.mxu0
        %v2826 = vadd.f32 0.0, %v2825
        %2827 = vmatmul.bf16.gmra.mxu0 %v2550
        %v2828 = vpop.f32.mrf.mxu0
        %v2829 = vadd.f32 0.0, %v2828
        %v2830 = vpop.f32.mrf.mxu0
        %v2831 = vadd.f32 0.0, %v2830
        %2832 = vmatmul.bf16.gmra.mxu0 %v2551
        %v2833 = vpop.f32.mrf.mxu0
        %v2834 = vadd.f32 0.0, %v2833
        %v2835 = vpop.f32.mrf.mxu0
        %v2836 = vadd.f32 0.0, %v2835
        %2837 = vmatmul.bf16.gmra.mxu0 %v2552
        %v2838 = vpop.f32.mrf.mxu0
        %v2839 = vadd.f32 0.0, %v2838
        %v2840 = vpop.f32.mrf.mxu0
        %v2841 = vadd.f32 0.0, %v2840
        %2842 = vdwg.mxu0
        %2843 = vmatpush.bf16.msra.mxu0 %v2711
        %2844 = vmatpush.bf16.msra.mxu0 %v2707
        %2845 = vmatpush.bf16.msra.mxu0 %v2703
        %2846 = vmatpush.bf16.msra.mxu0 %v2699
        %2847 = vmatpush.bf16.msra.mxu0 %v2695
        %2848 = vmatpush.bf16.msra.mxu0 %v2691
        %2849 = vmatpush.bf16.msra.mxu0 %v2687
        %2850 = vmatpush.bf16.msra.mxu0 %v2683
        %2851 = vmatmul.bf16.gmra.mxu0 %v2545
        %v2852 = vpop.f32.mrf.mxu0
        %v2853 = vadd.f32 0.0, %v2852
        %v2854 = vpop.f32.mrf.mxu0
        %v2855 = vadd.f32 0.0, %v2854
        %2856 = vmatmul.bf16.gmra.mxu0 %v2546
        %v2857 = vpop.f32.mrf.mxu0
        %v2858 = vadd.f32 0.0, %v2857
        %v2859 = vpop.f32.mrf.mxu0
        %v2860 = vadd.f32 0.0, %v2859
        %2861 = vmatmul.bf16.gmra.mxu0 %v2547
        %v2862 = vpop.f32.mrf.mxu0
        %v2863 = vadd.f32 0.0, %v2862
        %v2864 = vpop.f32.mrf.mxu0
        %v2865 = vadd.f32 0.0, %v2864
        %2866 = vmatmul.bf16.gmra.mxu0 %v2548
        %v2867 = vpop.f32.mrf.mxu0
        %v2868 = vadd.f32 0.0, %v2867
        %v2869 = vpop.f32.mrf.mxu0
        %v2870 = vadd.f32 0.0, %v2869
        %2871 = vmatmul.bf16.gmra.mxu0 %v2549
        %v2872 = vpop.f32.mrf.mxu0
        %v2873 = vadd.f32 0.0, %v2872
        %v2874 = vpop.f32.mrf.mxu0
        %v2875 = vadd.f32 0.0, %v2874
        %2876 = vmatmul.bf16.gmra.mxu0 %v2550
        %v2877 = vpop.f32.mrf.mxu0
        %v2878 = vadd.f32 0.0, %v2877
        %v2879 = vpop.f32.mrf.mxu0
        %v2880 = vadd.f32 0.0, %v2879
        %2881 = vmatmul.bf16.gmra.mxu0 %v2551
        %v2882 = vpop.f32.mrf.mxu0
        %v2883 = vadd.f32 0.0, %v2882
        %v2884 = vpop.f32.mrf.mxu0
        %v2885 = vadd.f32 0.0, %v2884
        %2886 = vmatmul.bf16.gmra.mxu0 %v2552
        %v2887 = vpop.f32.mrf.mxu0
        %v2888 = vadd.f32 0.0, %v2887
        %v2889 = vpop.f32.mrf.mxu0
        %v2890 = vadd.f32 0.0, %v2889
        %2891 = vdwg.mxu0
        %2892 = vmatpush.bf16.msra.mxu0 %v2712
        %2893 = vmatpush.bf16.msra.mxu0 %v2708
        %2894 = vmatpush.bf16.msra.mxu0 %v2704
        %2895 = vmatpush.bf16.msra.mxu0 %v2700
        %2896 = vmatpush.bf16.msra.mxu0 %v2696
        %2897 = vmatpush.bf16.msra.mxu0 %v2692
        %2898 = vmatpush.bf16.msra.mxu0 %v2688
        %2899 = vmatpush.bf16.msra.mxu0 %v2684
        %2900 = vmatmul.bf16.gmra.mxu0 %v2545
        %v2901 = vpop.f32.mrf.mxu0
        %v2902 = vadd.f32 0.0, %v2901
        %v2903 = vpop.f32.mrf.mxu0
        %v2904 = vadd.f32 0.0, %v2903
        %2905 = vmatmul.bf16.gmra.mxu0 %v2546
        %v2906 = vpop.f32.mrf.mxu0
        %v2907 = vadd.f32 0.0, %v2906
        %v2908 = vpop.f32.mrf.mxu0
        %v2909 = vadd.f32 0.0, %v2908
        %2910 = vmatmul.bf16.gmra.mxu0 %v2547
        %v2911 = vpop.f32.mrf.mxu0
        %v2912 = vadd.f32 0.0, %v2911
        %v2913 = vpop.f32.mrf.mxu0
        %v2914 = vadd.f32 0.0, %v2913
        %2915 = vmatmul.bf16.gmra.mxu0 %v2548
        %v2916 = vpop.f32.mrf.mxu0
        %v2917 = vadd.f32 0.0, %v2916
        %v2918 = vpop.f32.mrf.mxu0
        %v2919 = vadd.f32 0.0, %v2918
        %2920 = vmatmul.bf16.gmra.mxu0 %v2549
        %v2921 = vpop.f32.mrf.mxu0
        %v2922 = vadd.f32 0.0, %v2921
        %v2923 = vpop.f32.mrf.mxu0
        %v2924 = vadd.f32 0.0, %v2923
        %2925 = vmatmul.bf16.gmra.mxu0 %v2550
        %v2926 = vpop.f32.mrf.mxu0
        %v2927 = vadd.f32 0.0, %v2926
        %v2928 = vpop.f32.mrf.mxu0
        %v2929 = vadd.f32 0.0, %v2928
        %2930 = vmatmul.bf16.gmra.mxu0 %v2551
        %v2931 = vpop.f32.mrf.mxu0
        %v2932 = vadd.f32 0.0, %v2931
        %v2933 = vpop.f32.mrf.mxu0
        %v2934 = vadd.f32 0.0, %v2933
        %2935 = vmatmul.bf16.gmra.mxu0 %v2552
        %v2936 = vpop.f32.mrf.mxu0
        %v2937 = vadd.f32 0.0, %v2936
        %v2938 = vpop.f32.mrf.mxu0
        %v2939 = vadd.f32 0.0, %v2938
        %2940 = vdwg.mxu0
        %v2941 = vmax.f32 %v2755, 0.0
        %v2942 = vmax.f32 %v2804, 0.0
        %v2943 = vmax.f32 %v2853, 0.0
        %v2944 = vmax.f32 %v2902, 0.0
        %v2945 = vmax.f32 %v2757, 0.0
        %v2946 = vmax.f32 %v2806, 0.0
        %v2947 = vmax.f32 %v2855, 0.0
        %v2948 = vmax.f32 %v2904, 0.0
        %v2949 = vmax.f32 %v2760, 0.0
        %v2950 = vmax.f32 %v2809, 0.0
        %v2951 = vmax.f32 %v2858, 0.0
        %v2952 = vmax.f32 %v2907, 0.0
        %v2953 = vmax.f32 %v2762, 0.0
        %v2954 = vmax.f32 %v2811, 0.0
        %v2955 = vmax.f32 %v2860, 0.0
        %v2956 = vmax.f32 %v2909, 0.0
        %v2957 = vmax.f32 %v2765, 0.0
        %v2958 = vmax.f32 %v2814, 0.0
        %v2959 = vmax.f32 %v2863, 0.0
        %v2960 = vmax.f32 %v2912, 0.0
        %v2961 = vmax.f32 %v2767, 0.0
        %v2962 = vmax.f32 %v2816, 0.0
        %v2963 = vmax.f32 %v2865, 0.0
        %v2964 = vmax.f32 %v2914, 0.0
        %v2965 = vmax.f32 %v2770, 0.0
        %v2966 = vmax.f32 %v2819, 0.0
        %v2967 = vmax.f32 %v2868, 0.0
        %v2968 = vmax.f32 %v2917, 0.0
        %v2969 = vmax.f32 %v2772, 0.0
        %v2970 = vmax.f32 %v2821, 0.0
        %v2971 = vmax.f32 %v2870, 0.0
        %v2972 = vmax.f32 %v2919, 0.0
        %v2973 = vmax.f32 %v2775, 0.0
        %v2974 = vmax.f32 %v2824, 0.0
        %v2975 = vmax.f32 %v2873, 0.0
        %v2976 = vmax.f32 %v2922, 0.0
        %v2977 = vmax.f32 %v2777, 0.0
        %v2978 = vmax.f32 %v2826, 0.0
        %v2979 = vmax.f32 %v2875, 0.0
        %v2980 = vmax.f32 %v2924, 0.0
        %v2981 = vmax.f32 %v2780, 0.0
        %v2982 = vmax.f32 %v2829, 0.0
        %v2983 = vmax.f32 %v2878, 0.0
        %v2984 = vmax.f32 %v2927, 0.0
        %v2985 = vmax.f32 %v2782, 0.0
        %v2986 = vmax.f32 %v2831, 0.0
        %v2987 = vmax.f32 %v2880, 0.0
        %v2988 = vmax.f32 %v2929, 0.0
        %v2989 = vmax.f32 %v2785, 0.0
        %v2990 = vmax.f32 %v2834, 0.0
        %v2991 = vmax.f32 %v2883, 0.0
        %v2992 = vmax.f32 %v2932, 0.0
        %v2993 = vmax.f32 %v2787, 0.0
        %v2994 = vmax.f32 %v2836, 0.0
        %v2995 = vmax.f32 %v2885, 0.0
        %v2996 = vmax.f32 %v2934, 0.0
        %v2997 = vmax.f32 %v2790, 0.0
        %v2998 = vmax.f32 %v2839, 0.0
        %v2999 = vmax.f32 %v2888, 0.0
        %v3000 = vmax.f32 %v2937, 0.0
        %v3001 = vmax.f32 %v2792, 0.0
        %v3002 = vmax.f32 %v2841, 0.0
        %v3003 = vmax.f32 %v2890, 0.0
        %v3004 = vmax.f32 %v2939, 0.0
        %v3005 = vmin.f32 %v2941, 6.0
        %v3006 = vmin.f32 %v2942, 6.0
        %v3007 = vmin.f32 %v2943, 6.0
        %v3008 = vmin.f32 %v2944, 6.0
        %v3009 = vmin.f32 %v2945, 6.0
        %v3010 = vmin.f32 %v2946, 6.0
        %v3011 = vmin.f32 %v2947, 6.0
        %v3012 = vmin.f32 %v2948, 6.0
        %v3013 = vmin.f32 %v2949, 6.0
        %v3014 = vmin.f32 %v2950, 6.0
        %v3015 = vmin.f32 %v2951, 6.0
        %v3016 = vmin.f32 %v2952, 6.0
        %v3017 = vmin.f32 %v2953, 6.0
        %v3018 = vmin.f32 %v2954, 6.0
        %v3019 = vmin.f32 %v2955, 6.0
        %v3020 = vmin.f32 %v2956, 6.0
        %v3021 = vmin.f32 %v2957, 6.0
        %v3022 = vmin.f32 %v2958, 6.0
        %v3023 = vmin.f32 %v2959, 6.0
        %v3024 = vmin.f32 %v2960, 6.0
        %v3025 = vmin.f32 %v2961, 6.0
        %v3026 = vmin.f32 %v2962, 6.0
        %v3027 = vmin.f32 %v2963, 6.0
        %v3028 = vmin.f32 %v2964, 6.0
        %v3029 = vmin.f32 %v2965, 6.0
        %v3030 = vmin.f32 %v2966, 6.0
        %v3031 = vmin.f32 %v2967, 6.0
        %v3032 = vmin.f32 %v2968, 6.0
        %v3033 = vmin.f32 %v2969, 6.0
        %v3034 = vmin.f32 %v2970, 6.0
        %v3035 = vmin.f32 %v2971, 6.0
        %v3036 = vmin.f32 %v2972, 6.0
        %v3037 = vmin.f32 %v2973, 6.0
        %v3038 = vmin.f32 %v2974, 6.0
        %v3039 = vmin.f32 %v2975, 6.0
        %v3040 = vmin.f32 %v2976, 6.0
        %v3041 = vmin.f32 %v2977, 6.0
        %v3042 = vmin.f32 %v2978, 6.0
        %v3043 = vmin.f32 %v2979, 6.0
        %v3044 = vmin.f32 %v2980, 6.0
        %v3045 = vmin.f32 %v2981, 6.0
        %v3046 = vmin.f32 %v2982, 6.0
        %v3047 = vmin.f32 %v2983, 6.0
        %v3048 = vmin.f32 %v2984, 6.0
        %v3049 = vmin.f32 %v2985, 6.0
        %v3050 = vmin.f32 %v2986, 6.0
        %v3051 = vmin.f32 %v2987, 6.0
        %v3052 = vmin.f32 %v2988, 6.0
        %v3053 = vmin.f32 %v2989, 6.0
        %v3054 = vmin.f32 %v2990, 6.0
        %v3055 = vmin.f32 %v2991, 6.0
        %v3056 = vmin.f32 %v2992, 6.0
        %v3057 = vmin.f32 %v2993, 6.0
        %v3058 = vmin.f32 %v2994, 6.0
        %v3059 = vmin.f32 %v2995, 6.0
        %v3060 = vmin.f32 %v2996, 6.0
        %v3061 = vmin.f32 %v2997, 6.0
        %v3062 = vmin.f32 %v2998, 6.0
        %v3063 = vmin.f32 %v2999, 6.0
        %v3064 = vmin.f32 %v3000, 6.0
        %v3065 = vmin.f32 %v3001, 6.0
        %v3066 = vmin.f32 %v3002, 6.0
        %v3067 = vmin.f32 %v3003, 6.0
        %v3068 = vmin.f32 %v3004, 6.0
        %v3069 = vpack.c.bf16 %v3009, %v3005
        %v3070 = vpack.c.bf16 %v3010, %v3006
        %v3071 = vpack.c.bf16 %v3011, %v3007
        %v3072 = vpack.c.bf16 %v3012, %v3008
        %v3073 = vpack.c.bf16 %v3017, %v3013
        %v3074 = vpack.c.bf16 %v3018, %v3014
        %v3075 = vpack.c.bf16 %v3019, %v3015
        %v3076 = vpack.c.bf16 %v3020, %v3016
        %v3077 = vpack.c.bf16 %v3025, %v3021
        %v3078 = vpack.c.bf16 %v3026, %v3022
        %v3079 = vpack.c.bf16 %v3027, %v3023
        %v3080 = vpack.c.bf16 %v3028, %v3024
        %v3081 = vpack.c.bf16 %v3033, %v3029
        %v3082 = vpack.c.bf16 %v3034, %v3030
        %v3083 = vpack.c.bf16 %v3035, %v3031
        %v3084 = vpack.c.bf16 %v3036, %v3032
        %v3085 = vpack.c.bf16 %v3041, %v3037
        %v3086 = vpack.c.bf16 %v3042, %v3038
        %v3087 = vpack.c.bf16 %v3043, %v3039
        %v3088 = vpack.c.bf16 %v3044, %v3040
        %v3089 = vpack.c.bf16 %v3049, %v3045
        %v3090 = vpack.c.bf16 %v3050, %v3046
        %v3091 = vpack.c.bf16 %v3051, %v3047
        %v3092 = vpack.c.bf16 %v3052, %v3048
        %v3093 = vpack.c.bf16 %v3057, %v3053
        %v3094 = vpack.c.bf16 %v3058, %v3054
        %v3095 = vpack.c.bf16 %v3059, %v3055
        %v3096 = vpack.c.bf16 %v3060, %v3056
        %v3097 = vpack.c.bf16 %v3065, %v3061
        %v3098 = vpack.c.bf16 %v3066, %v3062
        %v3099 = vpack.c.bf16 %v3067, %v3063
        %v3100 = vpack.c.bf16 %v3068, %v3064
        %v3101 = vld [vmem:[#allocation11] sm:$0xf]
        %v3102 = vld [vmem:[#allocation11 + $0x4] sm:$0xf]
        %v3103 = vld [vmem:[#allocation11 + $0x8] sm:$0xf]
        %v3104 = vld [vmem:[#allocation11 + $0xc] sm:$0xf]
        %v3105 = vld [vmem:[#allocation11 + $0x10] sm:$0xf]
        %v3106 = vld [vmem:[#allocation11 + $0x14] sm:$0xf]
        %v3107 = vld [vmem:[#allocation11 + $0x18] sm:$0xf]
        %v3108 = vld [vmem:[#allocation11 + $0x1c] sm:$0xf]
        %v3109 = vld [vmem:[#allocation11 + $0x20] sm:$0xf]
        %v3110 = vld [vmem:[#allocation11 + $0x24] sm:$0xf]
        %v3111 = vld [vmem:[#allocation11 + $0x28] sm:$0xf]
        %v3112 = vld [vmem:[#allocation11 + $0x2c] sm:$0xf]
        %v3113 = vld [vmem:[#allocation11 + $0x30] sm:$0xf]
        %v3114 = vld [vmem:[#allocation11 + $0x34] sm:$0xf]
        %v3115 = vld [vmem:[#allocation11 + $0x38] sm:$0xf]
        %v3116 = vld [vmem:[#allocation11 + $0x3c] sm:$0xf]
        %v3117 = vld [vmem:[#allocation11 + $0x40] sm:$0xf]
        %v3118 = vld [vmem:[#allocation11 + $0x44] sm:$0xf]
        %v3119 = vld [vmem:[#allocation11 + $0x48] sm:$0xf]
        %v3120 = vld [vmem:[#allocation11 + $0x4c] sm:$0xf]
        %v3121 = vld [vmem:[#allocation11 + $0x50] sm:$0xf]
        %v3122 = vld [vmem:[#allocation11 + $0x54] sm:$0xf]
        %v3123 = vld [vmem:[#allocation11 + $0x58] sm:$0xf]
        %v3124 = vld [vmem:[#allocation11 + $0x5c] sm:$0xf]
        %v3125 = vld [vmem:[#allocation11 + $0x60] sm:$0xf]
        %v3126 = vld [vmem:[#allocation11 + $0x64] sm:$0xf]
        %v3127 = vld [vmem:[#allocation11 + $0x68] sm:$0xf]
        %v3128 = vld [vmem:[#allocation11 + $0x6c] sm:$0xf]
        %v3129 = vld [vmem:[#allocation11 + $0x70] sm:$0xf]
        %v3130 = vld [vmem:[#allocation11 + $0x74] sm:$0xf]
        %v3131 = vld [vmem:[#allocation11 + $0x78] sm:$0xf]
        %v3132 = vld [vmem:[#allocation11 + $0x7c] sm:$0xf]
        %v3133 = vld [vmem:[#allocation11 + $0x80] sm:$0xf]
        %v3134 = vld [vmem:[#allocation11 + $0x84] sm:$0xf]
        %v3135 = vld [vmem:[#allocation11 + $0x88] sm:$0xf]
        %v3136 = vld [vmem:[#allocation11 + $0x8c] sm:$0xf]
        %v3137 = vld [vmem:[#allocation11 + $0x90] sm:$0xf]
        %v3138 = vld [vmem:[#allocation11 + $0x94] sm:$0xf]
        %v3139 = vld [vmem:[#allocation11 + $0x98] sm:$0xf]
        %v3140 = vld [vmem:[#allocation11 + $0x9c] sm:$0xf]
        %v3141 = vld [vmem:[#allocation11 + $0xa0] sm:$0xf]
        %v3142 = vld [vmem:[#allocation11 + $0xa4] sm:$0xf]
        %v3143 = vld [vmem:[#allocation11 + $0xa8] sm:$0xf]
        %v3144 = vld [vmem:[#allocation11 + $0xac] sm:$0xf]
        %v3145 = vld [vmem:[#allocation11 + $0xb0] sm:$0xf]
        %v3146 = vld [vmem:[#allocation11 + $0xb4] sm:$0xf]
        %v3147 = vld [vmem:[#allocation11 + $0xb8] sm:$0xf]
        %v3148 = vld [vmem:[#allocation11 + $0xbc] sm:$0xf]
        %v3149 = vld [vmem:[#allocation11 + $0xc0] sm:$0xf]
        %v3150 = vld [vmem:[#allocation11 + $0xc4] sm:$0xf]
        %v3151 = vld [vmem:[#allocation11 + $0xc8] sm:$0xf]
        %v3152 = vld [vmem:[#allocation11 + $0xcc] sm:$0xf]
        %v3153 = vld [vmem:[#allocation11 + $0xd0] sm:$0xf]
        %v3154 = vld [vmem:[#allocation11 + $0xd4] sm:$0xf]
        %v3155 = vld [vmem:[#allocation11 + $0xd8] sm:$0xf]
        %v3156 = vld [vmem:[#allocation11 + $0xdc] sm:$0xf]
        %v3157 = vld [vmem:[#allocation11 + $0xe0] sm:$0xf]
        %v3158 = vld [vmem:[#allocation11 + $0xe4] sm:$0xf]
        %v3159 = vld [vmem:[#allocation11 + $0xe8] sm:$0xf]
        %v3160 = vld [vmem:[#allocation11 + $0xec] sm:$0xf]
        %v3161 = vld [vmem:[#allocation11 + $0xf0] sm:$0xf]
        %v3162 = vld [vmem:[#allocation11 + $0xf4] sm:$0xf]
        %v3163 = vld [vmem:[#allocation11 + $0xf8] sm:$0xf]
        %v3164 = vld [vmem:[#allocation11 + $0xfc] sm:$0xf]
        %v3229 = vunpack.c.l.b16 %v3101
        %v3230 = vunpack.c.l.b16 %v3102
        %v3231 = vunpack.c.l.b16 %v3103
        %v3232 = vunpack.c.l.b16 %v3104
        %v3233 = vunpack.c.l.b16 %v3105
        %v3234 = vunpack.c.l.b16 %v3106
        %v3235 = vunpack.c.l.b16 %v3107
        %v3236 = vunpack.c.l.b16 %v3108
        %v3237 = vunpack.c.l.b16 %v3109
        %v3238 = vunpack.c.l.b16 %v3110
        %v3239 = vunpack.c.l.b16 %v3111
        %v3240 = vunpack.c.l.b16 %v3112
        %v3241 = vunpack.c.l.b16 %v3113
        %v3242 = vunpack.c.l.b16 %v3114
        %v3243 = vunpack.c.l.b16 %v3115
        %v3244 = vunpack.c.l.b16 %v3116
        %v3245 = vunpack.c.l.b16 %v3117
        %v3246 = vunpack.c.l.b16 %v3118
        %v3247 = vunpack.c.l.b16 %v3119
        %v3248 = vunpack.c.l.b16 %v3120
        %v3249 = vunpack.c.l.b16 %v3121
        %v3250 = vunpack.c.l.b16 %v3122
        %v3251 = vunpack.c.l.b16 %v3123
        %v3252 = vunpack.c.l.b16 %v3124
        %v3253 = vunpack.c.l.b16 %v3125
        %v3254 = vunpack.c.l.b16 %v3126
        %v3255 = vunpack.c.l.b16 %v3127
        %v3256 = vunpack.c.l.b16 %v3128
        %v3257 = vunpack.c.l.b16 %v3129
        %v3258 = vunpack.c.l.b16 %v3130
        %v3259 = vunpack.c.l.b16 %v3131
        %v3260 = vunpack.c.l.b16 %v3132
        %v3261 = vunpack.c.l.b16 %v3133
        %v3262 = vunpack.c.l.b16 %v3134
        %v3263 = vunpack.c.l.b16 %v3135
        %v3264 = vunpack.c.l.b16 %v3136
        %v3265 = vunpack.c.l.b16 %v3137
        %v3266 = vunpack.c.l.b16 %v3138
        %v3267 = vunpack.c.l.b16 %v3139
        %v3268 = vunpack.c.l.b16 %v3140
        %v3269 = vunpack.c.l.b16 %v3141
        %v3270 = vunpack.c.l.b16 %v3142
        %v3271 = vunpack.c.l.b16 %v3143
        %v3272 = vunpack.c.l.b16 %v3144
        %v3273 = vunpack.c.l.b16 %v3145
        %v3274 = vunpack.c.l.b16 %v3146
        %v3275 = vunpack.c.l.b16 %v3147
        %v3276 = vunpack.c.l.b16 %v3148
        %v3277 = vunpack.c.l.b16 %v3149
        %v3278 = vunpack.c.l.b16 %v3150
        %v3279 = vunpack.c.l.b16 %v3151
        %v3280 = vunpack.c.l.b16 %v3152
        %v3281 = vunpack.c.l.b16 %v3153
        %v3282 = vunpack.c.l.b16 %v3154
        %v3283 = vunpack.c.l.b16 %v3155
        %v3284 = vunpack.c.l.b16 %v3156
        %v3285 = vunpack.c.l.b16 %v3157
        %v3286 = vunpack.c.l.b16 %v3158
        %v3287 = vunpack.c.l.b16 %v3159
        %v3288 = vunpack.c.l.b16 %v3160
        %v3289 = vunpack.c.l.b16 %v3161
        %v3290 = vunpack.c.l.b16 %v3162
        %v3291 = vunpack.c.l.b16 %v3163
        %v3292 = vunpack.c.l.b16 %v3164
        %v3293 = vpack.c.b16 %v3230, %v3229
        %v3294 = vpack.c.b16 %v3232, %v3231
        %v3295 = vpack.c.b16 %v3234, %v3233
        %v3296 = vpack.c.b16 %v3236, %v3235
        %v3297 = vpack.c.b16 %v3238, %v3237
        %v3298 = vpack.c.b16 %v3240, %v3239
        %v3299 = vpack.c.b16 %v3242, %v3241
        %v3300 = vpack.c.b16 %v3244, %v3243
        %v3301 = vpack.c.b16 %v3246, %v3245
        %v3302 = vpack.c.b16 %v3248, %v3247
        %v3303 = vpack.c.b16 %v3250, %v3249
        %v3304 = vpack.c.b16 %v3252, %v3251
        %v3305 = vpack.c.b16 %v3254, %v3253
        %v3306 = vpack.c.b16 %v3256, %v3255
        %v3307 = vpack.c.b16 %v3258, %v3257
        %v3308 = vpack.c.b16 %v3260, %v3259
        %v3309 = vpack.c.b16 %v3262, %v3261
        %v3310 = vpack.c.b16 %v3264, %v3263
        %v3311 = vpack.c.b16 %v3266, %v3265
        %v3312 = vpack.c.b16 %v3268, %v3267
        %v3313 = vpack.c.b16 %v3270, %v3269
        %v3314 = vpack.c.b16 %v3272, %v3271
        %v3315 = vpack.c.b16 %v3274, %v3273
        %v3316 = vpack.c.b16 %v3276, %v3275
        %v3317 = vpack.c.b16 %v3278, %v3277
        %v3318 = vpack.c.b16 %v3280, %v3279
        %v3319 = vpack.c.b16 %v3282, %v3281
        %v3320 = vpack.c.b16 %v3284, %v3283
        %v3321 = vpack.c.b16 %v3286, %v3285
        %v3322 = vpack.c.b16 %v3288, %v3287
        %v3323 = vpack.c.b16 %v3290, %v3289
        %v3324 = vpack.c.b16 %v3292, %v3291
        %3357 = vmatpush.bf16.msra.mxu0 %v3300
        %3358 = vmatpush.bf16.msra.mxu0 %v3299
        %3359 = vmatpush.bf16.msra.mxu0 %v3298
        %3360 = vmatpush.bf16.msra.mxu0 %v3297
        %3361 = vmatpush.bf16.msra.mxu0 %v3296
        %3362 = vmatpush.bf16.msra.mxu0 %v3295
        %3363 = vmatpush.bf16.msra.mxu0 %v3294
        %3364 = vmatpush.bf16.msra.mxu0 %v3293
        %3365 = vmatmul.bf16.gmra.mxu0 %v3069
        %v3366 = vpop.f32.mrf.mxu0
        %v3367 = vadd.f32 0.0, %v3366
        %v3368 = vpop.f32.mrf.mxu0
        %v3369 = vadd.f32 0.0, %v3368
        %3370 = vmatmul.bf16.gmra.mxu0 %v3073
        %v3371 = vpop.f32.mrf.mxu0
        %v3372 = vadd.f32 0.0, %v3371
        %v3373 = vpop.f32.mrf.mxu0
        %v3374 = vadd.f32 0.0, %v3373
        %3375 = vmatmul.bf16.gmra.mxu0 %v3077
        %v3376 = vpop.f32.mrf.mxu0
        %v3377 = vadd.f32 0.0, %v3376
        %v3378 = vpop.f32.mrf.mxu0
        %v3379 = vadd.f32 0.0, %v3378
        %3380 = vmatmul.bf16.gmra.mxu0 %v3081
        %v3381 = vpop.f32.mrf.mxu0
        %v3382 = vadd.f32 0.0, %v3381
        %v3383 = vpop.f32.mrf.mxu0
        %v3384 = vadd.f32 0.0, %v3383
        %3385 = vmatmul.bf16.gmra.mxu0 %v3085
        %v3386 = vpop.f32.mrf.mxu0
        %v3387 = vadd.f32 0.0, %v3386
        %v3388 = vpop.f32.mrf.mxu0
        %v3389 = vadd.f32 0.0, %v3388
        %3390 = vmatmul.bf16.gmra.mxu0 %v3089
        %v3391 = vpop.f32.mrf.mxu0
        %v3392 = vadd.f32 0.0, %v3391
        %v3393 = vpop.f32.mrf.mxu0
        %v3394 = vadd.f32 0.0, %v3393
        %3395 = vmatmul.bf16.gmra.mxu0 %v3093
        %v3396 = vpop.f32.mrf.mxu0
        %v3397 = vadd.f32 0.0, %v3396
        %v3398 = vpop.f32.mrf.mxu0
        %v3399 = vadd.f32 0.0, %v3398
        %3400 = vmatmul.bf16.gmra.mxu0 %v3097
        %v3401 = vpop.f32.mrf.mxu0
        %v3402 = vadd.f32 0.0, %v3401
        %v3403 = vpop.f32.mrf.mxu0
        %v3404 = vadd.f32 0.0, %v3403
        %3405 = vdwg.mxu0
        %3406 = vmatpush.bf16.msra.mxu0 %v3308
        %3407 = vmatpush.bf16.msra.mxu0 %v3307
        %3408 = vmatpush.bf16.msra.mxu0 %v3306
        %3409 = vmatpush.bf16.msra.mxu0 %v3305
        %3410 = vmatpush.bf16.msra.mxu0 %v3304
        %3411 = vmatpush.bf16.msra.mxu0 %v3303
        %3412 = vmatpush.bf16.msra.mxu0 %v3302
        %3413 = vmatpush.bf16.msra.mxu0 %v3301
        %3414 = vmatmul.bf16.gmra.mxu0 %v3070
        %v3415 = vpop.f32.mrf.mxu0
        %v3416 = vadd.f32 %v3367, %v3415
        %v3417 = vpop.f32.mrf.mxu0
        %v3418 = vadd.f32 %v3369, %v3417
        %3419 = vmatmul.bf16.gmra.mxu0 %v3074
        %v3420 = vpop.f32.mrf.mxu0
        %v3421 = vadd.f32 %v3372, %v3420
        %v3422 = vpop.f32.mrf.mxu0
        %v3423 = vadd.f32 %v3374, %v3422
        %3424 = vmatmul.bf16.gmra.mxu0 %v3078
        %v3425 = vpop.f32.mrf.mxu0
        %v3426 = vadd.f32 %v3377, %v3425
        %v3427 = vpop.f32.mrf.mxu0
        %v3428 = vadd.f32 %v3379, %v3427
        %3429 = vmatmul.bf16.gmra.mxu0 %v3082
        %v3430 = vpop.f32.mrf.mxu0
        %v3431 = vadd.f32 %v3382, %v3430
        %v3432 = vpop.f32.mrf.mxu0
        %v3433 = vadd.f32 %v3384, %v3432
        %3434 = vmatmul.bf16.gmra.mxu0 %v3086
        %v3435 = vpop.f32.mrf.mxu0
        %v3436 = vadd.f32 %v3387, %v3435
        %v3437 = vpop.f32.mrf.mxu0
        %v3438 = vadd.f32 %v3389, %v3437
        %3439 = vmatmul.bf16.gmra.mxu0 %v3090
        %v3440 = vpop.f32.mrf.mxu0
        %v3441 = vadd.f32 %v3392, %v3440
        %v3442 = vpop.f32.mrf.mxu0
        %v3443 = vadd.f32 %v3394, %v3442
        %3444 = vmatmul.bf16.gmra.mxu0 %v3094
        %v3445 = vpop.f32.mrf.mxu0
        %v3446 = vadd.f32 %v3397, %v3445
        %v3447 = vpop.f32.mrf.mxu0
        %v3448 = vadd.f32 %v3399, %v3447
        %3449 = vmatmul.bf16.gmra.mxu0 %v3098
        %v3450 = vpop.f32.mrf.mxu0
        %v3451 = vadd.f32 %v3402, %v3450
        %v3452 = vpop.f32.mrf.mxu0
        %v3453 = vadd.f32 %v3404, %v3452
        %3454 = vdwg.mxu0
        %3455 = vmatpush.bf16.msra.mxu0 %v3316
        %3456 = vmatpush.bf16.msra.mxu0 %v3315
        %3457 = vmatpush.bf16.msra.mxu0 %v3314
        %3458 = vmatpush.bf16.msra.mxu0 %v3313
        %3459 = vmatpush.bf16.msra.mxu0 %v3312
        %3460 = vmatpush.bf16.msra.mxu0 %v3311
        %3461 = vmatpush.bf16.msra.mxu0 %v3310
        %3462 = vmatpush.bf16.msra.mxu0 %v3309
        %3463 = vmatmul.bf16.gmra.mxu0 %v3071
        %v3464 = vpop.f32.mrf.mxu0
        %v3465 = vadd.f32 %v3416, %v3464
        %v3466 = vpop.f32.mrf.mxu0
        %v3467 = vadd.f32 %v3418, %v3466
        %3468 = vmatmul.bf16.gmra.mxu0 %v3075
        %v3469 = vpop.f32.mrf.mxu0
        %v3470 = vadd.f32 %v3421, %v3469
        %v3471 = vpop.f32.mrf.mxu0
        %v3472 = vadd.f32 %v3423, %v3471
        %3473 = vmatmul.bf16.gmra.mxu0 %v3079
        %v3474 = vpop.f32.mrf.mxu0
        %v3475 = vadd.f32 %v3426, %v3474
        %v3476 = vpop.f32.mrf.mxu0
        %v3477 = vadd.f32 %v3428, %v3476
        %3478 = vmatmul.bf16.gmra.mxu0 %v3083
        %v3479 = vpop.f32.mrf.mxu0
        %v3480 = vadd.f32 %v3431, %v3479
        %v3481 = vpop.f32.mrf.mxu0
        %v3482 = vadd.f32 %v3433, %v3481
        %3483 = vmatmul.bf16.gmra.mxu0 %v3087
        %v3484 = vpop.f32.mrf.mxu0
        %v3485 = vadd.f32 %v3436, %v3484
        %v3486 = vpop.f32.mrf.mxu0
        %v3487 = vadd.f32 %v3438, %v3486
        %3488 = vmatmul.bf16.gmra.mxu0 %v3091
        %v3489 = vpop.f32.mrf.mxu0
        %v3490 = vadd.f32 %v3441, %v3489
        %v3491 = vpop.f32.mrf.mxu0
        %v3492 = vadd.f32 %v3443, %v3491
        %3493 = vmatmul.bf16.gmra.mxu0 %v3095
        %v3494 = vpop.f32.mrf.mxu0
        %v3495 = vadd.f32 %v3446, %v3494
        %v3496 = vpop.f32.mrf.mxu0
        %v3497 = vadd.f32 %v3448, %v3496
        %3498 = vmatmul.bf16.gmra.mxu0 %v3099
        %v3499 = vpop.f32.mrf.mxu0
        %v3500 = vadd.f32 %v3451, %v3499
        %v3501 = vpop.f32.mrf.mxu0
        %v3502 = vadd.f32 %v3453, %v3501
        %3503 = vdwg.mxu0
        %3504 = vmatpush.bf16.msra.mxu0 %v3324
        %3505 = vmatpush.bf16.msra.mxu0 %v3323
        %3506 = vmatpush.bf16.msra.mxu0 %v3322
        %3507 = vmatpush.bf16.msra.mxu0 %v3321
        %3508 = vmatpush.bf16.msra.mxu0 %v3320
        %3509 = vmatpush.bf16.msra.mxu0 %v3319
        %3510 = vmatpush.bf16.msra.mxu0 %v3318
        %3511 = vmatpush.bf16.msra.mxu0 %v3317
        %3512 = vmatmul.bf16.gmra.mxu0 %v3072
        %v3513 = vpop.f32.mrf.mxu0
        %v3514 = vadd.f32 %v3465, %v3513
        %v3515 = vpop.f32.mrf.mxu0
        %v3516 = vadd.f32 %v3467, %v3515
        %3517 = vmatmul.bf16.gmra.mxu0 %v3076
        %v3518 = vpop.f32.mrf.mxu0
        %v3519 = vadd.f32 %v3470, %v3518
        %v3520 = vpop.f32.mrf.mxu0
        %v3521 = vadd.f32 %v3472, %v3520
        %3522 = vmatmul.bf16.gmra.mxu0 %v3080
        %v3523 = vpop.f32.mrf.mxu0
        %v3524 = vadd.f32 %v3475, %v3523
        %v3525 = vpop.f32.mrf.mxu0
        %v3526 = vadd.f32 %v3477, %v3525
        %3527 = vmatmul.bf16.gmra.mxu0 %v3084
        %v3528 = vpop.f32.mrf.mxu0
        %v3529 = vadd.f32 %v3480, %v3528
        %v3530 = vpop.f32.mrf.mxu0
        %v3531 = vadd.f32 %v3482, %v3530
        %3532 = vmatmul.bf16.gmra.mxu0 %v3088
        %v3533 = vpop.f32.mrf.mxu0
        %v3534 = vadd.f32 %v3485, %v3533
        %v3535 = vpop.f32.mrf.mxu0
        %v3536 = vadd.f32 %v3487, %v3535
        %3537 = vmatmul.bf16.gmra.mxu0 %v3092
        %v3538 = vpop.f32.mrf.mxu0
        %v3539 = vadd.f32 %v3490, %v3538
        %v3540 = vpop.f32.mrf.mxu0
        %v3541 = vadd.f32 %v3492, %v3540
        %3542 = vmatmul.bf16.gmra.mxu0 %v3096
        %v3543 = vpop.f32.mrf.mxu0
        %v3544 = vadd.f32 %v3495, %v3543
        %v3545 = vpop.f32.mrf.mxu0
        %v3546 = vadd.f32 %v3497, %v3545
        %3547 = vmatmul.bf16.gmra.mxu0 %v3100
        %v3548 = vpop.f32.mrf.mxu0
        %v3549 = vadd.f32 %v3500, %v3548
        %v3550 = vpop.f32.mrf.mxu0
        %v3551 = vadd.f32 %v3502, %v3550
        %3552 = vdwg.mxu0
        %v3553 = vmax.f32 %v3514, 0.0
        %v3554 = vmax.f32 %v3516, 0.0
        %v3555 = vmax.f32 %v3519, 0.0
        %v3556 = vmax.f32 %v3521, 0.0
        %v3557 = vmax.f32 %v3524, 0.0
        %v3558 = vmax.f32 %v3526, 0.0
        %v3559 = vmax.f32 %v3529, 0.0
        %v3560 = vmax.f32 %v3531, 0.0
        %v3561 = vmax.f32 %v3534, 0.0
        %v3562 = vmax.f32 %v3536, 0.0
        %v3563 = vmax.f32 %v3539, 0.0
        %v3564 = vmax.f32 %v3541, 0.0
        %v3565 = vmax.f32 %v3544, 0.0
        %v3566 = vmax.f32 %v3546, 0.0
        %v3567 = vmax.f32 %v3549, 0.0
        %v3568 = vmax.f32 %v3551, 0.0
        %v3569 = vmin.f32 %v3553, 6.0
        %v3570 = vmin.f32 %v3554, 6.0
        %v3571 = vmin.f32 %v3555, 6.0
        %v3572 = vmin.f32 %v3556, 6.0
        %v3573 = vmin.f32 %v3557, 6.0
        %v3574 = vmin.f32 %v3558, 6.0
        %v3575 = vmin.f32 %v3559, 6.0
        %v3576 = vmin.f32 %v3560, 6.0
        %v3577 = vmin.f32 %v3561, 6.0
        %v3578 = vmin.f32 %v3562, 6.0
        %v3579 = vmin.f32 %v3563, 6.0
        %v3580 = vmin.f32 %v3564, 6.0
        %v3581 = vmin.f32 %v3565, 6.0
        %v3582 = vmin.f32 %v3566, 6.0
        %v3583 = vmin.f32 %v3567, 6.0
        %v3584 = vmin.f32 %v3568, 6.0
        %v3585 = vadd.f32 %v2529, %v3569
        %v3586 = vadd.f32 %v2530, %v3570
        %v3587 = vadd.f32 %v2531, %v3571
        %v3588 = vadd.f32 %v2532, %v3572
        %v3589 = vadd.f32 %v2533, %v3573
        %v3590 = vadd.f32 %v2534, %v3574
        %v3591 = vadd.f32 %v2535, %v3575
        %v3592 = vadd.f32 %v2536, %v3576
        %v3593 = vadd.f32 %v2537, %v3577
        %v3594 = vadd.f32 %v2538, %v3578
        %v3595 = vadd.f32 %v2539, %v3579
        %v3596 = vadd.f32 %v2540, %v3580
        %v3597 = vadd.f32 %v2541, %v3581
        %v3598 = vadd.f32 %v2542, %v3582
        %v3599 = vadd.f32 %v2543, %v3583
        %v3600 = vadd.f32 %v2544, %v3584
        %v3601 = vld [vmem:[%s8] sm:$0x1]
        %v3602 = vld [vmem:[%s9] sm:$0x1]
        %3603 = vadd.xlane.f32.xlu0 %v3585
        %v3604 = vpop.xlane.xlu0 %3603
        %3605 = vadd.xlane.f32.xlu0 %v3586
        %v3606 = vpop.xlane.xlu0 %3605
        %3607 = vadd.xlane.f32.xlu0 %v3587
        %v3608 = vpop.xlane.xlu0 %3607
        %3609 = vadd.xlane.f32.xlu0 %v3588
        %v3610 = vpop.xlane.xlu0 %3609
        %3611 = vadd.xlane.f32.xlu0 %v3589
        %v3612 = vpop.xlane.xlu0 %3611
        %3613 = vadd.xlane.f32.xlu0 %v3590
        %v3614 = vpop.xlane.xlu0 %3613
        %3615 = vadd.xlane.f32.xlu0 %v3591
        %v3616 = vpop.xlane.xlu0 %3615
        %3617 = vadd.xlane.f32.xlu0 %v3592
        %v3618 = vpop.xlane.xlu0 %3617
        %3619 = vadd.xlane.f32.xlu0 %v3593
        %v3620 = vpop.xlane.xlu0 %3619
        %3621 = vadd.xlane.f32.xlu0 %v3594
        %v3622 = vpop.xlane.xlu0 %3621
        %3623 = vadd.xlane.f32.xlu0 %v3595
        %v3624 = vpop.xlane.xlu0 %3623
        %3625 = vadd.xlane.f32.xlu0 %v3596
        %v3626 = vpop.xlane.xlu0 %3625
        %3627 = vadd.xlane.f32.xlu0 %v3597
        %v3628 = vpop.xlane.xlu0 %3627
        %3629 = vadd.xlane.f32.xlu0 %v3598
        %v3630 = vpop.xlane.xlu0 %3629
        %3631 = vadd.xlane.f32.xlu0 %v3599
        %v3632 = vpop.xlane.xlu0 %3631
        %3633 = vadd.xlane.f32.xlu0 %v3600
        %v3634 = vpop.xlane.xlu0 %3633
        %v3635 = vmul.f32 %v3604, %v2218
        %v3636 = vmul.f32 %v3606, %v2218
        %v3637 = vmul.f32 %v3608, %v2218
        %v3638 = vmul.f32 %v3610, %v2218
        %v3639 = vmul.f32 %v3612, %v2218
        %v3640 = vmul.f32 %v3614, %v2218
        %v3641 = vmul.f32 %v3616, %v2218
        %v3642 = vmul.f32 %v3618, %v2218
        %v3643 = vmul.f32 %v3620, %v2218
        %v3644 = vmul.f32 %v3622, %v2218
        %v3645 = vmul.f32 %v3624, %v2218
        %v3646 = vmul.f32 %v3626, %v2218
        %v3647 = vmul.f32 %v3628, %v2218
        %v3648 = vmul.f32 %v3630, %v2218
        %v3649 = vmul.f32 %v3632, %v2218
        %v3650 = vmul.f32 %v3634, %v2218
        %v3651 = vsub.f32 %v3585, %v3635
        %v3652 = vsub.f32 %v3586, %v3636
        %v3653 = vsub.f32 %v3587, %v3637
        %v3654 = vsub.f32 %v3588, %v3638
        %v3655 = vsub.f32 %v3589, %v3639
        %v3656 = vsub.f32 %v3590, %v3640
        %v3657 = vsub.f32 %v3591, %v3641
        %v3658 = vsub.f32 %v3592, %v3642
        %v3659 = vsub.f32 %v3593, %v3643
        %v3660 = vsub.f32 %v3594, %v3644
        %v3661 = vsub.f32 %v3595, %v3645
        %v3662 = vsub.f32 %v3596, %v3646
        %v3663 = vsub.f32 %v3597, %v3647
        %v3664 = vsub.f32 %v3598, %v3648
        %v3665 = vsub.f32 %v3599, %v3649
        %v3666 = vsub.f32 %v3600, %v3650
        %v3667 = vmul.f32 %v3651, %v3651
        %v3668 = vmul.f32 %v3652, %v3652
        %v3669 = vmul.f32 %v3653, %v3653
        %v3670 = vmul.f32 %v3654, %v3654
        %v3671 = vmul.f32 %v3655, %v3655
        %v3672 = vmul.f32 %v3656, %v3656
        %v3673 = vmul.f32 %v3657, %v3657
        %v3674 = vmul.f32 %v3658, %v3658
        %v3675 = vmul.f32 %v3659, %v3659
        %v3676 = vmul.f32 %v3660, %v3660
        %v3677 = vmul.f32 %v3661, %v3661
        %v3678 = vmul.f32 %v3662, %v3662
        %v3679 = vmul.f32 %v3663, %v3663
        %v3680 = vmul.f32 %v3664, %v3664
        %v3681 = vmul.f32 %v3665, %v3665
        %v3682 = vmul.f32 %v3666, %v3666
        %3683 = vadd.xlane.f32.xlu0 %v3667
        %v3684 = vpop.xlane.xlu0 %3683
        %3685 = vadd.xlane.f32.xlu0 %v3668
        %v3686 = vpop.xlane.xlu0 %3685
        %3687 = vadd.xlane.f32.xlu0 %v3669
        %v3688 = vpop.xlane.xlu0 %3687
        %3689 = vadd.xlane.f32.xlu0 %v3670
        %v3690 = vpop.xlane.xlu0 %3689
        %3691 = vadd.xlane.f32.xlu0 %v3671
        %v3692 = vpop.xlane.xlu0 %3691
        %3693 = vadd.xlane.f32.xlu0 %v3672
        %v3694 = vpop.xlane.xlu0 %3693
        %3695 = vadd.xlane.f32.xlu0 %v3673
        %v3696 = vpop.xlane.xlu0 %3695
        %3697 = vadd.xlane.f32.xlu0 %v3674
        %v3698 = vpop.xlane.xlu0 %3697
        %3699 = vadd.xlane.f32.xlu0 %v3675
        %v3700 = vpop.xlane.xlu0 %3699
        %3701 = vadd.xlane.f32.xlu0 %v3676
        %v3702 = vpop.xlane.xlu0 %3701
        %3703 = vadd.xlane.f32.xlu0 %v3677
        %v3704 = vpop.xlane.xlu0 %3703
        %3705 = vadd.xlane.f32.xlu0 %v3678
        %v3706 = vpop.xlane.xlu0 %3705
        %3707 = vadd.xlane.f32.xlu0 %v3679
        %v3708 = vpop.xlane.xlu0 %3707
        %3709 = vadd.xlane.f32.xlu0 %v3680
        %v3710 = vpop.xlane.xlu0 %3709
        %3711 = vadd.xlane.f32.xlu0 %v3681
        %v3712 = vpop.xlane.xlu0 %3711
        %3713 = vadd.xlane.f32.xlu0 %v3682
        %v3714 = vpop.xlane.xlu0 %3713
        %v3715 = vmul.f32 %v3684, %v2218
        %v3716 = vmul.f32 %v3686, %v2218
        %v3717 = vmul.f32 %v3688, %v2218
        %v3718 = vmul.f32 %v3690, %v2218
        %v3719 = vmul.f32 %v3692, %v2218
        %v3720 = vmul.f32 %v3694, %v2218
        %v3721 = vmul.f32 %v3696, %v2218
        %v3722 = vmul.f32 %v3698, %v2218
        %v3723 = vmul.f32 %v3700, %v2218
        %v3724 = vmul.f32 %v3702, %v2218
        %v3725 = vmul.f32 %v3704, %v2218
        %v3726 = vmul.f32 %v3706, %v2218
        %v3727 = vmul.f32 %v3708, %v2218
        %v3728 = vmul.f32 %v3710, %v2218
        %v3729 = vmul.f32 %v3712, %v2218
        %v3730 = vmul.f32 %v3714, %v2218
        %v3731 = vadd.f32 %v3715, 1e-06
        %v3732 = vadd.f32 %v3716, 1e-06
        %v3733 = vadd.f32 %v3717, 1e-06
        %v3734 = vadd.f32 %v3718, 1e-06
        %v3735 = vadd.f32 %v3719, 1e-06
        %v3736 = vadd.f32 %v3720, 1e-06
        %v3737 = vadd.f32 %v3721, 1e-06
        %v3738 = vadd.f32 %v3722, 1e-06
        %v3739 = vadd.f32 %v3723, 1e-06
        %v3740 = vadd.f32 %v3724, 1e-06
        %v3741 = vadd.f32 %v3725, 1e-06
        %v3742 = vadd.f32 %v3726, 1e-06
        %v3743 = vadd.f32 %v3727, 1e-06
        %v3744 = vadd.f32 %v3728, 1e-06
        %v3745 = vadd.f32 %v3729, 1e-06
        %v3746 = vadd.f32 %v3730, 1e-06
        %v3747 = vrsqrt.pop %v3731
        %v3748 = vmul.f32 %v3747, %v3731
        %v3749 = vmul.f32 %v3748, %v3747
        %v3750 = vmul.f32 0.5, %v3749
        %v3751 = vsub.f32 1.5, %v3750
        %v3752 = vmul.f32 %v3747, %v3751
        %vm3753 = vweird.f32 %v3731
        %vm3754 = vweird.f32 %v3747
        %vm3755 = vmor %vm3753, %vm3754
        %v3756 = vsel %vm3755, %v3747, %v3752
        %v3757 = vrsqrt.pop %v3732
        %v3758 = vmul.f32 %v3757, %v3732
        %v3759 = vmul.f32 %v3758, %v3757
        %v3760 = vmul.f32 0.5, %v3759
        %v3761 = vsub.f32 1.5, %v3760
        %v3762 = vmul.f32 %v3757, %v3761
        %vm3763 = vweird.f32 %v3732
        %vm3764 = vweird.f32 %v3757
        %vm3765 = vmor %vm3763, %vm3764
        %v3766 = vsel %vm3765, %v3757, %v3762
        %v3767 = vrsqrt.pop %v3733
        %v3768 = vmul.f32 %v3767, %v3733
        %v3769 = vmul.f32 %v3768, %v3767
        %v3770 = vmul.f32 0.5, %v3769
        %v3771 = vsub.f32 1.5, %v3770
        %v3772 = vmul.f32 %v3767, %v3771
        %vm3773 = vweird.f32 %v3733
        %vm3774 = vweird.f32 %v3767
        %vm3775 = vmor %vm3773, %vm3774
        %v3776 = vsel %vm3775, %v3767, %v3772
        %v3777 = vrsqrt.pop %v3734
        %v3778 = vmul.f32 %v3777, %v3734
        %v3779 = vmul.f32 %v3778, %v3777
        %v3780 = vmul.f32 0.5, %v3779
        %v3781 = vsub.f32 1.5, %v3780
        %v3782 = vmul.f32 %v3777, %v3781
        %vm3783 = vweird.f32 %v3734
        %vm3784 = vweird.f32 %v3777
        %vm3785 = vmor %vm3783, %vm3784
        %v3786 = vsel %vm3785, %v3777, %v3782
        %v3787 = vrsqrt.pop %v3735
        %v3788 = vmul.f32 %v3787, %v3735
        %v3789 = vmul.f32 %v3788, %v3787
        %v3790 = vmul.f32 0.5, %v3789
        %v3791 = vsub.f32 1.5, %v3790
        %v3792 = vmul.f32 %v3787, %v3791
        %vm3793 = vweird.f32 %v3735
        %vm3794 = vweird.f32 %v3787
        %vm3795 = vmor %vm3793, %vm3794
        %v3796 = vsel %vm3795, %v3787, %v3792
        %v3797 = vrsqrt.pop %v3736
        %v3798 = vmul.f32 %v3797, %v3736
        %v3799 = vmul.f32 %v3798, %v3797
        %v3800 = vmul.f32 0.5, %v3799
        %v3801 = vsub.f32 1.5, %v3800
        %v3802 = vmul.f32 %v3797, %v3801
        %vm3803 = vweird.f32 %v3736
        %vm3804 = vweird.f32 %v3797
        %vm3805 = vmor %vm3803, %vm3804
        %v3806 = vsel %vm3805, %v3797, %v3802
        %v3807 = vrsqrt.pop %v3737
        %v3808 = vmul.f32 %v3807, %v3737
        %v3809 = vmul.f32 %v3808, %v3807
        %v3810 = vmul.f32 0.5, %v3809
        %v3811 = vsub.f32 1.5, %v3810
        %v3812 = vmul.f32 %v3807, %v3811
        %vm3813 = vweird.f32 %v3737
        %vm3814 = vweird.f32 %v3807
        %vm3815 = vmor %vm3813, %vm3814
        %v3816 = vsel %vm3815, %v3807, %v3812
        %v3817 = vrsqrt.pop %v3738
        %v3818 = vmul.f32 %v3817, %v3738
        %v3819 = vmul.f32 %v3818, %v3817
        %v3820 = vmul.f32 0.5, %v3819
        %v3821 = vsub.f32 1.5, %v3820
        %v3822 = vmul.f32 %v3817, %v3821
        %vm3823 = vweird.f32 %v3738
        %vm3824 = vweird.f32 %v3817
        %vm3825 = vmor %vm3823, %vm3824
        %v3826 = vsel %vm3825, %v3817, %v3822
        %v3827 = vrsqrt.pop %v3739
        %v3828 = vmul.f32 %v3827, %v3739
        %v3829 = vmul.f32 %v3828, %v3827
        %v3830 = vmul.f32 0.5, %v3829
        %v3831 = vsub.f32 1.5, %v3830
        %v3832 = vmul.f32 %v3827, %v3831
        %vm3833 = vweird.f32 %v3739
        %vm3834 = vweird.f32 %v3827
        %vm3835 = vmor %vm3833, %vm3834
        %v3836 = vsel %vm3835, %v3827, %v3832
        %v3837 = vrsqrt.pop %v3740
        %v3838 = vmul.f32 %v3837, %v3740
        %v3839 = vmul.f32 %v3838, %v3837
        %v3840 = vmul.f32 0.5, %v3839
        %v3841 = vsub.f32 1.5, %v3840
        %v3842 = vmul.f32 %v3837, %v3841
        %vm3843 = vweird.f32 %v3740
        %vm3844 = vweird.f32 %v3837
        %vm3845 = vmor %vm3843, %vm3844
        %v3846 = vsel %vm3845, %v3837, %v3842
        %v3847 = vrsqrt.pop %v3741
        %v3848 = vmul.f32 %v3847, %v3741
        %v3849 = vmul.f32 %v3848, %v3847
        %v3850 = vmul.f32 0.5, %v3849
        %v3851 = vsub.f32 1.5, %v3850
        %v3852 = vmul.f32 %v3847, %v3851
        %vm3853 = vweird.f32 %v3741
        %vm3854 = vweird.f32 %v3847
        %vm3855 = vmor %vm3853, %vm3854
        %v3856 = vsel %vm3855, %v3847, %v3852
        %v3857 = vrsqrt.pop %v3742
        %v3858 = vmul.f32 %v3857, %v3742
        %v3859 = vmul.f32 %v3858, %v3857
        %v3860 = vmul.f32 0.5, %v3859
        %v3861 = vsub.f32 1.5, %v3860
        %v3862 = vmul.f32 %v3857, %v3861
        %vm3863 = vweird.f32 %v3742
        %vm3864 = vweird.f32 %v3857
        %vm3865 = vmor %vm3863, %vm3864
        %v3866 = vsel %vm3865, %v3857, %v3862
        %v3867 = vrsqrt.pop %v3743
        %v3868 = vmul.f32 %v3867, %v3743
        %v3869 = vmul.f32 %v3868, %v3867
        %v3870 = vmul.f32 0.5, %v3869
        %v3871 = vsub.f32 1.5, %v3870
        %v3872 = vmul.f32 %v3867, %v3871
        %vm3873 = vweird.f32 %v3743
        %vm3874 = vweird.f32 %v3867
        %vm3875 = vmor %vm3873, %vm3874
        %v3876 = vsel %vm3875, %v3867, %v3872
        %v3877 = vrsqrt.pop %v3744
        %v3878 = vmul.f32 %v3877, %v3744
        %v3879 = vmul.f32 %v3878, %v3877
        %v3880 = vmul.f32 0.5, %v3879
        %v3881 = vsub.f32 1.5, %v3880
        %v3882 = vmul.f32 %v3877, %v3881
        %vm3883 = vweird.f32 %v3744
        %vm3884 = vweird.f32 %v3877
        %vm3885 = vmor %vm3883, %vm3884
        %v3886 = vsel %vm3885, %v3877, %v3882
        %v3887 = vrsqrt.pop %v3745
        %v3888 = vmul.f32 %v3887, %v3745
        %v3889 = vmul.f32 %v3888, %v3887
        %v3890 = vmul.f32 0.5, %v3889
        %v3891 = vsub.f32 1.5, %v3890
        %v3892 = vmul.f32 %v3887, %v3891
        %vm3893 = vweird.f32 %v3745
        %vm3894 = vweird.f32 %v3887
        %vm3895 = vmor %vm3893, %vm3894
        %v3896 = vsel %vm3895, %v3887, %v3892
        %v3897 = vrsqrt.pop %v3746
        %v3898 = vmul.f32 %v3897, %v3746
        %v3899 = vmul.f32 %v3898, %v3897
        %v3900 = vmul.f32 0.5, %v3899
        %v3901 = vsub.f32 1.5, %v3900
        %v3902 = vmul.f32 %v3897, %v3901
        %vm3903 = vweird.f32 %v3746
        %vm3904 = vweird.f32 %v3897
        %vm3905 = vmor %vm3903, %vm3904
        %v3906 = vsel %vm3905, %v3897, %v3902
        %v3907 = vmul.f32 %v3651, %v3756
        %v3908 = vmul.f32 %v3652, %v3766
        %v3909 = vmul.f32 %v3653, %v3776
        %v3910 = vmul.f32 %v3654, %v3786
        %v3911 = vmul.f32 %v3655, %v3796
        %v3912 = vmul.f32 %v3656, %v3806
        %v3913 = vmul.f32 %v3657, %v3816
        %v3914 = vmul.f32 %v3658, %v3826
        %v3915 = vmul.f32 %v3659, %v3836
        %v3916 = vmul.f32 %v3660, %v3846
        %v3917 = vmul.f32 %v3661, %v3856
        %v3918 = vmul.f32 %v3662, %v3866
        %v3919 = vmul.f32 %v3663, %v3876
        %v3920 = vmul.f32 %v3664, %v3886
        %v3921 = vmul.f32 %v3665, %v3896
        %v3922 = vmul.f32 %v3666, %v3906
        %v3924 = vperm.slane %v3601, 0
        %v3926 = vmul.f32 %v3907, %v3924
        %v3927 = vmul.f32 %v3908, %v3924
        %v3928 = vmul.f32 %v3909, %v3924
        %v3929 = vmul.f32 %v3910, %v3924
        %v3930 = vmul.f32 %v3911, %v3924
        %v3931 = vmul.f32 %v3912, %v3924
        %v3932 = vmul.f32 %v3913, %v3924
        %v3933 = vmul.f32 %v3914, %v3924
        %v3934 = vmul.f32 %v3915, %v3924
        %v3935 = vmul.f32 %v3916, %v3924
        %v3936 = vmul.f32 %v3917, %v3924
        %v3937 = vmul.f32 %v3918, %v3924
        %v3938 = vmul.f32 %v3919, %v3924
        %v3939 = vmul.f32 %v3920, %v3924
        %v3940 = vmul.f32 %v3921, %v3924
        %v3941 = vmul.f32 %v3922, %v3924
        %v3943 = vperm.slane %v3602, 0
        %v3945 = vadd.f32 %v3926, %v3943
        %v3946 = vadd.f32 %v3927, %v3943
        %v3947 = vadd.f32 %v3928, %v3943
        %v3948 = vadd.f32 %v3929, %v3943
        %v3949 = vadd.f32 %v3930, %v3943
        %v3950 = vadd.f32 %v3931, %v3943
        %v3951 = vadd.f32 %v3932, %v3943
        %v3952 = vadd.f32 %v3933, %v3943
        %v3953 = vadd.f32 %v3934, %v3943
        %v3954 = vadd.f32 %v3935, %v3943
        %v3955 = vadd.f32 %v3936, %v3943
        %v3956 = vadd.f32 %v3937, %v3943
        %v3957 = vadd.f32 %v3938, %v3943
        %v3958 = vadd.f32 %v3939, %v3943
        %v3959 = vadd.f32 %v3940, %v3943
        %v3960 = vadd.f32 %v3941, %v3943
        %3961 = vst [vmem:[%s445] sm:$0xff] %v3945
        %3962 = vst [vmem:[%s445 + $0x8] sm:$0xff] %v3946
        %3963 = vst [vmem:[%s445 + $0x10] sm:$0xff] %v3947
        %3964 = vst [vmem:[%s445 + $0x18] sm:$0xff] %v3948
        %3965 = vst [vmem:[%s445 + $0x20] sm:$0xff] %v3949
        %3966 = vst [vmem:[%s445 + $0x28] sm:$0xff] %v3950
        %3967 = vst [vmem:[%s445 + $0x30] sm:$0xff] %v3951
        %3968 = vst [vmem:[%s445 + $0x38] sm:$0xff] %v3952
        %3969 = vst [vmem:[%s445 + $0x40] sm:$0xff] %v3953
        %3970 = vst [vmem:[%s445 + $0x48] sm:$0xff] %v3954
        %3971 = vst [vmem:[%s445 + $0x50] sm:$0xff] %v3955
        %3972 = vst [vmem:[%s445 + $0x58] sm:$0xff] %v3956
        %3973 = vst [vmem:[%s445 + $0x60] sm:$0xff] %v3957
        %3974 = vst [vmem:[%s445 + $0x68] sm:$0xff] %v3958
        %3975 = vst [vmem:[%s445 + $0x70] sm:$0xff] %v3959
        %3976 = vst [vmem:[%s445 + $0x78] sm:$0xff] %v3960
        %s3977 = sand.u32 %s252, 1
        %s3978 = scalar_lea.sflag [#allocation5], %s3977
        %s3979 = sand.u32 %s252, 1
        %s3980 = smul.addr %s3979, 128
        %s3981 = scalar_lea.vmem [#allocation12], %s3980
        // Predicated region
        $region81: #{tpu_custom_call.1} parent=59 // pred_check
          %p3982 = pneg %p262
        $region82: #{tpu_custom_call.1} parent=59 // pred_check_branch
          %3984 = sbr.rel (%p3982) target = $region84
        $region83: #{tpu_custom_call.1} parent=59 // pred_region
          %s3985 = smul.u32 16, %s29
          %3987 = vsyncadd %s3978, 0
          %s3988 = smul.addr %s3985, 8
          %s3989 = scalar_lea.hbm %s10, %s3988
          %s3990 = sshll.u32 %s3981, 4
          %s3991 = int_to_ptr.vmem [resolvable:$true] %s3990
          %s3992 = sshll.u32 %s3989, 4
          %s3993 = int_to_ptr.hbm [resolvable:$true] %s3992
          %3998 = dma.vmem_to_hbm [thread:$0]  %s3991, 2048, %s3993, %s3978, 128, 128, 8
        $region84: #{tpu_custom_call.1} parent=59 // pred_fallthru
          _
      $region60: #{tpu_custom_call.1} parent=5 // pred_fallthru
        _
      %p3999 = scmp.le.s32.totalorder 2, %s24
      // Predicated region
      $region85: #{tpu_custom_call.1} parent=5 // pred_check
        %p4000 = pneg %p3999
      $region86: #{tpu_custom_call.1} parent=5 // pred_check_branch
        %4002 = sbr.rel (%p4000) target = $region88
      $region87: #{tpu_custom_call.1} parent=5 // pred_region
        %s4003 = ssub.s32 %s24, 2
        // Predicated region
        $region89: #{tpu_custom_call.1} parent=87 // pred_check
          %p4004 = pneg %p268
        $region90: #{tpu_custom_call.1} parent=87 // pred_check_branch
          %4006 = sbr.rel (%p4004) target = $region92
        $region91: #{tpu_custom_call.1} parent=87 // pred_region
          %s4007 = sand.u32 %s253, 1
          %s4008 = scalar_lea.sflag [#allocation5], %s4007
          %s4009 = sand.u32 %s253, 1
          %s4010 = smul.addr %s4009, 128
          %s4011 = scalar_lea.vmem [#allocation12], %s4010
          %4013 = dma.done %s4008, 2048
        $region92: #{tpu_custom_call.1} parent=87 // pred_fallthru
          _
      $region88: #{tpu_custom_call.1} parent=5 // pred_fallthru
        _
    $region6: #{tpu_custom_call.1} parent=1 // loop_footer
      %s28 = sadd.s32 1, %s24
    $region7: #{tpu_custom_call.1} parent=1 // loop_footer_branch
      %23 = sbr.rel target = $region3
    $region8: #{tpu_custom_call.1} parent=1 // loop_exit
      _
    %4014 = vsyncpa [#allocation4], 1
    %s4015 = scalar_lea.sflag [#allocation4], 1
    %4016 = vsyncpa %s4015, 1
    %4017 = vsyncpa [#allocation7], 1
    %4018 = vsyncpa [#allocation10], 1
    %4019 = vsyncpa [#allocation5], 1
    %s4020 = scalar_lea.sflag [#allocation5], 1
    %4021 = vsyncpa %s4020, 1

// kernel: tpu_custom_call.1
$region0: #{tpu_custom_call.1}
  #allocation0 [shape = 'u32[]', space=smem, size = 0x4, offset = 0x4, fixed_abs, tag = 'smem constant byte address 0x4 - core index']
  #allocation1 [shape = 'u32[72,128]{1,0:T(1,128)}', space=vmem, size = 0x9000, scoped, tag = 'internal scratch']
  #allocation2 [shape = 'bf16[128,128]{1,0:T(8,128)(2,1)}', space=vmem, size = 0x8000, scoped, tag = 'scratch operand']
  %s0 = inlined_call_operand.hbm [shape: f32[512,128], index: 0, kind: input, shape index: {}]
  %s1 = inlined_call_operand.hbm [shape: bf16[128,384], index: 1, kind: input, shape index: {}]
  %s2 = inlined_call_operand.hbm [shape: bf16[128,128], index: 2, kind: input, shape index: {}]
  %s3 = inlined_call_operand.vmem [shape: f32[1,128], index: 3, kind: input, shape index: {}]
  %s4 = inlined_call_operand.vmem [shape: f32[1,128], index: 4, kind: input, shape index: {}]
  %s5 = inlined_call_operand.vmem [shape: f32[1,128], index: 5, kind: input, shape index: {}]
  %s6 = inlined_call_operand.hbm [shape: bf16[128,512], index: 6, kind: input, shape index: {}]
  %s7 = inlined_call_operand.hbm [shape: bf16[512,128], index: 7, kind: input, shape index: {}]
  %s8 = inlined_call_operand.vmem [shape: f32[1,128], index: 8, kind: input, shape index: {}]
  %s9 = inlined_call_operand.vmem [shape: f32[1,128], index: 9, kind: input, shape index: {}]
  %s10 = inlined_call_operand.hbm [shape: f32[512,128], index: 10, kind: output, shape index: {}]
  %s11 = sld [smem:[#allocation0]]
  $region93: #{tpu_custom_call.1} parent=0
    _
  %s13 = ssub.s32 1, %s11
  %s14 = scalar_select 0, %s13, %s11
  $region1: #{tpu_custom_call.1} parent=0
    #allocation3 [shape = 'u8[131072]{0}', space=vmem, size = 0x20000, scoped, tag = 'input window, operand 0']
    #allocation4 [shape = 's32[2]{0}', space=sflag, size = 0x8, scoped, tag = 'scoped memory for tpu_custom_call.1']
    #allocation5 [shape = 's32[2]{0}', space=sflag, size = 0x8, scoped, tag = 'scoped memory for tpu_custom_call.1']
    #allocation6 [shape = 'u8[98304]{0}', space=vmem, size = 0x18000, scoped, tag = 'input window, operand 1, single buffered']
    #allocation7 [shape = 's32[1]{0}', space=sflag, size = 0x4, scoped, tag = 'scoped memory for tpu_custom_call.1']
    #allocation8 [shape = 'u8[32768]{0}', space=vmem, size = 0x8000, scoped, tag = 'input window, operand 2, single buffered']
    #allocation9 [shape = 'u8[131072]{0}', space=vmem, size = 0x20000, scoped, tag = 'input window, operand 6, single buffered']
    #allocation10 [shape = 's32[1]{0}', space=sflag, size = 0x4, scoped, tag = 'scoped memory for tpu_custom_call.1']
    #allocation11 [shape = 'u8[131072]{0}', space=vmem, size = 0x20000, scoped, tag = 'input window, operand 7, single buffered']
    #allocation12 [shape = 'u8[131072]{0}', space=vmem, size = 0x20000, scoped, tag = 'output window, operand 0']
    %15 = vsyncpa [#allocation4], 0
    %s16 = scalar_lea.sflag [#allocation4], 1
    %17 = vsyncpa %s16, 0
    %18 = vsyncpa [#allocation7], 0
    %19 = vsyncpa [#allocation10], 0
    %20 = vsyncpa [#allocation5], 0
    %s21 = scalar_lea.sflag [#allocation5], 1
    %22 = vsyncpa %s21, 0
    loop: start=0, step=1, limit=6
    $region2: #{tpu_custom_call.1} parent=1 // loop_pre_header
      _
    $region3: #{tpu_custom_call.1} parent=1 // loop_header
      %s24 = sphi 0, %s28
      %p25 = scmp.ge.s32.totalorder %s24, 6
      %s34 = sphi 0, %s36
      %s37 = sphi 0, %s34
      %s38 = sphi 0, %s37
      %s54 = sphi 0, %s38
      %s58 = sphi 0, %s58
      %s60 = sphi 0, %s58
      %s61 = sphi 0, %s60
      %s75 = sphi 0, %s61
      %s79 = sphi 0, %s79
      %s81 = sphi 0, %s79
      %s82 = sphi 0, %s81
      %s96 = sphi 0, %s82
      %s100 = sphi 0, %s100
      %s102 = sphi 0, %s100
      %s103 = sphi 0, %s102
      %s117 = sphi 0, %s103
      %s121 = sphi 0, %s121
      %s123 = sphi 0, %s121
      %s124 = sphi 0, %s123
      %s138 = sphi 0, %s124
      %s142 = sphi 0, %s142
      %s144 = sphi 0, %s142
      %s145 = sphi 0, %s144
      %s159 = sphi 0, %s145
      %s163 = sphi 0, %s163
      %s165 = sphi 0, %s163
      %s166 = sphi 0, %s165
      %s180 = sphi 0, %s166
      %s184 = sphi 0, %s184
      %s186 = sphi 0, %s184
      %s187 = sphi 0, %s186
      %s201 = sphi 0, %s187
      %s205 = sphi 0, %s205
      %s207 = sphi 0, %s205
      %s208 = sphi 0, %s207
      %s222 = sphi 0, %s208
      %s226 = sphi 0, %s226
      %s228 = sphi 0, %s226
      %s229 = sphi 0, %s228
      %s243 = sphi 0, %s229
      %s249 = sphi 0, %s251
      %s252 = sphi 0, %s249
      %s253 = sphi 0, %s252
      %s269 = sphi 0, %s253
    $region4: #{tpu_custom_call.1} parent=1 // loop_header_branch
      %27 = sbr.rel (%p25) target = $region8
    $region5: #{tpu_custom_call.1} parent=1 // loop_body
      %s29 = ssub.s32 %s24, 1
      %s30 = ssub.s32 %s24, 2
      %s31 = sadd.s32 %s24, 1
      %s32 = ssub.s32 %s24, %s31
      %p33 = scmp.eq.s32.totalorder %s32, 0
      %s35 = sadd.s32 %s34, 1
      %s36 = scalar_select %p33, %s34, %s35
      %p39 = pneg %p33
      %p40 = scmp.eq.s32.totalorder %s24, 3
      %p41 = por %p39, %p40
      %p42 = scmp.ne.s32.totalorder %s34, %s37
      %p43 = scmp.eq.s32.totalorder %s24, 0
      %p44 = por %p42, %p43
      %p45 = scmp.ne.s32.totalorder %s34, %s37
      %p46 = scmp.eq.s32.totalorder %s29, 3
      %p47 = por %p45, %p46
      %p48 = scmp.ne.s32.totalorder %s37, %s38
      %p49 = scmp.eq.s32.totalorder %s29, 0
      %p50 = por %p48, %p49
      %p51 = scmp.ne.s32.totalorder %s37, %s38
      %p52 = scmp.eq.s32.totalorder %s30, 3
      %p53 = por %p51, %p52
      %p55 = scmp.ne.s32.totalorder %s38, %s54
      %p56 = scmp.eq.s32.totalorder %s30, 0
      %p57 = por %p55, %p56
      %s59 = sadd.s32 %s58, 1
      %p62 = scmp.eq.s32.totalorder %s24, 3
      %p63 = scmp.ne.s32.totalorder %s58, %s60
      %p64 = scmp.eq.s32.totalorder %s24, 0
      %p65 = por %p63, %p64
      %p66 = scmp.ne.s32.totalorder %s58, %s60
      %p67 = scmp.eq.s32.totalorder %s29, 3
      %p68 = por %p66, %p67
      %p69 = scmp.ne.s32.totalorder %s60, %s61
      %p70 = scmp.eq.s32.totalorder %s29, 0
      %p71 = por %p69, %p70
      %p72 = scmp.ne.s32.totalorder %s60, %s61
      %p73 = scmp.eq.s32.totalorder %s30, 3
      %p74 = por %p72, %p73
      %p76 = scmp.ne.s32.totalorder %s61, %s75
      %p77 = scmp.eq.s32.totalorder %s30, 0
      %p78 = por %p76, %p77
      %s80 = sadd.s32 %s79, 1
      %p83 = scmp.eq.s32.totalorder %s24, 3
      %p84 = scmp.ne.s32.totalorder %s79, %s81
      %p85 = scmp.eq.s32.totalorder %s24, 0
      %p86 = por %p84, %p85
      %p87 = scmp.ne.s32.totalorder %s79, %s81
      %p88 = scmp.eq.s32.totalorder %s29, 3
      %p89 = por %p87, %p88
      %p90 = scmp.ne.s32.totalorder %s81, %s82
      %p91 = scmp.eq.s32.totalorder %s29, 0
      %p92 = por %p90, %p91
      %p93 = scmp.ne.s32.totalorder %s81, %s82
      %p94 = scmp.eq.s32.totalorder %s30, 3
      %p95 = por %p93, %p94
      %p97 = scmp.ne.s32.totalorder %s82, %s96
      %p98 = scmp.eq.s32.totalorder %s30, 0
      %p99 = por %p97, %p98
      %s101 = sadd.s32 %s100, 1
      %p104 = scmp.eq.s32.totalorder %s24, 3
      %p105 = scmp.ne.s32.totalorder %s100, %s102
      %p106 = scmp.eq.s32.totalorder %s24, 0
      %p107 = por %p105, %p106
      %p108 = scmp.ne.s32.totalorder %s100, %s102
      %p109 = scmp.eq.s32.totalorder %s29, 3
      %p110 = por %p108, %p109
      %p111 = scmp.ne.s32.totalorder %s102, %s103
      %p112 = scmp.eq.s32.totalorder %s29, 0
      %p113 = por %p111, %p112
      %p114 = scmp.ne.s32.totalorder %s102, %s103
      %p115 = scmp.eq.s32.totalorder %s30, 3
      %p116 = por %p114, %p115
      %p118 = scmp.ne.s32.totalorder %s103, %s117
      %p119 = scmp.eq.s32.totalorder %s30, 0
      %p120 = por %p118, %p119
      %s122 = sadd.s32 %s121, 1
      %p125 = scmp.eq.s32.totalorder %s24, 3
      %p126 = scmp.ne.s32.totalorder %s121, %s123
      %p127 = scmp.eq.s32.totalorder %s24, 0
      %p128 = por %p126, %p127
      %p129 = scmp.ne.s32.totalorder %s121, %s123
      %p130 = scmp.eq.s32.totalorder %s29, 3
      %p131 = por %p129, %p130
      %p132 = scmp.ne.s32.totalorder %s123, %s124
      %p133 = scmp.eq.s32.totalorder %s29, 0
      %p134 = por %p132, %p133
      %p135 = scmp.ne.s32.totalorder %s123, %s124
      %p136 = scmp.eq.s32.totalorder %s30, 3
      %p137 = por %p135, %p136
      %p139 = scmp.ne.s32.totalorder %s124, %s138
      %p140 = scmp.eq.s32.totalorder %s30, 0
      %p141 = por %p139, %p140
      %s143 = sadd.s32 %s142, 1
      %p146 = scmp.eq.s32.totalorder %s24, 3
      %p147 = scmp.ne.s32.totalorder %s142, %s144
      %p148 = scmp.eq.s32.totalorder %s24, 0
      %p149 = por %p147, %p148
      %p150 = scmp.ne.s32.totalorder %s142, %s144
      %p151 = scmp.eq.s32.totalorder %s29, 3
      %p152 = por %p150, %p151
      %p153 = scmp.ne.s32.totalorder %s144, %s145
      %p154 = scmp.eq.s32.totalorder %s29, 0
      %p155 = por %p153, %p154
      %p156 = scmp.ne.s32.totalorder %s144, %s145
      %p157 = scmp.eq.s32.totalorder %s30, 3
      %p158 = por %p156, %p157
      %p160 = scmp.ne.s32.totalorder %s145, %s159
      %p161 = scmp.eq.s32.totalorder %s30, 0
      %p162 = por %p160, %p161
      %s164 = sadd.s32 %s163, 1
      %p167 = scmp.eq.s32.totalorder %s24, 3
      %p168 = scmp.ne.s32.totalorder %s163, %s165
      %p169 = scmp.eq.s32.totalorder %s24, 0
      %p170 = por %p168, %p169
      %p171 = scmp.ne.s32.totalorder %s163, %s165
      %p172 = scmp.eq.s32.totalorder %s29, 3
      %p173 = por %p171, %p172
      %p174 = scmp.ne.s32.totalorder %s165, %s166
      %p175 = scmp.eq.s32.totalorder %s29, 0
      %p176 = por %p174, %p175
      %p177 = scmp.ne.s32.totalorder %s165, %s166
      %p178 = scmp.eq.s32.totalorder %s30, 3
      %p179 = por %p177, %p178
      %p181 = scmp.ne.s32.totalorder %s166, %s180
      %p182 = scmp.eq.s32.totalorder %s30, 0
      %p183 = por %p181, %p182
      %s185 = sadd.s32 %s184, 1
      %p188 = scmp.eq.s32.totalorder %s24, 3
      %p189 = scmp.ne.s32.totalorder %s184, %s186
      %p190 = scmp.eq.s32.totalorder %s24, 0
      %p191 = por %p189, %p190
      %p192 = scmp.ne.s32.totalorder %s184, %s186
      %p193 = scmp.eq.s32.totalorder %s29, 3
      %p194 = por %p192, %p193
      %p195 = scmp.ne.s32.totalorder %s186, %s187
      %p196 = scmp.eq.s32.totalorder %s29, 0
      %p197 = por %p195, %p196
      %p198 = scmp.ne.s32.totalorder %s186, %s187
      %p199 = scmp.eq.s32.totalorder %s30, 3
      %p200 = por %p198, %p199
      %p202 = scmp.ne.s32.totalorder %s187, %s201
      %p203 = scmp.eq.s32.totalorder %s30, 0
      %p204 = por %p202, %p203
      %s206 = sadd.s32 %s205, 1
      %p209 = scmp.eq.s32.totalorder %s24, 3
      %p210 = scmp.ne.s32.totalorder %s205, %s207
      %p211 = scmp.eq.s32.totalorder %s24, 0
      %p212 = por %p210, %p211
      %p213 = scmp.ne.s32.totalorder %s205, %s207
      %p214 = scmp.eq.s32.totalorder %s29, 3
      %p215 = por %p213, %p214
      %p216 = scmp.ne.s32.totalorder %s207, %s208
      %p217 = scmp.eq.s32.totalorder %s29, 0
      %p218 = por %p216, %p217
      %p219 = scmp.ne.s32.totalorder %s207, %s208
      %p220 = scmp.eq.s32.totalorder %s30, 3
      %p221 = por %p219, %p220
      %p223 = scmp.ne.s32.totalorder %s208, %s222
      %p224 = scmp.eq.s32.totalorder %s30, 0
      %p225 = por %p223, %p224
      %s227 = sadd.s32 %s226, 1
      %p230 = scmp.eq.s32.totalorder %s24, 3
      %p231 = scmp.ne.s32.totalorder %s226, %s228
      %p232 = scmp.eq.s32.totalorder %s24, 0
      %p233 = por %p231, %p232
      %p234 = scmp.ne.s32.totalorder %s226, %s228
      %p235 = scmp.eq.s32.totalorder %s29, 3
      %p236 = por %p234, %p235
      %p237 = scmp.ne.s32.totalorder %s228, %s229
      %p238 = scmp.eq.s32.totalorder %s29, 0
      %p239 = por %p237, %p238
      %p240 = scmp.ne.s32.totalorder %s228, %s229
      %p241 = scmp.eq.s32.totalorder %s30, 3
      %p242 = por %p240, %p241
      %p244 = scmp.ne.s32.totalorder %s229, %s243
      %p245 = scmp.eq.s32.totalorder %s30, 0
      %p246 = por %p244, %p245
      %s247 = ssub.s32 %s24, %s31
      %p248 = scmp.eq.s32.totalorder %s247, 0
      %s250 = sadd.s32 %s249, 1
      %s251 = scalar_select %p248, %s249, %s250
      %p254 = pneg %p248
      %p255 = scmp.eq.s32.totalorder %s24, 3
      %p256 = por %p254, %p255
      %p257 = scmp.ne.s32.totalorder %s249, %s252
      %p258 = scmp.eq.s32.totalorder %s24, 0
      %p259 = por %p257, %p258
      %p260 = scmp.ne.s32.totalorder %s249, %s252
      %p261 = scmp.eq.s32.totalorder %s29, 3
      %p262 = por %p260, %p261
      %p263 = scmp.ne.s32.totalorder %s252, %s253
      %p264 = scmp.eq.s32.totalorder %s29, 0
      %p265 = por %p263, %p264
      %p266 = scmp.ne.s32.totalorder %s252, %s253
      %p267 = scmp.eq.s32.totalorder %s30, 3
      %p268 = por %p266, %p267
      %p270 = scmp.ne.s32.totalorder %s253, %s269
      %p271 = scmp.eq.s32.totalorder %s30, 0
      %p272 = por %p270, %p271
      %p273 = scmp.le.s32.totalorder 1, %s24
      %p274 = scmp.lt.s32.totalorder %s24, 5
      %p275 = pnand %p273, %p274
      %p276 = pneg %p275
      // Predicated region
      $region9: #{tpu_custom_call.1} parent=5 // pred_check
        _
      $region10: #{tpu_custom_call.1} parent=5 // pred_check_branch
        %278 = sbr.rel (%p275) target = $region12
      $region11: #{tpu_custom_call.1} parent=5 // pred_region
        %s279 = ssub.s32 %s24, 1
        // Predicated region
        $region13: #{tpu_custom_call.1} parent=11 // pred_check
          %p280 = pneg %p71
        $region14: #{tpu_custom_call.1} parent=11 // pred_check_branch
          %282 = sbr.rel (%p280) target = $region16
        $region15: #{tpu_custom_call.1} parent=11 // pred_region
          %284 = vsyncadd [#allocation7], 0
          %s285 = sshll.u32 %s1, 4
          %s286 = int_to_ptr.hbm [resolvable:$true] %s285
          %s287 = sshll.u32 [#allocation6], 4
          %s288 = int_to_ptr.vmem [resolvable:$true] %s287
          %293 = dma.hbm_to_vmem [thread:$0]  %s286, 3072, %s288, [#allocation7], 192, 192, 12
        $region16: #{tpu_custom_call.1} parent=11 // pred_fallthru
          _
        // Predicated region
        $region17: #{tpu_custom_call.1} parent=11 // pred_check
          %p294 = pneg %p92
        $region18: #{tpu_custom_call.1} parent=11 // pred_check_branch
          %296 = sbr.rel (%p294) target = $region20
        $region19: #{tpu_custom_call.1} parent=11 // pred_region
          %298 = vsyncadd [#allocation7], 0
          %s299 = sshll.u32 %s2, 4
          %s300 = int_to_ptr.hbm [resolvable:$true] %s299
          %s301 = sshll.u32 [#allocation8], 4
          %s302 = int_to_ptr.vmem [resolvable:$true] %s301
          %307 = dma.hbm_to_vmem [thread:$0]  %s300, 1024, %s302, [#allocation7], 64, 64, 4
        $region20: #{tpu_custom_call.1} parent=11 // pred_fallthru
          _
        // Predicated region
        $region21: #{tpu_custom_call.1} parent=11 // pred_check
          %p308 = pneg %p113
        $region22: #{tpu_custom_call.1} parent=11 // pred_check_branch
          %310 = sbr.rel (%p308) target = $region24
        $region23: #{tpu_custom_call.1} parent=11 // pred_region
          _
        $region24: #{tpu_custom_call.1} parent=11 // pred_fallthru
          _
        // Predicated region
        $region25: #{tpu_custom_call.1} parent=11 // pred_check
          %p311 = pneg %p134
        $region26: #{tpu_custom_call.1} parent=11 // pred_check_branch
          %313 = sbr.rel (%p311) target = $region28
        $region27: #{tpu_custom_call.1} parent=11 // pred_region
          _
        $region28: #{tpu_custom_call.1} parent=11 // pred_fallthru
          _
        // Predicated region
        $region29: #{tpu_custom_call.1} parent=11 // pred_check
          %p314 = pneg %p155
        $region30: #{tpu_custom_call.1} parent=11 // pred_check_branch
          %316 = sbr.rel (%p314) target = $region32
        $region31: #{tpu_custom_call.1} parent=11 // pred_region
          _
        $region32: #{tpu_custom_call.1} parent=11 // pred_fallthru
          _
        // Predicated region
        $region33: #{tpu_custom_call.1} parent=11 // pred_check
          %p317 = pneg %p176
        $region34: #{tpu_custom_call.1} parent=11 // pred_check_branch
          %319 = sbr.rel (%p317) target = $region36
        $region35: #{tpu_custom_call.1} parent=11 // pred_region
          %321 = vsyncadd [#allocation10], 0
          %s322 = sshll.u32 %s6, 4
          %s323 = int_to_ptr.hbm [resolvable:$true] %s322
          %s324 = sshll.u32 [#allocation9], 4
          %s325 = int_to_ptr.vmem [resolvable:$true] %s324
          %330 = dma.hbm_to_vmem [thread:$0]  %s323, 4096, %s325, [#allocation10], 256, 256, 16
        $region36: #{tpu_custom_call.1} parent=11 // pred_fallthru
          _
        // Predicated region
        $region37: #{tpu_custom_call.1} parent=11 // pred_check
          %p331 = pneg %p197
        $region38: #{tpu_custom_call.1} parent=11 // pred_check_branch
          %333 = sbr.rel (%p331) target = $region40
        $region39: #{tpu_custom_call.1} parent=11 // pred_region
          %335 = vsyncadd [#allocation10], 0
          %s336 = sshll.u32 %s7, 4
          %s337 = int_to_ptr.hbm [resolvable:$true] %s336
          %s338 = sshll.u32 [#allocation11], 4
          %s339 = int_to_ptr.vmem [resolvable:$true] %s338
          %344 = dma.hbm_to_vmem [thread:$0]  %s337, 4096, %s339, [#allocation10], 64, 64, 4
        $region40: #{tpu_custom_call.1} parent=11 // pred_fallthru
          _
        // Predicated region
        $region41: #{tpu_custom_call.1} parent=11 // pred_check
          %p345 = pneg %p218
        $region42: #{tpu_custom_call.1} parent=11 // pred_check_branch
          %347 = sbr.rel (%p345) target = $region44
        $region43: #{tpu_custom_call.1} parent=11 // pred_region
          _
        $region44: #{tpu_custom_call.1} parent=11 // pred_fallthru
          _
        // Predicated region
        $region45: #{tpu_custom_call.1} parent=11 // pred_check
          %p348 = pneg %p239
        $region46: #{tpu_custom_call.1} parent=11 // pred_check_branch
          %350 = sbr.rel (%p348) target = $region48
        $region47: #{tpu_custom_call.1} parent=11 // pred_region
          _
        $region48: #{tpu_custom_call.1} parent=11 // pred_fallthru
          _
      $region12: #{tpu_custom_call.1} parent=5 // pred_fallthru
        _
      %p351 = scmp.lt.s32.totalorder %s24, 4
      // Predicated region
      $region49: #{tpu_custom_call.1} parent=5 // pred_check
        %p352 = pneg %p351
      $region50: #{tpu_custom_call.1} parent=5 // pred_check_branch
        %354 = sbr.rel (%p352) target = $region52
      $region51: #{tpu_custom_call.1} parent=5 // pred_region
        // Predicated region
        $region53: #{tpu_custom_call.1} parent=51 // pred_check
          %p355 = pneg %p44
        $region54: #{tpu_custom_call.1} parent=51 // pred_check_branch
          %357 = sbr.rel (%p355) target = $region56
        $region55: #{tpu_custom_call.1} parent=51 // pred_region
          %s358 = sand.u32 %s34, 1
          %s359 = scalar_lea.sflag [#allocation4], %s358
          %s360 = sand.u32 %s34, 1
          %s361 = smul.addr %s360, 128
          %s362 = scalar_lea.vmem [#allocation3], %s361
          %s363 = smul.u32 16, %s24
          %365 = vsyncadd %s359, 0
          %s366 = smul.addr %s363, 8
          %s367 = scalar_lea.hbm %s0, %s366
          %s368 = sshll.u32 %s367, 4
          %s369 = int_to_ptr.hbm [resolvable:$true] %s368
          %s370 = sshll.u32 %s362, 4
          %s371 = int_to_ptr.vmem [resolvable:$true] %s370
          %376 = dma.hbm_to_vmem [thread:$0]  %s369, 2048, %s371, %s359, 128, 128, 8
        $region56: #{tpu_custom_call.1} parent=51 // pred_fallthru
          _
      $region52: #{tpu_custom_call.1} parent=5 // pred_fallthru
        _
      %p377 = scmp.le.s32.totalorder 1, %s24
      %p378 = scmp.lt.s32.totalorder %s24, 5
      %p379 = pnand %p377, %p378
      %p380 = pneg %p379
      // Predicated region
      $region57: #{tpu_custom_call.1} parent=5 // pred_check
        _
      $region58: #{tpu_custom_call.1} parent=5 // pred_check_branch
        %382 = sbr.rel (%p379) target = $region60
      $region59: #{tpu_custom_call.1} parent=5 // pred_region
        %s383 = ssub.s32 %s24, 1
        %s384 = sand.u32 %s37, 1
        %s385 = scalar_lea.sflag [#allocation4], %s384
        %s386 = sand.u32 %s37, 1
        %s387 = smul.addr %s386, 128
        %s388 = scalar_lea.vmem [#allocation3], %s387
        // Predicated region
        $region61: #{tpu_custom_call.1} parent=59 // pred_check
          %p389 = pneg %p50
        $region62: #{tpu_custom_call.1} parent=59 // pred_check_branch
          %391 = sbr.rel (%p389) target = $region64
        $region63: #{tpu_custom_call.1} parent=59 // pred_region
          %393 = dma.done %s385, 2048
        $region64: #{tpu_custom_call.1} parent=59 // pred_fallthru
          _
        // Predicated region
        $region65: #{tpu_custom_call.1} parent=59 // pred_check
          %p394 = pneg %p71
        $region66: #{tpu_custom_call.1} parent=59 // pred_check_branch
          %396 = sbr.rel (%p394) target = $region68
        $region67: #{tpu_custom_call.1} parent=59 // pred_region
          %398 = dma.done [#allocation7], 3072
        $region68: #{tpu_custom_call.1} parent=59 // pred_fallthru
          _
        // Predicated region
        $region69: #{tpu_custom_call.1} parent=59 // pred_check
          %p399 = pneg %p92
        $region70: #{tpu_custom_call.1} parent=59 // pred_check_branch
          %401 = sbr.rel (%p399) target = $region72
        $region71: #{tpu_custom_call.1} parent=59 // pred_region
          %403 = dma.done [#allocation7], 1024
        $region72: #{tpu_custom_call.1} parent=59 // pred_fallthru
          _
        // Predicated region
        $region73: #{tpu_custom_call.1} parent=59 // pred_check
          %p404 = pneg %p176
        $region74: #{tpu_custom_call.1} parent=59 // pred_check_branch
          %406 = sbr.rel (%p404) target = $region76
        $region75: #{tpu_custom_call.1} parent=59 // pred_region
          %408 = dma.done [#allocation10], 4096
        $region76: #{tpu_custom_call.1} parent=59 // pred_fallthru
          _
        // Predicated region
        $region77: #{tpu_custom_call.1} parent=59 // pred_check
          %p409 = pneg %p197
        $region78: #{tpu_custom_call.1} parent=59 // pred_check_branch
          %411 = sbr.rel (%p409) target = $region80
        $region79: #{tpu_custom_call.1} parent=59 // pred_region
          %413 = dma.done [#allocation10], 4096
        $region80: #{tpu_custom_call.1} parent=59 // pred_fallthru
          _
        %s414 = sand.u32 %s37, 1
        %s415 = scalar_lea.sflag [#allocation4], %s414
        %s416 = sand.u32 %s37, 1
        %s417 = smul.addr %s416, 128
        %s418 = scalar_lea.vmem [#allocation3], %s417
        %p419 = pneg %p50
        %p420 = pneg %p47
        %p421 = pneg %p71
        %p422 = pneg %p68
        %p423 = pneg %p92
        %p424 = pneg %p89
        %p425 = pneg %p113
        %p426 = pneg %p110
        %p427 = pneg %p134
        %p428 = pneg %p131
        %p429 = pneg %p155
        %p430 = pneg %p152
        %p431 = pneg %p176
        %p432 = pneg %p173
        %p433 = pneg %p197
        %p434 = pneg %p194
        %p435 = pneg %p218
        %p436 = pneg %p215
        %p437 = pneg %p239
        %p438 = pneg %p236
        %p439 = pneg %p265
        %p440 = pneg %p262
        %s441 = sand.u32 %s252, 1
        %s442 = scalar_lea.sflag [#allocation5], %s441
        %s443 = sand.u32 %s252, 1
        %s444 = smul.addr %s443, 128
        %s445 = scalar_lea.vmem [#allocation12], %s444
        %s446 = smul.u32 16, %s29
        %s447 = smul.u32 16, %s29
        %v449 = vld [vmem:[%s388] sm:$0xff]
        %v450 = vld [vmem:[%s388 + $0x8] sm:$0xff]
        %v451 = vld [vmem:[%s388 + $0x10] sm:$0xff]
        %v452 = vld [vmem:[%s388 + $0x18] sm:$0xff]
        %v453 = vld [vmem:[%s388 + $0x20] sm:$0xff]
        %v454 = vld [vmem:[%s388 + $0x28] sm:$0xff]
        %v455 = vld [vmem:[%s388 + $0x30] sm:$0xff]
        %v456 = vld [vmem:[%s388 + $0x38] sm:$0xff]
        %v457 = vld [vmem:[%s388 + $0x40] sm:$0xff]
        %v458 = vld [vmem:[%s388 + $0x48] sm:$0xff]
        %v459 = vld [vmem:[%s388 + $0x50] sm:$0xff]
        %v460 = vld [vmem:[%s388 + $0x58] sm:$0xff]
        %v461 = vld [vmem:[%s388 + $0x60] sm:$0xff]
        %v462 = vld [vmem:[%s388 + $0x68] sm:$0xff]
        %v463 = vld [vmem:[%s388 + $0x70] sm:$0xff]
        %v464 = vld [vmem:[%s388 + $0x78] sm:$0xff]
        %v465 = vpack.c.bf16 %v450, %v449
        %v466 = vpack.c.bf16 %v452, %v451
        %v467 = vpack.c.bf16 %v454, %v453
        %v468 = vpack.c.bf16 %v456, %v455
        %v469 = vpack.c.bf16 %v458, %v457
        %v470 = vpack.c.bf16 %v460, %v459
        %v471 = vpack.c.bf16 %v462, %v461
        %v472 = vpack.c.bf16 %v464, %v463
        %v473 = vld [vmem:[#allocation6] sm:$0xff]
        %v474 = vld [vmem:[#allocation6 + $0x8] sm:$0xf]
        %v475 = vld [vmem:[#allocation6 + $0xc] sm:$0xff]
        %v476 = vld [vmem:[#allocation6 + $0x14] sm:$0xf]
        %v477 = vld [vmem:[#allocation6 + $0x18] sm:$0xff]
        %v478 = vld [vmem:[#allocation6 + $0x20] sm:$0xf]
        %v479 = vld [vmem:[#allocation6 + $0x24] sm:$0xff]
        %v480 = vld [vmem:[#allocation6 + $0x2c] sm:$0xf]
        %v481 = vld [vmem:[#allocation6 + $0x30] sm:$0xff]
        %v482 = vld [vmem:[#allocation6 + $0x38] sm:$0xf]
        %v483 = vld [vmem:[#allocation6 + $0x3c] sm:$0xff]
        %v484 = vld [vmem:[#allocation6 + $0x44] sm:$0xf]
        %v485 = vld [vmem:[#allocation6 + $0x48] sm:$0xff]
        %v486 = vld [vmem:[#allocation6 + $0x50] sm:$0xf]
        %v487 = vld [vmem:[#allocation6 + $0x54] sm:$0xff]
        %v488 = vld [vmem:[#allocation6 + $0x5c] sm:$0xf]
        %v489 = vld [vmem:[#allocation6 + $0x60] sm:$0xff]
        %v490 = vld [vmem:[#allocation6 + $0x68] sm:$0xf]
        %v491 = vld [vmem:[#allocation6 + $0x6c] sm:$0xff]
        %v492 = vld [vmem:[#allocation6 + $0x74] sm:$0xf]
        %v493 = vld [vmem:[#allocation6 + $0x78] sm:$0xff]
        %v494 = vld [vmem:[#allocation6 + $0x80] sm:$0xf]
        %v495 = vld [vmem:[#allocation6 + $0x84] sm:$0xff]
        %v496 = vld [vmem:[#allocation6 + $0x8c] sm:$0xf]
        %v497 = vld [vmem:[#allocation6 + $0x90] sm:$0xff]
        %v498 = vld [vmem:[#allocation6 + $0x98] sm:$0xf]
        %v499 = vld [vmem:[#allocation6 + $0x9c] sm:$0xff]
        %v500 = vld [vmem:[#allocation6 + $0xa4] sm:$0xf]
        %v501 = vld [vmem:[#allocation6 + $0xa8] sm:$0xff]
        %v502 = vld [vmem:[#allocation6 + $0xb0] sm:$0xf]
        %v503 = vld [vmem:[#allocation6 + $0xb4] sm:$0xff]
        %v504 = vld [vmem:[#allocation6 + $0xbc] sm:$0xf]
        %v537 = vunpack.c.l.b16 %v473
        %v538 = vunpack.c.h.b16 %v473
        %v539 = vunpack.c.l.b16 %v474
        %v540 = vunpack.c.l.b16 %v475
        %v541 = vunpack.c.h.b16 %v475
        %v542 = vunpack.c.l.b16 %v476
        %v543 = vunpack.c.l.b16 %v477
        %v544 = vunpack.c.h.b16 %v477
        %v545 = vunpack.c.l.b16 %v478
        %v546 = vunpack.c.l.b16 %v479
        %v547 = vunpack.c.h.b16 %v479
        %v548 = vunpack.c.l.b16 %v480
        %v549 = vunpack.c.l.b16 %v481
        %v550 = vunpack.c.h.b16 %v481
        %v551 = vunpack.c.l.b16 %v482
        %v552 = vunpack.c.l.b16 %v483
        %v553 = vunpack.c.h.b16 %v483
        %v554 = vunpack.c.l.b16 %v484
        %v555 = vunpack.c.l.b16 %v485
        %v556 = vunpack.c.h.b16 %v485
        %v557 = vunpack.c.l.b16 %v486
        %v558 = vunpack.c.l.b16 %v487
        %v559 = vunpack.c.h.b16 %v487
        %v560 = vunpack.c.l.b16 %v488
        %v561 = vunpack.c.l.b16 %v489
        %v562 = vunpack.c.h.b16 %v489
        %v563 = vunpack.c.l.b16 %v490
        %v564 = vunpack.c.l.b16 %v491
        %v565 = vunpack.c.h.b16 %v491
        %v566 = vunpack.c.l.b16 %v492
        %v567 = vunpack.c.l.b16 %v493
        %v568 = vunpack.c.h.b16 %v493
        %v569 = vunpack.c.l.b16 %v494
        %v570 = vunpack.c.l.b16 %v495
        %v571 = vunpack.c.h.b16 %v495
        %v572 = vunpack.c.l.b16 %v496
        %v573 = vunpack.c.l.b16 %v497
        %v574 = vunpack.c.h.b16 %v497
        %v575 = vunpack.c.l.b16 %v498
        %v576 = vunpack.c.l.b16 %v499
        %v577 = vunpack.c.h.b16 %v499
        %v578 = vunpack.c.l.b16 %v500
        %v579 = vunpack.c.l.b16 %v501
        %v580 = vunpack.c.h.b16 %v501
        %v581 = vunpack.c.l.b16 %v502
        %v582 = vunpack.c.l.b16 %v503
        %v583 = vunpack.c.h.b16 %v503
        %v584 = vunpack.c.l.b16 %v504
        %v585 = vpack.c.b16 %v540, %v537
        %v586 = vpack.c.b16 %v541, %v538
        %v587 = vpack.c.b16 %v542, %v539
        %v588 = vpack.c.b16 %v546, %v543
        %v589 = vpack.c.b16 %v547, %v544
        %v590 = vpack.c.b16 %v548, %v545
        %v591 = vpack.c.b16 %v552, %v549
        %v592 = vpack.c.b16 %v553, %v550
        %v593 = vpack.c.b16 %v554, %v551
        %v594 = vpack.c.b16 %v558, %v555
        %v595 = vpack.c.b16 %v559, %v556
        %v596 = vpack.c.b16 %v560, %v557
        %v597 = vpack.c.b16 %v564, %v561
        %v598 = vpack.c.b16 %v565, %v562
        %v599 = vpack.c.b16 %v566, %v563
        %v600 = vpack.c.b16 %v570, %v567
        %v601 = vpack.c.b16 %v571, %v568
        %v602 = vpack.c.b16 %v572, %v569
        %v603 = vpack.c.b16 %v576, %v573
        %v604 = vpack.c.b16 %v577, %v574
        %v605 = vpack.c.b16 %v578, %v575
        %v606 = vpack.c.b16 %v582, %v579
        %v607 = vpack.c.b16 %v583, %v580
        %v608 = vpack.c.b16 %v584, %v581
        %633 = vmatpush.bf16.msra.mxu0 %v606
        %634 = vmatpush.bf16.msra.mxu0 %v603
        %635 = vmatpush.bf16.msra.mxu0 %v600
        %636 = vmatpush.bf16.msra.mxu0 %v597
        %637 = vmatpush.bf16.msra.mxu0 %v594
        %638 = vmatpush.bf16.msra.mxu0 %v591
        %639 = vmatpush.bf16.msra.mxu0 %v588
        %640 = vmatpush.bf16.msra.mxu0 %v585
        %641 = vmatmul.bf16.gmra.mxu0 %v465
        %v642 = vpop.f32.mrf.mxu0
        %v643 = vadd.f32 0.0, %v642
        %v644 = vpop.f32.mrf.mxu0
        %v645 = vadd.f32 0.0, %v644
        %646 = vmatmul.bf16.gmra.mxu0 %v466
        %v647 = vpop.f32.mrf.mxu0
        %v648 = vadd.f32 0.0, %v647
        %v649 = vpop.f32.mrf.mxu0
        %v650 = vadd.f32 0.0, %v649
        %651 = vmatmul.bf16.gmra.mxu0 %v467
        %v652 = vpop.f32.mrf.mxu0
        %v653 = vadd.f32 0.0, %v652
        %v654 = vpop.f32.mrf.mxu0
        %v655 = vadd.f32 0.0, %v654
        %656 = vmatmul.bf16.gmra.mxu0 %v468
        %v657 = vpop.f32.mrf.mxu0
        %v658 = vadd.f32 0.0, %v657
        %v659 = vpop.f32.mrf.mxu0
        %v660 = vadd.f32 0.0, %v659
        %661 = vmatmul.bf16.gmra.mxu0 %v469
        %v662 = vpop.f32.mrf.mxu0
        %v663 = vadd.f32 0.0, %v662
        %v664 = vpop.f32.mrf.mxu0
        %v665 = vadd.f32 0.0, %v664
        %666 = vmatmul.bf16.gmra.mxu0 %v470
        %v667 = vpop.f32.mrf.mxu0
        %v668 = vadd.f32 0.0, %v667
        %v669 = vpop.f32.mrf.mxu0
        %v670 = vadd.f32 0.0, %v669
        %671 = vmatmul.bf16.gmra.mxu0 %v471
        %v672 = vpop.f32.mrf.mxu0
        %v673 = vadd.f32 0.0, %v672
        %v674 = vpop.f32.mrf.mxu0
        %v675 = vadd.f32 0.0, %v674
        %676 = vmatmul.bf16.gmra.mxu0 %v472
        %v677 = vpop.f32.mrf.mxu0
        %v678 = vadd.f32 0.0, %v677
        %v679 = vpop.f32.mrf.mxu0
        %v680 = vadd.f32 0.0, %v679
        %681 = vdwg.mxu0
        %682 = vmatpush.bf16.msra.mxu0 %v607
        %683 = vmatpush.bf16.msra.mxu0 %v604
        %684 = vmatpush.bf16.msra.mxu0 %v601
        %685 = vmatpush.bf16.msra.mxu0 %v598
        %686 = vmatpush.bf16.msra.mxu0 %v595
        %687 = vmatpush.bf16.msra.mxu0 %v592
        %688 = vmatpush.bf16.msra.mxu0 %v589
        %689 = vmatpush.bf16.msra.mxu0 %v586
        %690 = vmatmul.bf16.gmra.mxu0 %v465
        %v691 = vpop.f32.mrf.mxu0
        %v692 = vadd.f32 0.0, %v691
        %v693 = vpop.f32.mrf.mxu0
        %v694 = vadd.f32 0.0, %v693
        %695 = vmatmul.bf16.gmra.mxu0 %v466
        %v696 = vpop.f32.mrf.mxu0
        %v697 = vadd.f32 0.0, %v696
        %v698 = vpop.f32.mrf.mxu0
        %v699 = vadd.f32 0.0, %v698
        %700 = vmatmul.bf16.gmra.mxu0 %v467
        %v701 = vpop.f32.mrf.mxu0
        %v702 = vadd.f32 0.0, %v701
        %v703 = vpop.f32.mrf.mxu0
        %v704 = vadd.f32 0.0, %v703
        %705 = vmatmul.bf16.gmra.mxu0 %v468
        %v706 = vpop.f32.mrf.mxu0
        %v707 = vadd.f32 0.0, %v706
        %v708 = vpop.f32.mrf.mxu0
        %v709 = vadd.f32 0.0, %v708
        %710 = vmatmul.bf16.gmra.mxu0 %v469
        %v711 = vpop.f32.mrf.mxu0
        %v712 = vadd.f32 0.0, %v711
        %v713 = vpop.f32.mrf.mxu0
        %v714 = vadd.f32 0.0, %v713
        %715 = vmatmul.bf16.gmra.mxu0 %v470
        %v716 = vpop.f32.mrf.mxu0
        %v717 = vadd.f32 0.0, %v716
        %v718 = vpop.f32.mrf.mxu0
        %v719 = vadd.f32 0.0, %v718
        %720 = vmatmul.bf16.gmra.mxu0 %v471
        %v721 = vpop.f32.mrf.mxu0
        %v722 = vadd.f32 0.0, %v721
        %v723 = vpop.f32.mrf.mxu0
        %v724 = vadd.f32 0.0, %v723
        %725 = vmatmul.bf16.gmra.mxu0 %v472
        %v726 = vpop.f32.mrf.mxu0
        %v727 = vadd.f32 0.0, %v726
        %v728 = vpop.f32.mrf.mxu0
        %v729 = vadd.f32 0.0, %v728
        %730 = vdwg.mxu0
        %731 = vmatpush.bf16.msra.mxu0 %v608
        %732 = vmatpush.bf16.msra.mxu0 %v605
        %733 = vmatpush.bf16.msra.mxu0 %v602
        %734 = vmatpush.bf16.msra.mxu0 %v599
        %735 = vmatpush.bf16.msra.mxu0 %v596
        %736 = vmatpush.bf16.msra.mxu0 %v593
        %737 = vmatpush.bf16.msra.mxu0 %v590
        %738 = vmatpush.bf16.msra.mxu0 %v587
        %739 = vmatmul.bf16.gmra.mxu0 %v465
        %v740 = vpop.f32.mrf.mxu0
        %v741 = vadd.f32 0.0, %v740
        %v742 = vpop.f32.mrf.mxu0
        %v743 = vadd.f32 0.0, %v742
        %744 = vmatmul.bf16.gmra.mxu0 %v466
        %v745 = vpop.f32.mrf.mxu0
        %v746 = vadd.f32 0.0, %v745
        %v747 = vpop.f32.mrf.mxu0
        %v748 = vadd.f32 0.0, %v747
        %749 = vmatmul.bf16.gmra.mxu0 %v467
        %v750 = vpop.f32.mrf.mxu0
        %v751 = vadd.f32 0.0, %v750
        %v752 = vpop.f32.mrf.mxu0
        %v753 = vadd.f32 0.0, %v752
        %754 = vmatmul.bf16.gmra.mxu0 %v468
        %v755 = vpop.f32.mrf.mxu0
        %v756 = vadd.f32 0.0, %v755
        %v757 = vpop.f32.mrf.mxu0
        %v758 = vadd.f32 0.0, %v757
        %759 = vmatmul.bf16.gmra.mxu0 %v469
        %v760 = vpop.f32.mrf.mxu0
        %v761 = vadd.f32 0.0, %v760
        %v762 = vpop.f32.mrf.mxu0
        %v763 = vadd.f32 0.0, %v762
        %764 = vmatmul.bf16.gmra.mxu0 %v470
        %v765 = vpop.f32.mrf.mxu0
        %v766 = vadd.f32 0.0, %v765
        %v767 = vpop.f32.mrf.mxu0
        %v768 = vadd.f32 0.0, %v767
        %769 = vmatmul.bf16.gmra.mxu0 %v471
        %v770 = vpop.f32.mrf.mxu0
        %v771 = vadd.f32 0.0, %v770
        %v772 = vpop.f32.mrf.mxu0
        %v773 = vadd.f32 0.0, %v772
        %774 = vmatmul.bf16.gmra.mxu0 %v472
        %v775 = vpop.f32.mrf.mxu0
        %v776 = vadd.f32 0.0, %v775
        %v777 = vpop.f32.mrf.mxu0
        %v778 = vadd.f32 0.0, %v777
        %779 = vdwg.mxu0
        %v780 = vpack.c.bf16 %v643, %v643
        %v781 = vpack.c.bf16 %v645, %v645
        %v782 = vpack.c.bf16 %v648, %v648
        %v783 = vpack.c.bf16 %v650, %v650
        %v784 = vpack.c.bf16 %v653, %v653
        %v785 = vpack.c.bf16 %v655, %v655
        %v786 = vpack.c.bf16 %v658, %v658
        %v787 = vpack.c.bf16 %v660, %v660
        %v788 = vpack.c.bf16 %v692, %v692
        %v789 = vpack.c.bf16 %v694, %v694
        %v790 = vpack.c.bf16 %v697, %v697
        %v791 = vpack.c.bf16 %v699, %v699
        %v792 = vpack.c.bf16 %v702, %v702
        %v793 = vpack.c.bf16 %v704, %v704
        %v794 = vpack.c.bf16 %v707, %v707
        %v795 = vpack.c.bf16 %v709, %v709
        %v796 = vpack.c.bf16 %v741, %v741
        %v797 = vpack.c.bf16 %v743, %v743
        %v798 = vpack.c.bf16 %v746, %v746
        %v799 = vpack.c.bf16 %v748, %v748
        %v800 = vpack.c.bf16 %v751, %v751
        %v801 = vpack.c.bf16 %v753, %v753
        %v802 = vpack.c.bf16 %v756, %v756
        %v803 = vpack.c.bf16 %v758, %v758
        %v812 = vunpack.c.l.b16 %v780
        %v813 = vunpack.c.l.b16 %v781
        %v814 = vunpack.c.l.b16 %v782
        %v815 = vunpack.c.l.b16 %v783
        %v816 = vunpack.c.l.b16 %v784
        %v817 = vunpack.c.l.b16 %v785
        %v818 = vunpack.c.l.b16 %v786
        %v819 = vunpack.c.l.b16 %v787
        %v820 = vpack.c.b16 %v813, %v812
        %v821 = vpack.c.b16 %v815, %v814
        %v822 = vpack.c.b16 %v817, %v816
        %v823 = vpack.c.b16 %v819, %v818
        %v832 = vunpack.c.l.b16 %v788
        %v833 = vunpack.c.l.b16 %v789
        %v834 = vunpack.c.l.b16 %v790
        %v835 = vunpack.c.l.b16 %v791
        %v836 = vunpack.c.l.b16 %v792
        %v837 = vunpack.c.l.b16 %v793
        %v838 = vunpack.c.l.b16 %v794
        %v839 = vunpack.c.l.b16 %v795
        %v840 = vpack.c.b16 %v833, %v832
        %v841 = vpack.c.b16 %v835, %v834
        %v842 = vpack.c.b16 %v837, %v836
        %v843 = vpack.c.b16 %v839, %v838
        %vm844 = vcmask 523264
        %v846 = vsel %vm844, %v820, 0
        %v849 = vsel %vm844, %v821, 0
        %v852 = vsel %vm844, %v822, 0
        %v855 = vsel %vm844, %v823, 0
        %v858 = vsel %vm844, %v840, 0
        %v861 = vsel %vm844, %v841, 0
        %v864 = vsel %vm844, %v842, 0
        %v867 = vsel %vm844, %v843, 0
        %869 = vmatpush.bf16.xpose.msra.mxu0 0
        %870 = vmatpush.bf16.xpose.msra.mxu0 0
        %871 = vmatpush.bf16.xpose.msra.mxu0 0
        %872 = vmatpush.bf16.xpose.msra.mxu0 0
        %873 = vmatpush.bf16.xpose.msra.mxu0 %v867
        %874 = vmatpush.bf16.xpose.msra.mxu0 %v864
        %875 = vmatpush.bf16.xpose.msra.mxu0 %v861
        %876 = vmatpush.bf16.xpose.msra.mxu0 %v858
        %877 = vmatmul.bf16.gmra.mxu0 %v846
        %v878 = vpop.f32.mrf.mxu0
        %v879 = vadd.f32 0.0, %v878
        %v880 = vpop.f32.mrf.mxu0
        %v881 = vadd.f32 0.0, %v880
        %882 = vmatmul.bf16.gmra.mxu0 %v849
        %v883 = vpop.f32.mrf.mxu0
        %v884 = vadd.f32 0.0, %v883
        %v885 = vpop.f32.mrf.mxu0
        %v886 = vadd.f32 0.0, %v885
        %887 = vmatmul.bf16.gmra.mxu0 %v852
        %v888 = vpop.f32.mrf.mxu0
        %v889 = vadd.f32 0.0, %v888
        %v890 = vpop.f32.mrf.mxu0
        %v891 = vadd.f32 0.0, %v890
        %892 = vmatmul.bf16.gmra.mxu0 %v855
        %v893 = vpop.f32.mrf.mxu0
        %v894 = vadd.f32 0.0, %v893
        %v895 = vpop.f32.mrf.mxu0
        %v896 = vadd.f32 0.0, %v895
        %897 = vdwg.mxu0
        %v898 = vsel %vm844, %v879, -inf
        %899 = vmax.xlane.f32.xlu0 %v898
        %v900 = vpop.xlane.xlu0 %899
        %v901 = vsel %vm844, %v881, -inf
        %902 = vmax.xlane.f32.xlu0 %v901
        %v903 = vpop.xlane.xlu0 %902
        %v904 = vsel %vm844, %v884, -inf
        %905 = vmax.xlane.f32.xlu0 %v904
        %v906 = vpop.xlane.xlu0 %905
        %v907 = vsel %vm844, %v886, -inf
        %908 = vmax.xlane.f32.xlu0 %v907
        %v909 = vpop.xlane.xlu0 %908
        %v910 = vsel %vm844, %v889, -inf
        %911 = vmax.xlane.f32.xlu0 %v910
        %v912 = vpop.xlane.xlu0 %911
        %v913 = vsel %vm844, %v891, -inf
        %914 = vmax.xlane.f32.xlu0 %v913
        %v915 = vpop.xlane.xlu0 %914
        %v916 = vsel %vm844, %v894, -inf
        %917 = vmax.xlane.f32.xlu0 %v916
        %v918 = vpop.xlane.xlu0 %917
        %v919 = vsel %vm844, %v896, -inf
        %920 = vmax.xlane.f32.xlu0 %v919
        %v921 = vpop.xlane.xlu0 %920
        %v922 = vsub.f32 %v879, %v900
        %v923 = vsub.f32 %v881, %v903
        %v924 = vsub.f32 %v884, %v906
        %v925 = vsub.f32 %v886, %v909
        %v926 = vsub.f32 %v889, %v912
        %v927 = vsub.f32 %v891, %v915
        %v928 = vsub.f32 %v894, %v918
        %v929 = vsub.f32 %v896, %v921
        %v930 = vmul.f32 %v922, 1.442695
        %v931 = vpow.pop %v930
        %v932 = vmul.f32 %v923, 1.442695
        %v933 = vpow.pop %v932
        %v934 = vmul.f32 %v924, 1.442695
        %v935 = vpow.pop %v934
        %v936 = vmul.f32 %v925, 1.442695
        %v937 = vpow.pop %v936
        %v938 = vmul.f32 %v926, 1.442695
        %v939 = vpow.pop %v938
        %v940 = vmul.f32 %v927, 1.442695
        %v941 = vpow.pop %v940
        %v942 = vmul.f32 %v928, 1.442695
        %v943 = vpow.pop %v942
        %v944 = vmul.f32 %v929, 1.442695
        %v945 = vpow.pop %v944
        %v946 = vsel %vm844, %v931, 0.0
        %947 = vadd.xlane.f32.xlu0 %v946
        %v948 = vpop.xlane.xlu0 %947
        %v949 = vsel %vm844, %v933, 0.0
        %950 = vadd.xlane.f32.xlu0 %v949
        %v951 = vpop.xlane.xlu0 %950
        %v952 = vsel %vm844, %v935, 0.0
        %953 = vadd.xlane.f32.xlu0 %v952
        %v954 = vpop.xlane.xlu0 %953
        %v955 = vsel %vm844, %v937, 0.0
        %956 = vadd.xlane.f32.xlu0 %v955
        %v957 = vpop.xlane.xlu0 %956
        %v958 = vsel %vm844, %v939, 0.0
        %959 = vadd.xlane.f32.xlu0 %v958
        %v960 = vpop.xlane.xlu0 %959
        %v961 = vsel %vm844, %v941, 0.0
        %962 = vadd.xlane.f32.xlu0 %v961
        %v963 = vpop.xlane.xlu0 %962
        %v964 = vsel %vm844, %v943, 0.0
        %965 = vadd.xlane.f32.xlu0 %v964
        %v966 = vpop.xlane.xlu0 %965
        %v967 = vsel %vm844, %v945, 0.0
        %968 = vadd.xlane.f32.xlu0 %v967
        %v969 = vpop.xlane.xlu0 %968
        %v970 = vrcp.pop %v948
        %v971 = vrcp.pop %v951
        %v972 = vrcp.pop %v954
        %v973 = vrcp.pop %v957
        %v974 = vrcp.pop %v960
        %v975 = vrcp.pop %v963
        %v976 = vrcp.pop %v966
        %v977 = vrcp.pop %v969
        %v978 = vmul.f32 %v931, %v970
        %v979 = vmul.f32 %v933, %v971
        %v980 = vmul.f32 %v935, %v972
        %v981 = vmul.f32 %v937, %v973
        %v982 = vmul.f32 %v939, %v974
        %v983 = vmul.f32 %v941, %v975
        %v984 = vmul.f32 %v943, %v976
        %v985 = vmul.f32 %v945, %v977
        %v986 = vpack.c.bf16 %v979, %v978
        %v987 = vpack.c.bf16 %v981, %v980
        %v988 = vpack.c.bf16 %v983, %v982
        %v989 = vpack.c.bf16 %v985, %v984
        %v998 = vunpack.c.l.b16 %v796
        %v999 = vunpack.c.l.b16 %v797
        %v1000 = vunpack.c.l.b16 %v798
        %v1001 = vunpack.c.l.b16 %v799
        %v1002 = vunpack.c.l.b16 %v800
        %v1003 = vunpack.c.l.b16 %v801
        %v1004 = vunpack.c.l.b16 %v802
        %v1005 = vunpack.c.l.b16 %v803
        %v1006 = vpack.c.b16 %v999, %v998
        %v1007 = vpack.c.b16 %v1001, %v1000
        %v1008 = vpack.c.b16 %v1003, %v1002
        %v1009 = vpack.c.b16 %v1005, %v1004
        %v1015 = vsel %vm844, %v986, 0
        %v1018 = vsel %vm844, %v987, 0
        %v1021 = vsel %vm844, %v988, 0
        %v1024 = vsel %vm844, %v989, 0
        %1026 = vmatpush.bf16.msra.mxu0 0
        %1027 = vmatpush.bf16.msra.mxu0 0
        %1028 = vmatpush.bf16.msra.mxu0 0
        %1029 = vmatpush.bf16.msra.mxu0 0
        %1030 = vmatpush.bf16.msra.mxu0 %v1009
        %1031 = vmatpush.bf16.msra.mxu0 %v1008
        %1032 = vmatpush.bf16.msra.mxu0 %v1007
        %1033 = vmatpush.bf16.msra.mxu0 %v1006
        %1034 = vmatmul.bf16.gmra.mxu0 %v1015
        %v1035 = vpop.f32.mrf.mxu0
        %v1036 = vadd.f32 0.0, %v1035
        %v1037 = vpop.f32.mrf.mxu0
        %v1038 = vadd.f32 0.0, %v1037
        %1039 = vmatmul.bf16.gmra.mxu0 %v1018
        %v1040 = vpop.f32.mrf.mxu0
        %v1041 = vadd.f32 0.0, %v1040
        %v1042 = vpop.f32.mrf.mxu0
        %v1043 = vadd.f32 0.0, %v1042
        %1044 = vmatmul.bf16.gmra.mxu0 %v1021
        %v1045 = vpop.f32.mrf.mxu0
        %v1046 = vadd.f32 0.0, %v1045
        %v1047 = vpop.f32.mrf.mxu0
        %v1048 = vadd.f32 0.0, %v1047
        %1049 = vmatmul.bf16.gmra.mxu0 %v1024
        %v1050 = vpop.f32.mrf.mxu0
        %v1051 = vadd.f32 0.0, %v1050
        %v1052 = vpop.f32.mrf.mxu0
        %v1053 = vadd.f32 0.0, %v1052
        %1054 = vdwg.mxu0
        %v1055 = vpack.c.bf16 %v1036, %v1036
        %v1056 = vpack.c.bf16 %v1038, %v1038
        %v1057 = vpack.c.bf16 %v1041, %v1041
        %v1058 = vpack.c.bf16 %v1043, %v1043
        %v1059 = vpack.c.bf16 %v1046, %v1046
        %v1060 = vpack.c.bf16 %v1048, %v1048
        %v1061 = vpack.c.bf16 %v1051, %v1051
        %v1062 = vpack.c.bf16 %v1053, %v1053
        %1063 = vrot.lane.b32.xlu0 %v820, 64
        %v1064 = vpop.permute.xlu0 %1063
        %1065 = vrot.lane.b32.xlu0 %v821, 64
        %v1066 = vpop.permute.xlu0 %1065
        %1067 = vrot.lane.b32.xlu0 %v822, 64
        %v1068 = vpop.permute.xlu0 %1067
        %1069 = vrot.lane.b32.xlu0 %v823, 64
        %v1070 = vpop.permute.xlu0 %1069
        %1071 = vrot.lane.b32.xlu0 %v840, 64
        %v1072 = vpop.permute.xlu0 %1071
        %1073 = vrot.lane.b32.xlu0 %v841, 64
        %v1074 = vpop.permute.xlu0 %1073
        %1075 = vrot.lane.b32.xlu0 %v842, 64
        %v1076 = vpop.permute.xlu0 %1075
        %1077 = vrot.lane.b32.xlu0 %v843, 64
        %v1078 = vpop.permute.xlu0 %1077
        %v1080 = vsel %vm844, %v1064, 0
        %v1083 = vsel %vm844, %v1066, 0
        %v1086 = vsel %vm844, %v1068, 0
        %v1089 = vsel %vm844, %v1070, 0
        %v1092 = vsel %vm844, %v1072, 0
        %v1095 = vsel %vm844, %v1074, 0
        %v1098 = vsel %vm844, %v1076, 0
        %v1101 = vsel %vm844, %v1078, 0
        %1103 = vmatpush.bf16.xpose.msra.mxu0 0
        %1104 = vmatpush.bf16.xpose.msra.mxu0 0
        %1105 = vmatpush.bf16.xpose.msra.mxu0 0
        %1106 = vmatpush.bf16.xpose.msra.mxu0 0
        %1107 = vmatpush.bf16.xpose.msra.mxu0 %v1101
        %1108 = vmatpush.bf16.xpose.msra.mxu0 %v1098
        %1109 = vmatpush.bf16.xpose.msra.mxu0 %v1095
        %1110 = vmatpush.bf16.xpose.msra.mxu0 %v1092
        %1111 = vmatmul.bf16.gmra.mxu0 %v1080
        %v1112 = vpop.f32.mrf.mxu0
        %v1113 = vadd.f32 0.0, %v1112
        %v1114 = vpop.f32.mrf.mxu0
        %v1115 = vadd.f32 0.0, %v1114
        %1116 = vmatmul.bf16.gmra.mxu0 %v1083
        %v1117 = vpop.f32.mrf.mxu0
        %v1118 = vadd.f32 0.0, %v1117
        %v1119 = vpop.f32.mrf.mxu0
        %v1120 = vadd.f32 0.0, %v1119
        %1121 = vmatmul.bf16.gmra.mxu0 %v1086
        %v1122 = vpop.f32.mrf.mxu0
        %v1123 = vadd.f32 0.0, %v1122
        %v1124 = vpop.f32.mrf.mxu0
        %v1125 = vadd.f32 0.0, %v1124
        %1126 = vmatmul.bf16.gmra.mxu0 %v1089
        %v1127 = vpop.f32.mrf.mxu0
        %v1128 = vadd.f32 0.0, %v1127
        %v1129 = vpop.f32.mrf.mxu0
        %v1130 = vadd.f32 0.0, %v1129
        %1131 = vdwg.mxu0
        %v1132 = vsel %vm844, %v1113, -inf
        %1133 = vmax.xlane.f32.xlu0 %v1132
        %v1134 = vpop.xlane.xlu0 %1133
        %v1135 = vsel %vm844, %v1115, -inf
        %1136 = vmax.xlane.f32.xlu0 %v1135
        %v1137 = vpop.xlane.xlu0 %1136
        %v1138 = vsel %vm844, %v1118, -inf
        %1139 = vmax.xlane.f32.xlu0 %v1138
        %v1140 = vpop.xlane.xlu0 %1139
        %v1141 = vsel %vm844, %v1120, -inf
        %1142 = vmax.xlane.f32.xlu0 %v1141
        %v1143 = vpop.xlane.xlu0 %1142
        %v1144 = vsel %vm844, %v1123, -inf
        %1145 = vmax.xlane.f32.xlu0 %v1144
        %v1146 = vpop.xlane.xlu0 %1145
        %v1147 = vsel %vm844, %v1125, -inf
        %1148 = vmax.xlane.f32.xlu0 %v1147
        %v1149 = vpop.xlane.xlu0 %1148
        %v1150 = vsel %vm844, %v1128, -inf
        %1151 = vmax.xlane.f32.xlu0 %v1150
        %v1152 = vpop.xlane.xlu0 %1151
        %v1153 = vsel %vm844, %v1130, -inf
        %1154 = vmax.xlane.f32.xlu0 %v1153
        %v1155 = vpop.xlane.xlu0 %1154
        %v1156 = vsub.f32 %v1113, %v1134
        %v1157 = vsub.f32 %v1115, %v1137
        %v1158 = vsub.f32 %v1118, %v1140
        %v1159 = vsub.f32 %v1120, %v1143
        %v1160 = vsub.f32 %v1123, %v1146
        %v1161 = vsub.f32 %v1125, %v1149
        %v1162 = vsub.f32 %v1128, %v1152
        %v1163 = vsub.f32 %v1130, %v1155
        %v1164 = vmul.f32 %v1156, 1.442695
        %v1165 = vpow.pop %v1164
        %v1166 = vmul.f32 %v1157, 1.442695
        %v1167 = vpow.pop %v1166
        %v1168 = vmul.f32 %v1158, 1.442695
        %v1169 = vpow.pop %v1168
        %v1170 = vmul.f32 %v1159, 1.442695
        %v1171 = vpow.pop %v1170
        %v1172 = vmul.f32 %v1160, 1.442695
        %v1173 = vpow.pop %v1172
        %v1174 = vmul.f32 %v1161, 1.442695
        %v1175 = vpow.pop %v1174
        %v1176 = vmul.f32 %v1162, 1.442695
        %v1177 = vpow.pop %v1176
        %v1178 = vmul.f32 %v1163, 1.442695
        %v1179 = vpow.pop %v1178
        %v1180 = vsel %vm844, %v1165, 0.0
        %1181 = vadd.xlane.f32.xlu0 %v1180
        %v1182 = vpop.xlane.xlu0 %1181
        %v1183 = vsel %vm844, %v1167, 0.0
        %1184 = vadd.xlane.f32.xlu0 %v1183
        %v1185 = vpop.xlane.xlu0 %1184
        %v1186 = vsel %vm844, %v1169, 0.0
        %1187 = vadd.xlane.f32.xlu0 %v1186
        %v1188 = vpop.xlane.xlu0 %1187
        %v1189 = vsel %vm844, %v1171, 0.0
        %1190 = vadd.xlane.f32.xlu0 %v1189
        %v1191 = vpop.xlane.xlu0 %1190
        %v1192 = vsel %vm844, %v1173, 0.0
        %1193 = vadd.xlane.f32.xlu0 %v1192
        %v1194 = vpop.xlane.xlu0 %1193
        %v1195 = vsel %vm844, %v1175, 0.0
        %1196 = vadd.xlane.f32.xlu0 %v1195
        %v1197 = vpop.xlane.xlu0 %1196
        %v1198 = vsel %vm844, %v1177, 0.0
        %1199 = vadd.xlane.f32.xlu0 %v1198
        %v1200 = vpop.xlane.xlu0 %1199
        %v1201 = vsel %vm844, %v1179, 0.0
        %1202 = vadd.xlane.f32.xlu0 %v1201
        %v1203 = vpop.xlane.xlu0 %1202
        %v1204 = vrcp.pop %v1182
        %v1205 = vrcp.pop %v1185
        %v1206 = vrcp.pop %v1188
        %v1207 = vrcp.pop %v1191
        %v1208 = vrcp.pop %v1194
        %v1209 = vrcp.pop %v1197
        %v1210 = vrcp.pop %v1200
        %v1211 = vrcp.pop %v1203
        %v1212 = vmul.f32 %v1165, %v1204
        %v1213 = vmul.f32 %v1167, %v1205
        %v1214 = vmul.f32 %v1169, %v1206
        %v1215 = vmul.f32 %v1171, %v1207
        %v1216 = vmul.f32 %v1173, %v1208
        %v1217 = vmul.f32 %v1175, %v1209
        %v1218 = vmul.f32 %v1177, %v1210
        %v1219 = vmul.f32 %v1179, %v1211
        %v1220 = vpack.c.bf16 %v1213, %v1212
        %v1221 = vpack.c.bf16 %v1215, %v1214
        %v1222 = vpack.c.bf16 %v1217, %v1216
        %v1223 = vpack.c.bf16 %v1219, %v1218
        %1224 = vrot.lane.b32.xlu0 %v1006, 64
        %v1225 = vpop.permute.xlu0 %1224
        %1226 = vrot.lane.b32.xlu0 %v1007, 64
        %v1227 = vpop.permute.xlu0 %1226
        %1228 = vrot.lane.b32.xlu0 %v1008, 64
        %v1229 = vpop.permute.xlu0 %1228
        %1230 = vrot.lane.b32.xlu0 %v1009, 64
        %v1231 = vpop.permute.xlu0 %1230
        %v1237 = vsel %vm844, %v1220, 0
        %v1240 = vsel %vm844, %v1221, 0
        %v1243 = vsel %vm844, %v1222, 0
        %v1246 = vsel %vm844, %v1223, 0
        %1248 = vmatpush.bf16.msra.mxu0 0
        %1249 = vmatpush.bf16.msra.mxu0 0
        %1250 = vmatpush.bf16.msra.mxu0 0
        %1251 = vmatpush.bf16.msra.mxu0 0
        %1252 = vmatpush.bf16.msra.mxu0 %v1231
        %1253 = vmatpush.bf16.msra.mxu0 %v1229
        %1254 = vmatpush.bf16.msra.mxu0 %v1227
        %1255 = vmatpush.bf16.msra.mxu0 %v1225
        %1256 = vmatmul.bf16.gmra.mxu0 %v1237
        %v1257 = vpop.f32.mrf.mxu0
        %v1258 = vadd.f32 0.0, %v1257
        %v1259 = vpop.f32.mrf.mxu0
        %v1260 = vadd.f32 0.0, %v1259
        %1261 = vmatmul.bf16.gmra.mxu0 %v1240
        %v1262 = vpop.f32.mrf.mxu0
        %v1263 = vadd.f32 0.0, %v1262
        %v1264 = vpop.f32.mrf.mxu0
        %v1265 = vadd.f32 0.0, %v1264
        %1266 = vmatmul.bf16.gmra.mxu0 %v1243
        %v1267 = vpop.f32.mrf.mxu0
        %v1268 = vadd.f32 0.0, %v1267
        %v1269 = vpop.f32.mrf.mxu0
        %v1270 = vadd.f32 0.0, %v1269
        %1271 = vmatmul.bf16.gmra.mxu0 %v1246
        %v1272 = vpop.f32.mrf.mxu0
        %v1273 = vadd.f32 0.0, %v1272
        %v1274 = vpop.f32.mrf.mxu0
        %v1275 = vadd.f32 0.0, %v1274
        %1276 = vdwg.mxu0
        %v1277 = vpack.c.bf16 %v1258, %v1258
        %v1278 = vpack.c.bf16 %v1260, %v1260
        %v1279 = vpack.c.bf16 %v1263, %v1263
        %v1280 = vpack.c.bf16 %v1265, %v1265
        %v1281 = vpack.c.bf16 %v1268, %v1268
        %v1282 = vpack.c.bf16 %v1270, %v1270
        %v1283 = vpack.c.bf16 %v1273, %v1273
        %v1284 = vpack.c.bf16 %v1275, %v1275
        %v1293 = vunpack.c.l.b16 %v1055
        %v1294 = vunpack.c.l.b16 %v1056
        %v1295 = vunpack.c.l.b16 %v1057
        %v1296 = vunpack.c.l.b16 %v1058
        %v1297 = vunpack.c.l.b16 %v1059
        %v1298 = vunpack.c.l.b16 %v1060
        %v1299 = vunpack.c.l.b16 %v1061
        %v1300 = vunpack.c.l.b16 %v1062
        %v1301 = vpack.c.b16 %v1294, %v1293
        %v1302 = vpack.c.b16 %v1296, %v1295
        %v1303 = vpack.c.b16 %v1298, %v1297
        %v1304 = vpack.c.b16 %v1300, %v1299
        %v1313 = vunpack.c.l.b16 %v1277
        %v1314 = vunpack.c.l.b16 %v1278
        %v1315 = vunpack.c.l.b16 %v1279
        %v1316 = vunpack.c.l.b16 %v1280
        %v1317 = vunpack.c.l.b16 %v1281
        %v1318 = vunpack.c.l.b16 %v1282
        %v1319 = vunpack.c.l.b16 %v1283
        %v1320 = vunpack.c.l.b16 %v1284
        %v1321 = vpack.c.b16 %v1314, %v1313
        %v1322 = vpack.c.b16 %v1316, %v1315
        %v1323 = vpack.c.b16 %v1318, %v1317
        %v1324 = vpack.c.b16 %v1320, %v1319
        %1325 = vrot.lane.b32.xlu0 %v1321, 64
        %v1326 = vpop.permute.xlu0 %1325
        %1327 = vrot.lane.b32.xlu0 %v1322, 64
        %v1328 = vpop.permute.xlu0 %1327
        %1329 = vrot.lane.b32.xlu0 %v1323, 64
        %v1330 = vpop.permute.xlu0 %1329
        %1331 = vrot.lane.b32.xlu0 %v1324, 64
        %v1332 = vpop.permute.xlu0 %1331
        %v1335 = vsel %vm844, %v1301, %v1326
        %v1338 = vsel %vm844, %v1302, %v1328
        %v1341 = vsel %vm844, %v1303, %v1330
        %v1344 = vsel %vm844, %v1304, %v1332
        %v1349 = vunpack.c.l.b16 %v1335
        %v1350 = vunpack.c.h.b16 %v1335
        %v1351 = vunpack.c.l.b16 %v1338
        %v1352 = vunpack.c.h.b16 %v1338
        %v1353 = vunpack.c.l.b16 %v1341
        %v1354 = vunpack.c.h.b16 %v1341
        %v1355 = vunpack.c.l.b16 %v1344
        %v1356 = vunpack.c.h.b16 %v1344
        %v1357 = vpack.c.b16 %v1349, %v1349
        %v1358 = vpack.c.b16 %v1350, %v1350
        %v1359 = vpack.c.b16 %v1351, %v1351
        %v1360 = vpack.c.b16 %v1352, %v1352
        %v1361 = vpack.c.b16 %v1353, %v1353
        %v1362 = vpack.c.b16 %v1354, %v1354
        %v1363 = vpack.c.b16 %v1355, %v1355
        %v1364 = vpack.c.b16 %v1356, %v1356
        %1373 = vst [vmem:[#allocation2] sm:$0xf] %v1357
        %1374 = vst [vmem:[#allocation2 + $0x4] sm:$0xf] %v1358
        %1375 = vst [vmem:[#allocation2 + $0x8] sm:$0xf] %v1359
        %1376 = vst [vmem:[#allocation2 + $0xc] sm:$0xf] %v1360
        %1377 = vst [vmem:[#allocation2 + $0x10] sm:$0xf] %v1361
        %1378 = vst [vmem:[#allocation2 + $0x14] sm:$0xf] %v1362
        %1379 = vst [vmem:[#allocation2 + $0x18] sm:$0xf] %v1363
        %1380 = vst [vmem:[#allocation2 + $0x1c] sm:$0xf] %v1364
        %v1381 = vpack.c.bf16 %v663, %v663
        %v1382 = vpack.c.bf16 %v665, %v665
        %v1383 = vpack.c.bf16 %v668, %v668
        %v1384 = vpack.c.bf16 %v670, %v670
        %v1385 = vpack.c.bf16 %v673, %v673
        %v1386 = vpack.c.bf16 %v675, %v675
        %v1387 = vpack.c.bf16 %v678, %v678
        %v1388 = vpack.c.bf16 %v680, %v680
        %v1389 = vpack.c.bf16 %v712, %v712
        %v1390 = vpack.c.bf16 %v714, %v714
        %v1391 = vpack.c.bf16 %v717, %v717
        %v1392 = vpack.c.bf16 %v719, %v719
        %v1393 = vpack.c.bf16 %v722, %v722
        %v1394 = vpack.c.bf16 %v724, %v724
        %v1395 = vpack.c.bf16 %v727, %v727
        %v1396 = vpack.c.bf16 %v729, %v729
        %v1397 = vpack.c.bf16 %v761, %v761
        %v1398 = vpack.c.bf16 %v763, %v763
        %v1399 = vpack.c.bf16 %v766, %v766
        %v1400 = vpack.c.bf16 %v768, %v768
        %v1401 = vpack.c.bf16 %v771, %v771
        %v1402 = vpack.c.bf16 %v773, %v773
        %v1403 = vpack.c.bf16 %v776, %v776
        %v1404 = vpack.c.bf16 %v778, %v778
        %v1413 = vunpack.c.l.b16 %v1381
        %v1414 = vunpack.c.l.b16 %v1382
        %v1415 = vunpack.c.l.b16 %v1383
        %v1416 = vunpack.c.l.b16 %v1384
        %v1417 = vunpack.c.l.b16 %v1385
        %v1418 = vunpack.c.l.b16 %v1386
        %v1419 = vunpack.c.l.b16 %v1387
        %v1420 = vunpack.c.l.b16 %v1388
        %v1421 = vpack.c.b16 %v1414, %v1413
        %v1422 = vpack.c.b16 %v1416, %v1415
        %v1423 = vpack.c.b16 %v1418, %v1417
        %v1424 = vpack.c.b16 %v1420, %v1419
        %v1433 = vunpack.c.l.b16 %v1389
        %v1434 = vunpack.c.l.b16 %v1390
        %v1435 = vunpack.c.l.b16 %v1391
        %v1436 = vunpack.c.l.b16 %v1392
        %v1437 = vunpack.c.l.b16 %v1393
        %v1438 = vunpack.c.l.b16 %v1394
        %v1439 = vunpack.c.l.b16 %v1395
        %v1440 = vunpack.c.l.b16 %v1396
        %v1441 = vpack.c.b16 %v1434, %v1433
        %v1442 = vpack.c.b16 %v1436, %v1435
        %v1443 = vpack.c.b16 %v1438, %v1437
        %v1444 = vpack.c.b16 %v1440, %v1439
        %v1446 = vsel %vm844, %v1421, 0
        %v1449 = vsel %vm844, %v1422, 0
        %v1452 = vsel %vm844, %v1423, 0
        %v1455 = vsel %vm844, %v1424, 0
        %v1458 = vsel %vm844, %v1441, 0
        %v1461 = vsel %vm844, %v1442, 0
        %v1464 = vsel %vm844, %v1443, 0
        %v1467 = vsel %vm844, %v1444, 0
        %1469 = vmatpush.bf16.xpose.msra.mxu0 0
        %1470 = vmatpush.bf16.xpose.msra.mxu0 0
        %1471 = vmatpush.bf16.xpose.msra.mxu0 0
        %1472 = vmatpush.bf16.xpose.msra.mxu0 0
        %1473 = vmatpush.bf16.xpose.msra.mxu0 %v1467
        %1474 = vmatpush.bf16.xpose.msra.mxu0 %v1464
        %1475 = vmatpush.bf16.xpose.msra.mxu0 %v1461
        %1476 = vmatpush.bf16.xpose.msra.mxu0 %v1458
        %1477 = vmatmul.bf16.gmra.mxu0 %v1446
        %v1478 = vpop.f32.mrf.mxu0
        %v1479 = vadd.f32 0.0, %v1478
        %v1480 = vpop.f32.mrf.mxu0
        %v1481 = vadd.f32 0.0, %v1480
        %1482 = vmatmul.bf16.gmra.mxu0 %v1449
        %v1483 = vpop.f32.mrf.mxu0
        %v1484 = vadd.f32 0.0, %v1483
        %v1485 = vpop.f32.mrf.mxu0
        %v1486 = vadd.f32 0.0, %v1485
        %1487 = vmatmul.bf16.gmra.mxu0 %v1452
        %v1488 = vpop.f32.mrf.mxu0
        %v1489 = vadd.f32 0.0, %v1488
        %v1490 = vpop.f32.mrf.mxu0
        %v1491 = vadd.f32 0.0, %v1490
        %1492 = vmatmul.bf16.gmra.mxu0 %v1455
        %v1493 = vpop.f32.mrf.mxu0
        %v1494 = vadd.f32 0.0, %v1493
        %v1495 = vpop.f32.mrf.mxu0
        %v1496 = vadd.f32 0.0, %v1495
        %1497 = vdwg.mxu0
        %v1498 = vsel %vm844, %v1479, -inf
        %1499 = vmax.xlane.f32.xlu0 %v1498
        %v1500 = vpop.xlane.xlu0 %1499
        %v1501 = vsel %vm844, %v1481, -inf
        %1502 = vmax.xlane.f32.xlu0 %v1501
        %v1503 = vpop.xlane.xlu0 %1502
        %v1504 = vsel %vm844, %v1484, -inf
        %1505 = vmax.xlane.f32.xlu0 %v1504
        %v1506 = vpop.xlane.xlu0 %1505
        %v1507 = vsel %vm844, %v1486, -inf
        %1508 = vmax.xlane.f32.xlu0 %v1507
        %v1509 = vpop.xlane.xlu0 %1508
        %v1510 = vsel %vm844, %v1489, -inf
        %1511 = vmax.xlane.f32.xlu0 %v1510
        %v1512 = vpop.xlane.xlu0 %1511
        %v1513 = vsel %vm844, %v1491, -inf
        %1514 = vmax.xlane.f32.xlu0 %v1513
        %v1515 = vpop.xlane.xlu0 %1514
        %v1516 = vsel %vm844, %v1494, -inf
        %1517 = vmax.xlane.f32.xlu0 %v1516
        %v1518 = vpop.xlane.xlu0 %1517
        %v1519 = vsel %vm844, %v1496, -inf
        %1520 = vmax.xlane.f32.xlu0 %v1519
        %v1521 = vpop.xlane.xlu0 %1520
        %v1522 = vsub.f32 %v1479, %v1500
        %v1523 = vsub.f32 %v1481, %v1503
        %v1524 = vsub.f32 %v1484, %v1506
        %v1525 = vsub.f32 %v1486, %v1509
        %v1526 = vsub.f32 %v1489, %v1512
        %v1527 = vsub.f32 %v1491, %v1515
        %v1528 = vsub.f32 %v1494, %v1518
        %v1529 = vsub.f32 %v1496, %v1521
        %v1530 = vmul.f32 %v1522, 1.442695
        %v1531 = vpow.pop %v1530
        %v1532 = vmul.f32 %v1523, 1.442695
        %v1533 = vpow.pop %v1532
        %v1534 = vmul.f32 %v1524, 1.442695
        %v1535 = vpow.pop %v1534
        %v1536 = vmul.f32 %v1525, 1.442695
        %v1537 = vpow.pop %v1536
        %v1538 = vmul.f32 %v1526, 1.442695
        %v1539 = vpow.pop %v1538
        %v1540 = vmul.f32 %v1527, 1.442695
        %v1541 = vpow.pop %v1540
        %v1542 = vmul.f32 %v1528, 1.442695
        %v1543 = vpow.pop %v1542
        %v1544 = vmul.f32 %v1529, 1.442695
        %v1545 = vpow.pop %v1544
        %v1546 = vsel %vm844, %v1531, 0.0
        %1547 = vadd.xlane.f32.xlu0 %v1546
        %v1548 = vpop.xlane.xlu0 %1547
        %v1549 = vsel %vm844, %v1533, 0.0
        %1550 = vadd.xlane.f32.xlu0 %v1549
        %v1551 = vpop.xlane.xlu0 %1550
        %v1552 = vsel %vm844, %v1535, 0.0
        %1553 = vadd.xlane.f32.xlu0 %v1552
        %v1554 = vpop.xlane.xlu0 %1553
        %v1555 = vsel %vm844, %v1537, 0.0
        %1556 = vadd.xlane.f32.xlu0 %v1555
        %v1557 = vpop.xlane.xlu0 %1556
        %v1558 = vsel %vm844, %v1539, 0.0
        %1559 = vadd.xlane.f32.xlu0 %v1558
        %v1560 = vpop.xlane.xlu0 %1559
        %v1561 = vsel %vm844, %v1541, 0.0
        %1562 = vadd.xlane.f32.xlu0 %v1561
        %v1563 = vpop.xlane.xlu0 %1562
        %v1564 = vsel %vm844, %v1543, 0.0
        %1565 = vadd.xlane.f32.xlu0 %v1564
        %v1566 = vpop.xlane.xlu0 %1565
        %v1567 = vsel %vm844, %v1545, 0.0
        %1568 = vadd.xlane.f32.xlu0 %v1567
        %v1569 = vpop.xlane.xlu0 %1568
        %v1570 = vrcp.pop %v1548
        %v1571 = vrcp.pop %v1551
        %v1572 = vrcp.pop %v1554
        %v1573 = vrcp.pop %v1557
        %v1574 = vrcp.pop %v1560
        %v1575 = vrcp.pop %v1563
        %v1576 = vrcp.pop %v1566
        %v1577 = vrcp.pop %v1569
        %v1578 = vmul.f32 %v1531, %v1570
        %v1579 = vmul.f32 %v1533, %v1571
        %v1580 = vmul.f32 %v1535, %v1572
        %v1581 = vmul.f32 %v1537, %v1573
        %v1582 = vmul.f32 %v1539, %v1574
        %v1583 = vmul.f32 %v1541, %v1575
        %v1584 = vmul.f32 %v1543, %v1576
        %v1585 = vmul.f32 %v1545, %v1577
        %v1586 = vpack.c.bf16 %v1579, %v1578
        %v1587 = vpack.c.bf16 %v1581, %v1580
        %v1588 = vpack.c.bf16 %v1583, %v1582
        %v1589 = vpack.c.bf16 %v1585, %v1584
        %v1598 = vunpack.c.l.b16 %v1397
        %v1599 = vunpack.c.l.b16 %v1398
        %v1600 = vunpack.c.l.b16 %v1399
        %v1601 = vunpack.c.l.b16 %v1400
        %v1602 = vunpack.c.l.b16 %v1401
        %v1603 = vunpack.c.l.b16 %v1402
        %v1604 = vunpack.c.l.b16 %v1403
        %v1605 = vunpack.c.l.b16 %v1404
        %v1606 = vpack.c.b16 %v1599, %v1598
        %v1607 = vpack.c.b16 %v1601, %v1600
        %v1608 = vpack.c.b16 %v1603, %v1602
        %v1609 = vpack.c.b16 %v1605, %v1604
        %v1615 = vsel %vm844, %v1586, 0
        %v1618 = vsel %vm844, %v1587, 0
        %v1621 = vsel %vm844, %v1588, 0
        %v1624 = vsel %vm844, %v1589, 0
        %1626 = vmatpush.bf16.msra.mxu0 0
        %1627 = vmatpush.bf16.msra.mxu0 0
        %1628 = vmatpush.bf16.msra.mxu0 0
        %1629 = vmatpush.bf16.msra.mxu0 0
        %1630 = vmatpush.bf16.msra.mxu0 %v1609
        %1631 = vmatpush.bf16.msra.mxu0 %v1608
        %1632 = vmatpush.bf16.msra.mxu0 %v1607
        %1633 = vmatpush.bf16.msra.mxu0 %v1606
        %1634 = vmatmul.bf16.gmra.mxu0 %v1615
        %v1635 = vpop.f32.mrf.mxu0
        %v1636 = vadd.f32 0.0, %v1635
        %v1637 = vpop.f32.mrf.mxu0
        %v1638 = vadd.f32 0.0, %v1637
        %1639 = vmatmul.bf16.gmra.mxu0 %v1618
        %v1640 = vpop.f32.mrf.mxu0
        %v1641 = vadd.f32 0.0, %v1640
        %v1642 = vpop.f32.mrf.mxu0
        %v1643 = vadd.f32 0.0, %v1642
        %1644 = vmatmul.bf16.gmra.mxu0 %v1621
        %v1645 = vpop.f32.mrf.mxu0
        %v1646 = vadd.f32 0.0, %v1645
        %v1647 = vpop.f32.mrf.mxu0
        %v1648 = vadd.f32 0.0, %v1647
        %1649 = vmatmul.bf16.gmra.mxu0 %v1624
        %v1650 = vpop.f32.mrf.mxu0
        %v1651 = vadd.f32 0.0, %v1650
        %v1652 = vpop.f32.mrf.mxu0
        %v1653 = vadd.f32 0.0, %v1652
        %1654 = vdwg.mxu0
        %v1655 = vpack.c.bf16 %v1636, %v1636
        %v1656 = vpack.c.bf16 %v1638, %v1638
        %v1657 = vpack.c.bf16 %v1641, %v1641
        %v1658 = vpack.c.bf16 %v1643, %v1643
        %v1659 = vpack.c.bf16 %v1646, %v1646
        %v1660 = vpack.c.bf16 %v1648, %v1648
        %v1661 = vpack.c.bf16 %v1651, %v1651
        %v1662 = vpack.c.bf16 %v1653, %v1653
        %1663 = vrot.lane.b32.xlu0 %v1421, 64
        %v1664 = vpop.permute.xlu0 %1663
        %1665 = vrot.lane.b32.xlu0 %v1422, 64
        %v1666 = vpop.permute.xlu0 %1665
        %1667 = vrot.lane.b32.xlu0 %v1423, 64
        %v1668 = vpop.permute.xlu0 %1667
        %1669 = vrot.lane.b32.xlu0 %v1424, 64
        %v1670 = vpop.permute.xlu0 %1669
        %1671 = vrot.lane.b32.xlu0 %v1441, 64
        %v1672 = vpop.permute.xlu0 %1671
        %1673 = vrot.lane.b32.xlu0 %v1442, 64
        %v1674 = vpop.permute.xlu0 %1673
        %1675 = vrot.lane.b32.xlu0 %v1443, 64
        %v1676 = vpop.permute.xlu0 %1675
        %1677 = vrot.lane.b32.xlu0 %v1444, 64
        %v1678 = vpop.permute.xlu0 %1677
        %v1680 = vsel %vm844, %v1664, 0
        %v1683 = vsel %vm844, %v1666, 0
        %v1686 = vsel %vm844, %v1668, 0
        %v1689 = vsel %vm844, %v1670, 0
        %v1692 = vsel %vm844, %v1672, 0
        %v1695 = vsel %vm844, %v1674, 0
        %v1698 = vsel %vm844, %v1676, 0
        %v1701 = vsel %vm844, %v1678, 0
        %1703 = vmatpush.bf16.xpose.msra.mxu0 0
        %1704 = vmatpush.bf16.xpose.msra.mxu0 0
        %1705 = vmatpush.bf16.xpose.msra.mxu0 0
        %1706 = vmatpush.bf16.xpose.msra.mxu0 0
        %1707 = vmatpush.bf16.xpose.msra.mxu0 %v1701
        %1708 = vmatpush.bf16.xpose.msra.mxu0 %v1698
        %1709 = vmatpush.bf16.xpose.msra.mxu0 %v1695
        %1710 = vmatpush.bf16.xpose.msra.mxu0 %v1692
        %1711 = vmatmul.bf16.gmra.mxu0 %v1680
        %v1712 = vpop.f32.mrf.mxu0
        %v1713 = vadd.f32 0.0, %v1712
        %v1714 = vpop.f32.mrf.mxu0
        %v1715 = vadd.f32 0.0, %v1714
        %1716 = vmatmul.bf16.gmra.mxu0 %v1683
        %v1717 = vpop.f32.mrf.mxu0
        %v1718 = vadd.f32 0.0, %v1717
        %v1719 = vpop.f32.mrf.mxu0
        %v1720 = vadd.f32 0.0, %v1719
        %1721 = vmatmul.bf16.gmra.mxu0 %v1686
        %v1722 = vpop.f32.mrf.mxu0
        %v1723 = vadd.f32 0.0, %v1722
        %v1724 = vpop.f32.mrf.mxu0
        %v1725 = vadd.f32 0.0, %v1724
        %1726 = vmatmul.bf16.gmra.mxu0 %v1689
        %v1727 = vpop.f32.mrf.mxu0
        %v1728 = vadd.f32 0.0, %v1727
        %v1729 = vpop.f32.mrf.mxu0
        %v1730 = vadd.f32 0.0, %v1729
        %1731 = vdwg.mxu0
        %v1732 = vsel %vm844, %v1713, -inf
        %1733 = vmax.xlane.f32.xlu0 %v1732
        %v1734 = vpop.xlane.xlu0 %1733
        %v1735 = vsel %vm844, %v1715, -inf
        %1736 = vmax.xlane.f32.xlu0 %v1735
        %v1737 = vpop.xlane.xlu0 %1736
        %v1738 = vsel %vm844, %v1718, -inf
        %1739 = vmax.xlane.f32.xlu0 %v1738
        %v1740 = vpop.xlane.xlu0 %1739
        %v1741 = vsel %vm844, %v1720, -inf
        %1742 = vmax.xlane.f32.xlu0 %v1741
        %v1743 = vpop.xlane.xlu0 %1742
        %v1744 = vsel %vm844, %v1723, -inf
        %1745 = vmax.xlane.f32.xlu0 %v1744
        %v1746 = vpop.xlane.xlu0 %1745
        %v1747 = vsel %vm844, %v1725, -inf
        %1748 = vmax.xlane.f32.xlu0 %v1747
        %v1749 = vpop.xlane.xlu0 %1748
        %v1750 = vsel %vm844, %v1728, -inf
        %1751 = vmax.xlane.f32.xlu0 %v1750
        %v1752 = vpop.xlane.xlu0 %1751
        %v1753 = vsel %vm844, %v1730, -inf
        %1754 = vmax.xlane.f32.xlu0 %v1753
        %v1755 = vpop.xlane.xlu0 %1754
        %v1756 = vsub.f32 %v1713, %v1734
        %v1757 = vsub.f32 %v1715, %v1737
        %v1758 = vsub.f32 %v1718, %v1740
        %v1759 = vsub.f32 %v1720, %v1743
        %v1760 = vsub.f32 %v1723, %v1746
        %v1761 = vsub.f32 %v1725, %v1749
        %v1762 = vsub.f32 %v1728, %v1752
        %v1763 = vsub.f32 %v1730, %v1755
        %v1764 = vmul.f32 %v1756, 1.442695
        %v1765 = vpow.pop %v1764
        %v1766 = vmul.f32 %v1757, 1.442695
        %v1767 = vpow.pop %v1766
        %v1768 = vmul.f32 %v1758, 1.442695
        %v1769 = vpow.pop %v1768
        %v1770 = vmul.f32 %v1759, 1.442695
        %v1771 = vpow.pop %v1770
        %v1772 = vmul.f32 %v1760, 1.442695
        %v1773 = vpow.pop %v1772
        %v1774 = vmul.f32 %v1761, 1.442695
        %v1775 = vpow.pop %v1774
        %v1776 = vmul.f32 %v1762, 1.442695
        %v1777 = vpow.pop %v1776
        %v1778 = vmul.f32 %v1763, 1.442695
        %v1779 = vpow.pop %v1778
        %v1780 = vsel %vm844, %v1765, 0.0
        %1781 = vadd.xlane.f32.xlu0 %v1780
        %v1782 = vpop.xlane.xlu0 %1781
        %v1783 = vsel %vm844, %v1767, 0.0
        %1784 = vadd.xlane.f32.xlu0 %v1783
        %v1785 = vpop.xlane.xlu0 %1784
        %v1786 = vsel %vm844, %v1769, 0.0
        %1787 = vadd.xlane.f32.xlu0 %v1786
        %v1788 = vpop.xlane.xlu0 %1787
        %v1789 = vsel %vm844, %v1771, 0.0
        %1790 = vadd.xlane.f32.xlu0 %v1789
        %v1791 = vpop.xlane.xlu0 %1790
        %v1792 = vsel %vm844, %v1773, 0.0
        %1793 = vadd.xlane.f32.xlu0 %v1792
        %v1794 = vpop.xlane.xlu0 %1793
        %v1795 = vsel %vm844, %v1775, 0.0
        %1796 = vadd.xlane.f32.xlu0 %v1795
        %v1797 = vpop.xlane.xlu0 %1796
        %v1798 = vsel %vm844, %v1777, 0.0
        %1799 = vadd.xlane.f32.xlu0 %v1798
        %v1800 = vpop.xlane.xlu0 %1799
        %v1801 = vsel %vm844, %v1779, 0.0
        %1802 = vadd.xlane.f32.xlu0 %v1801
        %v1803 = vpop.xlane.xlu0 %1802
        %v1804 = vrcp.pop %v1782
        %v1805 = vrcp.pop %v1785
        %v1806 = vrcp.pop %v1788
        %v1807 = vrcp.pop %v1791
        %v1808 = vrcp.pop %v1794
        %v1809 = vrcp.pop %v1797
        %v1810 = vrcp.pop %v1800
        %v1811 = vrcp.pop %v1803
        %v1812 = vmul.f32 %v1765, %v1804
        %v1813 = vmul.f32 %v1767, %v1805
        %v1814 = vmul.f32 %v1769, %v1806
        %v1815 = vmul.f32 %v1771, %v1807
        %v1816 = vmul.f32 %v1773, %v1808
        %v1817 = vmul.f32 %v1775, %v1809
        %v1818 = vmul.f32 %v1777, %v1810
        %v1819 = vmul.f32 %v1779, %v1811
        %v1820 = vpack.c.bf16 %v1813, %v1812
        %v1821 = vpack.c.bf16 %v1815, %v1814
        %v1822 = vpack.c.bf16 %v1817, %v1816
        %v1823 = vpack.c.bf16 %v1819, %v1818
        %1824 = vrot.lane.b32.xlu0 %v1606, 64
        %v1825 = vpop.permute.xlu0 %1824
        %1826 = vrot.lane.b32.xlu0 %v1607, 64
        %v1827 = vpop.permute.xlu0 %1826
        %1828 = vrot.lane.b32.xlu0 %v1608, 64
        %v1829 = vpop.permute.xlu0 %1828
        %1830 = vrot.lane.b32.xlu0 %v1609, 64
        %v1831 = vpop.permute.xlu0 %1830
        %v1837 = vsel %vm844, %v1820, 0
        %v1840 = vsel %vm844, %v1821, 0
        %v1843 = vsel %vm844, %v1822, 0
        %v1846 = vsel %vm844, %v1823, 0
        %1848 = vmatpush.bf16.msra.mxu0 0
        %1849 = vmatpush.bf16.msra.mxu0 0
        %1850 = vmatpush.bf16.msra.mxu0 0
        %1851 = vmatpush.bf16.msra.mxu0 0
        %1852 = vmatpush.bf16.msra.mxu0 %v1831
        %1853 = vmatpush.bf16.msra.mxu0 %v1829
        %1854 = vmatpush.bf16.msra.mxu0 %v1827
        %1855 = vmatpush.bf16.msra.mxu0 %v1825
        %1856 = vmatmul.bf16.gmra.mxu0 %v1837
        %v1857 = vpop.f32.mrf.mxu0
        %v1858 = vadd.f32 0.0, %v1857
        %v1859 = vpop.f32.mrf.mxu0
        %v1860 = vadd.f32 0.0, %v1859
        %1861 = vmatmul.bf16.gmra.mxu0 %v1840
        %v1862 = vpop.f32.mrf.mxu0
        %v1863 = vadd.f32 0.0, %v1862
        %v1864 = vpop.f32.mrf.mxu0
        %v1865 = vadd.f32 0.0, %v1864
        %1866 = vmatmul.bf16.gmra.mxu0 %v1843
        %v1867 = vpop.f32.mrf.mxu0
        %v1868 = vadd.f32 0.0, %v1867
        %v1869 = vpop.f32.mrf.mxu0
        %v1870 = vadd.f32 0.0, %v1869
        %1871 = vmatmul.bf16.gmra.mxu0 %v1846
        %v1872 = vpop.f32.mrf.mxu0
        %v1873 = vadd.f32 0.0, %v1872
        %v1874 = vpop.f32.mrf.mxu0
        %v1875 = vadd.f32 0.0, %v1874
        %1876 = vdwg.mxu0
        %v1877 = vpack.c.bf16 %v1858, %v1858
        %v1878 = vpack.c.bf16 %v1860, %v1860
        %v1879 = vpack.c.bf16 %v1863, %v1863
        %v1880 = vpack.c.bf16 %v1865, %v1865
        %v1881 = vpack.c.bf16 %v1868, %v1868
        %v1882 = vpack.c.bf16 %v1870, %v1870
        %v1883 = vpack.c.bf16 %v1873, %v1873
        %v1884 = vpack.c.bf16 %v1875, %v1875
        %v1893 = vunpack.c.l.b16 %v1655
        %v1894 = vunpack.c.l.b16 %v1656
        %v1895 = vunpack.c.l.b16 %v1657
        %v1896 = vunpack.c.l.b16 %v1658
        %v1897 = vunpack.c.l.b16 %v1659
        %v1898 = vunpack.c.l.b16 %v1660
        %v1899 = vunpack.c.l.b16 %v1661
        %v1900 = vunpack.c.l.b16 %v1662
        %v1901 = vpack.c.b16 %v1894, %v1893
        %v1902 = vpack.c.b16 %v1896, %v1895
        %v1903 = vpack.c.b16 %v1898, %v1897
        %v1904 = vpack.c.b16 %v1900, %v1899
        %v1913 = vunpack.c.l.b16 %v1877
        %v1914 = vunpack.c.l.b16 %v1878
        %v1915 = vunpack.c.l.b16 %v1879
        %v1916 = vunpack.c.l.b16 %v1880
        %v1917 = vunpack.c.l.b16 %v1881
        %v1918 = vunpack.c.l.b16 %v1882
        %v1919 = vunpack.c.l.b16 %v1883
        %v1920 = vunpack.c.l.b16 %v1884
        %v1921 = vpack.c.b16 %v1914, %v1913
        %v1922 = vpack.c.b16 %v1916, %v1915
        %v1923 = vpack.c.b16 %v1918, %v1917
        %v1924 = vpack.c.b16 %v1920, %v1919
        %1925 = vrot.lane.b32.xlu0 %v1921, 64
        %v1926 = vpop.permute.xlu0 %1925
        %1927 = vrot.lane.b32.xlu0 %v1922, 64
        %v1928 = vpop.permute.xlu0 %1927
        %1929 = vrot.lane.b32.xlu0 %v1923, 64
        %v1930 = vpop.permute.xlu0 %1929
        %1931 = vrot.lane.b32.xlu0 %v1924, 64
        %v1932 = vpop.permute.xlu0 %1931
        %v1935 = vsel %vm844, %v1901, %v1926
        %v1938 = vsel %vm844, %v1902, %v1928
        %v1941 = vsel %vm844, %v1903, %v1930
        %v1944 = vsel %vm844, %v1904, %v1932
        %v1949 = vunpack.c.l.b16 %v1935
        %v1950 = vunpack.c.h.b16 %v1935
        %v1951 = vunpack.c.l.b16 %v1938
        %v1952 = vunpack.c.h.b16 %v1938
        %v1953 = vunpack.c.l.b16 %v1941
        %v1954 = vunpack.c.h.b16 %v1941
        %v1955 = vunpack.c.l.b16 %v1944
        %v1956 = vunpack.c.h.b16 %v1944
        %v1957 = vpack.c.b16 %v1949, %v1949
        %v1958 = vpack.c.b16 %v1950, %v1950
        %v1959 = vpack.c.b16 %v1951, %v1951
        %v1960 = vpack.c.b16 %v1952, %v1952
        %v1961 = vpack.c.b16 %v1953, %v1953
        %v1962 = vpack.c.b16 %v1954, %v1954
        %v1963 = vpack.c.b16 %v1955, %v1955
        %v1964 = vpack.c.b16 %v1956, %v1956
        %1973 = vst [vmem:[#allocation2 + $0x20] sm:$0xf] %v1957
        %1974 = vst [vmem:[#allocation2 + $0x24] sm:$0xf] %v1958
        %1975 = vst [vmem:[#allocation2 + $0x28] sm:$0xf] %v1959
        %1976 = vst [vmem:[#allocation2 + $0x2c] sm:$0xf] %v1960
        %1977 = vst [vmem:[#allocation2 + $0x30] sm:$0xf] %v1961
        %1978 = vst [vmem:[#allocation2 + $0x34] sm:$0xf] %v1962
        %1979 = vst [vmem:[#allocation2 + $0x38] sm:$0xf] %v1963
        %1980 = vst [vmem:[#allocation2 + $0x3c] sm:$0xf] %v1964
        %v1981 = vld [vmem:[#allocation2] sm:$0xf]
        %v1982 = vld [vmem:[#allocation2 + $0x4] sm:$0xf]
        %v1983 = vld [vmem:[#allocation2 + $0x8] sm:$0xf]
        %v1984 = vld [vmem:[#allocation2 + $0xc] sm:$0xf]
        %v1985 = vld [vmem:[#allocation2 + $0x10] sm:$0xf]
        %v1986 = vld [vmem:[#allocation2 + $0x14] sm:$0xf]
        %v1987 = vld [vmem:[#allocation2 + $0x18] sm:$0xf]
        %v1988 = vld [vmem:[#allocation2 + $0x1c] sm:$0xf]
        %v1989 = vld [vmem:[#allocation2 + $0x20] sm:$0xf]
        %v1990 = vld [vmem:[#allocation2 + $0x24] sm:$0xf]
        %v1991 = vld [vmem:[#allocation2 + $0x28] sm:$0xf]
        %v1992 = vld [vmem:[#allocation2 + $0x2c] sm:$0xf]
        %v1993 = vld [vmem:[#allocation2 + $0x30] sm:$0xf]
        %v1994 = vld [vmem:[#allocation2 + $0x34] sm:$0xf]
        %v1995 = vld [vmem:[#allocation2 + $0x38] sm:$0xf]
        %v1996 = vld [vmem:[#allocation2 + $0x3c] sm:$0xf]
        %v1997 = vld [vmem:[#allocation8] sm:$0xf]
        %v1998 = vld [vmem:[#allocation8 + $0x4] sm:$0xf]
        %v1999 = vld [vmem:[#allocation8 + $0x8] sm:$0xf]
        %v2000 = vld [vmem:[#allocation8 + $0xc] sm:$0xf]
        %v2001 = vld [vmem:[#allocation8 + $0x10] sm:$0xf]
        %v2002 = vld [vmem:[#allocation8 + $0x14] sm:$0xf]
        %v2003 = vld [vmem:[#allocation8 + $0x18] sm:$0xf]
        %v2004 = vld [vmem:[#allocation8 + $0x1c] sm:$0xf]
        %v2005 = vld [vmem:[#allocation8 + $0x20] sm:$0xf]
        %v2006 = vld [vmem:[#allocation8 + $0x24] sm:$0xf]
        %v2007 = vld [vmem:[#allocation8 + $0x28] sm:$0xf]
        %v2008 = vld [vmem:[#allocation8 + $0x2c] sm:$0xf]
        %v2009 = vld [vmem:[#allocation8 + $0x30] sm:$0xf]
        %v2010 = vld [vmem:[#allocation8 + $0x34] sm:$0xf]
        %v2011 = vld [vmem:[#allocation8 + $0x38] sm:$0xf]
        %v2012 = vld [vmem:[#allocation8 + $0x3c] sm:$0xf]
        %v2013 = vld [vmem:[%s3] sm:$0x1]
        %v2015 = vperm.slane %v2013, 0
        %v2033 = vunpack.c.l.b16 %v1981
        %v2034 = vunpack.c.l.b16 %v1982
        %v2035 = vunpack.c.l.b16 %v1983
        %v2036 = vunpack.c.l.b16 %v1984
        %v2037 = vunpack.c.l.b16 %v1985
        %v2038 = vunpack.c.l.b16 %v1986
        %v2039 = vunpack.c.l.b16 %v1987
        %v2040 = vunpack.c.l.b16 %v1988
        %v2041 = vunpack.c.l.b16 %v1989
        %v2042 = vunpack.c.l.b16 %v1990
        %v2043 = vunpack.c.l.b16 %v1991
        %v2044 = vunpack.c.l.b16 %v1992
        %v2045 = vunpack.c.l.b16 %v1993
        %v2046 = vunpack.c.l.b16 %v1994
        %v2047 = vunpack.c.l.b16 %v1995
        %v2048 = vunpack.c.l.b16 %v1996
        %v2049 = vpack.c.b16 %v2034, %v2033
        %v2050 = vpack.c.b16 %v2036, %v2035
        %v2051 = vpack.c.b16 %v2038, %v2037
        %v2052 = vpack.c.b16 %v2040, %v2039
        %v2053 = vpack.c.b16 %v2042, %v2041
        %v2054 = vpack.c.b16 %v2044, %v2043
        %v2055 = vpack.c.b16 %v2046, %v2045
        %v2056 = vpack.c.b16 %v2048, %v2047
        %v2081 = vunpack.c.l.b16 %v1997
        %v2082 = vunpack.c.l.b16 %v1998
        %v2083 = vunpack.c.l.b16 %v1999
        %v2084 = vunpack.c.l.b16 %v2000
        %v2085 = vunpack.c.l.b16 %v2001
        %v2086 = vunpack.c.l.b16 %v2002
        %v2087 = vunpack.c.l.b16 %v2003
        %v2088 = vunpack.c.l.b16 %v2004
        %v2089 = vunpack.c.l.b16 %v2005
        %v2090 = vunpack.c.l.b16 %v2006
        %v2091 = vunpack.c.l.b16 %v2007
        %v2092 = vunpack.c.l.b16 %v2008
        %v2093 = vunpack.c.l.b16 %v2009
        %v2094 = vunpack.c.l.b16 %v2010
        %v2095 = vunpack.c.l.b16 %v2011
        %v2096 = vunpack.c.l.b16 %v2012
        %v2097 = vpack.c.b16 %v2082, %v2081
        %v2098 = vpack.c.b16 %v2084, %v2083
        %v2099 = vpack.c.b16 %v2086, %v2085
        %v2100 = vpack.c.b16 %v2088, %v2087
        %v2101 = vpack.c.b16 %v2090, %v2089
        %v2102 = vpack.c.b16 %v2092, %v2091
        %v2103 = vpack.c.b16 %v2094, %v2093
        %v2104 = vpack.c.b16 %v2096, %v2095
        %2113 = vmatpush.bf16.msra.mxu0 %v2104
        %2114 = vmatpush.bf16.msra.mxu0 %v2103
        %2115 = vmatpush.bf16.msra.mxu0 %v2102
        %2116 = vmatpush.bf16.msra.mxu0 %v2101
        %2117 = vmatpush.bf16.msra.mxu0 %v2100
        %2118 = vmatpush.bf16.msra.mxu0 %v2099
        %2119 = vmatpush.bf16.msra.mxu0 %v2098
        %2120 = vmatpush.bf16.msra.mxu0 %v2097
        %2121 = vmatmul.bf16.gmra.mxu0 %v2049
        %v2122 = vpop.f32.mrf.mxu0
        %v2123 = vadd.f32 %v2015, %v2122
        %v2124 = vpop.f32.mrf.mxu0
        %v2125 = vadd.f32 %v2015, %v2124
        %2126 = vmatmul.bf16.gmra.mxu0 %v2050
        %v2127 = vpop.f32.mrf.mxu0
        %v2128 = vadd.f32 %v2015, %v2127
        %v2129 = vpop.f32.mrf.mxu0
        %v2130 = vadd.f32 %v2015, %v2129
        %2131 = vmatmul.bf16.gmra.mxu0 %v2051
        %v2132 = vpop.f32.mrf.mxu0
        %v2133 = vadd.f32 %v2015, %v2132
        %v2134 = vpop.f32.mrf.mxu0
        %v2135 = vadd.f32 %v2015, %v2134
        %2136 = vmatmul.bf16.gmra.mxu0 %v2052
        %v2137 = vpop.f32.mrf.mxu0
        %v2138 = vadd.f32 %v2015, %v2137
        %v2139 = vpop.f32.mrf.mxu0
        %v2140 = vadd.f32 %v2015, %v2139
        %2141 = vmatmul.bf16.gmra.mxu0 %v2053
        %v2142 = vpop.f32.mrf.mxu0
        %v2143 = vadd.f32 %v2015, %v2142
        %v2144 = vpop.f32.mrf.mxu0
        %v2145 = vadd.f32 %v2015, %v2144
        %2146 = vmatmul.bf16.gmra.mxu0 %v2054
        %v2147 = vpop.f32.mrf.mxu0
        %v2148 = vadd.f32 %v2015, %v2147
        %v2149 = vpop.f32.mrf.mxu0
        %v2150 = vadd.f32 %v2015, %v2149
        %2151 = vmatmul.bf16.gmra.mxu0 %v2055
        %v2152 = vpop.f32.mrf.mxu0
        %v2153 = vadd.f32 %v2015, %v2152
        %v2154 = vpop.f32.mrf.mxu0
        %v2155 = vadd.f32 %v2015, %v2154
        %2156 = vmatmul.bf16.gmra.mxu0 %v2056
        %v2157 = vpop.f32.mrf.mxu0
        %v2158 = vadd.f32 %v2015, %v2157
        %v2159 = vpop.f32.mrf.mxu0
        %v2160 = vadd.f32 %v2015, %v2159
        %2161 = vdwg.mxu0
        %v2162 = vadd.f32 %v449, %v2123
        %v2163 = vadd.f32 %v450, %v2125
        %v2164 = vadd.f32 %v451, %v2128
        %v2165 = vadd.f32 %v452, %v2130
        %v2166 = vadd.f32 %v453, %v2133
        %v2167 = vadd.f32 %v454, %v2135
        %v2168 = vadd.f32 %v455, %v2138
        %v2169 = vadd.f32 %v456, %v2140
        %v2170 = vadd.f32 %v457, %v2143
        %v2171 = vadd.f32 %v458, %v2145
        %v2172 = vadd.f32 %v459, %v2148
        %v2173 = vadd.f32 %v460, %v2150
        %v2174 = vadd.f32 %v461, %v2153
        %v2175 = vadd.f32 %v462, %v2155
        %v2176 = vadd.f32 %v463, %v2158
        %v2177 = vadd.f32 %v464, %v2160
        %v2178 = vld [vmem:[%s4] sm:$0x1]
        %v2179 = vld [vmem:[%s5] sm:$0x1]
        %2180 = vadd.xlane.f32.xlu0 %v2162
        %v2181 = vpop.xlane.xlu0 %2180
        %2182 = vadd.xlane.f32.xlu0 %v2163
        %v2183 = vpop.xlane.xlu0 %2182
        %2184 = vadd.xlane.f32.xlu0 %v2164
        %v2185 = vpop.xlane.xlu0 %2184
        %2186 = vadd.xlane.f32.xlu0 %v2165
        %v2187 = vpop.xlane.xlu0 %2186
        %2188 = vadd.xlane.f32.xlu0 %v2166
        %v2189 = vpop.xlane.xlu0 %2188
        %2190 = vadd.xlane.f32.xlu0 %v2167
        %v2191 = vpop.xlane.xlu0 %2190
        %2192 = vadd.xlane.f32.xlu0 %v2168
        %v2193 = vpop.xlane.xlu0 %2192
        %2194 = vadd.xlane.f32.xlu0 %v2169
        %v2195 = vpop.xlane.xlu0 %2194
        %2196 = vadd.xlane.f32.xlu0 %v2170
        %v2197 = vpop.xlane.xlu0 %2196
        %2198 = vadd.xlane.f32.xlu0 %v2171
        %v2199 = vpop.xlane.xlu0 %2198
        %2200 = vadd.xlane.f32.xlu0 %v2172
        %v2201 = vpop.xlane.xlu0 %2200
        %2202 = vadd.xlane.f32.xlu0 %v2173
        %v2203 = vpop.xlane.xlu0 %2202
        %2204 = vadd.xlane.f32.xlu0 %v2174
        %v2205 = vpop.xlane.xlu0 %2204
        %2206 = vadd.xlane.f32.xlu0 %v2175
        %v2207 = vpop.xlane.xlu0 %2206
        %2208 = vadd.xlane.f32.xlu0 %v2176
        %v2209 = vpop.xlane.xlu0 %2208
        %2210 = vadd.xlane.f32.xlu0 %v2177
        %v2211 = vpop.xlane.xlu0 %2210
        %v2212 = vrcp.pop 128.0
        %v2213 = vmul.f32 128.0, %v2212
        %v2214 = vsub.f32 1.0, %v2213
        %v2215 = vmul.f32 %v2212, %v2214
        %v2216 = vadd.f32 %v2212, %v2215
        %vm2217 = vweird.f32 %v2212
        %v2218 = vsel %vm2217, %v2212, %v2216
        %v2219 = vmul.f32 %v2181, %v2218
        %v2220 = vmul.f32 %v2183, %v2218
        %v2221 = vmul.f32 %v2185, %v2218
        %v2222 = vmul.f32 %v2187, %v2218
        %v2223 = vmul.f32 %v2189, %v2218
        %v2224 = vmul.f32 %v2191, %v2218
        %v2225 = vmul.f32 %v2193, %v2218
        %v2226 = vmul.f32 %v2195, %v2218
        %v2227 = vmul.f32 %v2197, %v2218
        %v2228 = vmul.f32 %v2199, %v2218
        %v2229 = vmul.f32 %v2201, %v2218
        %v2230 = vmul.f32 %v2203, %v2218
        %v2231 = vmul.f32 %v2205, %v2218
        %v2232 = vmul.f32 %v2207, %v2218
        %v2233 = vmul.f32 %v2209, %v2218
        %v2234 = vmul.f32 %v2211, %v2218
        %v2235 = vsub.f32 %v2162, %v2219
        %v2236 = vsub.f32 %v2163, %v2220
        %v2237 = vsub.f32 %v2164, %v2221
        %v2238 = vsub.f32 %v2165, %v2222
        %v2239 = vsub.f32 %v2166, %v2223
        %v2240 = vsub.f32 %v2167, %v2224
        %v2241 = vsub.f32 %v2168, %v2225
        %v2242 = vsub.f32 %v2169, %v2226
        %v2243 = vsub.f32 %v2170, %v2227
        %v2244 = vsub.f32 %v2171, %v2228
        %v2245 = vsub.f32 %v2172, %v2229
        %v2246 = vsub.f32 %v2173, %v2230
        %v2247 = vsub.f32 %v2174, %v2231
        %v2248 = vsub.f32 %v2175, %v2232
        %v2249 = vsub.f32 %v2176, %v2233
        %v2250 = vsub.f32 %v2177, %v2234
        %v2251 = vmul.f32 %v2235, %v2235
        %v2252 = vmul.f32 %v2236, %v2236
        %v2253 = vmul.f32 %v2237, %v2237
        %v2254 = vmul.f32 %v2238, %v2238
        %v2255 = vmul.f32 %v2239, %v2239
        %v2256 = vmul.f32 %v2240, %v2240
        %v2257 = vmul.f32 %v2241, %v2241
        %v2258 = vmul.f32 %v2242, %v2242
        %v2259 = vmul.f32 %v2243, %v2243
        %v2260 = vmul.f32 %v2244, %v2244
        %v2261 = vmul.f32 %v2245, %v2245
        %v2262 = vmul.f32 %v2246, %v2246
        %v2263 = vmul.f32 %v2247, %v2247
        %v2264 = vmul.f32 %v2248, %v2248
        %v2265 = vmul.f32 %v2249, %v2249
        %v2266 = vmul.f32 %v2250, %v2250
        %2267 = vadd.xlane.f32.xlu0 %v2251
        %v2268 = vpop.xlane.xlu0 %2267
        %2269 = vadd.xlane.f32.xlu0 %v2252
        %v2270 = vpop.xlane.xlu0 %2269
        %2271 = vadd.xlane.f32.xlu0 %v2253
        %v2272 = vpop.xlane.xlu0 %2271
        %2273 = vadd.xlane.f32.xlu0 %v2254
        %v2274 = vpop.xlane.xlu0 %2273
        %2275 = vadd.xlane.f32.xlu0 %v2255
        %v2276 = vpop.xlane.xlu0 %2275
        %2277 = vadd.xlane.f32.xlu0 %v2256
        %v2278 = vpop.xlane.xlu0 %2277
        %2279 = vadd.xlane.f32.xlu0 %v2257
        %v2280 = vpop.xlane.xlu0 %2279
        %2281 = vadd.xlane.f32.xlu0 %v2258
        %v2282 = vpop.xlane.xlu0 %2281
        %2283 = vadd.xlane.f32.xlu0 %v2259
        %v2284 = vpop.xlane.xlu0 %2283
        %2285 = vadd.xlane.f32.xlu0 %v2260
        %v2286 = vpop.xlane.xlu0 %2285
        %2287 = vadd.xlane.f32.xlu0 %v2261
        %v2288 = vpop.xlane.xlu0 %2287
        %2289 = vadd.xlane.f32.xlu0 %v2262
        %v2290 = vpop.xlane.xlu0 %2289
        %2291 = vadd.xlane.f32.xlu0 %v2263
        %v2292 = vpop.xlane.xlu0 %2291
        %2293 = vadd.xlane.f32.xlu0 %v2264
        %v2294 = vpop.xlane.xlu0 %2293
        %2295 = vadd.xlane.f32.xlu0 %v2265
        %v2296 = vpop.xlane.xlu0 %2295
        %2297 = vadd.xlane.f32.xlu0 %v2266
        %v2298 = vpop.xlane.xlu0 %2297
        %v2299 = vmul.f32 %v2268, %v2218
        %v2300 = vmul.f32 %v2270, %v2218
        %v2301 = vmul.f32 %v2272, %v2218
        %v2302 = vmul.f32 %v2274, %v2218
        %v2303 = vmul.f32 %v2276, %v2218
        %v2304 = vmul.f32 %v2278, %v2218
        %v2305 = vmul.f32 %v2280, %v2218
        %v2306 = vmul.f32 %v2282, %v2218
        %v2307 = vmul.f32 %v2284, %v2218
        %v2308 = vmul.f32 %v2286, %v2218
        %v2309 = vmul.f32 %v2288, %v2218
        %v2310 = vmul.f32 %v2290, %v2218
        %v2311 = vmul.f32 %v2292, %v2218
        %v2312 = vmul.f32 %v2294, %v2218
        %v2313 = vmul.f32 %v2296, %v2218
        %v2314 = vmul.f32 %v2298, %v2218
        %v2315 = vadd.f32 %v2299, 1e-06
        %v2316 = vadd.f32 %v2300, 1e-06
        %v2317 = vadd.f32 %v2301, 1e-06
        %v2318 = vadd.f32 %v2302, 1e-06
        %v2319 = vadd.f32 %v2303, 1e-06
        %v2320 = vadd.f32 %v2304, 1e-06
        %v2321 = vadd.f32 %v2305, 1e-06
        %v2322 = vadd.f32 %v2306, 1e-06
        %v2323 = vadd.f32 %v2307, 1e-06
        %v2324 = vadd.f32 %v2308, 1e-06
        %v2325 = vadd.f32 %v2309, 1e-06
        %v2326 = vadd.f32 %v2310, 1e-06
        %v2327 = vadd.f32 %v2311, 1e-06
        %v2328 = vadd.f32 %v2312, 1e-06
        %v2329 = vadd.f32 %v2313, 1e-06
        %v2330 = vadd.f32 %v2314, 1e-06
        %v2331 = vrsqrt.pop %v2315
        %v2332 = vmul.f32 %v2331, %v2315
        %v2333 = vmul.f32 %v2332, %v2331
        %v2334 = vmul.f32 0.5, %v2333
        %v2335 = vsub.f32 1.5, %v2334
        %v2336 = vmul.f32 %v2331, %v2335
        %vm2337 = vweird.f32 %v2315
        %vm2338 = vweird.f32 %v2331
        %vm2339 = vmor %vm2337, %vm2338
        %v2340 = vsel %vm2339, %v2331, %v2336
        %v2341 = vrsqrt.pop %v2316
        %v2342 = vmul.f32 %v2341, %v2316
        %v2343 = vmul.f32 %v2342, %v2341
        %v2344 = vmul.f32 0.5, %v2343
        %v2345 = vsub.f32 1.5, %v2344
        %v2346 = vmul.f32 %v2341, %v2345
        %vm2347 = vweird.f32 %v2316
        %vm2348 = vweird.f32 %v2341
        %vm2349 = vmor %vm2347, %vm2348
        %v2350 = vsel %vm2349, %v2341, %v2346
        %v2351 = vrsqrt.pop %v2317
        %v2352 = vmul.f32 %v2351, %v2317
        %v2353 = vmul.f32 %v2352, %v2351
        %v2354 = vmul.f32 0.5, %v2353
        %v2355 = vsub.f32 1.5, %v2354
        %v2356 = vmul.f32 %v2351, %v2355
        %vm2357 = vweird.f32 %v2317
        %vm2358 = vweird.f32 %v2351
        %vm2359 = vmor %vm2357, %vm2358
        %v2360 = vsel %vm2359, %v2351, %v2356
        %v2361 = vrsqrt.pop %v2318
        %v2362 = vmul.f32 %v2361, %v2318
        %v2363 = vmul.f32 %v2362, %v2361
        %v2364 = vmul.f32 0.5, %v2363
        %v2365 = vsub.f32 1.5, %v2364
        %v2366 = vmul.f32 %v2361, %v2365
        %vm2367 = vweird.f32 %v2318
        %vm2368 = vweird.f32 %v2361
        %vm2369 = vmor %vm2367, %vm2368
        %v2370 = vsel %vm2369, %v2361, %v2366
        %v2371 = vrsqrt.pop %v2319
        %v2372 = vmul.f32 %v2371, %v2319
        %v2373 = vmul.f32 %v2372, %v2371
        %v2374 = vmul.f32 0.5, %v2373
        %v2375 = vsub.f32 1.5, %v2374
        %v2376 = vmul.f32 %v2371, %v2375
        %vm2377 = vweird.f32 %v2319
        %vm2378 = vweird.f32 %v2371
        %vm2379 = vmor %vm2377, %vm2378
        %v2380 = vsel %vm2379, %v2371, %v2376
        %v2381 = vrsqrt.pop %v2320
        %v2382 = vmul.f32 %v2381, %v2320
        %v2383 = vmul.f32 %v2382, %v2381
        %v2384 = vmul.f32 0.5, %v2383
        %v2385 = vsub.f32 1.5, %v2384
        %v2386 = vmul.f32 %v2381, %v2385
        %vm2387 = vweird.f32 %v2320
        %vm2388 = vweird.f32 %v2381
        %vm2389 = vmor %vm2387, %vm2388
        %v2390 = vsel %vm2389, %v2381, %v2386
        %v2391 = vrsqrt.pop %v2321
        %v2392 = vmul.f32 %v2391, %v2321
        %v2393 = vmul.f32 %v2392, %v2391
        %v2394 = vmul.f32 0.5, %v2393
        %v2395 = vsub.f32 1.5, %v2394
        %v2396 = vmul.f32 %v2391, %v2395
        %vm2397 = vweird.f32 %v2321
        %vm2398 = vweird.f32 %v2391
        %vm2399 = vmor %vm2397, %vm2398
        %v2400 = vsel %vm2399, %v2391, %v2396
        %v2401 = vrsqrt.pop %v2322
        %v2402 = vmul.f32 %v2401, %v2322
        %v2403 = vmul.f32 %v2402, %v2401
        %v2404 = vmul.f32 0.5, %v2403
        %v2405 = vsub.f32 1.5, %v2404
        %v2406 = vmul.f32 %v2401, %v2405
        %vm2407 = vweird.f32 %v2322
        %vm2408 = vweird.f32 %v2401
        %vm2409 = vmor %vm2407, %vm2408
        %v2410 = vsel %vm2409, %v2401, %v2406
        %v2411 = vrsqrt.pop %v2323
        %v2412 = vmul.f32 %v2411, %v2323
        %v2413 = vmul.f32 %v2412, %v2411
        %v2414 = vmul.f32 0.5, %v2413
        %v2415 = vsub.f32 1.5, %v2414
        %v2416 = vmul.f32 %v2411, %v2415
        %vm2417 = vweird.f32 %v2323
        %vm2418 = vweird.f32 %v2411
        %vm2419 = vmor %vm2417, %vm2418
        %v2420 = vsel %vm2419, %v2411, %v2416
        %v2421 = vrsqrt.pop %v2324
        %v2422 = vmul.f32 %v2421, %v2324
        %v2423 = vmul.f32 %v2422, %v2421
        %v2424 = vmul.f32 0.5, %v2423
        %v2425 = vsub.f32 1.5, %v2424
        %v2426 = vmul.f32 %v2421, %v2425
        %vm2427 = vweird.f32 %v2324
        %vm2428 = vweird.f32 %v2421
        %vm2429 = vmor %vm2427, %vm2428
        %v2430 = vsel %vm2429, %v2421, %v2426
        %v2431 = vrsqrt.pop %v2325
        %v2432 = vmul.f32 %v2431, %v2325
        %v2433 = vmul.f32 %v2432, %v2431
        %v2434 = vmul.f32 0.5, %v2433
        %v2435 = vsub.f32 1.5, %v2434
        %v2436 = vmul.f32 %v2431, %v2435
        %vm2437 = vweird.f32 %v2325
        %vm2438 = vweird.f32 %v2431
        %vm2439 = vmor %vm2437, %vm2438
        %v2440 = vsel %vm2439, %v2431, %v2436
        %v2441 = vrsqrt.pop %v2326
        %v2442 = vmul.f32 %v2441, %v2326
        %v2443 = vmul.f32 %v2442, %v2441
        %v2444 = vmul.f32 0.5, %v2443
        %v2445 = vsub.f32 1.5, %v2444
        %v2446 = vmul.f32 %v2441, %v2445
        %vm2447 = vweird.f32 %v2326
        %vm2448 = vweird.f32 %v2441
        %vm2449 = vmor %vm2447, %vm2448
        %v2450 = vsel %vm2449, %v2441, %v2446
        %v2451 = vrsqrt.pop %v2327
        %v2452 = vmul.f32 %v2451, %v2327
        %v2453 = vmul.f32 %v2452, %v2451
        %v2454 = vmul.f32 0.5, %v2453
        %v2455 = vsub.f32 1.5, %v2454
        %v2456 = vmul.f32 %v2451, %v2455
        %vm2457 = vweird.f32 %v2327
        %vm2458 = vweird.f32 %v2451
        %vm2459 = vmor %vm2457, %vm2458
        %v2460 = vsel %vm2459, %v2451, %v2456
        %v2461 = vrsqrt.pop %v2328
        %v2462 = vmul.f32 %v2461, %v2328
        %v2463 = vmul.f32 %v2462, %v2461
        %v2464 = vmul.f32 0.5, %v2463
        %v2465 = vsub.f32 1.5, %v2464
        %v2466 = vmul.f32 %v2461, %v2465
        %vm2467 = vweird.f32 %v2328
        %vm2468 = vweird.f32 %v2461
        %vm2469 = vmor %vm2467, %vm2468
        %v2470 = vsel %vm2469, %v2461, %v2466
        %v2471 = vrsqrt.pop %v2329
        %v2472 = vmul.f32 %v2471, %v2329
        %v2473 = vmul.f32 %v2472, %v2471
        %v2474 = vmul.f32 0.5, %v2473
        %v2475 = vsub.f32 1.5, %v2474
        %v2476 = vmul.f32 %v2471, %v2475
        %vm2477 = vweird.f32 %v2329
        %vm2478 = vweird.f32 %v2471
        %vm2479 = vmor %vm2477, %vm2478
        %v2480 = vsel %vm2479, %v2471, %v2476
        %v2481 = vrsqrt.pop %v2330
        %v2482 = vmul.f32 %v2481, %v2330
        %v2483 = vmul.f32 %v2482, %v2481
        %v2484 = vmul.f32 0.5, %v2483
        %v2485 = vsub.f32 1.5, %v2484
        %v2486 = vmul.f32 %v2481, %v2485
        %vm2487 = vweird.f32 %v2330
        %vm2488 = vweird.f32 %v2481
        %vm2489 = vmor %vm2487, %vm2488
        %v2490 = vsel %vm2489, %v2481, %v2486
        %v2491 = vmul.f32 %v2235, %v2340
        %v2492 = vmul.f32 %v2236, %v2350
        %v2493 = vmul.f32 %v2237, %v2360
        %v2494 = vmul.f32 %v2238, %v2370
        %v2495 = vmul.f32 %v2239, %v2380
        %v2496 = vmul.f32 %v2240, %v2390
        %v2497 = vmul.f32 %v2241, %v2400
        %v2498 = vmul.f32 %v2242, %v2410
        %v2499 = vmul.f32 %v2243, %v2420
        %v2500 = vmul.f32 %v2244, %v2430
        %v2501 = vmul.f32 %v2245, %v2440
        %v2502 = vmul.f32 %v2246, %v2450
        %v2503 = vmul.f32 %v2247, %v2460
        %v2504 = vmul.f32 %v2248, %v2470
        %v2505 = vmul.f32 %v2249, %v2480
        %v2506 = vmul.f32 %v2250, %v2490
        %v2508 = vperm.slane %v2178, 0
        %v2510 = vmul.f32 %v2491, %v2508
        %v2511 = vmul.f32 %v2492, %v2508
        %v2512 = vmul.f32 %v2493, %v2508
        %v2513 = vmul.f32 %v2494, %v2508
        %v2514 = vmul.f32 %v2495, %v2508
        %v2515 = vmul.f32 %v2496, %v2508
        %v2516 = vmul.f32 %v2497, %v2508
        %v2517 = vmul.f32 %v2498, %v2508
        %v2518 = vmul.f32 %v2499, %v2508
        %v2519 = vmul.f32 %v2500, %v2508
        %v2520 = vmul.f32 %v2501, %v2508
        %v2521 = vmul.f32 %v2502, %v2508
        %v2522 = vmul.f32 %v2503, %v2508
        %v2523 = vmul.f32 %v2504, %v2508
        %v2524 = vmul.f32 %v2505, %v2508
        %v2525 = vmul.f32 %v2506, %v2508
        %v2527 = vperm.slane %v2179, 0
        %v2529 = vadd.f32 %v2510, %v2527
        %v2530 = vadd.f32 %v2511, %v2527
        %v2531 = vadd.f32 %v2512, %v2527
        %v2532 = vadd.f32 %v2513, %v2527
        %v2533 = vadd.f32 %v2514, %v2527
        %v2534 = vadd.f32 %v2515, %v2527
        %v2535 = vadd.f32 %v2516, %v2527
        %v2536 = vadd.f32 %v2517, %v2527
        %v2537 = vadd.f32 %v2518, %v2527
        %v2538 = vadd.f32 %v2519, %v2527
        %v2539 = vadd.f32 %v2520, %v2527
        %v2540 = vadd.f32 %v2521, %v2527
        %v2541 = vadd.f32 %v2522, %v2527
        %v2542 = vadd.f32 %v2523, %v2527
        %v2543 = vadd.f32 %v2524, %v2527
        %v2544 = vadd.f32 %v2525, %v2527
        %v2545 = vpack.c.bf16 %v2530, %v2529
        %v2546 = vpack.c.bf16 %v2532, %v2531
        %v2547 = vpack.c.bf16 %v2534, %v2533
        %v2548 = vpack.c.bf16 %v2536, %v2535
        %v2549 = vpack.c.bf16 %v2538, %v2537
        %v2550 = vpack.c.bf16 %v2540, %v2539
        %v2551 = vpack.c.bf16 %v2542, %v2541
        %v2552 = vpack.c.bf16 %v2544, %v2543
        %v2553 = vld [vmem:[#allocation9] sm:$0xff]
        %v2554 = vld [vmem:[#allocation9 + $0x8] sm:$0xff]
        %v2555 = vld [vmem:[#allocation9 + $0x10] sm:$0xff]
        %v2556 = vld [vmem:[#allocation9 + $0x18] sm:$0xff]
        %v2557 = vld [vmem:[#allocation9 + $0x20] sm:$0xff]
        %v2558 = vld [vmem:[#allocation9 + $0x28] sm:$0xff]
        %v2559 = vld [vmem:[#allocation9 + $0x30] sm:$0xff]
        %v2560 = vld [vmem:[#allocation9 + $0x38] sm:$0xff]
        %v2561 = vld [vmem:[#allocation9 + $0x40] sm:$0xff]
        %v2562 = vld [vmem:[#allocation9 + $0x48] sm:$0xff]
        %v2563 = vld [vmem:[#allocation9 + $0x50] sm:$0xff]
        %v2564 = vld [vmem:[#allocation9 + $0x58] sm:$0xff]
        %v2565 = vld [vmem:[#allocation9 + $0x60] sm:$0xff]
        %v2566 = vld [vmem:[#allocation9 + $0x68] sm:$0xff]
        %v2567 = vld [vmem:[#allocation9 + $0x70] sm:$0xff]
        %v2568 = vld [vmem:[#allocation9 + $0x78] sm:$0xff]
        %v2569 = vld [vmem:[#allocation9 + $0x80] sm:$0xff]
        %v2570 = vld [vmem:[#allocation9 + $0x88] sm:$0xff]
        %v2571 = vld [vmem:[#allocation9 + $0x90] sm:$0xff]
        %v2572 = vld [vmem:[#allocation9 + $0x98] sm:$0xff]
        %v2573 = vld [vmem:[#allocation9 + $0xa0] sm:$0xff]
        %v2574 = vld [vmem:[#allocation9 + $0xa8] sm:$0xff]
        %v2575 = vld [vmem:[#allocation9 + $0xb0] sm:$0xff]
        %v2576 = vld [vmem:[#allocation9 + $0xb8] sm:$0xff]
        %v2577 = vld [vmem:[#allocation9 + $0xc0] sm:$0xff]
        %v2578 = vld [vmem:[#allocation9 + $0xc8] sm:$0xff]
        %v2579 = vld [vmem:[#allocation9 + $0xd0] sm:$0xff]
        %v2580 = vld [vmem:[#allocation9 + $0xd8] sm:$0xff]
        %v2581 = vld [vmem:[#allocation9 + $0xe0] sm:$0xff]
        %v2582 = vld [vmem:[#allocation9 + $0xe8] sm:$0xff]
        %v2583 = vld [vmem:[#allocation9 + $0xf0] sm:$0xff]
        %v2584 = vld [vmem:[#allocation9 + $0xf8] sm:$0xff]
        %v2617 = vunpack.c.l.b16 %v2553
        %v2618 = vunpack.c.h.b16 %v2553
        %v2619 = vunpack.c.l.b16 %v2554
        %v2620 = vunpack.c.h.b16 %v2554
        %v2621 = vunpack.c.l.b16 %v2555
        %v2622 = vunpack.c.h.b16 %v2555
        %v2623 = vunpack.c.l.b16 %v2556
        %v2624 = vunpack.c.h.b16 %v2556
        %v2625 = vunpack.c.l.b16 %v2557
        %v2626 = vunpack.c.h.b16 %v2557
        %v2627 = vunpack.c.l.b16 %v2558
        %v2628 = vunpack.c.h.b16 %v2558
        %v2629 = vunpack.c.l.b16 %v2559
        %v2630 = vunpack.c.h.b16 %v2559
        %v2631 = vunpack.c.l.b16 %v2560
        %v2632 = vunpack.c.h.b16 %v2560
        %v2633 = vunpack.c.l.b16 %v2561
        %v2634 = vunpack.c.h.b16 %v2561
        %v2635 = vunpack.c.l.b16 %v2562
        %v2636 = vunpack.c.h.b16 %v2562
        %v2637 = vunpack.c.l.b16 %v2563
        %v2638 = vunpack.c.h.b16 %v2563
        %v2639 = vunpack.c.l.b16 %v2564
        %v2640 = vunpack.c.h.b16 %v2564
        %v2641 = vunpack.c.l.b16 %v2565
        %v2642 = vunpack.c.h.b16 %v2565
        %v2643 = vunpack.c.l.b16 %v2566
        %v2644 = vunpack.c.h.b16 %v2566
        %v2645 = vunpack.c.l.b16 %v2567
        %v2646 = vunpack.c.h.b16 %v2567
        %v2647 = vunpack.c.l.b16 %v2568
        %v2648 = vunpack.c.h.b16 %v2568
        %v2649 = vunpack.c.l.b16 %v2569
        %v2650 = vunpack.c.h.b16 %v2569
        %v2651 = vunpack.c.l.b16 %v2570
        %v2652 = vunpack.c.h.b16 %v2570
        %v2653 = vunpack.c.l.b16 %v2571
        %v2654 = vunpack.c.h.b16 %v2571
        %v2655 = vunpack.c.l.b16 %v2572
        %v2656 = vunpack.c.h.b16 %v2572
        %v2657 = vunpack.c.l.b16 %v2573
        %v2658 = vunpack.c.h.b16 %v2573
        %v2659 = vunpack.c.l.b16 %v2574
        %v2660 = vunpack.c.h.b16 %v2574
        %v2661 = vunpack.c.l.b16 %v2575
        %v2662 = vunpack.c.h.b16 %v2575
        %v2663 = vunpack.c.l.b16 %v2576
        %v2664 = vunpack.c.h.b16 %v2576
        %v2665 = vunpack.c.l.b16 %v2577
        %v2666 = vunpack.c.h.b16 %v2577
        %v2667 = vunpack.c.l.b16 %v2578
        %v2668 = vunpack.c.h.b16 %v2578
        %v2669 = vunpack.c.l.b16 %v2579
        %v2670 = vunpack.c.h.b16 %v2579
        %v2671 = vunpack.c.l.b16 %v2580
        %v2672 = vunpack.c.h.b16 %v2580
        %v2673 = vunpack.c.l.b16 %v2581
        %v2674 = vunpack.c.h.b16 %v2581
        %v2675 = vunpack.c.l.b16 %v2582
        %v2676 = vunpack.c.h.b16 %v2582
        %v2677 = vunpack.c.l.b16 %v2583
        %v2678 = vunpack.c.h.b16 %v2583
        %v2679 = vunpack.c.l.b16 %v2584
        %v2680 = vunpack.c.h.b16 %v2584
        %v2681 = vpack.c.b16 %v2621, %v2617
        %v2682 = vpack.c.b16 %v2622, %v2618
        %v2683 = vpack.c.b16 %v2623, %v2619
        %v2684 = vpack.c.b16 %v2624, %v2620
        %v2685 = vpack.c.b16 %v2629, %v2625
        %v2686 = vpack.c.b16 %v2630, %v2626
        %v2687 = vpack.c.b16 %v2631, %v2627
        %v2688 = vpack.c.b16 %v2632, %v2628
        %v2689 = vpack.c.b16 %v2637, %v2633
        %v2690 = vpack.c.b16 %v2638, %v2634
        %v2691 = vpack.c.b16 %v2639, %v2635
        %v2692 = vpack.c.b16 %v2640, %v2636
        %v2693 = vpack.c.b16 %v2645, %v2641
        %v2694 = vpack.c.b16 %v2646, %v2642
        %v2695 = vpack.c.b16 %v2647, %v2643
        %v2696 = vpack.c.b16 %v2648, %v2644
        %v2697 = vpack.c.b16 %v2653, %v2649
        %v2698 = vpack.c.b16 %v2654, %v2650
        %v2699 = vpack.c.b16 %v2655, %v2651
        %v2700 = vpack.c.b16 %v2656, %v2652
        %v2701 = vpack.c.b16 %v2661, %v2657
        %v2702 = vpack.c.b16 %v2662, %v2658
        %v2703 = vpack.c.b16 %v2663, %v2659
        %v2704 = vpack.c.b16 %v2664, %v2660
        %v2705 = vpack.c.b16 %v2669, %v2665
        %v2706 = vpack.c.b16 %v2670, %v2666
        %v2707 = vpack.c.b16 %v2671, %v2667
        %v2708 = vpack.c.b16 %v2672, %v2668
        %v2709 = vpack.c.b16 %v2677, %v2673
        %v2710 = vpack.c.b16 %v2678, %v2674
        %v2711 = vpack.c.b16 %v2679, %v2675
        %v2712 = vpack.c.b16 %v2680, %v2676
        %2745 = vmatpush.bf16.msra.mxu0 %v2709
        %2746 = vmatpush.bf16.msra.mxu0 %v2705
        %2747 = vmatpush.bf16.msra.mxu0 %v2701
        %2748 = vmatpush.bf16.msra.mxu0 %v2697
        %2749 = vmatpush.bf16.msra.mxu0 %v2693
        %2750 = vmatpush.bf16.msra.mxu0 %v2689
        %2751 = vmatpush.bf16.msra.mxu0 %v2685
        %2752 = vmatpush.bf16.msra.mxu0 %v2681
        %2753 = vmatmul.bf16.gmra.mxu0 %v2545
        %v2754 = vpop.f32.mrf.mxu0
        %v2755 = vadd.f32 0.0, %v2754
        %v2756 = vpop.f32.mrf.mxu0
        %v2757 = vadd.f32 0.0, %v2756
        %2758 = vmatmul.bf16.gmra.mxu0 %v2546
        %v2759 = vpop.f32.mrf.mxu0
        %v2760 = vadd.f32 0.0, %v2759
        %v2761 = vpop.f32.mrf.mxu0
        %v2762 = vadd.f32 0.0, %v2761
        %2763 = vmatmul.bf16.gmra.mxu0 %v2547
        %v2764 = vpop.f32.mrf.mxu0
        %v2765 = vadd.f32 0.0, %v2764
        %v2766 = vpop.f32.mrf.mxu0
        %v2767 = vadd.f32 0.0, %v2766
        %2768 = vmatmul.bf16.gmra.mxu0 %v2548
        %v2769 = vpop.f32.mrf.mxu0
        %v2770 = vadd.f32 0.0, %v2769
        %v2771 = vpop.f32.mrf.mxu0
        %v2772 = vadd.f32 0.0, %v2771
        %2773 = vmatmul.bf16.gmra.mxu0 %v2549
        %v2774 = vpop.f32.mrf.mxu0
        %v2775 = vadd.f32 0.0, %v2774
        %v2776 = vpop.f32.mrf.mxu0
        %v2777 = vadd.f32 0.0, %v2776
        %2778 = vmatmul.bf16.gmra.mxu0 %v2550
        %v2779 = vpop.f32.mrf.mxu0
        %v2780 = vadd.f32 0.0, %v2779
        %v2781 = vpop.f32.mrf.mxu0
        %v2782 = vadd.f32 0.0, %v2781
        %2783 = vmatmul.bf16.gmra.mxu0 %v2551
        %v2784 = vpop.f32.mrf.mxu0
        %v2785 = vadd.f32 0.0, %v2784
        %v2786 = vpop.f32.mrf.mxu0
        %v2787 = vadd.f32 0.0, %v2786
        %2788 = vmatmul.bf16.gmra.mxu0 %v2552
        %v2789 = vpop.f32.mrf.mxu0
        %v2790 = vadd.f32 0.0, %v2789
        %v2791 = vpop.f32.mrf.mxu0
        %v2792 = vadd.f32 0.0, %v2791
        %2793 = vdwg.mxu0
        %2794 = vmatpush.bf16.msra.mxu0 %v2710
        %2795 = vmatpush.bf16.msra.mxu0 %v2706
        %2796 = vmatpush.bf16.msra.mxu0 %v2702
        %2797 = vmatpush.bf16.msra.mxu0 %v2698
        %2798 = vmatpush.bf16.msra.mxu0 %v2694
        %2799 = vmatpush.bf16.msra.mxu0 %v2690
        %2800 = vmatpush.bf16.msra.mxu0 %v2686
        %2801 = vmatpush.bf16.msra.mxu0 %v2682
        %2802 = vmatmul.bf16.gmra.mxu0 %v2545
        %v2803 = vpop.f32.mrf.mxu0
        %v2804 = vadd.f32 0.0, %v2803
        %v2805 = vpop.f32.mrf.mxu0
        %v2806 = vadd.f32 0.0, %v2805
        %2807 = vmatmul.bf16.gmra.mxu0 %v2546
        %v2808 = vpop.f32.mrf.mxu0
        %v2809 = vadd.f32 0.0, %v2808
        %v2810 = vpop.f32.mrf.mxu0
        %v2811 = vadd.f32 0.0, %v2810
        %2812 = vmatmul.bf16.gmra.mxu0 %v2547
        %v2813 = vpop.f32.mrf.mxu0
        %v2814 = vadd.f32 0.0, %v2813
        %v2815 = vpop.f32.mrf.mxu0
        %v2816 = vadd.f32 0.0, %v2815
        %2817 = vmatmul.bf16.gmra.mxu0 %v2548
        %v2818 = vpop.f32.mrf.mxu0
        %v2819 = vadd.f32 0.0, %v2818
        %v2820 = vpop.f32.mrf.mxu0
        %v2821 = vadd.f32 0.0, %v2820
        %2822 = vmatmul.bf16.gmra.mxu0 %v2549
        %v2823 = vpop.f32.mrf.mxu0
        %v2824 = vadd.f32 0.0, %v2823
        %v2825 = vpop.f32.mrf.mxu0
        %v2826 = vadd.f32 0.0, %v2825
        %2827 = vmatmul.bf16.gmra.mxu0 %v2550
        %v2828 = vpop.f32.mrf.mxu0
        %v2829 = vadd.f32 0.0, %v2828
        %v2830 = vpop.f32.mrf.mxu0
        %v2831 = vadd.f32 0.0, %v2830
        %2832 = vmatmul.bf16.gmra.mxu0 %v2551
        %v2833 = vpop.f32.mrf.mxu0
        %v2834 = vadd.f32 0.0, %v2833
        %v2835 = vpop.f32.mrf.mxu0
        %v2836 = vadd.f32 0.0, %v2835
        %2837 = vmatmul.bf16.gmra.mxu0 %v2552
        %v2838 = vpop.f32.mrf.mxu0
        %v2839 = vadd.f32 0.0, %v2838
        %v2840 = vpop.f32.mrf.mxu0
        %v2841 = vadd.f32 0.0, %v2840
        %2842 = vdwg.mxu0
        %2843 = vmatpush.bf16.msra.mxu0 %v2711
        %2844 = vmatpush.bf16.msra.mxu0 %v2707
        %2845 = vmatpush.bf16.msra.mxu0 %v2703
        %2846 = vmatpush.bf16.msra.mxu0 %v2699
        %2847 = vmatpush.bf16.msra.mxu0 %v2695
        %2848 = vmatpush.bf16.msra.mxu0 %v2691
        %2849 = vmatpush.bf16.msra.mxu0 %v2687
        %2850 = vmatpush.bf16.msra.mxu0 %v2683
        %2851 = vmatmul.bf16.gmra.mxu0 %v2545
        %v2852 = vpop.f32.mrf.mxu0
        %v2853 = vadd.f32 0.0, %v2852
        %v2854 = vpop.f32.mrf.mxu0
        %v2855 = vadd.f32 0.0, %v2854
        %2856 = vmatmul.bf16.gmra.mxu0 %v2546
        %v2857 = vpop.f32.mrf.mxu0
        %v2858 = vadd.f32 0.0, %v2857
        %v2859 = vpop.f32.mrf.mxu0
        %v2860 = vadd.f32 0.0, %v2859
        %2861 = vmatmul.bf16.gmra.mxu0 %v2547
        %v2862 = vpop.f32.mrf.mxu0
        %v2863 = vadd.f32 0.0, %v2862
        %v2864 = vpop.f32.mrf.mxu0
        %v2865 = vadd.f32 0.0, %v2864
        %2866 = vmatmul.bf16.gmra.mxu0 %v2548
        %v2867 = vpop.f32.mrf.mxu0
        %v2868 = vadd.f32 0.0, %v2867
        %v2869 = vpop.f32.mrf.mxu0
        %v2870 = vadd.f32 0.0, %v2869
        %2871 = vmatmul.bf16.gmra.mxu0 %v2549
        %v2872 = vpop.f32.mrf.mxu0
        %v2873 = vadd.f32 0.0, %v2872
        %v2874 = vpop.f32.mrf.mxu0
        %v2875 = vadd.f32 0.0, %v2874
        %2876 = vmatmul.bf16.gmra.mxu0 %v2550
        %v2877 = vpop.f32.mrf.mxu0
        %v2878 = vadd.f32 0.0, %v2877
        %v2879 = vpop.f32.mrf.mxu0
        %v2880 = vadd.f32 0.0, %v2879
        %2881 = vmatmul.bf16.gmra.mxu0 %v2551
        %v2882 = vpop.f32.mrf.mxu0
        %v2883 = vadd.f32 0.0, %v2882
        %v2884 = vpop.f32.mrf.mxu0
        %v2885 = vadd.f32 0.0, %v2884
        %2886 = vmatmul.bf16.gmra.mxu0 %v2552
        %v2887 = vpop.f32.mrf.mxu0
        %v2888 = vadd.f32 0.0, %v2887
        %v2889 = vpop.f32.mrf.mxu0
        %v2890 = vadd.f32 0.0, %v2889
        %2891 = vdwg.mxu0
        %2892 = vmatpush.bf16.msra.mxu0 %v2712
        %2893 = vmatpush.bf16.msra.mxu0 %v2708
        %2894 = vmatpush.bf16.msra.mxu0 %v2704
        %2895 = vmatpush.bf16.msra.mxu0 %v2700
        %2896 = vmatpush.bf16.msra.mxu0 %v2696
        %2897 = vmatpush.bf16.msra.mxu0 %v2692
        %2898 = vmatpush.bf16.msra.mxu0 %v2688
        %2899 = vmatpush.bf16.msra.mxu0 %v2684
        %2900 = vmatmul.bf16.gmra.mxu0 %v2545
        %v2901 = vpop.f32.mrf.mxu0
        %v2902 = vadd.f32 0.0, %v2901
        %v2903 = vpop.f32.mrf.mxu0
        %v2904 = vadd.f32 0.0, %v2903
        %2905 = vmatmul.bf16.gmra.mxu0 %v2546
        %v2906 = vpop.f32.mrf.mxu0
        %v2907 = vadd.f32 0.0, %v2906
        %v2908 = vpop.f32.mrf.mxu0
        %v2909 = vadd.f32 0.0, %v2908
        %2910 = vmatmul.bf16.gmra.mxu0 %v2547
        %v2911 = vpop.f32.mrf.mxu0
        %v2912 = vadd.f32 0.0, %v2911
        %v2913 = vpop.f32.mrf.mxu0
        %v2914 = vadd.f32 0.0, %v2913
        %2915 = vmatmul.bf16.gmra.mxu0 %v2548
        %v2916 = vpop.f32.mrf.mxu0
        %v2917 = vadd.f32 0.0, %v2916
        %v2918 = vpop.f32.mrf.mxu0
        %v2919 = vadd.f32 0.0, %v2918
        %2920 = vmatmul.bf16.gmra.mxu0 %v2549
        %v2921 = vpop.f32.mrf.mxu0
        %v2922 = vadd.f32 0.0, %v2921
        %v2923 = vpop.f32.mrf.mxu0
        %v2924 = vadd.f32 0.0, %v2923
        %2925 = vmatmul.bf16.gmra.mxu0 %v2550
        %v2926 = vpop.f32.mrf.mxu0
        %v2927 = vadd.f32 0.0, %v2926
        %v2928 = vpop.f32.mrf.mxu0
        %v2929 = vadd.f32 0.0, %v2928
        %2930 = vmatmul.bf16.gmra.mxu0 %v2551
        %v2931 = vpop.f32.mrf.mxu0
        %v2932 = vadd.f32 0.0, %v2931
        %v2933 = vpop.f32.mrf.mxu0
        %v2934 = vadd.f32 0.0, %v2933
        %2935 = vmatmul.bf16.gmra.mxu0 %v2552
        %v2936 = vpop.f32.mrf.mxu0
        %v2937 = vadd.f32 0.0, %v2936
        %v2938 = vpop.f32.mrf.mxu0
        %v2939 = vadd.f32 0.0, %v2938
        %2940 = vdwg.mxu0
        %v2941 = vmax.f32 %v2755, 0.0
        %v2942 = vmax.f32 %v2804, 0.0
        %v2943 = vmax.f32 %v2853, 0.0
        %v2944 = vmax.f32 %v2902, 0.0
        %v2945 = vmax.f32 %v2757, 0.0
        %v2946 = vmax.f32 %v2806, 0.0
        %v2947 = vmax.f32 %v2855, 0.0
        %v2948 = vmax.f32 %v2904, 0.0
        %v2949 = vmax.f32 %v2760, 0.0
        %v2950 = vmax.f32 %v2809, 0.0
        %v2951 = vmax.f32 %v2858, 0.0
        %v2952 = vmax.f32 %v2907, 0.0
        %v2953 = vmax.f32 %v2762, 0.0
        %v2954 = vmax.f32 %v2811, 0.0
        %v2955 = vmax.f32 %v2860, 0.0
        %v2956 = vmax.f32 %v2909, 0.0
        %v2957 = vmax.f32 %v2765, 0.0
        %v2958 = vmax.f32 %v2814, 0.0
        %v2959 = vmax.f32 %v2863, 0.0
        %v2960 = vmax.f32 %v2912, 0.0
        %v2961 = vmax.f32 %v2767, 0.0
        %v2962 = vmax.f32 %v2816, 0.0
        %v2963 = vmax.f32 %v2865, 0.0
        %v2964 = vmax.f32 %v2914, 0.0
        %v2965 = vmax.f32 %v2770, 0.0
        %v2966 = vmax.f32 %v2819, 0.0
        %v2967 = vmax.f32 %v2868, 0.0
        %v2968 = vmax.f32 %v2917, 0.0
        %v2969 = vmax.f32 %v2772, 0.0
        %v2970 = vmax.f32 %v2821, 0.0
        %v2971 = vmax.f32 %v2870, 0.0
        %v2972 = vmax.f32 %v2919, 0.0
        %v2973 = vmax.f32 %v2775, 0.0
        %v2974 = vmax.f32 %v2824, 0.0
        %v2975 = vmax.f32 %v2873, 0.0
        %v2976 = vmax.f32 %v2922, 0.0
        %v2977 = vmax.f32 %v2777, 0.0
        %v2978 = vmax.f32 %v2826, 0.0
        %v2979 = vmax.f32 %v2875, 0.0
        %v2980 = vmax.f32 %v2924, 0.0
        %v2981 = vmax.f32 %v2780, 0.0
        %v2982 = vmax.f32 %v2829, 0.0
        %v2983 = vmax.f32 %v2878, 0.0
        %v2984 = vmax.f32 %v2927, 0.0
        %v2985 = vmax.f32 %v2782, 0.0
        %v2986 = vmax.f32 %v2831, 0.0
        %v2987 = vmax.f32 %v2880, 0.0
        %v2988 = vmax.f32 %v2929, 0.0
        %v2989 = vmax.f32 %v2785, 0.0
        %v2990 = vmax.f32 %v2834, 0.0
        %v2991 = vmax.f32 %v2883, 0.0
        %v2992 = vmax.f32 %v2932, 0.0
        %v2993 = vmax.f32 %v2787, 0.0
        %v2994 = vmax.f32 %v2836, 0.0
        %v2995 = vmax.f32 %v2885, 0.0
        %v2996 = vmax.f32 %v2934, 0.0
        %v2997 = vmax.f32 %v2790, 0.0
        %v2998 = vmax.f32 %v2839, 0.0
        %v2999 = vmax.f32 %v2888, 0.0
        %v3000 = vmax.f32 %v2937, 0.0
        %v3001 = vmax.f32 %v2792, 0.0
        %v3002 = vmax.f32 %v2841, 0.0
        %v3003 = vmax.f32 %v2890, 0.0
        %v3004 = vmax.f32 %v2939, 0.0
        %v3005 = vmin.f32 %v2941, 6.0
        %v3006 = vmin.f32 %v2942, 6.0
        %v3007 = vmin.f32 %v2943, 6.0
        %v3008 = vmin.f32 %v2944, 6.0
        %v3009 = vmin.f32 %v2945, 6.0
        %v3010 = vmin.f32 %v2946, 6.0
        %v3011 = vmin.f32 %v2947, 6.0
        %v3012 = vmin.f32 %v2948, 6.0
        %v3013 = vmin.f32 %v2949, 6.0
        %v3014 = vmin.f32 %v2950, 6.0
        %v3015 = vmin.f32 %v2951, 6.0
        %v3016 = vmin.f32 %v2952, 6.0
        %v3017 = vmin.f32 %v2953, 6.0
        %v3018 = vmin.f32 %v2954, 6.0
        %v3019 = vmin.f32 %v2955, 6.0
        %v3020 = vmin.f32 %v2956, 6.0
        %v3021 = vmin.f32 %v2957, 6.0
        %v3022 = vmin.f32 %v2958, 6.0
        %v3023 = vmin.f32 %v2959, 6.0
        %v3024 = vmin.f32 %v2960, 6.0
        %v3025 = vmin.f32 %v2961, 6.0
        %v3026 = vmin.f32 %v2962, 6.0
        %v3027 = vmin.f32 %v2963, 6.0
        %v3028 = vmin.f32 %v2964, 6.0
        %v3029 = vmin.f32 %v2965, 6.0
        %v3030 = vmin.f32 %v2966, 6.0
        %v3031 = vmin.f32 %v2967, 6.0
        %v3032 = vmin.f32 %v2968, 6.0
        %v3033 = vmin.f32 %v2969, 6.0
        %v3034 = vmin.f32 %v2970, 6.0
        %v3035 = vmin.f32 %v2971, 6.0
        %v3036 = vmin.f32 %v2972, 6.0
        %v3037 = vmin.f32 %v2973, 6.0
        %v3038 = vmin.f32 %v2974, 6.0
        %v3039 = vmin.f32 %v2975, 6.0
        %v3040 = vmin.f32 %v2976, 6.0
        %v3041 = vmin.f32 %v2977, 6.0
        %v3042 = vmin.f32 %v2978, 6.0
        %v3043 = vmin.f32 %v2979, 6.0
        %v3044 = vmin.f32 %v2980, 6.0
        %v3045 = vmin.f32 %v2981, 6.0
        %v3046 = vmin.f32 %v2982, 6.0
        %v3047 = vmin.f32 %v2983, 6.0
        %v3048 = vmin.f32 %v2984, 6.0
        %v3049 = vmin.f32 %v2985, 6.0
        %v3050 = vmin.f32 %v2986, 6.0
        %v3051 = vmin.f32 %v2987, 6.0
        %v3052 = vmin.f32 %v2988, 6.0
        %v3053 = vmin.f32 %v2989, 6.0
        %v3054 = vmin.f32 %v2990, 6.0
        %v3055 = vmin.f32 %v2991, 6.0
        %v3056 = vmin.f32 %v2992, 6.0
        %v3057 = vmin.f32 %v2993, 6.0
        %v3058 = vmin.f32 %v2994, 6.0
        %v3059 = vmin.f32 %v2995, 6.0
        %v3060 = vmin.f32 %v2996, 6.0
        %v3061 = vmin.f32 %v2997, 6.0
        %v3062 = vmin.f32 %v2998, 6.0
        %v3063 = vmin.f32 %v2999, 6.0
        %v3064 = vmin.f32 %v3000, 6.0
        %v3065 = vmin.f32 %v3001, 6.0
        %v3066 = vmin.f32 %v3002, 6.0
        %v3067 = vmin.f32 %v3003, 6.0
        %v3068 = vmin.f32 %v3004, 6.0
        %v3069 = vpack.c.bf16 %v3009, %v3005
        %v3070 = vpack.c.bf16 %v3010, %v3006
        %v3071 = vpack.c.bf16 %v3011, %v3007
        %v3072 = vpack.c.bf16 %v3012, %v3008
        %v3073 = vpack.c.bf16 %v3017, %v3013
        %v3074 = vpack.c.bf16 %v3018, %v3014
        %v3075 = vpack.c.bf16 %v3019, %v3015
        %v3076 = vpack.c.bf16 %v3020, %v3016
        %v3077 = vpack.c.bf16 %v3025, %v3021
        %v3078 = vpack.c.bf16 %v3026, %v3022
        %v3079 = vpack.c.bf16 %v3027, %v3023
        %v3080 = vpack.c.bf16 %v3028, %v3024
        %v3081 = vpack.c.bf16 %v3033, %v3029
        %v3082 = vpack.c.bf16 %v3034, %v3030
        %v3083 = vpack.c.bf16 %v3035, %v3031
        %v3084 = vpack.c.bf16 %v3036, %v3032
        %v3085 = vpack.c.bf16 %v3041, %v3037
        %v3086 = vpack.c.bf16 %v3042, %v3038
        %v3087 = vpack.c.bf16 %v3043, %v3039
        %v3088 = vpack.c.bf16 %v3044, %v3040
        %v3089 = vpack.c.bf16 %v3049, %v3045
        %v3090 = vpack.c.bf16 %v3050, %v3046
        %v3091 = vpack.c.bf16 %v3051, %v3047
        %v3092 = vpack.c.bf16 %v3052, %v3048
        %v3093 = vpack.c.bf16 %v3057, %v3053
        %v3094 = vpack.c.bf16 %v3058, %v3054
        %v3095 = vpack.c.bf16 %v3059, %v3055
        %v3096 = vpack.c.bf16 %v3060, %v3056
        %v3097 = vpack.c.bf16 %v3065, %v3061
        %v3098 = vpack.c.bf16 %v3066, %v3062
        %v3099 = vpack.c.bf16 %v3067, %v3063
        %v3100 = vpack.c.bf16 %v3068, %v3064
        %v3101 = vld [vmem:[#allocation11] sm:$0xf]
        %v3102 = vld [vmem:[#allocation11 + $0x4] sm:$0xf]
        %v3103 = vld [vmem:[#allocation11 + $0x8] sm:$0xf]
        %v3104 = vld [vmem:[#allocation11 + $0xc] sm:$0xf]
        %v3105 = vld [vmem:[#allocation11 + $0x10] sm:$0xf]
        %v3106 = vld [vmem:[#allocation11 + $0x14] sm:$0xf]
        %v3107 = vld [vmem:[#allocation11 + $0x18] sm:$0xf]
        %v3108 = vld [vmem:[#allocation11 + $0x1c] sm:$0xf]
        %v3109 = vld [vmem:[#allocation11 + $0x20] sm:$0xf]
        %v3110 = vld [vmem:[#allocation11 + $0x24] sm:$0xf]
        %v3111 = vld [vmem:[#allocation11 + $0x28] sm:$0xf]
        %v3112 = vld [vmem:[#allocation11 + $0x2c] sm:$0xf]
        %v3113 = vld [vmem:[#allocation11 + $0x30] sm:$0xf]
        %v3114 = vld [vmem:[#allocation11 + $0x34] sm:$0xf]
        %v3115 = vld [vmem:[#allocation11 + $0x38] sm:$0xf]
        %v3116 = vld [vmem:[#allocation11 + $0x3c] sm:$0xf]
        %v3117 = vld [vmem:[#allocation11 + $0x40] sm:$0xf]
        %v3118 = vld [vmem:[#allocation11 + $0x44] sm:$0xf]
        %v3119 = vld [vmem:[#allocation11 + $0x48] sm:$0xf]
        %v3120 = vld [vmem:[#allocation11 + $0x4c] sm:$0xf]
        %v3121 = vld [vmem:[#allocation11 + $0x50] sm:$0xf]
        %v3122 = vld [vmem:[#allocation11 + $0x54] sm:$0xf]
        %v3123 = vld [vmem:[#allocation11 + $0x58] sm:$0xf]
        %v3124 = vld [vmem:[#allocation11 + $0x5c] sm:$0xf]
        %v3125 = vld [vmem:[#allocation11 + $0x60] sm:$0xf]
        %v3126 = vld [vmem:[#allocation11 + $0x64] sm:$0xf]
        %v3127 = vld [vmem:[#allocation11 + $0x68] sm:$0xf]
        %v3128 = vld [vmem:[#allocation11 + $0x6c] sm:$0xf]
        %v3129 = vld [vmem:[#allocation11 + $0x70] sm:$0xf]
        %v3130 = vld [vmem:[#allocation11 + $0x74] sm:$0xf]
        %v3131 = vld [vmem:[#allocation11 + $0x78] sm:$0xf]
        %v3132 = vld [vmem:[#allocation11 + $0x7c] sm:$0xf]
        %v3133 = vld [vmem:[#allocation11 + $0x80] sm:$0xf]
        %v3134 = vld [vmem:[#allocation11 + $0x84] sm:$0xf]
        %v3135 = vld [vmem:[#allocation11 + $0x88] sm:$0xf]
        %v3136 = vld [vmem:[#allocation11 + $0x8c] sm:$0xf]
        %v3137 = vld [vmem:[#allocation11 + $0x90] sm:$0xf]
        %v3138 = vld [vmem:[#allocation11 + $0x94] sm:$0xf]
        %v3139 = vld [vmem:[#allocation11 + $0x98] sm:$0xf]
        %v3140 = vld [vmem:[#allocation11 + $0x9c] sm:$0xf]
        %v3141 = vld [vmem:[#allocation11 + $0xa0] sm:$0xf]
        %v3142 = vld [vmem:[#allocation11 + $0xa4] sm:$0xf]
        %v3143 = vld [vmem:[#allocation11 + $0xa8] sm:$0xf]
        %v3144 = vld [vmem:[#allocation11 + $0xac] sm:$0xf]
        %v3145 = vld [vmem:[#allocation11 + $0xb0] sm:$0xf]
        %v3146 = vld [vmem:[#allocation11 + $0xb4] sm:$0xf]
        %v3147 = vld [vmem:[#allocation11 + $0xb8] sm:$0xf]
        %v3148 = vld [vmem:[#allocation11 + $0xbc] sm:$0xf]
        %v3149 = vld [vmem:[#allocation11 + $0xc0] sm:$0xf]
        %v3150 = vld [vmem:[#allocation11 + $0xc4] sm:$0xf]
        %v3151 = vld [vmem:[#allocation11 + $0xc8] sm:$0xf]
        %v3152 = vld [vmem:[#allocation11 + $0xcc] sm:$0xf]
        %v3153 = vld [vmem:[#allocation11 + $0xd0] sm:$0xf]
        %v3154 = vld [vmem:[#allocation11 + $0xd4] sm:$0xf]
        %v3155 = vld [vmem:[#allocation11 + $0xd8] sm:$0xf]
        %v3156 = vld [vmem:[#allocation11 + $0xdc] sm:$0xf]
        %v3157 = vld [vmem:[#allocation11 + $0xe0] sm:$0xf]
        %v3158 = vld [vmem:[#allocation11 + $0xe4] sm:$0xf]
        %v3159 = vld [vmem:[#allocation11 + $0xe8] sm:$0xf]
        %v3160 = vld [vmem:[#allocation11 + $0xec] sm:$0xf]
        %v3161 = vld [vmem:[#allocation11 + $0xf0] sm:$0xf]
        %v3162 = vld [vmem:[#allocation11 + $0xf4] sm:$0xf]
        %v3163 = vld [vmem:[#allocation11 + $0xf8] sm:$0xf]
        %v3164 = vld [vmem:[#allocation11 + $0xfc] sm:$0xf]
        %v3229 = vunpack.c.l.b16 %v3101
        %v3230 = vunpack.c.l.b16 %v3102
        %v3231 = vunpack.c.l.b16 %v3103
        %v3232 = vunpack.c.l.b16 %v3104
        %v3233 = vunpack.c.l.b16 %v3105
        %v3234 = vunpack.c.l.b16 %v3106
        %v3235 = vunpack.c.l.b16 %v3107
        %v3236 = vunpack.c.l.b16 %v3108
        %v3237 = vunpack.c.l.b16 %v3109
        %v3238 = vunpack.c.l.b16 %v3110
        %v3239 = vunpack.c.l.b16 %v3111
        %v3240 = vunpack.c.l.b16 %v3112
        %v3241 = vunpack.c.l.b16 %v3113
        %v3242 = vunpack.c.l.b16 %v3114
        %v3243 = vunpack.c.l.b16 %v3115
        %v3244 = vunpack.c.l.b16 %v3116
        %v3245 = vunpack.c.l.b16 %v3117
        %v3246 = vunpack.c.l.b16 %v3118
        %v3247 = vunpack.c.l.b16 %v3119
        %v3248 = vunpack.c.l.b16 %v3120
        %v3249 = vunpack.c.l.b16 %v3121
        %v3250 = vunpack.c.l.b16 %v3122
        %v3251 = vunpack.c.l.b16 %v3123
        %v3252 = vunpack.c.l.b16 %v3124
        %v3253 = vunpack.c.l.b16 %v3125
        %v3254 = vunpack.c.l.b16 %v3126
        %v3255 = vunpack.c.l.b16 %v3127
        %v3256 = vunpack.c.l.b16 %v3128
        %v3257 = vunpack.c.l.b16 %v3129
        %v3258 = vunpack.c.l.b16 %v3130
        %v3259 = vunpack.c.l.b16 %v3131
        %v3260 = vunpack.c.l.b16 %v3132
        %v3261 = vunpack.c.l.b16 %v3133
        %v3262 = vunpack.c.l.b16 %v3134
        %v3263 = vunpack.c.l.b16 %v3135
        %v3264 = vunpack.c.l.b16 %v3136
        %v3265 = vunpack.c.l.b16 %v3137
        %v3266 = vunpack.c.l.b16 %v3138
        %v3267 = vunpack.c.l.b16 %v3139
        %v3268 = vunpack.c.l.b16 %v3140
        %v3269 = vunpack.c.l.b16 %v3141
        %v3270 = vunpack.c.l.b16 %v3142
        %v3271 = vunpack.c.l.b16 %v3143
        %v3272 = vunpack.c.l.b16 %v3144
        %v3273 = vunpack.c.l.b16 %v3145
        %v3274 = vunpack.c.l.b16 %v3146
        %v3275 = vunpack.c.l.b16 %v3147
        %v3276 = vunpack.c.l.b16 %v3148
        %v3277 = vunpack.c.l.b16 %v3149
        %v3278 = vunpack.c.l.b16 %v3150
        %v3279 = vunpack.c.l.b16 %v3151
        %v3280 = vunpack.c.l.b16 %v3152
        %v3281 = vunpack.c.l.b16 %v3153
        %v3282 = vunpack.c.l.b16 %v3154
        %v3283 = vunpack.c.l.b16 %v3155
        %v3284 = vunpack.c.l.b16 %v3156
        %v3285 = vunpack.c.l.b16 %v3157
        %v3286 = vunpack.c.l.b16 %v3158
        %v3287 = vunpack.c.l.b16 %v3159
        %v3288 = vunpack.c.l.b16 %v3160
        %v3289 = vunpack.c.l.b16 %v3161
        %v3290 = vunpack.c.l.b16 %v3162
        %v3291 = vunpack.c.l.b16 %v3163
        %v3292 = vunpack.c.l.b16 %v3164
        %v3293 = vpack.c.b16 %v3230, %v3229
        %v3294 = vpack.c.b16 %v3232, %v3231
        %v3295 = vpack.c.b16 %v3234, %v3233
        %v3296 = vpack.c.b16 %v3236, %v3235
        %v3297 = vpack.c.b16 %v3238, %v3237
        %v3298 = vpack.c.b16 %v3240, %v3239
        %v3299 = vpack.c.b16 %v3242, %v3241
        %v3300 = vpack.c.b16 %v3244, %v3243
        %v3301 = vpack.c.b16 %v3246, %v3245
        %v3302 = vpack.c.b16 %v3248, %v3247
        %v3303 = vpack.c.b16 %v3250, %v3249
        %v3304 = vpack.c.b16 %v3252, %v3251
        %v3305 = vpack.c.b16 %v3254, %v3253
        %v3306 = vpack.c.b16 %v3256, %v3255
        %v3307 = vpack.c.b16 %v3258, %v3257
        %v3308 = vpack.c.b16 %v3260, %v3259
        %v3309 = vpack.c.b16 %v3262, %v3261
        %v3310 = vpack.c.b16 %v3264, %v3263
        %v3311 = vpack.c.b16 %v3266, %v3265
        %v3312 = vpack.c.b16 %v3268, %v3267
        %v3313 = vpack.c.b16 %v3270, %v3269
        %v3314 = vpack.c.b16 %v3272, %v3271
        %v3315 = vpack.c.b16 %v3274, %v3273
        %v3316 = vpack.c.b16 %v3276, %v3275
        %v3317 = vpack.c.b16 %v3278, %v3277
        %v3318 = vpack.c.b16 %v3280, %v3279
        %v3319 = vpack.c.b16 %v3282, %v3281
        %v3320 = vpack.c.b16 %v3284, %v3283
        %v3321 = vpack.c.b16 %v3286, %v3285
        %v3322 = vpack.c.b16 %v3288, %v3287
        %v3323 = vpack.c.b16 %v3290, %v3289
        %v3324 = vpack.c.b16 %v3292, %v3291
        %3357 = vmatpush.bf16.msra.mxu0 %v3300
        %3358 = vmatpush.bf16.msra.mxu0 %v3299
        %3359 = vmatpush.bf16.msra.mxu0 %v3298
        %3360 = vmatpush.bf16.msra.mxu0 %v3297
        %3361 = vmatpush.bf16.msra.mxu0 %v3296
        %3362 = vmatpush.bf16.msra.mxu0 %v3295
        %3363 = vmatpush.bf16.msra.mxu0 %v3294
        %3364 = vmatpush.bf16.msra.mxu0 %v3293
        %3365 = vmatmul.bf16.gmra.mxu0 %v3069
        %v3366 = vpop.f32.mrf.mxu0
        %v3367 = vadd.f32 0.0, %v3366
        %v3368 = vpop.f32.mrf.mxu0
        %v3369 = vadd.f32 0.0, %v3368
        %3370 = vmatmul.bf16.gmra.mxu0 %v3073
        %v3371 = vpop.f32.mrf.mxu0
        %v3372 = vadd.f32 0.0, %v3371
        %v3373 = vpop.f32.mrf.mxu0
        %v3374 = vadd.f32 0.0, %v3373
        %3375 = vmatmul.bf16.gmra.mxu0 %v3077
        %v3376 = vpop.f32.mrf.mxu0
        %v3377 = vadd.f32 0.0, %v3376
        %v3378 = vpop.f32.mrf.mxu0
        %v3379 = vadd.f32 0.0, %v3378
        %3380 = vmatmul.bf16.gmra.mxu0 %v3081
        %v3381 = vpop.f32.mrf.mxu0
        %v3382 = vadd.f32 0.0, %v3381
        %v3383 = vpop.f32.mrf.mxu0
        %v3384 = vadd.f32 0.0, %v3383
        %3385 = vmatmul.bf16.gmra.mxu0 %v3085
        %v3386 = vpop.f32.mrf.mxu0
        %v3387 = vadd.f32 0.0, %v3386
        %v3388 = vpop.f32.mrf.mxu0
        %v3389 = vadd.f32 0.0, %v3388
        %3390 = vmatmul.bf16.gmra.mxu0 %v3089
        %v3391 = vpop.f32.mrf.mxu0
        %v3392 = vadd.f32 0.0, %v3391
        %v3393 = vpop.f32.mrf.mxu0
        %v3394 = vadd.f32 0.0, %v3393
        %3395 = vmatmul.bf16.gmra.mxu0 %v3093
        %v3396 = vpop.f32.mrf.mxu0
        %v3397 = vadd.f32 0.0, %v3396
        %v3398 = vpop.f32.mrf.mxu0
        %v3399 = vadd.f32 0.0, %v3398
        %3400 = vmatmul.bf16.gmra.mxu0 %v3097
        %v3401 = vpop.f32.mrf.mxu0
        %v3402 = vadd.f32 0.0, %v3401
        %v3403 = vpop.f32.mrf.mxu0
        %v3404 = vadd.f32 0.0, %v3403
        %3405 = vdwg.mxu0
        %3406 = vmatpush.bf16.msra.mxu0 %v3308
        %3407 = vmatpush.bf16.msra.mxu0 %v3307
        %3408 = vmatpush.bf16.msra.mxu0 %v3306
        %3409 = vmatpush.bf16.msra.mxu0 %v3305
        %3410 = vmatpush.bf16.msra.mxu0 %v3304
        %3411 = vmatpush.bf16.msra.mxu0 %v3303
        %3412 = vmatpush.bf16.msra.mxu0 %v3302
        %3413 = vmatpush.bf16.msra.mxu0 %v3301
        %3414 = vmatmul.bf16.gmra.mxu0 %v3070
        %v3415 = vpop.f32.mrf.mxu0
        %v3416 = vadd.f32 %v3367, %v3415
        %v3417 = vpop.f32.mrf.mxu0
        %v3418 = vadd.f32 %v3369, %v3417
        %3419 = vmatmul.bf16.gmra.mxu0 %v3074
        %v3420 = vpop.f32.mrf.mxu0
        %v3421 = vadd.f32 %v3372, %v3420
        %v3422 = vpop.f32.mrf.mxu0
        %v3423 = vadd.f32 %v3374, %v3422
        %3424 = vmatmul.bf16.gmra.mxu0 %v3078
        %v3425 = vpop.f32.mrf.mxu0
        %v3426 = vadd.f32 %v3377, %v3425
        %v3427 = vpop.f32.mrf.mxu0
        %v3428 = vadd.f32 %v3379, %v3427
        %3429 = vmatmul.bf16.gmra.mxu0 %v3082
        %v3430 = vpop.f32.mrf.mxu0
        %v3431 = vadd.f32 %v3382, %v3430
        %v3432 = vpop.f32.mrf.mxu0
        %v3433 = vadd.f32 %v3384, %v3432
        %3434 = vmatmul.bf16.gmra.mxu0 %v3086
        %v3435 = vpop.f32.mrf.mxu0
        %v3436 = vadd.f32 %v3387, %v3435
        %v3437 = vpop.f32.mrf.mxu0
        %v3438 = vadd.f32 %v3389, %v3437
        %3439 = vmatmul.bf16.gmra.mxu0 %v3090
        %v3440 = vpop.f32.mrf.mxu0
        %v3441 = vadd.f32 %v3392, %v3440
        %v3442 = vpop.f32.mrf.mxu0
        %v3443 = vadd.f32 %v3394, %v3442
        %3444 = vmatmul.bf16.gmra.mxu0 %v3094
        %v3445 = vpop.f32.mrf.mxu0
        %v3446 = vadd.f32 %v3397, %v3445
        %v3447 = vpop.f32.mrf.mxu0
        %v3448 = vadd.f32 %v3399, %v3447
        %3449 = vmatmul.bf16.gmra.mxu0 %v3098
        %v3450 = vpop.f32.mrf.mxu0
        %v3451 = vadd.f32 %v3402, %v3450
        %v3452 = vpop.f32.mrf.mxu0
        %v3453 = vadd.f32 %v3404, %v3452
        %3454 = vdwg.mxu0
        %3455 = vmatpush.bf16.msra.mxu0 %v3316
        %3456 = vmatpush.bf16.msra.mxu0 %v3315
        %3457 = vmatpush.bf16.msra.mxu0 %v3314
        %3458 = vmatpush.bf16.msra.mxu0 %v3313
        %3459 = vmatpush.bf16.msra.mxu0 %v3312
        %3460 = vmatpush.bf16.msra.mxu0 %v3311
        %3461 = vmatpush.bf16.msra.mxu0 %v3310
        %3462 = vmatpush.bf16.msra.mxu0 %v3309
        %3463 = vmatmul.bf16.gmra.mxu0 %v3071
        %v3464 = vpop.f32.mrf.mxu0
        %v3465 = vadd.f32 %v3416, %v3464
        %v3466 = vpop.f32.mrf.mxu0
        %v3467 = vadd.f32 %v3418, %v3466
        %3468 = vmatmul.bf16.gmra.mxu0 %v3075
        %v3469 = vpop.f32.mrf.mxu0
        %v3470 = vadd.f32 %v3421, %v3469
        %v3471 = vpop.f32.mrf.mxu0
        %v3472 = vadd.f32 %v3423, %v3471
        %3473 = vmatmul.bf16.gmra.mxu0 %v3079
        %v3474 = vpop.f32.mrf.mxu0
        %v3475 = vadd.f32 %v3426, %v3474
        %v3476 = vpop.f32.mrf.mxu0
        %v3477 = vadd.f32 %v3428, %v3476
        %3478 = vmatmul.bf16.gmra.mxu0 %v3083
        %v3479 = vpop.f32.mrf.mxu0
        %v3480 = vadd.f32 %v3431, %v3479
        %v3481 = vpop.f32.mrf.mxu0
        %v3482 = vadd.f32 %v3433, %v3481
        %3483 = vmatmul.bf16.gmra.mxu0 %v3087
        %v3484 = vpop.f32.mrf.mxu0
        %v3485 = vadd.f32 %v3436, %v3484
        %v3486 = vpop.f32.mrf.mxu0
        %v3487 = vadd.f32 %v3438, %v3486
        %3488 = vmatmul.bf16.gmra.mxu0 %v3091
        %v3489 = vpop.f32.mrf.mxu0
        %v3490 = vadd.f32 %v3441, %v3489
        %v3491 = vpop.f32.mrf.mxu0
        %v3492 = vadd.f32 %v3443, %v3491
        %3493 = vmatmul.bf16.gmra.mxu0 %v3095
        %v3494 = vpop.f32.mrf.mxu0
        %v3495 = vadd.f32 %v3446, %v3494
        %v3496 = vpop.f32.mrf.mxu0
        %v3497 = vadd.f32 %v3448, %v3496
        %3498 = vmatmul.bf16.gmra.mxu0 %v3099
        %v3499 = vpop.f32.mrf.mxu0
        %v3500 = vadd.f32 %v3451, %v3499
        %v3501 = vpop.f32.mrf.mxu0
        %v3502 = vadd.f32 %v3453, %v3501
        %3503 = vdwg.mxu0
        %3504 = vmatpush.bf16.msra.mxu0 %v3324
        %3505 = vmatpush.bf16.msra.mxu0 %v3323
        %3506 = vmatpush.bf16.msra.mxu0 %v3322
        %3507 = vmatpush.bf16.msra.mxu0 %v3321
        %3508 = vmatpush.bf16.msra.mxu0 %v3320
        %3509 = vmatpush.bf16.msra.mxu0 %v3319
        %3510 = vmatpush.bf16.msra.mxu0 %v3318
        %3511 = vmatpush.bf16.msra.mxu0 %v3317
        %3512 = vmatmul.bf16.gmra.mxu0 %v3072
        %v3513 = vpop.f32.mrf.mxu0
        %v3514 = vadd.f32 %v3465, %v3513
        %v3515 = vpop.f32.mrf.mxu0
        %v3516 = vadd.f32 %v3467, %v3515
        %3517 = vmatmul.bf16.gmra.mxu0 %v3076
        %v3518 = vpop.f32.mrf.mxu0
        %v3519 = vadd.f32 %v3470, %v3518
        %v3520 = vpop.f32.mrf.mxu0
        %v3521 = vadd.f32 %v3472, %v3520
        %3522 = vmatmul.bf16.gmra.mxu0 %v3080
        %v3523 = vpop.f32.mrf.mxu0
        %v3524 = vadd.f32 %v3475, %v3523
        %v3525 = vpop.f32.mrf.mxu0
        %v3526 = vadd.f32 %v3477, %v3525
        %3527 = vmatmul.bf16.gmra.mxu0 %v3084
        %v3528 = vpop.f32.mrf.mxu0
        %v3529 = vadd.f32 %v3480, %v3528
        %v3530 = vpop.f32.mrf.mxu0
        %v3531 = vadd.f32 %v3482, %v3530
        %3532 = vmatmul.bf16.gmra.mxu0 %v3088
        %v3533 = vpop.f32.mrf.mxu0
        %v3534 = vadd.f32 %v3485, %v3533
        %v3535 = vpop.f32.mrf.mxu0
        %v3536 = vadd.f32 %v3487, %v3535
        %3537 = vmatmul.bf16.gmra.mxu0 %v3092
        %v3538 = vpop.f32.mrf.mxu0
        %v3539 = vadd.f32 %v3490, %v3538
        %v3540 = vpop.f32.mrf.mxu0
        %v3541 = vadd.f32 %v3492, %v3540
        %3542 = vmatmul.bf16.gmra.mxu0 %v3096
        %v3543 = vpop.f32.mrf.mxu0
        %v3544 = vadd.f32 %v3495, %v3543
        %v3545 = vpop.f32.mrf.mxu0
        %v3546 = vadd.f32 %v3497, %v3545
        %3547 = vmatmul.bf16.gmra.mxu0 %v3100
        %v3548 = vpop.f32.mrf.mxu0
        %v3549 = vadd.f32 %v3500, %v3548
        %v3550 = vpop.f32.mrf.mxu0
        %v3551 = vadd.f32 %v3502, %v3550
        %3552 = vdwg.mxu0
        %v3553 = vmax.f32 %v3514, 0.0
        %v3554 = vmax.f32 %v3516, 0.0
        %v3555 = vmax.f32 %v3519, 0.0
        %v3556 = vmax.f32 %v3521, 0.0
        %v3557 = vmax.f32 %v3524, 0.0
        %v3558 = vmax.f32 %v3526, 0.0
        %v3559 = vmax.f32 %v3529, 0.0
        %v3560 = vmax.f32 %v3531, 0.0
        %v3561 = vmax.f32 %v3534, 0.0
        %v3562 = vmax.f32 %v3536, 0.0
        %v3563 = vmax.f32 %v3539, 0.0
        %v3564 = vmax.f32 %v3541, 0.0
        %v3565 = vmax.f32 %v3544, 0.0
        %v3566 = vmax.f32 %v3546, 0.0
        %v3567 = vmax.f32 %v3549, 0.0
        %v3568 = vmax.f32 %v3551, 0.0
        %v3569 = vmin.f32 %v3553, 6.0
        %v3570 = vmin.f32 %v3554, 6.0
        %v3571 = vmin.f32 %v3555, 6.0
        %v3572 = vmin.f32 %v3556, 6.0
        %v3573 = vmin.f32 %v3557, 6.0
        %v3574 = vmin.f32 %v3558, 6.0
        %v3575 = vmin.f32 %v3559, 6.0
        %v3576 = vmin.f32 %v3560, 6.0
        %v3577 = vmin.f32 %v3561, 6.0
        %v3578 = vmin.f32 %v3562, 6.0
        %v3579 = vmin.f32 %v3563, 6.0
        %v3580 = vmin.f32 %v3564, 6.0
        %v3581 = vmin.f32 %v3565, 6.0
        %v3582 = vmin.f32 %v3566, 6.0
        %v3583 = vmin.f32 %v3567, 6.0
        %v3584 = vmin.f32 %v3568, 6.0
        %v3585 = vadd.f32 %v2529, %v3569
        %v3586 = vadd.f32 %v2530, %v3570
        %v3587 = vadd.f32 %v2531, %v3571
        %v3588 = vadd.f32 %v2532, %v3572
        %v3589 = vadd.f32 %v2533, %v3573
        %v3590 = vadd.f32 %v2534, %v3574
        %v3591 = vadd.f32 %v2535, %v3575
        %v3592 = vadd.f32 %v2536, %v3576
        %v3593 = vadd.f32 %v2537, %v3577
        %v3594 = vadd.f32 %v2538, %v3578
        %v3595 = vadd.f32 %v2539, %v3579
        %v3596 = vadd.f32 %v2540, %v3580
        %v3597 = vadd.f32 %v2541, %v3581
        %v3598 = vadd.f32 %v2542, %v3582
        %v3599 = vadd.f32 %v2543, %v3583
        %v3600 = vadd.f32 %v2544, %v3584
        %v3601 = vld [vmem:[%s8] sm:$0x1]
        %v3602 = vld [vmem:[%s9] sm:$0x1]
        %3603 = vadd.xlane.f32.xlu0 %v3585
        %v3604 = vpop.xlane.xlu0 %3603
        %3605 = vadd.xlane.f32.xlu0 %v3586
        %v3606 = vpop.xlane.xlu0 %3605
        %3607 = vadd.xlane.f32.xlu0 %v3587
        %v3608 = vpop.xlane.xlu0 %3607
        %3609 = vadd.xlane.f32.xlu0 %v3588
        %v3610 = vpop.xlane.xlu0 %3609
        %3611 = vadd.xlane.f32.xlu0 %v3589
        %v3612 = vpop.xlane.xlu0 %3611
        %3613 = vadd.xlane.f32.xlu0 %v3590
        %v3614 = vpop.xlane.xlu0 %3613
        %3615 = vadd.xlane.f32.xlu0 %v3591
        %v3616 = vpop.xlane.xlu0 %3615
        %3617 = vadd.xlane.f32.xlu0 %v3592
        %v3618 = vpop.xlane.xlu0 %3617
        %3619 = vadd.xlane.f32.xlu0 %v3593
        %v3620 = vpop.xlane.xlu0 %3619
        %3621 = vadd.xlane.f32.xlu0 %v3594
        %v3622 = vpop.xlane.xlu0 %3621
        %3623 = vadd.xlane.f32.xlu0 %v3595
        %v3624 = vpop.xlane.xlu0 %3623
        %3625 = vadd.xlane.f32.xlu0 %v3596
        %v3626 = vpop.xlane.xlu0 %3625
        %3627 = vadd.xlane.f32.xlu0 %v3597
        %v3628 = vpop.xlane.xlu0 %3627
        %3629 = vadd.xlane.f32.xlu0 %v3598
        %v3630 = vpop.xlane.xlu0 %3629
        %3631 = vadd.xlane.f32.xlu0 %v3599
        %v3632 = vpop.xlane.xlu0 %3631
        %3633 = vadd.xlane.f32.xlu0 %v3600
        %v3634 = vpop.xlane.xlu0 %3633
        %v3635 = vmul.f32 %v3604, %v2218
        %v3636 = vmul.f32 %v3606, %v2218
        %v3637 = vmul.f32 %v3608, %v2218
        %v3638 = vmul.f32 %v3610, %v2218
        %v3639 = vmul.f32 %v3612, %v2218
        %v3640 = vmul.f32 %v3614, %v2218
        %v3641 = vmul.f32 %v3616, %v2218
        %v3642 = vmul.f32 %v3618, %v2218
        %v3643 = vmul.f32 %v3620, %v2218
        %v3644 = vmul.f32 %v3622, %v2218
        %v3645 = vmul.f32 %v3624, %v2218
        %v3646 = vmul.f32 %v3626, %v2218
        %v3647 = vmul.f32 %v3628, %v2218
        %v3648 = vmul.f32 %v3630, %v2218
        %v3649 = vmul.f32 %v3632, %v2218
        %v3650 = vmul.f32 %v3634, %v2218
        %v3651 = vsub.f32 %v3585, %v3635
        %v3652 = vsub.f32 %v3586, %v3636
        %v3653 = vsub.f32 %v3587, %v3637
        %v3654 = vsub.f32 %v3588, %v3638
        %v3655 = vsub.f32 %v3589, %v3639
        %v3656 = vsub.f32 %v3590, %v3640
        %v3657 = vsub.f32 %v3591, %v3641
        %v3658 = vsub.f32 %v3592, %v3642
        %v3659 = vsub.f32 %v3593, %v3643
        %v3660 = vsub.f32 %v3594, %v3644
        %v3661 = vsub.f32 %v3595, %v3645
        %v3662 = vsub.f32 %v3596, %v3646
        %v3663 = vsub.f32 %v3597, %v3647
        %v3664 = vsub.f32 %v3598, %v3648
        %v3665 = vsub.f32 %v3599, %v3649
        %v3666 = vsub.f32 %v3600, %v3650
        %v3667 = vmul.f32 %v3651, %v3651
        %v3668 = vmul.f32 %v3652, %v3652
        %v3669 = vmul.f32 %v3653, %v3653
        %v3670 = vmul.f32 %v3654, %v3654
        %v3671 = vmul.f32 %v3655, %v3655
        %v3672 = vmul.f32 %v3656, %v3656
        %v3673 = vmul.f32 %v3657, %v3657
        %v3674 = vmul.f32 %v3658, %v3658
        %v3675 = vmul.f32 %v3659, %v3659
        %v3676 = vmul.f32 %v3660, %v3660
        %v3677 = vmul.f32 %v3661, %v3661
        %v3678 = vmul.f32 %v3662, %v3662
        %v3679 = vmul.f32 %v3663, %v3663
        %v3680 = vmul.f32 %v3664, %v3664
        %v3681 = vmul.f32 %v3665, %v3665
        %v3682 = vmul.f32 %v3666, %v3666
        %3683 = vadd.xlane.f32.xlu0 %v3667
        %v3684 = vpop.xlane.xlu0 %3683
        %3685 = vadd.xlane.f32.xlu0 %v3668
        %v3686 = vpop.xlane.xlu0 %3685
        %3687 = vadd.xlane.f32.xlu0 %v3669
        %v3688 = vpop.xlane.xlu0 %3687
        %3689 = vadd.xlane.f32.xlu0 %v3670
        %v3690 = vpop.xlane.xlu0 %3689
        %3691 = vadd.xlane.f32.xlu0 %v3671
        %v3692 = vpop.xlane.xlu0 %3691
        %3693 = vadd.xlane.f32.xlu0 %v3672
        %v3694 = vpop.xlane.xlu0 %3693
        %3695 = vadd.xlane.f32.xlu0 %v3673
        %v3696 = vpop.xlane.xlu0 %3695
        %3697 = vadd.xlane.f32.xlu0 %v3674
        %v3698 = vpop.xlane.xlu0 %3697
        %3699 = vadd.xlane.f32.xlu0 %v3675
        %v3700 = vpop.xlane.xlu0 %3699
        %3701 = vadd.xlane.f32.xlu0 %v3676
        %v3702 = vpop.xlane.xlu0 %3701
        %3703 = vadd.xlane.f32.xlu0 %v3677
        %v3704 = vpop.xlane.xlu0 %3703
        %3705 = vadd.xlane.f32.xlu0 %v3678
        %v3706 = vpop.xlane.xlu0 %3705
        %3707 = vadd.xlane.f32.xlu0 %v3679
        %v3708 = vpop.xlane.xlu0 %3707
        %3709 = vadd.xlane.f32.xlu0 %v3680
        %v3710 = vpop.xlane.xlu0 %3709
        %3711 = vadd.xlane.f32.xlu0 %v3681
        %v3712 = vpop.xlane.xlu0 %3711
        %3713 = vadd.xlane.f32.xlu0 %v3682
        %v3714 = vpop.xlane.xlu0 %3713
        %v3715 = vmul.f32 %v3684, %v2218
        %v3716 = vmul.f32 %v3686, %v2218
        %v3717 = vmul.f32 %v3688, %v2218
        %v3718 = vmul.f32 %v3690, %v2218
        %v3719 = vmul.f32 %v3692, %v2218
        %v3720 = vmul.f32 %v3694, %v2218
        %v3721 = vmul.f32 %v3696, %v2218
        %v3722 = vmul.f32 %v3698, %v2218
        %v3723 = vmul.f32 %v3700, %v2218
        %v3724 = vmul.f32 %v3702, %v2218
        %v3725 = vmul.f32 %v3704, %v2218
        %v3726 = vmul.f32 %v3706, %v2218
        %v3727 = vmul.f32 %v3708, %v2218
        %v3728 = vmul.f32 %v3710, %v2218
        %v3729 = vmul.f32 %v3712, %v2218
        %v3730 = vmul.f32 %v3714, %v2218
        %v3731 = vadd.f32 %v3715, 1e-06
        %v3732 = vadd.f32 %v3716, 1e-06
        %v3733 = vadd.f32 %v3717, 1e-06
        %v3734 = vadd.f32 %v3718, 1e-06
        %v3735 = vadd.f32 %v3719, 1e-06
        %v3736 = vadd.f32 %v3720, 1e-06
        %v3737 = vadd.f32 %v3721, 1e-06
        %v3738 = vadd.f32 %v3722, 1e-06
        %v3739 = vadd.f32 %v3723, 1e-06
        %v3740 = vadd.f32 %v3724, 1e-06
        %v3741 = vadd.f32 %v3725, 1e-06
        %v3742 = vadd.f32 %v3726, 1e-06
        %v3743 = vadd.f32 %v3727, 1e-06
        %v3744 = vadd.f32 %v3728, 1e-06
        %v3745 = vadd.f32 %v3729, 1e-06
        %v3746 = vadd.f32 %v3730, 1e-06
        %v3747 = vrsqrt.pop %v3731
        %v3748 = vmul.f32 %v3747, %v3731
        %v3749 = vmul.f32 %v3748, %v3747
        %v3750 = vmul.f32 0.5, %v3749
        %v3751 = vsub.f32 1.5, %v3750
        %v3752 = vmul.f32 %v3747, %v3751
        %vm3753 = vweird.f32 %v3731
        %vm3754 = vweird.f32 %v3747
        %vm3755 = vmor %vm3753, %vm3754
        %v3756 = vsel %vm3755, %v3747, %v3752
        %v3757 = vrsqrt.pop %v3732
        %v3758 = vmul.f32 %v3757, %v3732
        %v3759 = vmul.f32 %v3758, %v3757
        %v3760 = vmul.f32 0.5, %v3759
        %v3761 = vsub.f32 1.5, %v3760
        %v3762 = vmul.f32 %v3757, %v3761
        %vm3763 = vweird.f32 %v3732
        %vm3764 = vweird.f32 %v3757
        %vm3765 = vmor %vm3763, %vm3764
        %v3766 = vsel %vm3765, %v3757, %v3762
        %v3767 = vrsqrt.pop %v3733
        %v3768 = vmul.f32 %v3767, %v3733
        %v3769 = vmul.f32 %v3768, %v3767
        %v3770 = vmul.f32 0.5, %v3769
        %v3771 = vsub.f32 1.5, %v3770
        %v3772 = vmul.f32 %v3767, %v3771
        %vm3773 = vweird.f32 %v3733
        %vm3774 = vweird.f32 %v3767
        %vm3775 = vmor %vm3773, %vm3774
        %v3776 = vsel %vm3775, %v3767, %v3772
        %v3777 = vrsqrt.pop %v3734
        %v3778 = vmul.f32 %v3777, %v3734
        %v3779 = vmul.f32 %v3778, %v3777
        %v3780 = vmul.f32 0.5, %v3779
        %v3781 = vsub.f32 1.5, %v3780
        %v3782 = vmul.f32 %v3777, %v3781
        %vm3783 = vweird.f32 %v3734
        %vm3784 = vweird.f32 %v3777
        %vm3785 = vmor %vm3783, %vm3784
        %v3786 = vsel %vm3785, %v3777, %v3782
        %v3787 = vrsqrt.pop %v3735
        %v3788 = vmul.f32 %v3787, %v3735
        %v3789 = vmul.f32 %v3788, %v3787
        %v3790 = vmul.f32 0.5, %v3789
        %v3791 = vsub.f32 1.5, %v3790
        %v3792 = vmul.f32 %v3787, %v3791
        %vm3793 = vweird.f32 %v3735
        %vm3794 = vweird.f32 %v3787
        %vm3795 = vmor %vm3793, %vm3794
        %v3796 = vsel %vm3795, %v3787, %v3792
        %v3797 = vrsqrt.pop %v3736
        %v3798 = vmul.f32 %v3797, %v3736
        %v3799 = vmul.f32 %v3798, %v3797
        %v3800 = vmul.f32 0.5, %v3799
        %v3801 = vsub.f32 1.5, %v3800
        %v3802 = vmul.f32 %v3797, %v3801
        %vm3803 = vweird.f32 %v3736
        %vm3804 = vweird.f32 %v3797
        %vm3805 = vmor %vm3803, %vm3804
        %v3806 = vsel %vm3805, %v3797, %v3802
        %v3807 = vrsqrt.pop %v3737
        %v3808 = vmul.f32 %v3807, %v3737
        %v3809 = vmul.f32 %v3808, %v3807
        %v3810 = vmul.f32 0.5, %v3809
        %v3811 = vsub.f32 1.5, %v3810
        %v3812 = vmul.f32 %v3807, %v3811
        %vm3813 = vweird.f32 %v3737
        %vm3814 = vweird.f32 %v3807
        %vm3815 = vmor %vm3813, %vm3814
        %v3816 = vsel %vm3815, %v3807, %v3812
        %v3817 = vrsqrt.pop %v3738
        %v3818 = vmul.f32 %v3817, %v3738
        %v3819 = vmul.f32 %v3818, %v3817
        %v3820 = vmul.f32 0.5, %v3819
        %v3821 = vsub.f32 1.5, %v3820
        %v3822 = vmul.f32 %v3817, %v3821
        %vm3823 = vweird.f32 %v3738
        %vm3824 = vweird.f32 %v3817
        %vm3825 = vmor %vm3823, %vm3824
        %v3826 = vsel %vm3825, %v3817, %v3822
        %v3827 = vrsqrt.pop %v3739
        %v3828 = vmul.f32 %v3827, %v3739
        %v3829 = vmul.f32 %v3828, %v3827
        %v3830 = vmul.f32 0.5, %v3829
        %v3831 = vsub.f32 1.5, %v3830
        %v3832 = vmul.f32 %v3827, %v3831
        %vm3833 = vweird.f32 %v3739
        %vm3834 = vweird.f32 %v3827
        %vm3835 = vmor %vm3833, %vm3834
        %v3836 = vsel %vm3835, %v3827, %v3832
        %v3837 = vrsqrt.pop %v3740
        %v3838 = vmul.f32 %v3837, %v3740
        %v3839 = vmul.f32 %v3838, %v3837
        %v3840 = vmul.f32 0.5, %v3839
        %v3841 = vsub.f32 1.5, %v3840
        %v3842 = vmul.f32 %v3837, %v3841
        %vm3843 = vweird.f32 %v3740
        %vm3844 = vweird.f32 %v3837
        %vm3845 = vmor %vm3843, %vm3844
        %v3846 = vsel %vm3845, %v3837, %v3842
        %v3847 = vrsqrt.pop %v3741
        %v3848 = vmul.f32 %v3847, %v3741
        %v3849 = vmul.f32 %v3848, %v3847
        %v3850 = vmul.f32 0.5, %v3849
        %v3851 = vsub.f32 1.5, %v3850
        %v3852 = vmul.f32 %v3847, %v3851
        %vm3853 = vweird.f32 %v3741
        %vm3854 = vweird.f32 %v3847
        %vm3855 = vmor %vm3853, %vm3854
        %v3856 = vsel %vm3855, %v3847, %v3852
        %v3857 = vrsqrt.pop %v3742
        %v3858 = vmul.f32 %v3857, %v3742
        %v3859 = vmul.f32 %v3858, %v3857
        %v3860 = vmul.f32 0.5, %v3859
        %v3861 = vsub.f32 1.5, %v3860
        %v3862 = vmul.f32 %v3857, %v3861
        %vm3863 = vweird.f32 %v3742
        %vm3864 = vweird.f32 %v3857
        %vm3865 = vmor %vm3863, %vm3864
        %v3866 = vsel %vm3865, %v3857, %v3862
        %v3867 = vrsqrt.pop %v3743
        %v3868 = vmul.f32 %v3867, %v3743
        %v3869 = vmul.f32 %v3868, %v3867
        %v3870 = vmul.f32 0.5, %v3869
        %v3871 = vsub.f32 1.5, %v3870
        %v3872 = vmul.f32 %v3867, %v3871
        %vm3873 = vweird.f32 %v3743
        %vm3874 = vweird.f32 %v3867
        %vm3875 = vmor %vm3873, %vm3874
        %v3876 = vsel %vm3875, %v3867, %v3872
        %v3877 = vrsqrt.pop %v3744
        %v3878 = vmul.f32 %v3877, %v3744
        %v3879 = vmul.f32 %v3878, %v3877
        %v3880 = vmul.f32 0.5, %v3879
        %v3881 = vsub.f32 1.5, %v3880
        %v3882 = vmul.f32 %v3877, %v3881
        %vm3883 = vweird.f32 %v3744
        %vm3884 = vweird.f32 %v3877
        %vm3885 = vmor %vm3883, %vm3884
        %v3886 = vsel %vm3885, %v3877, %v3882
        %v3887 = vrsqrt.pop %v3745
        %v3888 = vmul.f32 %v3887, %v3745
        %v3889 = vmul.f32 %v3888, %v3887
        %v3890 = vmul.f32 0.5, %v3889
        %v3891 = vsub.f32 1.5, %v3890
        %v3892 = vmul.f32 %v3887, %v3891
        %vm3893 = vweird.f32 %v3745
        %vm3894 = vweird.f32 %v3887
        %vm3895 = vmor %vm3893, %vm3894
        %v3896 = vsel %vm3895, %v3887, %v3892
        %v3897 = vrsqrt.pop %v3746
        %v3898 = vmul.f32 %v3897, %v3746
        %v3899 = vmul.f32 %v3898, %v3897
        %v3900 = vmul.f32 0.5, %v3899
        %v3901 = vsub.f32 1.5, %v3900
        %v3902 = vmul.f32 %v3897, %v3901
        %vm3903 = vweird.f32 %v3746
        %vm3904 = vweird.f32 %v3897
        %vm3905 = vmor %vm3903, %vm3904
        %v3906 = vsel %vm3905, %v3897, %v3902
        %v3907 = vmul.f32 %v3651, %v3756
        %v3908 = vmul.f32 %v3652, %v3766
        %v3909 = vmul.f32 %v3653, %v3776
        %v3910 = vmul.f32 %v3654, %v3786
        %v3911 = vmul.f32 %v3655, %v3796
        %v3912 = vmul.f32 %v3656, %v3806
        %v3913 = vmul.f32 %v3657, %v3816
        %v3914 = vmul.f32 %v3658, %v3826
        %v3915 = vmul.f32 %v3659, %v3836
        %v3916 = vmul.f32 %v3660, %v3846
        %v3917 = vmul.f32 %v3661, %v3856
        %v3918 = vmul.f32 %v3662, %v3866
        %v3919 = vmul.f32 %v3663, %v3876
        %v3920 = vmul.f32 %v3664, %v3886
        %v3921 = vmul.f32 %v3665, %v3896
        %v3922 = vmul.f32 %v3666, %v3906
        %v3924 = vperm.slane %v3601, 0
        %v3926 = vmul.f32 %v3907, %v3924
        %v3927 = vmul.f32 %v3908, %v3924
        %v3928 = vmul.f32 %v3909, %v3924
        %v3929 = vmul.f32 %v3910, %v3924
        %v3930 = vmul.f32 %v3911, %v3924
        %v3931 = vmul.f32 %v3912, %v3924
        %v3932 = vmul.f32 %v3913, %v3924
        %v3933 = vmul.f32 %v3914, %v3924
        %v3934 = vmul.f32 %v3915, %v3924
        %v3935 = vmul.f32 %v3916, %v3924
        %v3936 = vmul.f32 %v3917, %v3924
        %v3937 = vmul.f32 %v3918, %v3924
        %v3938 = vmul.f32 %v3919, %v3924
        %v3939 = vmul.f32 %v3920, %v3924
        %v3940 = vmul.f32 %v3921, %v3924
        %v3941 = vmul.f32 %v3922, %v3924
        %v3943 = vperm.slane %v3602, 0
        %v3945 = vadd.f32 %v3926, %v3943
        %v3946 = vadd.f32 %v3927, %v3943
        %v3947 = vadd.f32 %v3928, %v3943
        %v3948 = vadd.f32 %v3929, %v3943
        %v3949 = vadd.f32 %v3930, %v3943
        %v3950 = vadd.f32 %v3931, %v3943
        %v3951 = vadd.f32 %v3932, %v3943
        %v3952 = vadd.f32 %v3933, %v3943
        %v3953 = vadd.f32 %v3934, %v3943
        %v3954 = vadd.f32 %v3935, %v3943
        %v3955 = vadd.f32 %v3936, %v3943
        %v3956 = vadd.f32 %v3937, %v3943
        %v3957 = vadd.f32 %v3938, %v3943
        %v3958 = vadd.f32 %v3939, %v3943
        %v3959 = vadd.f32 %v3940, %v3943
        %v3960 = vadd.f32 %v3941, %v3943
        %3961 = vst [vmem:[%s445] sm:$0xff] %v3945
        %3962 = vst [vmem:[%s445 + $0x8] sm:$0xff] %v3946
        %3963 = vst [vmem:[%s445 + $0x10] sm:$0xff] %v3947
        %3964 = vst [vmem:[%s445 + $0x18] sm:$0xff] %v3948
        %3965 = vst [vmem:[%s445 + $0x20] sm:$0xff] %v3949
        %3966 = vst [vmem:[%s445 + $0x28] sm:$0xff] %v3950
        %3967 = vst [vmem:[%s445 + $0x30] sm:$0xff] %v3951
        %3968 = vst [vmem:[%s445 + $0x38] sm:$0xff] %v3952
        %3969 = vst [vmem:[%s445 + $0x40] sm:$0xff] %v3953
        %3970 = vst [vmem:[%s445 + $0x48] sm:$0xff] %v3954
        %3971 = vst [vmem:[%s445 + $0x50] sm:$0xff] %v3955
        %3972 = vst [vmem:[%s445 + $0x58] sm:$0xff] %v3956
        %3973 = vst [vmem:[%s445 + $0x60] sm:$0xff] %v3957
        %3974 = vst [vmem:[%s445 + $0x68] sm:$0xff] %v3958
        %3975 = vst [vmem:[%s445 + $0x70] sm:$0xff] %v3959
        %3976 = vst [vmem:[%s445 + $0x78] sm:$0xff] %v3960
        %s3977 = sand.u32 %s252, 1
        %s3978 = scalar_lea.sflag [#allocation5], %s3977
        %s3979 = sand.u32 %s252, 1
        %s3980 = smul.addr %s3979, 128
        %s3981 = scalar_lea.vmem [#allocation12], %s3980
        // Predicated region
        $region81: #{tpu_custom_call.1} parent=59 // pred_check
          %p3982 = pneg %p262
        $region82: #{tpu_custom_call.1} parent=59 // pred_check_branch
          %3984 = sbr.rel (%p3982) target = $region84
        $region83: #{tpu_custom_call.1} parent=59 // pred_region
          %s3985 = smul.u32 16, %s29
          %3987 = vsyncadd %s3978, 0
          %s3988 = smul.addr %s3985, 8
          %s3989 = scalar_lea.hbm %s10, %s3988
          %s3990 = sshll.u32 %s3981, 4
          %s3991 = int_to_ptr.vmem [resolvable:$true] %s3990
          %s3992 = sshll.u32 %s3989, 4
          %s3993 = int_to_ptr.hbm [resolvable:$true] %s3992
          %3998 = dma.vmem_to_hbm [thread:$0]  %s3991, 2048, %s3993, %s3978, 128, 128, 8
        $region84: #{tpu_custom_call.1} parent=59 // pred_fallthru
          _
      $region60: #{tpu_custom_call.1} parent=5 // pred_fallthru
        _
      %p3999 = scmp.le.s32.totalorder 2, %s24
      // Predicated region
      $region85: #{tpu_custom_call.1} parent=5 // pred_check
        %p4000 = pneg %p3999
      $region86: #{tpu_custom_call.1} parent=5 // pred_check_branch
        %4002 = sbr.rel (%p4000) target = $region88
      $region87: #{tpu_custom_call.1} parent=5 // pred_region
        %s4003 = ssub.s32 %s24, 2
        // Predicated region
        $region89: #{tpu_custom_call.1} parent=87 // pred_check
          %p4004 = pneg %p268
        $region90: #{tpu_custom_call.1} parent=87 // pred_check_branch
          %4006 = sbr.rel (%p4004) target = $region92
        $region91: #{tpu_custom_call.1} parent=87 // pred_region
          %s4007 = sand.u32 %s253, 1
          %s4008 = scalar_lea.sflag [#allocation5], %s4007
          %s4009 = sand.u32 %s253, 1
          %s4010 = smul.addr %s4009, 128
          %s4011 = scalar_lea.vmem [#allocation12], %s4010
          %4013 = dma.done %s4008, 2048
        $region92: #{tpu_custom_call.1} parent=87 // pred_fallthru
          _
      $region88: #{tpu_custom_call.1} parent=5 // pred_fallthru
        _
    $region6: #{tpu_custom_call.1} parent=1 // loop_footer
      %s28 = sadd.s32 1, %s24
    $region7: #{tpu_custom_call.1} parent=1 // loop_footer_branch
      %23 = sbr.rel target = $region3
    $region8: #{tpu_custom_call.1} parent=1 // loop_exit
      _
    %4014 = vsyncpa [#allocation4], 1
    %s4015 = scalar_lea.sflag [#allocation4], 1
    %4016 = vsyncpa %s4015, 1
    %4017 = vsyncpa [#allocation7], 1
    %4018 = vsyncpa [#allocation10], 1
    %4019 = vsyncpa [#allocation5], 1
    %s4020 = scalar_lea.sflag [#allocation5], 1
    %4021 = vsyncpa %s4020, 1

</llo_original>
